<compile_context>
chip_gen: v6e
topology: v6e:2x2x1
jax: 0.10.0
libtpu: 0.0.40
codegen_flags: <defaults>
</compile_context>

<pallas_src>
import functools  # noqa: F401  (kernels are built via a named closure factory)

import numpy as np
import jax
import jax.numpy as jnp
from jax import lax
from jax.experimental import pallas as pl
from jax.experimental.pallas import tpu as pltpu

# Module hyper-parameters (constructor defaults of PoolHiddenNet)
EMB = 64          # embedding_dim
HID = 32          # h_dim
MID = 512         # hardcoded hidden width of mlp_pre_pool
BOT = 1024        # bottleneck_dim
BN_EPS = 1e-5     # nn.BatchNorm1d eps
NORM_EPS = 1e-12  # F.normalize eps


def _cdiv(a, b):
    return -(-a // b)


def _make_kernel(pool_dtype):
    """pool_dtype: dtype of the layer-2 normalize/ReLU/max-pool path
    (bf16 on v6e/v7x where the VPU has packed bf16; f32 on older parts)."""

    def pool_hidden_kernel(hp_ref, pos_ref, valid_ref,
                           wef_ref, g1_ref, be1_ref,
                           w2_ref, b2_ref, g2_ref, be2_ref,
                           out_ref):
        B, MAXN, mid = hp_ref.shape
        NP = MAXN * MAXN
        bot = w2_ref.shape[1]

        valid = valid_ref[...]                       # (B, MAXN, 1) f32 in {0, 1}
        pos = pos_ref[...]                           # (B, MAXN, 2)
        hproj = hp_ref[...]                          # (B, MAXN, MID) = h@w1[EMB:]+b1f
        wef = wef_ref[...]                           # (2, MID) folded spatial embed

        # --- pairwise relative positions: rel[b,i,j] = pos[b,j] - pos[b,i] ---
        px = pos[:, :, 0]                            # (B, MAXN)
        py = pos[:, :, 1]
        rx = px[:, None, :] - px[:, :, None]         # (B, MAXN_i, MAXN_j)
        ry = py[:, None, :] - py[:, :, None]
        # F.normalize(p=2, dim=-1): v / max(||v||, eps)
        inv = 1.0 / jnp.maximum(jnp.sqrt(rx * rx + ry * ry), NORM_EPS)
        nx = (rx * inv)[:, :, :, None]               # (B, MAXN, MAXN, 1)
        ny = (ry * inv)[:, :, :, None]

        # --- layer 1: spatial embedding folded into w1 (two rank-1 VPU updates);
        #     hidden projection (+ folded bias) precomputed per pedestrian ---
        x1 = (nx * wef[0:1, :] + ny * wef[1:2, :]
              + hproj[:, None, :, :]).reshape(B, NP, mid)      # (B, NP, MID)

        # --- pair-validity mask and per-scene BatchNorm batch size (n^2) ---
        vmask = (valid[:, :, None, :] * valid[:, None, :, :]).reshape(B, NP, 1)
        inv_count = 1.0 / jnp.maximum(jnp.sum(vmask, axis=1, keepdims=True), 1.0)

        def bn_stats(x):
            # masked single-pass biased batch stats (per scene)
            xm = x * vmask
            mean = jnp.sum(xm, axis=1, keepdims=True) * inv_count
            var = jnp.sum(xm * x, axis=1, keepdims=True) * inv_count - mean * mean
            return mean, jnp.maximum(var, 0.0)

        # --- layer-1 BN (train mode) + ReLU, affine folded to scale/shift ---
        m1, v1 = bn_stats(x1)
        sc1 = g1_ref[...] * lax.rsqrt(v1 + BN_EPS)
        sh1 = be1_ref[...] - m1 * sc1
        a1 = jnp.maximum(x1 * sc1 + sh1, 0.0).astype(jnp.bfloat16)

        # --- the only big MXU op: (B*NP, 512) x (512, 1024), bf16 in / f32 acc ---
        x2 = (jnp.dot(a1.reshape(B * NP, mid), w2_ref[...],
                      preferred_element_type=jnp.float32)
              + b2_ref[...]).reshape(B, NP, bot)

        # --- layer-2 BN stats in f32; normalize / ReLU / pool in pool_dtype ---
        m2, v2 = bn_stats(x2)
        sc2 = g2_ref[...] * lax.rsqrt(v2 + BN_EPS)
        sh2 = be2_ref[...] - m2 * sc2
        a2 = jnp.maximum(x2.astype(pool_dtype) * sc2.astype(pool_dtype)
                         + sh2.astype(pool_dtype), 0.0)

        # --- max-pool over partner j; invalid-j mask as additive penalty ---
        pen_j = ((valid[:, None, :, :] - 1.0) * 1e30).astype(pool_dtype)
        pooled = jnp.max(a2.reshape(B, MAXN, MAXN, bot) + pen_j, axis=2)

        out_ref[...] = jnp.where(valid > 0.0, pooled.astype(jnp.float32), 0.0)

    return pool_hidden_kernel


def _chip_config():
    kind = ""
    try:
        kind = jax.devices()[0].device_kind.lower()
    except Exception:
        pass
    vmem_cap = None
    try:
        vmem_cap = int(pltpu.get_tpu_info().vmem_capacity_bytes)
    except Exception:
        vmem_cap = None
    if not vmem_cap or vmem_cap <= 0:
        if "v2" in kind or "v3" in kind:
            vmem_cap = 16 * 2**20
        elif "7" in kind:
            vmem_cap = 64 * 2**20          # v7x: 64 MiB per TensorCore
        else:
            vmem_cap = 128 * 2**20         # v4 / v5e / v6e
    old_vpu = any(t in kind for t in ("v2", "v3", "v4", "v5"))
    return {
        "vmem_cap": vmem_cap,
        # packed-bf16 VALU exists on v6e/v7x; keep f32 elementwise on older parts
        "pool_dtype": jnp.float32 if old_vpu else jnp.bfloat16,
        "dual_tc": "7" in kind,            # v7x: 2 TensorCores per chip
    }


def _est_vmem_bytes(B, MAXN, a2_bytes):
    rows = B * MAXN * MAXN
    # in-kernel activations: x1 f32, a1 bf16, x2 f32, a2, ~one full-width temp
    act = rows * (MID * 4 + MID * 2 + BOT * 4 + BOT * a2_bytes + BOT * 4)
    # double-buffered per-step inputs/outputs
    io = 2 * B * MAXN * ((MID + 3) * 4 + BOT * 4)
    # double-buffered grid-invariant weights (bf16 w2 dominates)
    wts = 2 * (MID * BOT * 2 + 6 * MID * 4 + 3 * BOT * 4)
    return act + io + wts


def _run_bucket(scene_bounds, MAXN, hproj_all, end_pos, wts, cfg):
    sizes = [e - s for (s, e) in scene_bounds]
    G = len(sizes)
    NP = MAXN * MAXN
    a2b = 2 if cfg["pool_dtype"] == jnp.bfloat16 else 4

    # VMEM budget never exceeds physical capacity (64 MiB/TC on v7x).
    vmem_budget = int(0.85 * cfg["vmem_cap"])
    target_rows = 4096 if vmem_budget > 72 * 2**20 else 2048
    B = max(1, target_rows // NP)
    while B > 1 and _est_vmem_bytes(B, MAXN, a2b) > int(0.8 * vmem_budget):
        B -= 1
    B = min(B, G)
    n_blocks = _cdiv(G, B)
    if cfg["dual_tc"] and G >= 2:
        # keep the parallel grid axis >= 2 (and even) so both TensorCores work
        n_blocks = max(n_blocks, 2)
        if n_blocks % 2 == 1 and n_blocks < G:
            n_blocks += 1
    B = _cdiv(G, n_blocks)
    n_blocks = _cdiv(G, B)
    G_pad = n_blocks * B
    # TODO(synk): for scenes so large that a single scene (B=1) exceeds the VMEM
    # budget (MAXN >~ 96 on v7x), stream the i (query) axis with a two-pass BN
    # (pass 1 accumulates masked sum/sumsq, pass 2 normalizes + GEMM + pools).

    # Pack pedestrians into the padded (scene, slot) layout: one device scatter.
    src = np.concatenate([np.arange(s, e) for (s, e) in scene_bounds]).astype(np.int32)
    dst = np.concatenate([g * MAXN + np.arange(n)
                          for g, n in enumerate(sizes)]).astype(np.int32)
    src_j = jnp.asarray(src)
    dst_j = jnp.asarray(dst)

    hp_g = (jnp.zeros((G_pad * MAXN, MID), jnp.float32)
            .at[dst_j].set(hproj_all[src_j]).reshape(G_pad, MAXN, MID))
    p_g = (jnp.zeros((G_pad * MAXN, 2), jnp.float32)
           .at[dst_j].set(end_pos[src_j]).reshape(G_pad, MAXN, 2))
    v_g = (jnp.zeros((G_pad * MAXN, 1), jnp.float32)
           .at[dst_j].set(1.0).reshape(G_pad, MAXN, 1))

    est = _est_vmem_bytes(B, MAXN, a2b)
    vmem_limit = int(min(vmem_budget, max(est * 3 // 2, 32 * 2**20)))

    dmap = lambda g: (g, 0, 0)
    wmap = lambda g: (0, 0)
    out_padded = pl.pallas_call(
        _make_kernel(cfg["pool_dtype"]),
        out_shape=jax.ShapeDtypeStruct((G_pad, MAXN, BOT), jnp.float32),
        grid_spec=pltpu.PrefetchScalarGridSpec(
            num_scalar_prefetch=0,
            grid=(n_blocks,),
            in_specs=[
                pl.BlockSpec((B, MAXN, MID), dmap),   # hproj = h@w1[EMB:] + b1f
                pl.BlockSpec((B, MAXN, 2), dmap),     # end positions
                pl.BlockSpec((B, MAXN, 1), dmap),     # validity mask
                pl.BlockSpec((2, MID), wmap),         # folded spatial-embed weight
                pl.BlockSpec((1, MID), wmap),         # bn1 gamma
                pl.BlockSpec((1, MID), wmap),         # bn1 beta
                pl.BlockSpec((MID, BOT), wmap),       # w2 (bf16)
                pl.BlockSpec((1, BOT), wmap),         # b2
                pl.BlockSpec((1, BOT), wmap),         # bn2 gamma
                pl.BlockSpec((1, BOT), wmap),         # bn2 beta
            ],
            out_specs=pl.BlockSpec((B, MAXN, BOT), dmap)),
        compiler_params=pltpu.CompilerParams(
            dimension_semantics=("parallel",),
            vmem_limit_bytes=vmem_limit),
    )(hp_g, p_g, v_g, wts["wef"], wts["g1"], wts["be1"],
      wts["w2"], wts["b2"], wts["g2"], wts["be2"])

    # Gather back to per-pedestrian rows of this bucket.
    return out_padded.reshape(G_pad * MAXN, BOT)[dst_j], src_j


def pool_hidden_net_pallas(h_states, seq_start_end, end_pos, params):
    """Pallas implementation of PoolHiddenNet.forward (BatchNorm in train mode)."""
    h_flat = jnp.asarray(h_states, jnp.float32).reshape(-1, HID)
    end_pos = jnp.asarray(end_pos, jnp.float32)
    total = h_flat.shape[0]
    bounds = [(int(s), int(e)) for (s, e) in seq_start_end]

    # Fold spatial_embedding into mlp layer 1 (exact algebraic rewrite) and
    # precompute the per-pedestrian hidden projection (K=32 matmul) outside
    # the kernel -- it is O(num_peds), not O(num_pairs).
    w_emb = jnp.asarray(params["w_emb"], jnp.float32)
    b_emb = jnp.asarray(params["b_emb"], jnp.float32)
    w1 = jnp.asarray(params["w1"], jnp.float32)
    b1 = jnp.asarray(params["b1"], jnp.float32)
    wef = w_emb @ w1[:EMB]                      # (2, MID)
    b1f = b_emb @ w1[:EMB] + b1                 # (1, MID)
    hproj_all = h_flat @ w1[EMB:] + b1f         # (total, MID)

    wts = {
        "wef": wef,
        "g1": jnp.asarray(params["g1"], jnp.float32),
        "be1": jnp.asarray(params["be1"], jnp.float32),
        "w2": jnp.asarray(params["w2"], jnp.float32).astype(jnp.bfloat16),
        "b2": jnp.asarray(params["b2"], jnp.float32),
        "g2": jnp.asarray(params["g2"], jnp.float32),
        "be2": jnp.asarray(params["be2"], jnp.float32),
    }

    cfg = _chip_config()

    # Bucket scenes by padded size (8, 16, 32, ...): padding costs (MAXN/n)^2
    # in both MXU FLOPs and VPU work, so don't pad everyone to the global max.
    buckets = {}
    for (s, e) in bounds:
        n = e - s
        m = 8
        while m < n:
            m *= 2
        buckets.setdefault(m, []).append((s, e))

    out = jnp.zeros((total, BOT), jnp.float32)
    for maxn in sorted(buckets):
        vals, src_j = _run_bucket(buckets[maxn], maxn, hproj_all, end_pos, wts, cfg)
        out = out.at[src_j].set(vals)
    return out


def pool_hidden_net_ref(h_states, seq_start_end, end_pos, p):
    """Pure-JAX mirror of the PyTorch forward (for validation)."""
    h_flat = jnp.asarray(h_states, jnp.float32).reshape(-1, HID)
    end_pos = jnp.asarray(end_pos, jnp.float32)
    outs = []
    for (s, e) in seq_start_end:
        s, e = int(s), int(e)
        n = e - s
        ch = h_flat[s:e]
        cp = end_pos[s:e]
        pos1 = jnp.tile(cp, (n, 1))            # curr_end_pos_1
        pos2 = jnp.repeat(cp, n, axis=0)       # curr_end_pos_2 (self.repeat)
        rel = pos1 - pos2
        nrm = jnp.sqrt(jnp.sum(rel * rel, axis=-1, keepdims=True))
        rel = rel / jnp.maximum(nrm, NORM_EPS)
        emb = rel @ p["w_emb"] + p["b_emb"]
        h1 = jnp.tile(ch, (n, 1))              # curr_hidden_1
        x = jnp.concatenate([emb, h1], axis=1)
        x = x @ p["w1"] + p["b1"]
        x = (x - x.mean(0)) / jnp.sqrt(x.var(0) + BN_EPS) * p["g1"] + p["be1"]
        x = jnp.maximum(x, 0.0)
        x = x @ p["w2"] + p["b2"]
        x = (x - x.mean(0)) / jnp.sqrt(x.var(0) + BN_EPS) * p["g2"] + p["be2"]
        x = jnp.maximum(x, 0.0)
        outs.append(x.reshape(n, n, BOT).max(axis=1))
    return jnp.concatenate(outs, axis=0)


if __name__ == "__main__":
    key = jax.random.PRNGKey(0)
    keys = jax.random.split(key, 12)

    # Deterministic synthetic parameters (shapes from PoolHiddenNet.__init__).
    # TODO(synk): BatchNorm running-stat updates (training-mode side effect) are not modeled.
    params = {
        "w_emb": 0.5 * jax.random.normal(keys[0], (2, EMB), jnp.float32),
        "b_emb": 0.1 * jax.random.normal(keys[1], (1, EMB), jnp.float32),
        "w1":    jax.random.normal(keys[2], (EMB + HID, MID), jnp.float32) / np.sqrt(EMB + HID),
        "b1":    0.1 * jax.random.normal(keys[3], (1, MID), jnp.float32),
        "g1":    1.0 + 0.1 * jax.random.normal(keys[4], (1, MID), jnp.float32),
        "be1":   0.1 * jax.random.normal(keys[5], (1, MID), jnp.float32),
        "w2":    jax.random.normal(keys[6], (MID, BOT), jnp.float32) / np.sqrt(MID),
        "b2":    0.1 * jax.random.normal(keys[7], (1, BOT), jnp.float32),
        "g2":    1.0 + 0.1 * jax.random.normal(keys[8], (1, BOT), jnp.float32),
        "be2":   0.1 * jax.random.normal(keys[9], (1, BOT), jnp.float32),
    }

    # Two scenes: 3 pedestrians and 5 pedestrians (8 total).
    seq_start_end = [(0, 3), (3, 8)]
    total_peds = 8
    h_states = jax.random.normal(keys[10], (1, total_peds, HID), jnp.float32)
    end_pos = 2.0 * jax.random.normal(keys[11], (total_peds, 2), jnp.float32)

    out = pool_hidden_net_pallas(h_states, seq_start_end, end_pos, params)
    out = jax.block_until_ready(out)
    assert out.shape == (total_peds, BOT)

    ref = pool_hidden_net_ref(h_states, seq_start_end, end_pos, params)
    # Tolerance accounts for the bf16 MXU GEMM and the bf16 pooling path.
    np.testing.assert_allclose(np.asarray(out), np.asarray(ref), rtol=5e-2, atol=5e-2)

    print("KERNEL_OK")
</pallas_src>

<mosaic_0001>
module attributes {stable_mosaic.version = 11 : i64} {
  func.func @pool_hidden_kernel(%arg0: i32, %arg1: memref<2x8x512xf32, #tpu.memory_space<vmem>>, %arg2: memref<2x8x2xf32, #tpu.memory_space<vmem>>, %arg3: memref<2x8x1xf32, #tpu.memory_space<vmem>>, %arg4: memref<2x512xf32, #tpu.memory_space<vmem>>, %arg5: memref<1x512xf32, #tpu.memory_space<vmem>>, %arg6: memref<1x512xf32, #tpu.memory_space<vmem>>, %arg7: memref<512x1024xbf16, #tpu.memory_space<vmem>>, %arg8: memref<1x1024xf32, #tpu.memory_space<vmem>>, %arg9: memref<1x1024xf32, #tpu.memory_space<vmem>>, %arg10: memref<1x1024xf32, #tpu.memory_space<vmem>>, %arg11: memref<2x8x1024xf32, #tpu.memory_space<vmem>>) attributes {dimension_semantics = [#tpu.dimension_semantics<parallel>], iteration_bounds = array<i64: 1>, scalar_prefetch = 0 : i64, scratch_operands = 0 : i64, tpu.core_type = #tpu.core_type<tc>, window_params = [{transform_indices = @transform_0, window_bounds = array<i64: 2, 8, 512>}, {transform_indices = @transform_1, window_bounds = array<i64: 2, 8, 2>}, {transform_indices = @transform_2, window_bounds = array<i64: 2, 8, 1>}, {pipeline_mode = #tpu.pipeline_mode<synchronous>, transform_indices = @transform_3, window_bounds = array<i64: 2, 512>}, {pipeline_mode = #tpu.pipeline_mode<synchronous>, transform_indices = @transform_4, window_bounds = array<i64: 1, 512>}, {pipeline_mode = #tpu.pipeline_mode<synchronous>, transform_indices = @transform_5, window_bounds = array<i64: 1, 512>}, {pipeline_mode = #tpu.pipeline_mode<synchronous>, transform_indices = @transform_6, window_bounds = array<i64: 512, 1024>}, {pipeline_mode = #tpu.pipeline_mode<synchronous>, transform_indices = @transform_7, window_bounds = array<i64: 1, 1024>}, {pipeline_mode = #tpu.pipeline_mode<synchronous>, transform_indices = @transform_8, window_bounds = array<i64: 1, 1024>}, {pipeline_mode = #tpu.pipeline_mode<synchronous>, transform_indices = @transform_9, window_bounds = array<i64: 1, 1024>}, {transform_indices = @transform_10, window_bounds = array<i64: 2, 8, 1024>}]} {
    %c0 = arith.constant 0 : index
    %c0_0 = arith.constant 0 : index
    %c0_1 = arith.constant 0 : index
    %0 = vector.load %arg3[%c0, %c0_0, %c0_1] : memref<2x8x1xf32, #tpu.memory_space<vmem>>, vector<2x8x1xf32>
    %c0_2 = arith.constant 0 : index
    %c0_3 = arith.constant 0 : index
    %c0_4 = arith.constant 0 : index
    %1 = vector.load %arg2[%c0_2, %c0_3, %c0_4] : memref<2x8x2xf32, #tpu.memory_space<vmem>>, vector<2x8x2xf32>
    %c0_5 = arith.constant 0 : index
    %c0_6 = arith.constant 0 : index
    %c0_7 = arith.constant 0 : index
    %2 = vector.load %arg1[%c0_5, %c0_6, %c0_7] : memref<2x8x512xf32, #tpu.memory_space<vmem>>, vector<2x8x512xf32>
    %c0_8 = arith.constant 0 : index
    %c0_9 = arith.constant 0 : index
    %3 = vector.load %arg4[%c0_8, %c0_9] : memref<2x512xf32, #tpu.memory_space<vmem>>, vector<2x512xf32>
    %4 = vector.extract_strided_slice %1 {offsets = [0, 0, 0], sizes = [2, 8, 1], strides = [1, 1, 1]} : vector<2x8x2xf32> to vector<2x8x1xf32>
    %5 = vector.shape_cast %4 : vector<2x8x1xf32> to vector<2x8xf32>
    %6 = vector.extract_strided_slice %1 {offsets = [0, 0, 1], sizes = [2, 8, 1], strides = [1, 1, 1]} : vector<2x8x2xf32> to vector<2x8x1xf32>
    %7 = vector.shape_cast %6 : vector<2x8x1xf32> to vector<2x8xf32>
    %8 = vector.shape_cast %5 : vector<2x8xf32> to vector<2x1x8xf32>
    %9 = vector.shape_cast %5 : vector<2x8xf32> to vector<2x8x1xf32>
    %10 = vector.broadcast %8 : vector<2x1x8xf32> to vector<2x8x8xf32>
    %11 = vector.broadcast %9 : vector<2x8x1xf32> to vector<2x8x8xf32>
    %12 = arith.subf %10, %11 : vector<2x8x8xf32>
    %13 = vector.shape_cast %7 : vector<2x8xf32> to vector<2x1x8xf32>
    %14 = vector.shape_cast %7 : vector<2x8xf32> to vector<2x8x1xf32>
    %15 = vector.broadcast %13 : vector<2x1x8xf32> to vector<2x8x8xf32>
    %16 = vector.broadcast %14 : vector<2x8x1xf32> to vector<2x8x8xf32>
    %17 = arith.subf %15, %16 : vector<2x8x8xf32>
    %18 = arith.mulf %12, %12 : vector<2x8x8xf32>
    %19 = arith.mulf %17, %17 : vector<2x8x8xf32>
    %20 = arith.addf %18, %19 : vector<2x8x8xf32>
    %21 = math.sqrt %20 : vector<2x8x8xf32>
    %cst = arith.constant 9.99999996E-13 : f32
    %22 = vector.broadcast %cst : f32 to vector<2x8x8xf32>
    %23 = arith.maximumf %21, %22 : vector<2x8x8xf32>
    %cst_10 = arith.constant 1.000000e+00 : f32
    %24 = vector.broadcast %cst_10 : f32 to vector<2x8x8xf32>
    %25 = arith.divf %24, %23 : vector<2x8x8xf32>
    %26 = arith.mulf %12, %25 : vector<2x8x8xf32>
    %27 = vector.shape_cast %26 : vector<2x8x8xf32> to vector<2x8x8x1xf32>
    %28 = arith.mulf %17, %25 : vector<2x8x8xf32>
    %29 = vector.shape_cast %28 : vector<2x8x8xf32> to vector<2x8x8x1xf32>
    %30 = vector.extract_strided_slice %3 {offsets = [0, 0], sizes = [1, 512], strides = [1, 1]} : vector<2x512xf32> to vector<1x512xf32>
    %31 = vector.shape_cast %30 : vector<1x512xf32> to vector<1x1x1x512xf32>
    %32 = vector.broadcast %27 : vector<2x8x8x1xf32> to vector<2x8x8x512xf32>
    %33 = vector.broadcast %31 : vector<1x1x1x512xf32> to vector<2x8x8x512xf32>
    %34 = arith.mulf %32, %33 : vector<2x8x8x512xf32>
    %35 = vector.extract_strided_slice %3 {offsets = [1, 0], sizes = [1, 512], strides = [1, 1]} : vector<2x512xf32> to vector<1x512xf32>
    %36 = vector.shape_cast %35 : vector<1x512xf32> to vector<1x1x1x512xf32>
    %37 = vector.broadcast %29 : vector<2x8x8x1xf32> to vector<2x8x8x512xf32>
    %38 = vector.broadcast %36 : vector<1x1x1x512xf32> to vector<2x8x8x512xf32>
    %39 = arith.mulf %37, %38 : vector<2x8x8x512xf32>
    %40 = arith.addf %34, %39 : vector<2x8x8x512xf32>
    %41 = vector.shape_cast %2 : vector<2x8x512xf32> to vector<2x1x8x512xf32>
    %42 = vector.broadcast %41 : vector<2x1x8x512xf32> to vector<2x8x8x512xf32>
    %43 = arith.addf %40, %42 : vector<2x8x8x512xf32>
    %44 = vector.shape_cast %43 : vector<2x8x8x512xf32> to vector<2x64x512xf32>
    %45 = vector.shape_cast %0 : vector<2x8x1xf32> to vector<2x8x1x1xf32>
    %46 = vector.shape_cast %0 : vector<2x8x1xf32> to vector<2x1x8x1xf32>
    %47 = vector.broadcast %45 : vector<2x8x1x1xf32> to vector<2x8x8x1xf32>
    %48 = vector.broadcast %46 : vector<2x1x8x1xf32> to vector<2x8x8x1xf32>
    %49 = arith.mulf %47, %48 : vector<2x8x8x1xf32>
    %50 = vector.shape_cast %49 : vector<2x8x8x1xf32> to vector<2x64x1xf32>
    %cst_11 = arith.constant dense<0.000000e+00> : vector<2x1xf32>
    %51 = vector.multi_reduction <add>, %50, %cst_11 [1] : vector<2x64x1xf32> to vector<2x1xf32>
    %52 = vector.shape_cast %51 : vector<2x1xf32> to vector<2x1x1xf32>
    %cst_12 = arith.constant 1.000000e+00 : f32
    %53 = vector.broadcast %cst_12 : f32 to vector<2x1x1xf32>
    %54 = arith.maximumf %52, %53 : vector<2x1x1xf32>
    %cst_13 = arith.constant 1.000000e+00 : f32
    %55 = vector.broadcast %cst_13 : f32 to vector<2x1x1xf32>
    %56 = arith.divf %55, %54 : vector<2x1x1xf32>
    %57 = vector.broadcast %50 : vector<2x64x1xf32> to vector<2x64x512xf32>
    %58 = arith.mulf %44, %57 : vector<2x64x512xf32>
    %cst_14 = arith.constant dense<0.000000e+00> : vector<2x512xf32>
    %59 = vector.multi_reduction <add>, %58, %cst_14 [1] : vector<2x64x512xf32> to vector<2x512xf32>
    %60 = vector.shape_cast %59 : vector<2x512xf32> to vector<2x1x512xf32>
    %61 = vector.broadcast %56 : vector<2x1x1xf32> to vector<2x1x512xf32>
    %62 = arith.mulf %60, %61 : vector<2x1x512xf32>
    %63 = arith.mulf %58, %44 : vector<2x64x512xf32>
    %cst_15 = arith.constant dense<0.000000e+00> : vector<2x512xf32>
    %64 = vector.multi_reduction <add>, %63, %cst_15 [1] : vector<2x64x512xf32> to vector<2x512xf32>
    %65 = vector.shape_cast %64 : vector<2x512xf32> to vector<2x1x512xf32>
    %66 = vector.broadcast %56 : vector<2x1x1xf32> to vector<2x1x512xf32>
    %67 = arith.mulf %65, %66 : vector<2x1x512xf32>
    %68 = arith.mulf %62, %62 : vector<2x1x512xf32>
    %69 = arith.subf %67, %68 : vector<2x1x512xf32>
    %cst_16 = arith.constant 0.000000e+00 : f32
    %70 = vector.broadcast %cst_16 : f32 to vector<2x1x512xf32>
    %71 = arith.maximumf %69, %70 : vector<2x1x512xf32>
    %c0_17 = arith.constant 0 : index
    %c0_18 = arith.constant 0 : index
    %72 = vector.load %arg5[%c0_17, %c0_18] : memref<1x512xf32, #tpu.memory_space<vmem>>, vector<1x512xf32>
    %cst_19 = arith.constant 9.99999974E-6 : f32
    %73 = vector.broadcast %cst_19 : f32 to vector<2x1x512xf32>
    %74 = arith.addf %71, %73 : vector<2x1x512xf32>
    %75 = math.rsqrt %74 : vector<2x1x512xf32>
    %76 = vector.shape_cast %72 : vector<1x512xf32> to vector<1x1x512xf32>
    %77 = vector.broadcast %76 : vector<1x1x512xf32> to vector<2x1x512xf32>
    %78 = arith.mulf %77, %75 : vector<2x1x512xf32>
    %c0_20 = arith.constant 0 : index
    %c0_21 = arith.constant 0 : index
    %79 = vector.load %arg6[%c0_20, %c0_21] : memref<1x512xf32, #tpu.memory_space<vmem>>, vector<1x512xf32>
    %80 = arith.mulf %62, %78 : vector<2x1x512xf32>
    %81 = vector.shape_cast %79 : vector<1x512xf32> to vector<1x1x512xf32>
    %82 = vector.broadcast %81 : vector<1x1x512xf32> to vector<2x1x512xf32>
    %83 = arith.subf %82, %80 : vector<2x1x512xf32>
    %84 = vector.broadcast %78 : vector<2x1x512xf32> to vector<2x64x512xf32>
    %85 = arith.mulf %44, %84 : vector<2x64x512xf32>
    %86 = vector.broadcast %83 : vector<2x1x512xf32> to vector<2x64x512xf32>
    %87 = arith.addf %85, %86 : vector<2x64x512xf32>
    %cst_22 = arith.constant 0.000000e+00 : f32
    %88 = vector.broadcast %cst_22 : f32 to vector<2x64x512xf32>
    %89 = arith.maximumf %87, %88 : vector<2x64x512xf32>
    %90 = arith.truncf %89 : vector<2x64x512xf32> to vector<2x64x512xbf16>
    %91 = vector.shape_cast %90 : vector<2x64x512xbf16> to vector<128x512xbf16>
    %c0_23 = arith.constant 0 : index
    %c0_24 = arith.constant 0 : index
    %92 = vector.load %arg7[%c0_23, %c0_24] : memref<512x1024xbf16, #tpu.memory_space<vmem>>, vector<512x1024xbf16>
    %cst_25 = arith.constant dense<0.000000e+00> : vector<128x1024xf32>
    %93 = tpu.matmul %91, %92, %cst_25 {dimension_numbers = #tpu.dot_dimension_numbers<[1], [0], [0], [1], [0, 0, 1, 1], [], []>} : vector<128x512xbf16>, vector<512x1024xbf16>, vector<128x1024xf32> -> vector<128x1024xf32>
    %c0_26 = arith.constant 0 : index
    %c0_27 = arith.constant 0 : index
    %94 = vector.load %arg8[%c0_26, %c0_27] : memref<1x1024xf32, #tpu.memory_space<vmem>>, vector<1x1024xf32>
    %95 = vector.broadcast %94 : vector<1x1024xf32> to vector<128x1024xf32>
    %96 = arith.addf %93, %95 : vector<128x1024xf32>
    %97 = vector.shape_cast %96 : vector<128x1024xf32> to vector<2x64x1024xf32>
    %98 = vector.broadcast %50 : vector<2x64x1xf32> to vector<2x64x1024xf32>
    %99 = arith.mulf %97, %98 : vector<2x64x1024xf32>
    %cst_28 = arith.constant dense<0.000000e+00> : vector<2x1024xf32>
    %100 = vector.multi_reduction <add>, %99, %cst_28 [1] : vector<2x64x1024xf32> to vector<2x1024xf32>
    %101 = vector.shape_cast %100 : vector<2x1024xf32> to vector<2x1x1024xf32>
    %102 = vector.broadcast %56 : vector<2x1x1xf32> to vector<2x1x1024xf32>
    %103 = arith.mulf %101, %102 : vector<2x1x1024xf32>
    %104 = arith.mulf %99, %97 : vector<2x64x1024xf32>
    %cst_29 = arith.constant dense<0.000000e+00> : vector<2x1024xf32>
    %105 = vector.multi_reduction <add>, %104, %cst_29 [1] : vector<2x64x1024xf32> to vector<2x1024xf32>
    %106 = vector.shape_cast %105 : vector<2x1024xf32> to vector<2x1x1024xf32>
    %107 = vector.broadcast %56 : vector<2x1x1xf32> to vector<2x1x1024xf32>
    %108 = arith.mulf %106, %107 : vector<2x1x1024xf32>
    %109 = arith.mulf %103, %103 : vector<2x1x1024xf32>
    %110 = arith.subf %108, %109 : vector<2x1x1024xf32>
    %cst_30 = arith.constant 0.000000e+00 : f32
    %111 = vector.broadcast %cst_30 : f32 to vector<2x1x1024xf32>
    %112 = arith.maximumf %110, %111 : vector<2x1x1024xf32>
    %c0_31 = arith.constant 0 : index
    %c0_32 = arith.constant 0 : index
    %113 = vector.load %arg9[%c0_31, %c0_32] : memref<1x1024xf32, #tpu.memory_space<vmem>>, vector<1x1024xf32>
    %cst_33 = arith.constant 9.99999974E-6 : f32
    %114 = vector.broadcast %cst_33 : f32 to vector<2x1x1024xf32>
    %115 = arith.addf %112, %114 : vector<2x1x1024xf32>
    %116 = math.rsqrt %115 : vector<2x1x1024xf32>
    %117 = vector.shape_cast %113 : vector<1x1024xf32> to vector<1x1x1024xf32>
    %118 = vector.broadcast %117 : vector<1x1x1024xf32> to vector<2x1x1024xf32>
    %119 = arith.mulf %118, %116 : vector<2x1x1024xf32>
    %c0_34 = arith.constant 0 : index
    %c0_35 = arith.constant 0 : index
    %120 = vector.load %arg10[%c0_34, %c0_35] : memref<1x1024xf32, #tpu.memory_space<vmem>>, vector<1x1024xf32>
    %121 = arith.mulf %103, %119 : vector<2x1x1024xf32>
    %122 = vector.shape_cast %120 : vector<1x1024xf32> to vector<1x1x1024xf32>
    %123 = vector.broadcast %122 : vector<1x1x1024xf32> to vector<2x1x1024xf32>
    %124 = arith.subf %123, %121 : vector<2x1x1024xf32>
    %125 = arith.truncf %97 : vector<2x64x1024xf32> to vector<2x64x1024xbf16>
    %126 = arith.truncf %119 : vector<2x1x1024xf32> to vector<2x1x1024xbf16>
    %127 = vector.broadcast %126 : vector<2x1x1024xbf16> to vector<2x64x1024xbf16>
    %128 = arith.mulf %125, %127 : vector<2x64x1024xbf16>
    %129 = arith.truncf %124 : vector<2x1x1024xf32> to vector<2x1x1024xbf16>
    %130 = vector.broadcast %129 : vector<2x1x1024xbf16> to vector<2x64x1024xbf16>
    %131 = arith.addf %128, %130 : vector<2x64x1024xbf16>
    %cst_36 = arith.constant 0.000000e+00 : bf16
    %132 = vector.broadcast %cst_36 : bf16 to vector<2x64x1024xbf16>
    %133 = arith.maximumf %131, %132 : vector<2x64x1024xbf16>
    %134 = vector.shape_cast %0 : vector<2x8x1xf32> to vector<2x1x8x1xf32>
    %cst_37 = arith.constant 1.000000e+00 : f32
    %135 = vector.broadcast %cst_37 : f32 to vector<2x1x8x1xf32>
    %136 = arith.subf %134, %135 : vector<2x1x8x1xf32>
    %cst_38 = arith.constant 1.000000e+30 : f32
    %137 = vector.broadcast %cst_38 : f32 to vector<2x1x8x1xf32>
    %138 = arith.mulf %136, %137 : vector<2x1x8x1xf32>
    %139 = arith.truncf %138 : vector<2x1x8x1xf32> to vector<2x1x8x1xbf16>
    %140 = vector.shape_cast %133 : vector<2x64x1024xbf16> to vector<2x8x8x1024xbf16>
    %141 = vector.broadcast %139 : vector<2x1x8x1xbf16> to vector<2x8x8x1024xbf16>
    %142 = arith.addf %140, %141 : vector<2x8x8x1024xbf16>
    %cst_39 = arith.constant dense<0xFF80> : vector<2x8x1024xbf16>
    %143 = vector.multi_reduction <maximumf>, %142, %cst_39 [2] : vector<2x8x8x1024xbf16> to vector<2x8x1024xbf16>
    %cst_40 = arith.constant 0.000000e+00 : f32
    %144 = vector.broadcast %cst_40 : f32 to vector<2x8x1xf32>
    %145 = arith.cmpf ogt, %0, %144 : vector<2x8x1xf32>
    %146 = arith.extf %143 : vector<2x8x1024xbf16> to vector<2x8x1024xf32>
    %cst_41 = arith.constant 0.000000e+00 : f32
    %147 = vector.shape_cast %145 : vector<2x8x1xi1> to vector<2x8x1xi1>
    %148 = vector.broadcast %147 : vector<2x8x1xi1> to vector<2x8x1024xi1>
    %149 = vector.broadcast %cst_41 : f32 to vector<2x8x1024xf32>
    %150 = arith.select %148, %146, %149 : vector<2x8x1024xi1>, vector<2x8x1024xf32>
    %c0_42 = arith.constant 0 : index
    %c0_43 = arith.constant 0 : index
    %c0_44 = arith.constant 0 : index
    %151 = vector.load %arg11[%c0_42, %c0_43, %c0_44] : memref<2x8x1024xf32, #tpu.memory_space<vmem>>, vector<2x8x1024xf32>
    tpu.vector_store %arg11[%c0_42, %c0_43, %c0_44], %150 {strides = array<i32>} : memref<2x8x1024xf32, #tpu.memory_space<vmem>>, vector<2x8x1024xf32>,
    return
  }
  func.func @transform_0(%arg0: i32) -> (i32, i32, i32) {
    %c0_i32 = arith.constant 0 : i32
    %c0_i32_0 = arith.constant 0 : i32
    %c0_i32_1 = arith.constant 0 : i32
    return %arg0, %c0_i32, %c0_i32_0 : i32, i32, i32
  }
  func.func @transform_1(%arg0: i32) -> (i32, i32, i32) {
    %c0_i32 = arith.constant 0 : i32
    %c0_i32_0 = arith.constant 0 : i32
    %c0_i32_1 = arith.constant 0 : i32
    return %arg0, %c0_i32, %c0_i32_0 : i32, i32, i32
  }
  func.func @transform_2(%arg0: i32) -> (i32, i32, i32) {
    %c0_i32 = arith.constant 0 : i32
    %c0_i32_0 = arith.constant 0 : i32
    %c0_i32_1 = arith.constant 0 : i32
    return %arg0, %c0_i32, %c0_i32_0 : i32, i32, i32
  }
  func.func @transform_3(%arg0: i32) -> (i32, i32) {
    %c0_i32 = arith.constant 0 : i32
    %c0_i32_0 = arith.constant 0 : i32
    %c0_i32_1 = arith.constant 0 : i32
    return %c0_i32, %c0_i32_0 : i32, i32
  }
  func.func @transform_4(%arg0: i32) -> (i32, i32) {
    %c0_i32 = arith.constant 0 : i32
    %c0_i32_0 = arith.constant 0 : i32
    %c0_i32_1 = arith.constant 0 : i32
    return %c0_i32, %c0_i32_0 : i32, i32
  }
  func.func @transform_5(%arg0: i32) -> (i32, i32) {
    %c0_i32 = arith.constant 0 : i32
    %c0_i32_0 = arith.constant 0 : i32
    %c0_i32_1 = arith.constant 0 : i32
    return %c0_i32, %c0_i32_0 : i32, i32
  }
  func.func @transform_6(%arg0: i32) -> (i32, i32) {
    %c0_i32 = arith.constant 0 : i32
    %c0_i32_0 = arith.constant 0 : i32
    %c0_i32_1 = arith.constant 0 : i32
    return %c0_i32, %c0_i32_0 : i32, i32
  }
  func.func @transform_7(%arg0: i32) -> (i32, i32) {
    %c0_i32 = arith.constant 0 : i32
    %c0_i32_0 = arith.constant 0 : i32
    %c0_i32_1 = arith.constant 0 : i32
    return %c0_i32, %c0_i32_0 : i32, i32
  }
  func.func @transform_8(%arg0: i32) -> (i32, i32) {
    %c0_i32 = arith.constant 0 : i32
    %c0_i32_0 = arith.constant 0 : i32
    %c0_i32_1 = arith.constant 0 : i32
    return %c0_i32, %c0_i32_0 : i32, i32
  }
  func.func @transform_9(%arg0: i32) -> (i32, i32) {
    %c0_i32 = arith.constant 0 : i32
    %c0_i32_0 = arith.constant 0 : i32
    %c0_i32_1 = arith.constant 0 : i32
    return %c0_i32, %c0_i32_0 : i32, i32
  }
  func.func @transform_10(%arg0: i32) -> (i32, i32, i32) {
    %c0_i32 = arith.constant 0 : i32
    %c0_i32_0 = arith.constant 0 : i32
    %c0_i32_1 = arith.constant 0 : i32
    return %arg0, %c0_i32, %c0_i32_0 : i32, i32, i32
  }
}

</mosaic_0001>

<llo_original>
// kernel: tpu_custom_call.1
$region0: #{tpu_custom_call.1}
  #allocation0 [shape = 'u32[]', space=smem, size = 0x4, offset = 0x4, fixed_abs, tag = 'smem constant byte address 0x4 - core index']
  #allocation1 [shape = 'u32[144,128]{1,0:T(1,128)}', space=vmem, size = 0x12000, scoped, tag = 'internal scratch']
  %s0 = inlined_call_operand.hbm [shape: f32[2,8,512], index: 0, kind: input, shape index: {}]
  %s1 = inlined_call_operand.vmem [shape: f32[2,8,2], index: 1, kind: input, shape index: {}]
  %s2 = inlined_call_operand.vmem [shape: f32[2,8,1], index: 2, kind: input, shape index: {}]
  %s3 = inlined_call_operand.vmem [shape: f32[2,512], index: 3, kind: input, shape index: {}]
  %s4 = inlined_call_operand.vmem [shape: f32[1,512], index: 4, kind: input, shape index: {}]
  %s5 = inlined_call_operand.vmem [shape: f32[1,512], index: 5, kind: input, shape index: {}]
  %s6 = inlined_call_operand.hbm [shape: bf16[512,1024], index: 6, kind: input, shape index: {}]
  %s7 = inlined_call_operand.vmem [shape: f32[1,1024], index: 7, kind: input, shape index: {}]
  %s8 = inlined_call_operand.vmem [shape: f32[1,1024], index: 8, kind: input, shape index: {}]
  %s9 = inlined_call_operand.vmem [shape: f32[1,1024], index: 9, kind: input, shape index: {}]
  %s10 = inlined_call_operand.hbm [shape: f32[2,8,1024], index: 10, kind: output, shape index: {}]
  %s11 = sld [smem:[#allocation0]]
  $region58: #{tpu_custom_call.1} parent=0
    _
  %s13 = ssub.s32 1, %s11
  %s14 = scalar_select 0, %s13, %s11
  $region1: #{tpu_custom_call.1} parent=0
    #allocation2 [shape = 'u8[32768]{0}', space=vmem, size = 0x8000, scoped, tag = 'input window, operand 0, single buffered']
    #allocation3 [shape = 's32[1]{0}', space=sflag, size = 0x4, scoped, tag = 'scoped memory for tpu_custom_call.1']
    #allocation4 [shape = 's32[1]{0}', space=sflag, size = 0x4, scoped, tag = 'scoped memory for tpu_custom_call.1']
    #allocation5 [shape = 'u8[1048576]{0}', space=vmem, size = 0x100000, scoped, tag = 'input window, operand 6, single buffered']
    #allocation6 [shape = 's32[1]{0}', space=sflag, size = 0x4, scoped, tag = 'scoped memory for tpu_custom_call.1']
    #allocation7 [shape = 'u8[65536]{0}', space=vmem, size = 0x10000, scoped, tag = 'output window, operand 0, single buffered']
    %15 = vsyncpa [#allocation3], 0
    %16 = vsyncpa [#allocation6], 0
    %17 = vsyncpa [#allocation4], 0
    // Predicated region
    $region2: #{tpu_custom_call.1} parent=1 // pred_check
      _
    $region3: #{tpu_custom_call.1} parent=1 // pred_check_branch
      %19 = sbr.rel (0) target = $region5
    $region4: #{tpu_custom_call.1} parent=1 // pred_region
      %s21 = ssub.s32 1024, 1024
      %22 = vsyncadd [#allocation3], %s21
      %s23 = sshll.u32 [#allocation2], 4
      %s24 = int_to_ptr.vmem [resolvable:$true] %s23
      %29 = dma.hbm_to_vmem [thread:$0]  %s0, 1024, %s24, [#allocation3], 512, 512, 32
    $region5: #{tpu_custom_call.1} parent=1 // pred_fallthru
      _
    // Predicated region
    $region6: #{tpu_custom_call.1} parent=1 // pred_check
      _
    $region7: #{tpu_custom_call.1} parent=1 // pred_check_branch
      %31 = sbr.rel (0) target = $region9
    $region8: #{tpu_custom_call.1} parent=1 // pred_region
      _
    $region9: #{tpu_custom_call.1} parent=1 // pred_fallthru
      _
    // Predicated region
    $region10: #{tpu_custom_call.1} parent=1 // pred_check
      _
    $region11: #{tpu_custom_call.1} parent=1 // pred_check_branch
      %33 = sbr.rel (0) target = $region13
    $region12: #{tpu_custom_call.1} parent=1 // pred_region
      _
    $region13: #{tpu_custom_call.1} parent=1 // pred_fallthru
      _
    // Predicated region
    $region14: #{tpu_custom_call.1} parent=1 // pred_check
      _
    $region15: #{tpu_custom_call.1} parent=1 // pred_check_branch
      %35 = sbr.rel (0) target = $region17
    $region16: #{tpu_custom_call.1} parent=1 // pred_region
      _
    $region17: #{tpu_custom_call.1} parent=1 // pred_fallthru
      _
    // Predicated region
    $region18: #{tpu_custom_call.1} parent=1 // pred_check
      _
    $region19: #{tpu_custom_call.1} parent=1 // pred_check_branch
      %37 = sbr.rel (0) target = $region21
    $region20: #{tpu_custom_call.1} parent=1 // pred_region
      _
    $region21: #{tpu_custom_call.1} parent=1 // pred_fallthru
      _
    // Predicated region
    $region22: #{tpu_custom_call.1} parent=1 // pred_check
      _
    $region23: #{tpu_custom_call.1} parent=1 // pred_check_branch
      %39 = sbr.rel (0) target = $region25
    $region24: #{tpu_custom_call.1} parent=1 // pred_region
      _
    $region25: #{tpu_custom_call.1} parent=1 // pred_fallthru
      _
    // Predicated region
    $region26: #{tpu_custom_call.1} parent=1 // pred_check
      _
    $region27: #{tpu_custom_call.1} parent=1 // pred_check_branch
      %41 = sbr.rel (0) target = $region29
    $region28: #{tpu_custom_call.1} parent=1 // pred_region
      %s43 = ssub.s32 32768, 32768
      %44 = vsyncadd [#allocation6], %s43
      %s45 = sshll.u32 [#allocation5], 4
      %s46 = int_to_ptr.vmem [resolvable:$true] %s45
      %51 = dma.hbm_to_vmem [thread:$0]  %s6, 32768, %s46, [#allocation6], 512, 512, 32
    $region29: #{tpu_custom_call.1} parent=1 // pred_fallthru
      _
    // Predicated region
    $region30: #{tpu_custom_call.1} parent=1 // pred_check
      _
    $region31: #{tpu_custom_call.1} parent=1 // pred_check_branch
      %53 = sbr.rel (0) target = $region33
    $region32: #{tpu_custom_call.1} parent=1 // pred_region
      _
    $region33: #{tpu_custom_call.1} parent=1 // pred_fallthru
      _
    // Predicated region
    $region34: #{tpu_custom_call.1} parent=1 // pred_check
      _
    $region35: #{tpu_custom_call.1} parent=1 // pred_check_branch
      %55 = sbr.rel (0) target = $region37
    $region36: #{tpu_custom_call.1} parent=1 // pred_region
      _
    $region37: #{tpu_custom_call.1} parent=1 // pred_fallthru
      _
    // Predicated region
    $region38: #{tpu_custom_call.1} parent=1 // pred_check
      _
    $region39: #{tpu_custom_call.1} parent=1 // pred_check_branch
      %57 = sbr.rel (0) target = $region41
    $region40: #{tpu_custom_call.1} parent=1 // pred_region
      _
    $region41: #{tpu_custom_call.1} parent=1 // pred_fallthru
      _
    // Predicated region
    $region42: #{tpu_custom_call.1} parent=1 // pred_check
      _
    $region43: #{tpu_custom_call.1} parent=1 // pred_check_branch
      %59 = sbr.rel (0) target = $region45
    $region44: #{tpu_custom_call.1} parent=1 // pred_region
      %60 = dma.done [#allocation3], 1024
    $region45: #{tpu_custom_call.1} parent=1 // pred_fallthru
      _
    // Predicated region
    $region46: #{tpu_custom_call.1} parent=1 // pred_check
      _
    $region47: #{tpu_custom_call.1} parent=1 // pred_check_branch
      %62 = sbr.rel (0) target = $region49
    $region48: #{tpu_custom_call.1} parent=1 // pred_region
      %63 = dma.done [#allocation6], 32768
    $region49: #{tpu_custom_call.1} parent=1 // pred_fallthru
      _
    %v66 = vld [vmem:[%s2] sm:$0xff]
    %v67 = vld [vmem:[%s2 + $0x8] sm:$0xff]
    %v68 = vld [vmem:[%s1] sm:$0xff]
    %v69 = vld [vmem:[%s1 + $0x8] sm:$0xff]
    %v70 = vld [vmem:[#allocation2] sm:$0xff]
    %v71 = vld [vmem:[#allocation2 + $0x8] sm:$0xff]
    %v72 = vld [vmem:[#allocation2 + $0x10] sm:$0xff]
    %v73 = vld [vmem:[#allocation2 + $0x18] sm:$0xff]
    %v74 = vld [vmem:[#allocation2 + $0x20] sm:$0xff]
    %v75 = vld [vmem:[#allocation2 + $0x28] sm:$0xff]
    %v76 = vld [vmem:[#allocation2 + $0x30] sm:$0xff]
    %v77 = vld [vmem:[#allocation2 + $0x38] sm:$0xff]
    %v78 = vld [vmem:[%s3] sm:$0xff]
    %80 = vset.pattern.permute.xlu0 0
    %81 = vperm.xlu0 %80, %v68
    %v82 = vpop.permute.xlu0 %81
    %84 = vset.pattern.permute.xlu0 0
    %85 = vperm.xlu0 %84, %v69
    %v86 = vpop.permute.xlu0 %85
    %v87 = vlaneseq
    %v88 = vshrl.u32 %v87, 7
    %v89 = vsub.s32 0, %v88
    %v90 = vrot.slane %v82, %v89
    %v91 = vlaneseq
    %v92 = vshrl.u32 %v91, 7
    %v93 = vsub.s32 1, %v92
    %v94 = vrot.slane %v82, %v93
    %v95 = vlaneseq
    %v96 = vshrl.u32 %v95, 7
    %v97 = vsub.s32 2, %v96
    %v98 = vrot.slane %v82, %v97
    %v99 = vlaneseq
    %v100 = vshrl.u32 %v99, 7
    %v101 = vsub.s32 3, %v100
    %v102 = vrot.slane %v82, %v101
    %v103 = vlaneseq
    %v104 = vshrl.u32 %v103, 7
    %v105 = vsub.s32 4, %v104
    %v106 = vrot.slane %v82, %v105
    %v107 = vlaneseq
    %v108 = vshrl.u32 %v107, 7
    %v109 = vsub.s32 5, %v108
    %v110 = vrot.slane %v82, %v109
    %v111 = vlaneseq
    %v112 = vshrl.u32 %v111, 7
    %v113 = vsub.s32 6, %v112
    %v114 = vrot.slane %v82, %v113
    %v115 = vlaneseq
    %v116 = vshrl.u32 %v115, 7
    %v117 = vsub.s32 7, %v116
    %v118 = vrot.slane %v82, %v117
    %v119 = vlaneseq
    %v120 = vshrl.u32 %v119, 7
    %v121 = vsub.s32 0, %v120
    %v122 = vrot.slane %v86, %v121
    %v123 = vlaneseq
    %v124 = vshrl.u32 %v123, 7
    %v125 = vsub.s32 1, %v124
    %v126 = vrot.slane %v86, %v125
    %v127 = vlaneseq
    %v128 = vshrl.u32 %v127, 7
    %v129 = vsub.s32 2, %v128
    %v130 = vrot.slane %v86, %v129
    %v131 = vlaneseq
    %v132 = vshrl.u32 %v131, 7
    %v133 = vsub.s32 3, %v132
    %v134 = vrot.slane %v86, %v133
    %v135 = vlaneseq
    %v136 = vshrl.u32 %v135, 7
    %v137 = vsub.s32 4, %v136
    %v138 = vrot.slane %v86, %v137
    %v139 = vlaneseq
    %v140 = vshrl.u32 %v139, 7
    %v141 = vsub.s32 5, %v140
    %v142 = vrot.slane %v86, %v141
    %v143 = vlaneseq
    %v144 = vshrl.u32 %v143, 7
    %v145 = vsub.s32 6, %v144
    %v146 = vrot.slane %v86, %v145
    %v147 = vlaneseq
    %v148 = vshrl.u32 %v147, 7
    %v149 = vsub.s32 7, %v148
    %v150 = vrot.slane %v86, %v149
    %v167 = vsub.f32 %v68, %v90
    %v168 = vsub.f32 %v68, %v94
    %v169 = vsub.f32 %v68, %v98
    %v170 = vsub.f32 %v68, %v102
    %v171 = vsub.f32 %v68, %v106
    %v172 = vsub.f32 %v68, %v110
    %v173 = vsub.f32 %v68, %v114
    %v174 = vsub.f32 %v68, %v118
    %v175 = vsub.f32 %v69, %v122
    %v176 = vsub.f32 %v69, %v126
    %v177 = vsub.f32 %v69, %v130
    %v178 = vsub.f32 %v69, %v134
    %v179 = vsub.f32 %v69, %v138
    %v180 = vsub.f32 %v69, %v142
    %v181 = vsub.f32 %v69, %v146
    %v182 = vsub.f32 %v69, %v150
    %183 = vset.pattern.permute.xlu0 1
    %184 = vperm.xlu0 %183, %v68
    %v185 = vpop.permute.xlu0 %184
    %186 = vset.pattern.permute.xlu0 1
    %187 = vperm.xlu0 %186, %v69
    %v188 = vpop.permute.xlu0 %187
    %v189 = vlaneseq
    %v190 = vshrl.u32 %v189, 7
    %v191 = vsub.s32 0, %v190
    %v192 = vrot.slane %v185, %v191
    %v193 = vlaneseq
    %v194 = vshrl.u32 %v193, 7
    %v195 = vsub.s32 1, %v194
    %v196 = vrot.slane %v185, %v195
    %v197 = vlaneseq
    %v198 = vshrl.u32 %v197, 7
    %v199 = vsub.s32 2, %v198
    %v200 = vrot.slane %v185, %v199
    %v201 = vlaneseq
    %v202 = vshrl.u32 %v201, 7
    %v203 = vsub.s32 3, %v202
    %v204 = vrot.slane %v185, %v203
    %v205 = vlaneseq
    %v206 = vshrl.u32 %v205, 7
    %v207 = vsub.s32 4, %v206
    %v208 = vrot.slane %v185, %v207
    %v209 = vlaneseq
    %v210 = vshrl.u32 %v209, 7
    %v211 = vsub.s32 5, %v210
    %v212 = vrot.slane %v185, %v211
    %v213 = vlaneseq
    %v214 = vshrl.u32 %v213, 7
    %v215 = vsub.s32 6, %v214
    %v216 = vrot.slane %v185, %v215
    %v217 = vlaneseq
    %v218 = vshrl.u32 %v217, 7
    %v219 = vsub.s32 7, %v218
    %v220 = vrot.slane %v185, %v219
    %v221 = vlaneseq
    %v222 = vshrl.u32 %v221, 7
    %v223 = vsub.s32 0, %v222
    %v224 = vrot.slane %v188, %v223
    %v225 = vlaneseq
    %v226 = vshrl.u32 %v225, 7
    %v227 = vsub.s32 1, %v226
    %v228 = vrot.slane %v188, %v227
    %v229 = vlaneseq
    %v230 = vshrl.u32 %v229, 7
    %v231 = vsub.s32 2, %v230
    %v232 = vrot.slane %v188, %v231
    %v233 = vlaneseq
    %v234 = vshrl.u32 %v233, 7
    %v235 = vsub.s32 3, %v234
    %v236 = vrot.slane %v188, %v235
    %v237 = vlaneseq
    %v238 = vshrl.u32 %v237, 7
    %v239 = vsub.s32 4, %v238
    %v240 = vrot.slane %v188, %v239
    %v241 = vlaneseq
    %v242 = vshrl.u32 %v241, 7
    %v243 = vsub.s32 5, %v242
    %v244 = vrot.slane %v188, %v243
    %v245 = vlaneseq
    %v246 = vshrl.u32 %v245, 7
    %v247 = vsub.s32 6, %v246
    %v248 = vrot.slane %v188, %v247
    %v249 = vlaneseq
    %v250 = vshrl.u32 %v249, 7
    %v251 = vsub.s32 7, %v250
    %v252 = vrot.slane %v188, %v251
    %v269 = vsub.f32 %v68, %v192
    %v270 = vsub.f32 %v68, %v196
    %v271 = vsub.f32 %v68, %v200
    %v272 = vsub.f32 %v68, %v204
    %v273 = vsub.f32 %v68, %v208
    %v274 = vsub.f32 %v68, %v212
    %v275 = vsub.f32 %v68, %v216
    %v276 = vsub.f32 %v68, %v220
    %v277 = vsub.f32 %v69, %v224
    %v278 = vsub.f32 %v69, %v228
    %v279 = vsub.f32 %v69, %v232
    %v280 = vsub.f32 %v69, %v236
    %v281 = vsub.f32 %v69, %v240
    %v282 = vsub.f32 %v69, %v244
    %v283 = vsub.f32 %v69, %v248
    %v284 = vsub.f32 %v69, %v252
    %v285 = vmul.f32 %v167, %v167
    %v286 = vmul.f32 %v168, %v168
    %v287 = vmul.f32 %v169, %v169
    %v288 = vmul.f32 %v170, %v170
    %v289 = vmul.f32 %v171, %v171
    %v290 = vmul.f32 %v172, %v172
    %v291 = vmul.f32 %v173, %v173
    %v292 = vmul.f32 %v174, %v174
    %v293 = vmul.f32 %v175, %v175
    %v294 = vmul.f32 %v176, %v176
    %v295 = vmul.f32 %v177, %v177
    %v296 = vmul.f32 %v178, %v178
    %v297 = vmul.f32 %v179, %v179
    %v298 = vmul.f32 %v180, %v180
    %v299 = vmul.f32 %v181, %v181
    %v300 = vmul.f32 %v182, %v182
    %v301 = vmul.f32 %v269, %v269
    %v302 = vmul.f32 %v270, %v270
    %v303 = vmul.f32 %v271, %v271
    %v304 = vmul.f32 %v272, %v272
    %v305 = vmul.f32 %v273, %v273
    %v306 = vmul.f32 %v274, %v274
    %v307 = vmul.f32 %v275, %v275
    %v308 = vmul.f32 %v276, %v276
    %v309 = vmul.f32 %v277, %v277
    %v310 = vmul.f32 %v278, %v278
    %v311 = vmul.f32 %v279, %v279
    %v312 = vmul.f32 %v280, %v280
    %v313 = vmul.f32 %v281, %v281
    %v314 = vmul.f32 %v282, %v282
    %v315 = vmul.f32 %v283, %v283
    %v316 = vmul.f32 %v284, %v284
    %333 = vrot.lane.b32.xlu0 %v301, 127
    %v334 = vpop.permute.xlu0 %333
    %335 = vrot.lane.b32.xlu0 %v302, 127
    %v336 = vpop.permute.xlu0 %335
    %337 = vrot.lane.b32.xlu0 %v303, 127
    %v338 = vpop.permute.xlu0 %337
    %339 = vrot.lane.b32.xlu0 %v304, 127
    %v340 = vpop.permute.xlu0 %339
    %341 = vrot.lane.b32.xlu0 %v305, 127
    %v342 = vpop.permute.xlu0 %341
    %343 = vrot.lane.b32.xlu0 %v306, 127
    %v344 = vpop.permute.xlu0 %343
    %345 = vrot.lane.b32.xlu0 %v307, 127
    %v346 = vpop.permute.xlu0 %345
    %347 = vrot.lane.b32.xlu0 %v308, 127
    %v348 = vpop.permute.xlu0 %347
    %349 = vrot.lane.b32.xlu0 %v309, 127
    %v350 = vpop.permute.xlu0 %349
    %351 = vrot.lane.b32.xlu0 %v310, 127
    %v352 = vpop.permute.xlu0 %351
    %353 = vrot.lane.b32.xlu0 %v311, 127
    %v354 = vpop.permute.xlu0 %353
    %355 = vrot.lane.b32.xlu0 %v312, 127
    %v356 = vpop.permute.xlu0 %355
    %357 = vrot.lane.b32.xlu0 %v313, 127
    %v358 = vpop.permute.xlu0 %357
    %359 = vrot.lane.b32.xlu0 %v314, 127
    %v360 = vpop.permute.xlu0 %359
    %361 = vrot.lane.b32.xlu0 %v315, 127
    %v362 = vpop.permute.xlu0 %361
    %363 = vrot.lane.b32.xlu0 %v316, 127
    %v364 = vpop.permute.xlu0 %363
    %v381 = vadd.f32 %v285, %v334
    %v382 = vadd.f32 %v286, %v336
    %v383 = vadd.f32 %v287, %v338
    %v384 = vadd.f32 %v288, %v340
    %v385 = vadd.f32 %v289, %v342
    %v386 = vadd.f32 %v290, %v344
    %v387 = vadd.f32 %v291, %v346
    %v388 = vadd.f32 %v292, %v348
    %v389 = vadd.f32 %v293, %v350
    %v390 = vadd.f32 %v294, %v352
    %v391 = vadd.f32 %v295, %v354
    %v392 = vadd.f32 %v296, %v356
    %v393 = vadd.f32 %v297, %v358
    %v394 = vadd.f32 %v298, %v360
    %v395 = vadd.f32 %v299, %v362
    %v396 = vadd.f32 %v300, %v364
    %v397 = vrsqrt.pop %v381
    %v398 = vmul.f32 %v381, %v397
    %vm399 = vcmp.eq.f32.partialorder %v381, inf
    %v400 = vsel %vm399, %v381, %v398
    %vm401 = vcmp.eq.f32.partialorder %v381, 0.0
    %v402 = vand.u32 %v381, 2147483648
    %v403 = vsel %vm401, %v402, %v400
    %v404 = vrsqrt.pop %v382
    %v405 = vmul.f32 %v382, %v404
    %vm406 = vcmp.eq.f32.partialorder %v382, inf
    %v407 = vsel %vm406, %v382, %v405
    %vm408 = vcmp.eq.f32.partialorder %v382, 0.0
    %v409 = vand.u32 %v382, 2147483648
    %v410 = vsel %vm408, %v409, %v407
    %v411 = vrsqrt.pop %v383
    %v412 = vmul.f32 %v383, %v411
    %vm413 = vcmp.eq.f32.partialorder %v383, inf
    %v414 = vsel %vm413, %v383, %v412
    %vm415 = vcmp.eq.f32.partialorder %v383, 0.0
    %v416 = vand.u32 %v383, 2147483648
    %v417 = vsel %vm415, %v416, %v414
    %v418 = vrsqrt.pop %v384
    %v419 = vmul.f32 %v384, %v418
    %vm420 = vcmp.eq.f32.partialorder %v384, inf
    %v421 = vsel %vm420, %v384, %v419
    %vm422 = vcmp.eq.f32.partialorder %v384, 0.0
    %v423 = vand.u32 %v384, 2147483648
    %v424 = vsel %vm422, %v423, %v421
    %v425 = vrsqrt.pop %v385
    %v426 = vmul.f32 %v385, %v425
    %vm427 = vcmp.eq.f32.partialorder %v385, inf
    %v428 = vsel %vm427, %v385, %v426
    %vm429 = vcmp.eq.f32.partialorder %v385, 0.0
    %v430 = vand.u32 %v385, 2147483648
    %v431 = vsel %vm429, %v430, %v428
    %v432 = vrsqrt.pop %v386
    %v433 = vmul.f32 %v386, %v432
    %vm434 = vcmp.eq.f32.partialorder %v386, inf
    %v435 = vsel %vm434, %v386, %v433
    %vm436 = vcmp.eq.f32.partialorder %v386, 0.0
    %v437 = vand.u32 %v386, 2147483648
    %v438 = vsel %vm436, %v437, %v435
    %v439 = vrsqrt.pop %v387
    %v440 = vmul.f32 %v387, %v439
    %vm441 = vcmp.eq.f32.partialorder %v387, inf
    %v442 = vsel %vm441, %v387, %v440
    %vm443 = vcmp.eq.f32.partialorder %v387, 0.0
    %v444 = vand.u32 %v387, 2147483648
    %v445 = vsel %vm443, %v444, %v442
    %v446 = vrsqrt.pop %v388
    %v447 = vmul.f32 %v388, %v446
    %vm448 = vcmp.eq.f32.partialorder %v388, inf
    %v449 = vsel %vm448, %v388, %v447
    %vm450 = vcmp.eq.f32.partialorder %v388, 0.0
    %v451 = vand.u32 %v388, 2147483648
    %v452 = vsel %vm450, %v451, %v449
    %v453 = vrsqrt.pop %v389
    %v454 = vmul.f32 %v389, %v453
    %vm455 = vcmp.eq.f32.partialorder %v389, inf
    %v456 = vsel %vm455, %v389, %v454
    %vm457 = vcmp.eq.f32.partialorder %v389, 0.0
    %v458 = vand.u32 %v389, 2147483648
    %v459 = vsel %vm457, %v458, %v456
    %v460 = vrsqrt.pop %v390
    %v461 = vmul.f32 %v390, %v460
    %vm462 = vcmp.eq.f32.partialorder %v390, inf
    %v463 = vsel %vm462, %v390, %v461
    %vm464 = vcmp.eq.f32.partialorder %v390, 0.0
    %v465 = vand.u32 %v390, 2147483648
    %v466 = vsel %vm464, %v465, %v463
    %v467 = vrsqrt.pop %v391
    %v468 = vmul.f32 %v391, %v467
    %vm469 = vcmp.eq.f32.partialorder %v391, inf
    %v470 = vsel %vm469, %v391, %v468
    %vm471 = vcmp.eq.f32.partialorder %v391, 0.0
    %v472 = vand.u32 %v391, 2147483648
    %v473 = vsel %vm471, %v472, %v470
    %v474 = vrsqrt.pop %v392
    %v475 = vmul.f32 %v392, %v474
    %vm476 = vcmp.eq.f32.partialorder %v392, inf
    %v477 = vsel %vm476, %v392, %v475
    %vm478 = vcmp.eq.f32.partialorder %v392, 0.0
    %v479 = vand.u32 %v392, 2147483648
    %v480 = vsel %vm478, %v479, %v477
    %v481 = vrsqrt.pop %v393
    %v482 = vmul.f32 %v393, %v481
    %vm483 = vcmp.eq.f32.partialorder %v393, inf
    %v484 = vsel %vm483, %v393, %v482
    %vm485 = vcmp.eq.f32.partialorder %v393, 0.0
    %v486 = vand.u32 %v393, 2147483648
    %v487 = vsel %vm485, %v486, %v484
    %v488 = vrsqrt.pop %v394
    %v489 = vmul.f32 %v394, %v488
    %vm490 = vcmp.eq.f32.partialorder %v394, inf
    %v491 = vsel %vm490, %v394, %v489
    %vm492 = vcmp.eq.f32.partialorder %v394, 0.0
    %v493 = vand.u32 %v394, 2147483648
    %v494 = vsel %vm492, %v493, %v491
    %v495 = vrsqrt.pop %v395
    %v496 = vmul.f32 %v395, %v495
    %vm497 = vcmp.eq.f32.partialorder %v395, inf
    %v498 = vsel %vm497, %v395, %v496
    %vm499 = vcmp.eq.f32.partialorder %v395, 0.0
    %v500 = vand.u32 %v395, 2147483648
    %v501 = vsel %vm499, %v500, %v498
    %v502 = vrsqrt.pop %v396
    %v503 = vmul.f32 %v396, %v502
    %vm504 = vcmp.eq.f32.partialorder %v396, inf
    %v505 = vsel %vm504, %v396, %v503
    %vm506 = vcmp.eq.f32.partialorder %v396, 0.0
    %v507 = vand.u32 %v396, 2147483648
    %v508 = vsel %vm506, %v507, %v505
    %v509 = vmax.f32 %v403, 1e-12
    %v510 = vmax.f32 %v410, 1e-12
    %v511 = vmax.f32 %v417, 1e-12
    %v512 = vmax.f32 %v424, 1e-12
    %v513 = vmax.f32 %v431, 1e-12
    %v514 = vmax.f32 %v438, 1e-12
    %v515 = vmax.f32 %v445, 1e-12
    %v516 = vmax.f32 %v452, 1e-12
    %v517 = vmax.f32 %v459, 1e-12
    %v518 = vmax.f32 %v466, 1e-12
    %v519 = vmax.f32 %v473, 1e-12
    %v520 = vmax.f32 %v480, 1e-12
    %v521 = vmax.f32 %v487, 1e-12
    %v522 = vmax.f32 %v494, 1e-12
    %v523 = vmax.f32 %v501, 1e-12
    %v524 = vmax.f32 %v508, 1e-12
    %v525 = vrcp.pop %v509
    %v526 = vmul.f32 1.0, %v525
    %v527 = vrcp.pop %v510
    %v528 = vmul.f32 1.0, %v527
    %v529 = vrcp.pop %v511
    %v530 = vmul.f32 1.0, %v529
    %v531 = vrcp.pop %v512
    %v532 = vmul.f32 1.0, %v531
    %v533 = vrcp.pop %v513
    %v534 = vmul.f32 1.0, %v533
    %v535 = vrcp.pop %v514
    %v536 = vmul.f32 1.0, %v535
    %v537 = vrcp.pop %v515
    %v538 = vmul.f32 1.0, %v537
    %v539 = vrcp.pop %v516
    %v540 = vmul.f32 1.0, %v539
    %v541 = vrcp.pop %v517
    %v542 = vmul.f32 1.0, %v541
    %v543 = vrcp.pop %v518
    %v544 = vmul.f32 1.0, %v543
    %v545 = vrcp.pop %v519
    %v546 = vmul.f32 1.0, %v545
    %v547 = vrcp.pop %v520
    %v548 = vmul.f32 1.0, %v547
    %v549 = vrcp.pop %v521
    %v550 = vmul.f32 1.0, %v549
    %v551 = vrcp.pop %v522
    %v552 = vmul.f32 1.0, %v551
    %v553 = vrcp.pop %v523
    %v554 = vmul.f32 1.0, %v553
    %v555 = vrcp.pop %v524
    %v556 = vmul.f32 1.0, %v555
    %v557 = vmul.f32 %v167, %v526
    %v558 = vmul.f32 %v168, %v528
    %v559 = vmul.f32 %v169, %v530
    %v560 = vmul.f32 %v170, %v532
    %v561 = vmul.f32 %v171, %v534
    %v562 = vmul.f32 %v172, %v536
    %v563 = vmul.f32 %v173, %v538
    %v564 = vmul.f32 %v174, %v540
    %v565 = vmul.f32 %v175, %v542
    %v566 = vmul.f32 %v176, %v544
    %v567 = vmul.f32 %v177, %v546
    %v568 = vmul.f32 %v178, %v548
    %v569 = vmul.f32 %v179, %v550
    %v570 = vmul.f32 %v180, %v552
    %v571 = vmul.f32 %v181, %v554
    %v572 = vmul.f32 %v182, %v556
    %589 = vrot.lane.b32.xlu0 %v526, 1
    %v590 = vpop.permute.xlu0 %589
    %591 = vrot.lane.b32.xlu0 %v528, 1
    %v592 = vpop.permute.xlu0 %591
    %593 = vrot.lane.b32.xlu0 %v530, 1
    %v594 = vpop.permute.xlu0 %593
    %595 = vrot.lane.b32.xlu0 %v532, 1
    %v596 = vpop.permute.xlu0 %595
    %597 = vrot.lane.b32.xlu0 %v534, 1
    %v598 = vpop.permute.xlu0 %597
    %599 = vrot.lane.b32.xlu0 %v536, 1
    %v600 = vpop.permute.xlu0 %599
    %601 = vrot.lane.b32.xlu0 %v538, 1
    %v602 = vpop.permute.xlu0 %601
    %603 = vrot.lane.b32.xlu0 %v540, 1
    %v604 = vpop.permute.xlu0 %603
    %605 = vrot.lane.b32.xlu0 %v542, 1
    %v606 = vpop.permute.xlu0 %605
    %607 = vrot.lane.b32.xlu0 %v544, 1
    %v608 = vpop.permute.xlu0 %607
    %609 = vrot.lane.b32.xlu0 %v546, 1
    %v610 = vpop.permute.xlu0 %609
    %611 = vrot.lane.b32.xlu0 %v548, 1
    %v612 = vpop.permute.xlu0 %611
    %613 = vrot.lane.b32.xlu0 %v550, 1
    %v614 = vpop.permute.xlu0 %613
    %615 = vrot.lane.b32.xlu0 %v552, 1
    %v616 = vpop.permute.xlu0 %615
    %617 = vrot.lane.b32.xlu0 %v554, 1
    %v618 = vpop.permute.xlu0 %617
    %619 = vrot.lane.b32.xlu0 %v556, 1
    %v620 = vpop.permute.xlu0 %619
    %v637 = vmul.f32 %v269, %v590
    %v638 = vmul.f32 %v270, %v592
    %v639 = vmul.f32 %v271, %v594
    %v640 = vmul.f32 %v272, %v596
    %v641 = vmul.f32 %v273, %v598
    %v642 = vmul.f32 %v274, %v600
    %v643 = vmul.f32 %v275, %v602
    %v644 = vmul.f32 %v276, %v604
    %v645 = vmul.f32 %v277, %v606
    %v646 = vmul.f32 %v278, %v608
    %v647 = vmul.f32 %v279, %v610
    %v648 = vmul.f32 %v280, %v612
    %v649 = vmul.f32 %v281, %v614
    %v650 = vmul.f32 %v282, %v616
    %v651 = vmul.f32 %v283, %v618
    %v652 = vmul.f32 %v284, %v620
    %654 = vset.pattern.permute.xlu0 0
    %655 = vperm.xlu0 %654, %v557
    %v656 = vpop.permute.xlu0 %655
    %659 = vset.pattern.permute.xlu0 0
    %660 = vperm.xlu0 %659, %v558
    %v661 = vpop.permute.xlu0 %660
    %664 = vset.pattern.permute.xlu0 0
    %665 = vperm.xlu0 %664, %v559
    %v666 = vpop.permute.xlu0 %665
    %669 = vset.pattern.permute.xlu0 0
    %670 = vperm.xlu0 %669, %v560
    %v671 = vpop.permute.xlu0 %670
    %674 = vset.pattern.permute.xlu0 0
    %675 = vperm.xlu0 %674, %v561
    %v676 = vpop.permute.xlu0 %675
    %679 = vset.pattern.permute.xlu0 0
    %680 = vperm.xlu0 %679, %v562
    %v681 = vpop.permute.xlu0 %680
    %684 = vset.pattern.permute.xlu0 0
    %685 = vperm.xlu0 %684, %v563
    %v686 = vpop.permute.xlu0 %685
    %689 = vset.pattern.permute.xlu0 0
    %690 = vperm.xlu0 %689, %v564
    %v691 = vpop.permute.xlu0 %690
    %694 = vset.pattern.permute.xlu0 0
    %695 = vperm.xlu0 %694, %v565
    %v696 = vpop.permute.xlu0 %695
    %699 = vset.pattern.permute.xlu0 0
    %700 = vperm.xlu0 %699, %v566
    %v701 = vpop.permute.xlu0 %700
    %704 = vset.pattern.permute.xlu0 0
    %705 = vperm.xlu0 %704, %v567
    %v706 = vpop.permute.xlu0 %705
    %709 = vset.pattern.permute.xlu0 0
    %710 = vperm.xlu0 %709, %v568
    %v711 = vpop.permute.xlu0 %710
    %714 = vset.pattern.permute.xlu0 0
    %715 = vperm.xlu0 %714, %v569
    %v716 = vpop.permute.xlu0 %715
    %719 = vset.pattern.permute.xlu0 0
    %720 = vperm.xlu0 %719, %v570
    %v721 = vpop.permute.xlu0 %720
    %724 = vset.pattern.permute.xlu0 0
    %725 = vperm.xlu0 %724, %v571
    %v726 = vpop.permute.xlu0 %725
    %729 = vset.pattern.permute.xlu0 0
    %730 = vperm.xlu0 %729, %v572
    %v731 = vpop.permute.xlu0 %730
    %v734 = vlaneseq
    %v735 = vshrl.u32 %v734, 7
    %v736 = vsub.s32 0, %v735
    %v737 = vrot.slane %v78, %v736
    %v738 = vlaneseq
    %v739 = vshrl.u32 %v738, 7
    %v740 = vsub.s32 2, %v739
    %v741 = vrot.slane %v78, %v740
    %v742 = vlaneseq
    %v743 = vshrl.u32 %v742, 7
    %v744 = vsub.s32 4, %v743
    %v745 = vrot.slane %v78, %v744
    %v746 = vlaneseq
    %v747 = vshrl.u32 %v746, 7
    %v748 = vsub.s32 6, %v747
    %v749 = vrot.slane %v78, %v748
    %v754 = vlaneseq
    %v755 = vshrl.u32 %v754, 7
    %v756 = vsub.s32 0, %v755
    %v757 = vrot.slane %v737, %v756
    %v758 = vlaneseq
    %v759 = vshrl.u32 %v758, 7
    %v760 = vsub.s32 0, %v759
    %v761 = vrot.slane %v741, %v760
    %v762 = vlaneseq
    %v763 = vshrl.u32 %v762, 7
    %v764 = vsub.s32 0, %v763
    %v765 = vrot.slane %v745, %v764
    %v766 = vlaneseq
    %v767 = vshrl.u32 %v766, 7
    %v768 = vsub.s32 0, %v767
    %v769 = vrot.slane %v749, %v768
    %v770 = vmul.f32 %v656, %v757
    %v771 = vmul.f32 %v656, %v761
    %v772 = vmul.f32 %v656, %v765
    %v773 = vmul.f32 %v656, %v769
    %v774 = vmul.f32 %v661, %v757
    %v775 = vmul.f32 %v661, %v761
    %v776 = vmul.f32 %v661, %v765
    %v777 = vmul.f32 %v661, %v769
    %v778 = vmul.f32 %v666, %v757
    %v779 = vmul.f32 %v666, %v761
    %v780 = vmul.f32 %v666, %v765
    %v781 = vmul.f32 %v666, %v769
    %v782 = vmul.f32 %v671, %v757
    %v783 = vmul.f32 %v671, %v761
    %v784 = vmul.f32 %v671, %v765
    %v785 = vmul.f32 %v671, %v769
    %v786 = vmul.f32 %v676, %v757
    %v787 = vmul.f32 %v676, %v761
    %v788 = vmul.f32 %v676, %v765
    %v789 = vmul.f32 %v676, %v769
    %v790 = vmul.f32 %v681, %v757
    %v791 = vmul.f32 %v681, %v761
    %v792 = vmul.f32 %v681, %v765
    %v793 = vmul.f32 %v681, %v769
    %v794 = vmul.f32 %v686, %v757
    %v795 = vmul.f32 %v686, %v761
    %v796 = vmul.f32 %v686, %v765
    %v797 = vmul.f32 %v686, %v769
    %v798 = vmul.f32 %v691, %v757
    %v799 = vmul.f32 %v691, %v761
    %v800 = vmul.f32 %v691, %v765
    %v801 = vmul.f32 %v691, %v769
    %v802 = vmul.f32 %v696, %v757
    %v803 = vmul.f32 %v696, %v761
    %v804 = vmul.f32 %v696, %v765
    %v805 = vmul.f32 %v696, %v769
    %v806 = vmul.f32 %v701, %v757
    %v807 = vmul.f32 %v701, %v761
    %v808 = vmul.f32 %v701, %v765
    %v809 = vmul.f32 %v701, %v769
    %v810 = vmul.f32 %v706, %v757
    %v811 = vmul.f32 %v706, %v761
    %v812 = vmul.f32 %v706, %v765
    %v813 = vmul.f32 %v706, %v769
    %v814 = vmul.f32 %v711, %v757
    %v815 = vmul.f32 %v711, %v761
    %v816 = vmul.f32 %v711, %v765
    %v817 = vmul.f32 %v711, %v769
    %v818 = vmul.f32 %v716, %v757
    %v819 = vmul.f32 %v716, %v761
    %v820 = vmul.f32 %v716, %v765
    %v821 = vmul.f32 %v716, %v769
    %v822 = vmul.f32 %v721, %v757
    %v823 = vmul.f32 %v721, %v761
    %v824 = vmul.f32 %v721, %v765
    %v825 = vmul.f32 %v721, %v769
    %v826 = vmul.f32 %v726, %v757
    %v827 = vmul.f32 %v726, %v761
    %v828 = vmul.f32 %v726, %v765
    %v829 = vmul.f32 %v726, %v769
    %v830 = vmul.f32 %v731, %v757
    %v831 = vmul.f32 %v731, %v761
    %v832 = vmul.f32 %v731, %v765
    %v833 = vmul.f32 %v731, %v769
    %835 = vset.pattern.permute.xlu0 1
    %836 = vperm.xlu0 %835, %v637
    %v837 = vpop.permute.xlu0 %836
    %840 = vset.pattern.permute.xlu0 1
    %841 = vperm.xlu0 %840, %v638
    %v842 = vpop.permute.xlu0 %841
    %845 = vset.pattern.permute.xlu0 1
    %846 = vperm.xlu0 %845, %v639
    %v847 = vpop.permute.xlu0 %846
    %850 = vset.pattern.permute.xlu0 1
    %851 = vperm.xlu0 %850, %v640
    %v852 = vpop.permute.xlu0 %851
    %855 = vset.pattern.permute.xlu0 1
    %856 = vperm.xlu0 %855, %v641
    %v857 = vpop.permute.xlu0 %856
    %860 = vset.pattern.permute.xlu0 1
    %861 = vperm.xlu0 %860, %v642
    %v862 = vpop.permute.xlu0 %861
    %865 = vset.pattern.permute.xlu0 1
    %866 = vperm.xlu0 %865, %v643
    %v867 = vpop.permute.xlu0 %866
    %870 = vset.pattern.permute.xlu0 1
    %871 = vperm.xlu0 %870, %v644
    %v872 = vpop.permute.xlu0 %871
    %875 = vset.pattern.permute.xlu0 1
    %876 = vperm.xlu0 %875, %v645
    %v877 = vpop.permute.xlu0 %876
    %880 = vset.pattern.permute.xlu0 1
    %881 = vperm.xlu0 %880, %v646
    %v882 = vpop.permute.xlu0 %881
    %885 = vset.pattern.permute.xlu0 1
    %886 = vperm.xlu0 %885, %v647
    %v887 = vpop.permute.xlu0 %886
    %890 = vset.pattern.permute.xlu0 1
    %891 = vperm.xlu0 %890, %v648
    %v892 = vpop.permute.xlu0 %891
    %895 = vset.pattern.permute.xlu0 1
    %896 = vperm.xlu0 %895, %v649
    %v897 = vpop.permute.xlu0 %896
    %900 = vset.pattern.permute.xlu0 1
    %901 = vperm.xlu0 %900, %v650
    %v902 = vpop.permute.xlu0 %901
    %905 = vset.pattern.permute.xlu0 1
    %906 = vperm.xlu0 %905, %v651
    %v907 = vpop.permute.xlu0 %906
    %910 = vset.pattern.permute.xlu0 1
    %911 = vperm.xlu0 %910, %v652
    %v912 = vpop.permute.xlu0 %911
    %v914 = vlaneseq
    %v915 = vshrl.u32 %v914, 7
    %v916 = vsub.s32 1, %v915
    %v917 = vrot.slane %v78, %v916
    %v918 = vlaneseq
    %v919 = vshrl.u32 %v918, 7
    %v920 = vsub.s32 3, %v919
    %v921 = vrot.slane %v78, %v920
    %v922 = vlaneseq
    %v923 = vshrl.u32 %v922, 7
    %v924 = vsub.s32 5, %v923
    %v925 = vrot.slane %v78, %v924
    %v926 = vlaneseq
    %v927 = vshrl.u32 %v926, 7
    %v928 = vsub.s32 7, %v927
    %v929 = vrot.slane %v78, %v928
    %v934 = vlaneseq
    %v935 = vshrl.u32 %v934, 7
    %v936 = vsub.s32 1, %v935
    %v937 = vrot.slane %v917, %v936
    %v938 = vlaneseq
    %v939 = vshrl.u32 %v938, 7
    %v940 = vsub.s32 1, %v939
    %v941 = vrot.slane %v921, %v940
    %v942 = vlaneseq
    %v943 = vshrl.u32 %v942, 7
    %v944 = vsub.s32 1, %v943
    %v945 = vrot.slane %v925, %v944
    %v946 = vlaneseq
    %v947 = vshrl.u32 %v946, 7
    %v948 = vsub.s32 1, %v947
    %v949 = vrot.slane %v929, %v948
    %v950 = vmul.f32 %v837, %v937
    %v951 = vmul.f32 %v837, %v941
    %v952 = vmul.f32 %v837, %v945
    %v953 = vmul.f32 %v837, %v949
    %v954 = vmul.f32 %v842, %v937
    %v955 = vmul.f32 %v842, %v941
    %v956 = vmul.f32 %v842, %v945
    %v957 = vmul.f32 %v842, %v949
    %v958 = vmul.f32 %v847, %v937
    %v959 = vmul.f32 %v847, %v941
    %v960 = vmul.f32 %v847, %v945
    %v961 = vmul.f32 %v847, %v949
    %v962 = vmul.f32 %v852, %v937
    %v963 = vmul.f32 %v852, %v941
    %v964 = vmul.f32 %v852, %v945
    %v965 = vmul.f32 %v852, %v949
    %v966 = vmul.f32 %v857, %v937
    %v967 = vmul.f32 %v857, %v941
    %v968 = vmul.f32 %v857, %v945
    %v969 = vmul.f32 %v857, %v949
    %v970 = vmul.f32 %v862, %v937
    %v971 = vmul.f32 %v862, %v941
    %v972 = vmul.f32 %v862, %v945
    %v973 = vmul.f32 %v862, %v949
    %v974 = vmul.f32 %v867, %v937
    %v975 = vmul.f32 %v867, %v941
    %v976 = vmul.f32 %v867, %v945
    %v977 = vmul.f32 %v867, %v949
    %v978 = vmul.f32 %v872, %v937
    %v979 = vmul.f32 %v872, %v941
    %v980 = vmul.f32 %v872, %v945
    %v981 = vmul.f32 %v872, %v949
    %v982 = vmul.f32 %v877, %v937
    %v983 = vmul.f32 %v877, %v941
    %v984 = vmul.f32 %v877, %v945
    %v985 = vmul.f32 %v877, %v949
    %v986 = vmul.f32 %v882, %v937
    %v987 = vmul.f32 %v882, %v941
    %v988 = vmul.f32 %v882, %v945
    %v989 = vmul.f32 %v882, %v949
    %v990 = vmul.f32 %v887, %v937
    %v991 = vmul.f32 %v887, %v941
    %v992 = vmul.f32 %v887, %v945
    %v993 = vmul.f32 %v887, %v949
    %v994 = vmul.f32 %v892, %v937
    %v995 = vmul.f32 %v892, %v941
    %v996 = vmul.f32 %v892, %v945
    %v997 = vmul.f32 %v892, %v949
    %v998 = vmul.f32 %v897, %v937
    %v999 = vmul.f32 %v897, %v941
    %v1000 = vmul.f32 %v897, %v945
    %v1001 = vmul.f32 %v897, %v949
    %v1002 = vmul.f32 %v902, %v937
    %v1003 = vmul.f32 %v902, %v941
    %v1004 = vmul.f32 %v902, %v945
    %v1005 = vmul.f32 %v902, %v949
    %v1006 = vmul.f32 %v907, %v937
    %v1007 = vmul.f32 %v907, %v941
    %v1008 = vmul.f32 %v907, %v945
    %v1009 = vmul.f32 %v907, %v949
    %v1010 = vmul.f32 %v912, %v937
    %v1011 = vmul.f32 %v912, %v941
    %v1012 = vmul.f32 %v912, %v945
    %v1013 = vmul.f32 %v912, %v949
    %v1014 = vadd.f32 %v770, %v950
    %v1015 = vadd.f32 %v771, %v951
    %v1016 = vadd.f32 %v772, %v952
    %v1017 = vadd.f32 %v773, %v953
    %v1018 = vadd.f32 %v774, %v954
    %v1019 = vadd.f32 %v775, %v955
    %v1020 = vadd.f32 %v776, %v956
    %v1021 = vadd.f32 %v777, %v957
    %v1022 = vadd.f32 %v778, %v958
    %v1023 = vadd.f32 %v779, %v959
    %v1024 = vadd.f32 %v780, %v960
    %v1025 = vadd.f32 %v781, %v961
    %v1026 = vadd.f32 %v782, %v962
    %v1027 = vadd.f32 %v783, %v963
    %v1028 = vadd.f32 %v784, %v964
    %v1029 = vadd.f32 %v785, %v965
    %v1030 = vadd.f32 %v786, %v966
    %v1031 = vadd.f32 %v787, %v967
    %v1032 = vadd.f32 %v788, %v968
    %v1033 = vadd.f32 %v789, %v969
    %v1034 = vadd.f32 %v790, %v970
    %v1035 = vadd.f32 %v791, %v971
    %v1036 = vadd.f32 %v792, %v972
    %v1037 = vadd.f32 %v793, %v973
    %v1038 = vadd.f32 %v794, %v974
    %v1039 = vadd.f32 %v795, %v975
    %v1040 = vadd.f32 %v796, %v976
    %v1041 = vadd.f32 %v797, %v977
    %v1042 = vadd.f32 %v798, %v978
    %v1043 = vadd.f32 %v799, %v979
    %v1044 = vadd.f32 %v800, %v980
    %v1045 = vadd.f32 %v801, %v981
    %v1046 = vadd.f32 %v802, %v982
    %v1047 = vadd.f32 %v803, %v983
    %v1048 = vadd.f32 %v804, %v984
    %v1049 = vadd.f32 %v805, %v985
    %v1050 = vadd.f32 %v806, %v986
    %v1051 = vadd.f32 %v807, %v987
    %v1052 = vadd.f32 %v808, %v988
    %v1053 = vadd.f32 %v809, %v989
    %v1054 = vadd.f32 %v810, %v990
    %v1055 = vadd.f32 %v811, %v991
    %v1056 = vadd.f32 %v812, %v992
    %v1057 = vadd.f32 %v813, %v993
    %v1058 = vadd.f32 %v814, %v994
    %v1059 = vadd.f32 %v815, %v995
    %v1060 = vadd.f32 %v816, %v996
    %v1061 = vadd.f32 %v817, %v997
    %v1062 = vadd.f32 %v818, %v998
    %v1063 = vadd.f32 %v819, %v999
    %v1064 = vadd.f32 %v820, %v1000
    %v1065 = vadd.f32 %v821, %v1001
    %v1066 = vadd.f32 %v822, %v1002
    %v1067 = vadd.f32 %v823, %v1003
    %v1068 = vadd.f32 %v824, %v1004
    %v1069 = vadd.f32 %v825, %v1005
    %v1070 = vadd.f32 %v826, %v1006
    %v1071 = vadd.f32 %v827, %v1007
    %v1072 = vadd.f32 %v828, %v1008
    %v1073 = vadd.f32 %v829, %v1009
    %v1074 = vadd.f32 %v830, %v1010
    %v1075 = vadd.f32 %v831, %v1011
    %v1076 = vadd.f32 %v832, %v1012
    %v1077 = vadd.f32 %v833, %v1013
    %v1078 = vadd.f32 %v1014, %v70
    %v1079 = vadd.f32 %v1015, %v71
    %v1080 = vadd.f32 %v1016, %v72
    %v1081 = vadd.f32 %v1017, %v73
    %v1082 = vadd.f32 %v1018, %v70
    %v1083 = vadd.f32 %v1019, %v71
    %v1084 = vadd.f32 %v1020, %v72
    %v1085 = vadd.f32 %v1021, %v73
    %v1086 = vadd.f32 %v1022, %v70
    %v1087 = vadd.f32 %v1023, %v71
    %v1088 = vadd.f32 %v1024, %v72
    %v1089 = vadd.f32 %v1025, %v73
    %v1090 = vadd.f32 %v1026, %v70
    %v1091 = vadd.f32 %v1027, %v71
    %v1092 = vadd.f32 %v1028, %v72
    %v1093 = vadd.f32 %v1029, %v73
    %v1094 = vadd.f32 %v1030, %v70
    %v1095 = vadd.f32 %v1031, %v71
    %v1096 = vadd.f32 %v1032, %v72
    %v1097 = vadd.f32 %v1033, %v73
    %v1098 = vadd.f32 %v1034, %v70
    %v1099 = vadd.f32 %v1035, %v71
    %v1100 = vadd.f32 %v1036, %v72
    %v1101 = vadd.f32 %v1037, %v73
    %v1102 = vadd.f32 %v1038, %v70
    %v1103 = vadd.f32 %v1039, %v71
    %v1104 = vadd.f32 %v1040, %v72
    %v1105 = vadd.f32 %v1041, %v73
    %v1106 = vadd.f32 %v1042, %v70
    %v1107 = vadd.f32 %v1043, %v71
    %v1108 = vadd.f32 %v1044, %v72
    %v1109 = vadd.f32 %v1045, %v73
    %v1110 = vadd.f32 %v1046, %v74
    %v1111 = vadd.f32 %v1047, %v75
    %v1112 = vadd.f32 %v1048, %v76
    %v1113 = vadd.f32 %v1049, %v77
    %v1114 = vadd.f32 %v1050, %v74
    %v1115 = vadd.f32 %v1051, %v75
    %v1116 = vadd.f32 %v1052, %v76
    %v1117 = vadd.f32 %v1053, %v77
    %v1118 = vadd.f32 %v1054, %v74
    %v1119 = vadd.f32 %v1055, %v75
    %v1120 = vadd.f32 %v1056, %v76
    %v1121 = vadd.f32 %v1057, %v77
    %v1122 = vadd.f32 %v1058, %v74
    %v1123 = vadd.f32 %v1059, %v75
    %v1124 = vadd.f32 %v1060, %v76
    %v1125 = vadd.f32 %v1061, %v77
    %v1126 = vadd.f32 %v1062, %v74
    %v1127 = vadd.f32 %v1063, %v75
    %v1128 = vadd.f32 %v1064, %v76
    %v1129 = vadd.f32 %v1065, %v77
    %v1130 = vadd.f32 %v1066, %v74
    %v1131 = vadd.f32 %v1067, %v75
    %v1132 = vadd.f32 %v1068, %v76
    %v1133 = vadd.f32 %v1069, %v77
    %v1134 = vadd.f32 %v1070, %v74
    %v1135 = vadd.f32 %v1071, %v75
    %v1136 = vadd.f32 %v1072, %v76
    %v1137 = vadd.f32 %v1073, %v77
    %v1138 = vadd.f32 %v1074, %v74
    %v1139 = vadd.f32 %v1075, %v75
    %v1140 = vadd.f32 %v1076, %v76
    %v1141 = vadd.f32 %v1077, %v77
    %v1144 = vcombine.high %v66, %v66
    %v1146 = vunpack.c.l.s4 1966171168
    %v1147 = vunpack.c.0.s8 %v1146
    %v1148 = vlaneseq
    %v1149 = vshrl.u32 %v1148, 7
    %v1150 = vsub.s32 %v1147, %v1149
    %v1151 = vrot.slane %v66, %v1150
    %v1153 = vunpack.c.l.s4 1966171168
    %v1154 = vunpack.c.0.s8 %v1153
    %v1155 = vlaneseq
    %v1156 = vshrl.u32 %v1155, 7
    %v1157 = vsub.s32 %v1154, %v1156
    %v1158 = vrot.slane %v1144, %v1157
    %v1159 = vcombine.high %v1151, %v1151
    %v1160 = vcombine.high %v1158, %v1158
    %v1162 = vunpack.c.l.s4 1966171168
    %v1163 = vunpack.c.0.s8 %v1162
    %v1164 = vlaneseq
    %v1165 = vshrl.u32 %v1164, 7
    %v1166 = vsub.s32 %v1163, %v1165
    %v1167 = vrot.slane %v1151, %v1166
    %v1169 = vunpack.c.l.s4 1966171168
    %v1170 = vunpack.c.0.s8 %v1169
    %v1171 = vlaneseq
    %v1172 = vshrl.u32 %v1171, 7
    %v1173 = vsub.s32 %v1170, %v1172
    %v1174 = vrot.slane %v1158, %v1173
    %v1176 = vunpack.c.l.s4 1966171168
    %v1177 = vunpack.c.0.s8 %v1176
    %v1178 = vlaneseq
    %v1179 = vshrl.u32 %v1178, 7
    %v1180 = vsub.s32 %v1177, %v1179
    %v1181 = vrot.slane %v1159, %v1180
    %v1183 = vunpack.c.l.s4 1966171168
    %v1184 = vunpack.c.0.s8 %v1183
    %v1185 = vlaneseq
    %v1186 = vshrl.u32 %v1185, 7
    %v1187 = vsub.s32 %v1184, %v1186
    %v1188 = vrot.slane %v1160, %v1187
    %v1189 = vcombine.high %v1167, %v1167
    %v1190 = vcombine.high %v1174, %v1174
    %v1191 = vcombine.high %v1181, %v1181
    %v1192 = vcombine.high %v1188, %v1188
    %v1193 = vcombine.high %v67, %v67
    %v1195 = vunpack.c.l.s4 1966171168
    %v1196 = vunpack.c.0.s8 %v1195
    %v1197 = vlaneseq
    %v1198 = vshrl.u32 %v1197, 7
    %v1199 = vsub.s32 %v1196, %v1198
    %v1200 = vrot.slane %v67, %v1199
    %v1202 = vunpack.c.l.s4 1966171168
    %v1203 = vunpack.c.0.s8 %v1202
    %v1204 = vlaneseq
    %v1205 = vshrl.u32 %v1204, 7
    %v1206 = vsub.s32 %v1203, %v1205
    %v1207 = vrot.slane %v1193, %v1206
    %v1208 = vcombine.high %v1200, %v1200
    %v1209 = vcombine.high %v1207, %v1207
    %v1211 = vunpack.c.l.s4 1966171168
    %v1212 = vunpack.c.0.s8 %v1211
    %v1213 = vlaneseq
    %v1214 = vshrl.u32 %v1213, 7
    %v1215 = vsub.s32 %v1212, %v1214
    %v1216 = vrot.slane %v1200, %v1215
    %v1218 = vunpack.c.l.s4 1966171168
    %v1219 = vunpack.c.0.s8 %v1218
    %v1220 = vlaneseq
    %v1221 = vshrl.u32 %v1220, 7
    %v1222 = vsub.s32 %v1219, %v1221
    %v1223 = vrot.slane %v1207, %v1222
    %v1225 = vunpack.c.l.s4 1966171168
    %v1226 = vunpack.c.0.s8 %v1225
    %v1227 = vlaneseq
    %v1228 = vshrl.u32 %v1227, 7
    %v1229 = vsub.s32 %v1226, %v1228
    %v1230 = vrot.slane %v1208, %v1229
    %v1232 = vunpack.c.l.s4 1966171168
    %v1233 = vunpack.c.0.s8 %v1232
    %v1234 = vlaneseq
    %v1235 = vshrl.u32 %v1234, 7
    %v1236 = vsub.s32 %v1233, %v1235
    %v1237 = vrot.slane %v1209, %v1236
    %v1238 = vcombine.high %v1216, %v1216
    %v1239 = vcombine.high %v1223, %v1223
    %v1240 = vcombine.high %v1230, %v1230
    %v1241 = vcombine.high %v1237, %v1237
    %v1242 = vlaneseq
    %v1243 = vshrl.u32 %v1242, 7
    %v1244 = vsub.s32 0, %v1243
    %v1245 = vrot.slane %v1167, %v1244
    %v1246 = vlaneseq
    %v1247 = vshrl.u32 %v1246, 7
    %v1248 = vsub.s32 0, %v1247
    %v1249 = vrot.slane %v1181, %v1248
    %v1250 = vlaneseq
    %v1251 = vshrl.u32 %v1250, 7
    %v1252 = vsub.s32 0, %v1251
    %v1253 = vrot.slane %v1189, %v1252
    %v1254 = vlaneseq
    %v1255 = vshrl.u32 %v1254, 7
    %v1256 = vsub.s32 0, %v1255
    %v1257 = vrot.slane %v1191, %v1256
    %v1258 = vlaneseq
    %v1259 = vshrl.u32 %v1258, 7
    %v1260 = vsub.s32 0, %v1259
    %v1261 = vrot.slane %v1174, %v1260
    %v1262 = vlaneseq
    %v1263 = vshrl.u32 %v1262, 7
    %v1264 = vsub.s32 0, %v1263
    %v1265 = vrot.slane %v1188, %v1264
    %v1266 = vlaneseq
    %v1267 = vshrl.u32 %v1266, 7
    %v1268 = vsub.s32 0, %v1267
    %v1269 = vrot.slane %v1190, %v1268
    %v1270 = vlaneseq
    %v1271 = vshrl.u32 %v1270, 7
    %v1272 = vsub.s32 0, %v1271
    %v1273 = vrot.slane %v1192, %v1272
    %v1274 = vlaneseq
    %v1275 = vshrl.u32 %v1274, 7
    %v1276 = vsub.s32 0, %v1275
    %v1277 = vrot.slane %v1216, %v1276
    %v1278 = vlaneseq
    %v1279 = vshrl.u32 %v1278, 7
    %v1280 = vsub.s32 0, %v1279
    %v1281 = vrot.slane %v1230, %v1280
    %v1282 = vlaneseq
    %v1283 = vshrl.u32 %v1282, 7
    %v1284 = vsub.s32 0, %v1283
    %v1285 = vrot.slane %v1238, %v1284
    %v1286 = vlaneseq
    %v1287 = vshrl.u32 %v1286, 7
    %v1288 = vsub.s32 0, %v1287
    %v1289 = vrot.slane %v1240, %v1288
    %v1290 = vlaneseq
    %v1291 = vshrl.u32 %v1290, 7
    %v1292 = vsub.s32 0, %v1291
    %v1293 = vrot.slane %v1223, %v1292
    %v1294 = vlaneseq
    %v1295 = vshrl.u32 %v1294, 7
    %v1296 = vsub.s32 0, %v1295
    %v1297 = vrot.slane %v1237, %v1296
    %v1298 = vlaneseq
    %v1299 = vshrl.u32 %v1298, 7
    %v1300 = vsub.s32 0, %v1299
    %v1301 = vrot.slane %v1239, %v1300
    %v1302 = vlaneseq
    %v1303 = vshrl.u32 %v1302, 7
    %v1304 = vsub.s32 0, %v1303
    %v1305 = vrot.slane %v1241, %v1304
    %v1322 = vmul.f32 %v1245, %v66
    %v1323 = vmul.f32 %v1249, %v66
    %v1324 = vmul.f32 %v1253, %v66
    %v1325 = vmul.f32 %v1257, %v66
    %v1326 = vmul.f32 %v1261, %v66
    %v1327 = vmul.f32 %v1265, %v66
    %v1328 = vmul.f32 %v1269, %v66
    %v1329 = vmul.f32 %v1273, %v66
    %v1330 = vmul.f32 %v1277, %v67
    %v1331 = vmul.f32 %v1281, %v67
    %v1332 = vmul.f32 %v1285, %v67
    %v1333 = vmul.f32 %v1289, %v67
    %v1334 = vmul.f32 %v1293, %v67
    %v1335 = vmul.f32 %v1297, %v67
    %v1336 = vmul.f32 %v1301, %v67
    %v1337 = vmul.f32 %v1305, %v67
    %vm1338 = vcmask 7168
    %v1339 = vsel %vm1338, %v1322, 0.0
    %v1340 = vsel %vm1338, %v1323, 0.0
    %v1341 = vadd.f32 %v1339, %v1340
    %v1342 = vsel %vm1338, %v1324, 0.0
    %v1343 = vadd.f32 %v1341, %v1342
    %v1344 = vsel %vm1338, %v1325, 0.0
    %v1345 = vadd.f32 %v1343, %v1344
    %v1346 = vsel %vm1338, %v1326, 0.0
    %v1347 = vadd.f32 %v1345, %v1346
    %v1348 = vsel %vm1338, %v1327, 0.0
    %v1349 = vadd.f32 %v1347, %v1348
    %v1350 = vsel %vm1338, %v1328, 0.0
    %v1351 = vadd.f32 %v1349, %v1350
    %v1352 = vsel %vm1338, %v1329, 0.0
    %v1353 = vadd.f32 %v1351, %v1352
    %v1354 = vrot.slane %v1353, 4
    %v1355 = vadd.f32 %v1353, %v1354
    %v1356 = vrot.slane %v1355, 2
    %v1357 = vadd.f32 %v1355, %v1356
    %v1358 = vrot.slane %v1357, 1
    %v1359 = vadd.f32 %v1357, %v1358
    %v1360 = vsel %vm1338, %v1330, 0.0
    %v1361 = vsel %vm1338, %v1331, 0.0
    %v1362 = vadd.f32 %v1360, %v1361
    %v1363 = vsel %vm1338, %v1332, 0.0
    %v1364 = vadd.f32 %v1362, %v1363
    %v1365 = vsel %vm1338, %v1333, 0.0
    %v1366 = vadd.f32 %v1364, %v1365
    %v1367 = vsel %vm1338, %v1334, 0.0
    %v1368 = vadd.f32 %v1366, %v1367
    %v1369 = vsel %vm1338, %v1335, 0.0
    %v1370 = vadd.f32 %v1368, %v1369
    %v1371 = vsel %vm1338, %v1336, 0.0
    %v1372 = vadd.f32 %v1370, %v1371
    %v1373 = vsel %vm1338, %v1337, 0.0
    %v1374 = vadd.f32 %v1372, %v1373
    %v1375 = vrot.slane %v1374, 4
    %v1376 = vadd.f32 %v1374, %v1375
    %v1377 = vrot.slane %v1376, 2
    %v1378 = vadd.f32 %v1376, %v1377
    %v1379 = vrot.slane %v1378, 1
    %v1380 = vadd.f32 %v1378, %v1379
    %v1381 = vmax.f32 %v1359, 1.0
    %v1382 = vmax.f32 %v1380, 1.0
    %v1383 = vrcp.pop %v1381
    %v1384 = vmul.f32 1.0, %v1383
    %v1385 = vrcp.pop %v1382
    %v1386 = vmul.f32 1.0, %v1385
    %1388 = vset.pattern.permute.xlu0 0
    %1389 = vperm.xlu0 %1388, %v1322
    %v1390 = vpop.permute.xlu0 %1389
    %1393 = vset.pattern.permute.xlu0 0
    %1394 = vperm.xlu0 %1393, %v1323
    %v1395 = vpop.permute.xlu0 %1394
    %1398 = vset.pattern.permute.xlu0 0
    %1399 = vperm.xlu0 %1398, %v1324
    %v1400 = vpop.permute.xlu0 %1399
    %1403 = vset.pattern.permute.xlu0 0
    %1404 = vperm.xlu0 %1403, %v1325
    %v1405 = vpop.permute.xlu0 %1404
    %1408 = vset.pattern.permute.xlu0 0
    %1409 = vperm.xlu0 %1408, %v1326
    %v1410 = vpop.permute.xlu0 %1409
    %1413 = vset.pattern.permute.xlu0 0
    %1414 = vperm.xlu0 %1413, %v1327
    %v1415 = vpop.permute.xlu0 %1414
    %1418 = vset.pattern.permute.xlu0 0
    %1419 = vperm.xlu0 %1418, %v1328
    %v1420 = vpop.permute.xlu0 %1419
    %1423 = vset.pattern.permute.xlu0 0
    %1424 = vperm.xlu0 %1423, %v1329
    %v1425 = vpop.permute.xlu0 %1424
    %1428 = vset.pattern.permute.xlu0 0
    %1429 = vperm.xlu0 %1428, %v1330
    %v1430 = vpop.permute.xlu0 %1429
    %1433 = vset.pattern.permute.xlu0 0
    %1434 = vperm.xlu0 %1433, %v1331
    %v1435 = vpop.permute.xlu0 %1434
    %1438 = vset.pattern.permute.xlu0 0
    %1439 = vperm.xlu0 %1438, %v1332
    %v1440 = vpop.permute.xlu0 %1439
    %1443 = vset.pattern.permute.xlu0 0
    %1444 = vperm.xlu0 %1443, %v1333
    %v1445 = vpop.permute.xlu0 %1444
    %1448 = vset.pattern.permute.xlu0 0
    %1449 = vperm.xlu0 %1448, %v1334
    %v1450 = vpop.permute.xlu0 %1449
    %1453 = vset.pattern.permute.xlu0 0
    %1454 = vperm.xlu0 %1453, %v1335
    %v1455 = vpop.permute.xlu0 %1454
    %1458 = vset.pattern.permute.xlu0 0
    %1459 = vperm.xlu0 %1458, %v1336
    %v1460 = vpop.permute.xlu0 %1459
    %1463 = vset.pattern.permute.xlu0 0
    %1464 = vperm.xlu0 %1463, %v1337
    %v1465 = vpop.permute.xlu0 %1464
    %v1467 = vmul.f32 %v1078, %v1390
    %v1468 = vmul.f32 %v1079, %v1390
    %v1469 = vmul.f32 %v1080, %v1390
    %v1470 = vmul.f32 %v1081, %v1390
    %v1471 = vmul.f32 %v1082, %v1395
    %v1472 = vmul.f32 %v1083, %v1395
    %v1473 = vmul.f32 %v1084, %v1395
    %v1474 = vmul.f32 %v1085, %v1395
    %v1475 = vmul.f32 %v1086, %v1400
    %v1476 = vmul.f32 %v1087, %v1400
    %v1477 = vmul.f32 %v1088, %v1400
    %v1478 = vmul.f32 %v1089, %v1400
    %v1479 = vmul.f32 %v1090, %v1405
    %v1480 = vmul.f32 %v1091, %v1405
    %v1481 = vmul.f32 %v1092, %v1405
    %v1482 = vmul.f32 %v1093, %v1405
    %v1483 = vmul.f32 %v1094, %v1410
    %v1484 = vmul.f32 %v1095, %v1410
    %v1485 = vmul.f32 %v1096, %v1410
    %v1486 = vmul.f32 %v1097, %v1410
    %v1487 = vmul.f32 %v1098, %v1415
    %v1488 = vmul.f32 %v1099, %v1415
    %v1489 = vmul.f32 %v1100, %v1415
    %v1490 = vmul.f32 %v1101, %v1415
    %v1491 = vmul.f32 %v1102, %v1420
    %v1492 = vmul.f32 %v1103, %v1420
    %v1493 = vmul.f32 %v1104, %v1420
    %v1494 = vmul.f32 %v1105, %v1420
    %v1495 = vmul.f32 %v1106, %v1425
    %v1496 = vmul.f32 %v1107, %v1425
    %v1497 = vmul.f32 %v1108, %v1425
    %v1498 = vmul.f32 %v1109, %v1425
    %v1499 = vmul.f32 %v1110, %v1430
    %v1500 = vmul.f32 %v1111, %v1430
    %v1501 = vmul.f32 %v1112, %v1430
    %v1502 = vmul.f32 %v1113, %v1430
    %v1503 = vmul.f32 %v1114, %v1435
    %v1504 = vmul.f32 %v1115, %v1435
    %v1505 = vmul.f32 %v1116, %v1435
    %v1506 = vmul.f32 %v1117, %v1435
    %v1507 = vmul.f32 %v1118, %v1440
    %v1508 = vmul.f32 %v1119, %v1440
    %v1509 = vmul.f32 %v1120, %v1440
    %v1510 = vmul.f32 %v1121, %v1440
    %v1511 = vmul.f32 %v1122, %v1445
    %v1512 = vmul.f32 %v1123, %v1445
    %v1513 = vmul.f32 %v1124, %v1445
    %v1514 = vmul.f32 %v1125, %v1445
    %v1515 = vmul.f32 %v1126, %v1450
    %v1516 = vmul.f32 %v1127, %v1450
    %v1517 = vmul.f32 %v1128, %v1450
    %v1518 = vmul.f32 %v1129, %v1450
    %v1519 = vmul.f32 %v1130, %v1455
    %v1520 = vmul.f32 %v1131, %v1455
    %v1521 = vmul.f32 %v1132, %v1455
    %v1522 = vmul.f32 %v1133, %v1455
    %v1523 = vmul.f32 %v1134, %v1460
    %v1524 = vmul.f32 %v1135, %v1460
    %v1525 = vmul.f32 %v1136, %v1460
    %v1526 = vmul.f32 %v1137, %v1460
    %v1527 = vmul.f32 %v1138, %v1465
    %v1528 = vmul.f32 %v1139, %v1465
    %v1529 = vmul.f32 %v1140, %v1465
    %v1530 = vmul.f32 %v1141, %v1465
    %v1531 = vadd.f32 %v1467, %v1471
    %v1532 = vadd.f32 %v1531, %v1475
    %v1533 = vadd.f32 %v1532, %v1479
    %v1534 = vadd.f32 %v1533, %v1483
    %v1535 = vadd.f32 %v1534, %v1487
    %v1536 = vadd.f32 %v1535, %v1491
    %v1537 = vadd.f32 %v1536, %v1495
    %v1538 = vrot.slane %v1537, 4
    %v1539 = vadd.f32 %v1537, %v1538
    %v1540 = vrot.slane %v1539, 2
    %v1541 = vadd.f32 %v1539, %v1540
    %v1542 = vrot.slane %v1541, 1
    %v1543 = vadd.f32 %v1541, %v1542
    %v1544 = vadd.f32 %v1468, %v1472
    %v1545 = vadd.f32 %v1544, %v1476
    %v1546 = vadd.f32 %v1545, %v1480
    %v1547 = vadd.f32 %v1546, %v1484
    %v1548 = vadd.f32 %v1547, %v1488
    %v1549 = vadd.f32 %v1548, %v1492
    %v1550 = vadd.f32 %v1549, %v1496
    %v1551 = vrot.slane %v1550, 4
    %v1552 = vadd.f32 %v1550, %v1551
    %v1553 = vrot.slane %v1552, 2
    %v1554 = vadd.f32 %v1552, %v1553
    %v1555 = vrot.slane %v1554, 1
    %v1556 = vadd.f32 %v1554, %v1555
    %v1557 = vadd.f32 %v1469, %v1473
    %v1558 = vadd.f32 %v1557, %v1477
    %v1559 = vadd.f32 %v1558, %v1481
    %v1560 = vadd.f32 %v1559, %v1485
    %v1561 = vadd.f32 %v1560, %v1489
    %v1562 = vadd.f32 %v1561, %v1493
    %v1563 = vadd.f32 %v1562, %v1497
    %v1564 = vrot.slane %v1563, 4
    %v1565 = vadd.f32 %v1563, %v1564
    %v1566 = vrot.slane %v1565, 2
    %v1567 = vadd.f32 %v1565, %v1566
    %v1568 = vrot.slane %v1567, 1
    %v1569 = vadd.f32 %v1567, %v1568
    %v1570 = vadd.f32 %v1470, %v1474
    %v1571 = vadd.f32 %v1570, %v1478
    %v1572 = vadd.f32 %v1571, %v1482
    %v1573 = vadd.f32 %v1572, %v1486
    %v1574 = vadd.f32 %v1573, %v1490
    %v1575 = vadd.f32 %v1574, %v1494
    %v1576 = vadd.f32 %v1575, %v1498
    %v1577 = vrot.slane %v1576, 4
    %v1578 = vadd.f32 %v1576, %v1577
    %v1579 = vrot.slane %v1578, 2
    %v1580 = vadd.f32 %v1578, %v1579
    %v1581 = vrot.slane %v1580, 1
    %v1582 = vadd.f32 %v1580, %v1581
    %v1583 = vadd.f32 %v1499, %v1503
    %v1584 = vadd.f32 %v1583, %v1507
    %v1585 = vadd.f32 %v1584, %v1511
    %v1586 = vadd.f32 %v1585, %v1515
    %v1587 = vadd.f32 %v1586, %v1519
    %v1588 = vadd.f32 %v1587, %v1523
    %v1589 = vadd.f32 %v1588, %v1527
    %v1590 = vrot.slane %v1589, 4
    %v1591 = vadd.f32 %v1589, %v1590
    %v1592 = vrot.slane %v1591, 2
    %v1593 = vadd.f32 %v1591, %v1592
    %v1594 = vrot.slane %v1593, 1
    %v1595 = vadd.f32 %v1593, %v1594
    %v1596 = vadd.f32 %v1500, %v1504
    %v1597 = vadd.f32 %v1596, %v1508
    %v1598 = vadd.f32 %v1597, %v1512
    %v1599 = vadd.f32 %v1598, %v1516
    %v1600 = vadd.f32 %v1599, %v1520
    %v1601 = vadd.f32 %v1600, %v1524
    %v1602 = vadd.f32 %v1601, %v1528
    %v1603 = vrot.slane %v1602, 4
    %v1604 = vadd.f32 %v1602, %v1603
    %v1605 = vrot.slane %v1604, 2
    %v1606 = vadd.f32 %v1604, %v1605
    %v1607 = vrot.slane %v1606, 1
    %v1608 = vadd.f32 %v1606, %v1607
    %v1609 = vadd.f32 %v1501, %v1505
    %v1610 = vadd.f32 %v1609, %v1509
    %v1611 = vadd.f32 %v1610, %v1513
    %v1612 = vadd.f32 %v1611, %v1517
    %v1613 = vadd.f32 %v1612, %v1521
    %v1614 = vadd.f32 %v1613, %v1525
    %v1615 = vadd.f32 %v1614, %v1529
    %v1616 = vrot.slane %v1615, 4
    %v1617 = vadd.f32 %v1615, %v1616
    %v1618 = vrot.slane %v1617, 2
    %v1619 = vadd.f32 %v1617, %v1618
    %v1620 = vrot.slane %v1619, 1
    %v1621 = vadd.f32 %v1619, %v1620
    %v1622 = vadd.f32 %v1502, %v1506
    %v1623 = vadd.f32 %v1622, %v1510
    %v1624 = vadd.f32 %v1623, %v1514
    %v1625 = vadd.f32 %v1624, %v1518
    %v1626 = vadd.f32 %v1625, %v1522
    %v1627 = vadd.f32 %v1626, %v1526
    %v1628 = vadd.f32 %v1627, %v1530
    %v1629 = vrot.slane %v1628, 4
    %v1630 = vadd.f32 %v1628, %v1629
    %v1631 = vrot.slane %v1630, 2
    %v1632 = vadd.f32 %v1630, %v1631
    %v1633 = vrot.slane %v1632, 1
    %v1634 = vadd.f32 %v1632, %v1633
    %1636 = vset.pattern.permute.xlu0 0
    %1637 = vperm.xlu0 %1636, %v1384
    %v1638 = vpop.permute.xlu0 %1637
    %1641 = vset.pattern.permute.xlu0 0
    %1642 = vperm.xlu0 %1641, %v1386
    %v1643 = vpop.permute.xlu0 %1642
    %v1645 = vmul.f32 %v1543, %v1638
    %v1646 = vmul.f32 %v1556, %v1638
    %v1647 = vmul.f32 %v1569, %v1638
    %v1648 = vmul.f32 %v1582, %v1638
    %v1649 = vmul.f32 %v1595, %v1643
    %v1650 = vmul.f32 %v1608, %v1643
    %v1651 = vmul.f32 %v1621, %v1643
    %v1652 = vmul.f32 %v1634, %v1643
    %v1653 = vmul.f32 %v1467, %v1078
    %v1654 = vmul.f32 %v1468, %v1079
    %v1655 = vmul.f32 %v1469, %v1080
    %v1656 = vmul.f32 %v1470, %v1081
    %v1657 = vmul.f32 %v1471, %v1082
    %v1658 = vmul.f32 %v1472, %v1083
    %v1659 = vmul.f32 %v1473, %v1084
    %v1660 = vmul.f32 %v1474, %v1085
    %v1661 = vmul.f32 %v1475, %v1086
    %v1662 = vmul.f32 %v1476, %v1087
    %v1663 = vmul.f32 %v1477, %v1088
    %v1664 = vmul.f32 %v1478, %v1089
    %v1665 = vmul.f32 %v1479, %v1090
    %v1666 = vmul.f32 %v1480, %v1091
    %v1667 = vmul.f32 %v1481, %v1092
    %v1668 = vmul.f32 %v1482, %v1093
    %v1669 = vmul.f32 %v1483, %v1094
    %v1670 = vmul.f32 %v1484, %v1095
    %v1671 = vmul.f32 %v1485, %v1096
    %v1672 = vmul.f32 %v1486, %v1097
    %v1673 = vmul.f32 %v1487, %v1098
    %v1674 = vmul.f32 %v1488, %v1099
    %v1675 = vmul.f32 %v1489, %v1100
    %v1676 = vmul.f32 %v1490, %v1101
    %v1677 = vmul.f32 %v1491, %v1102
    %v1678 = vmul.f32 %v1492, %v1103
    %v1679 = vmul.f32 %v1493, %v1104
    %v1680 = vmul.f32 %v1494, %v1105
    %v1681 = vmul.f32 %v1495, %v1106
    %v1682 = vmul.f32 %v1496, %v1107
    %v1683 = vmul.f32 %v1497, %v1108
    %v1684 = vmul.f32 %v1498, %v1109
    %v1685 = vmul.f32 %v1499, %v1110
    %v1686 = vmul.f32 %v1500, %v1111
    %v1687 = vmul.f32 %v1501, %v1112
    %v1688 = vmul.f32 %v1502, %v1113
    %v1689 = vmul.f32 %v1503, %v1114
    %v1690 = vmul.f32 %v1504, %v1115
    %v1691 = vmul.f32 %v1505, %v1116
    %v1692 = vmul.f32 %v1506, %v1117
    %v1693 = vmul.f32 %v1507, %v1118
    %v1694 = vmul.f32 %v1508, %v1119
    %v1695 = vmul.f32 %v1509, %v1120
    %v1696 = vmul.f32 %v1510, %v1121
    %v1697 = vmul.f32 %v1511, %v1122
    %v1698 = vmul.f32 %v1512, %v1123
    %v1699 = vmul.f32 %v1513, %v1124
    %v1700 = vmul.f32 %v1514, %v1125
    %v1701 = vmul.f32 %v1515, %v1126
    %v1702 = vmul.f32 %v1516, %v1127
    %v1703 = vmul.f32 %v1517, %v1128
    %v1704 = vmul.f32 %v1518, %v1129
    %v1705 = vmul.f32 %v1519, %v1130
    %v1706 = vmul.f32 %v1520, %v1131
    %v1707 = vmul.f32 %v1521, %v1132
    %v1708 = vmul.f32 %v1522, %v1133
    %v1709 = vmul.f32 %v1523, %v1134
    %v1710 = vmul.f32 %v1524, %v1135
    %v1711 = vmul.f32 %v1525, %v1136
    %v1712 = vmul.f32 %v1526, %v1137
    %v1713 = vmul.f32 %v1527, %v1138
    %v1714 = vmul.f32 %v1528, %v1139
    %v1715 = vmul.f32 %v1529, %v1140
    %v1716 = vmul.f32 %v1530, %v1141
    %v1717 = vadd.f32 %v1653, %v1657
    %v1718 = vadd.f32 %v1717, %v1661
    %v1719 = vadd.f32 %v1718, %v1665
    %v1720 = vadd.f32 %v1719, %v1669
    %v1721 = vadd.f32 %v1720, %v1673
    %v1722 = vadd.f32 %v1721, %v1677
    %v1723 = vadd.f32 %v1722, %v1681
    %v1724 = vrot.slane %v1723, 4
    %v1725 = vadd.f32 %v1723, %v1724
    %v1726 = vrot.slane %v1725, 2
    %v1727 = vadd.f32 %v1725, %v1726
    %v1728 = vrot.slane %v1727, 1
    %v1729 = vadd.f32 %v1727, %v1728
    %v1730 = vadd.f32 %v1654, %v1658
    %v1731 = vadd.f32 %v1730, %v1662
    %v1732 = vadd.f32 %v1731, %v1666
    %v1733 = vadd.f32 %v1732, %v1670
    %v1734 = vadd.f32 %v1733, %v1674
    %v1735 = vadd.f32 %v1734, %v1678
    %v1736 = vadd.f32 %v1735, %v1682
    %v1737 = vrot.slane %v1736, 4
    %v1738 = vadd.f32 %v1736, %v1737
    %v1739 = vrot.slane %v1738, 2
    %v1740 = vadd.f32 %v1738, %v1739
    %v1741 = vrot.slane %v1740, 1
    %v1742 = vadd.f32 %v1740, %v1741
    %v1743 = vadd.f32 %v1655, %v1659
    %v1744 = vadd.f32 %v1743, %v1663
    %v1745 = vadd.f32 %v1744, %v1667
    %v1746 = vadd.f32 %v1745, %v1671
    %v1747 = vadd.f32 %v1746, %v1675
    %v1748 = vadd.f32 %v1747, %v1679
    %v1749 = vadd.f32 %v1748, %v1683
    %v1750 = vrot.slane %v1749, 4
    %v1751 = vadd.f32 %v1749, %v1750
    %v1752 = vrot.slane %v1751, 2
    %v1753 = vadd.f32 %v1751, %v1752
    %v1754 = vrot.slane %v1753, 1
    %v1755 = vadd.f32 %v1753, %v1754
    %v1756 = vadd.f32 %v1656, %v1660
    %v1757 = vadd.f32 %v1756, %v1664
    %v1758 = vadd.f32 %v1757, %v1668
    %v1759 = vadd.f32 %v1758, %v1672
    %v1760 = vadd.f32 %v1759, %v1676
    %v1761 = vadd.f32 %v1760, %v1680
    %v1762 = vadd.f32 %v1761, %v1684
    %v1763 = vrot.slane %v1762, 4
    %v1764 = vadd.f32 %v1762, %v1763
    %v1765 = vrot.slane %v1764, 2
    %v1766 = vadd.f32 %v1764, %v1765
    %v1767 = vrot.slane %v1766, 1
    %v1768 = vadd.f32 %v1766, %v1767
    %v1769 = vadd.f32 %v1685, %v1689
    %v1770 = vadd.f32 %v1769, %v1693
    %v1771 = vadd.f32 %v1770, %v1697
    %v1772 = vadd.f32 %v1771, %v1701
    %v1773 = vadd.f32 %v1772, %v1705
    %v1774 = vadd.f32 %v1773, %v1709
    %v1775 = vadd.f32 %v1774, %v1713
    %v1776 = vrot.slane %v1775, 4
    %v1777 = vadd.f32 %v1775, %v1776
    %v1778 = vrot.slane %v1777, 2
    %v1779 = vadd.f32 %v1777, %v1778
    %v1780 = vrot.slane %v1779, 1
    %v1781 = vadd.f32 %v1779, %v1780
    %v1782 = vadd.f32 %v1686, %v1690
    %v1783 = vadd.f32 %v1782, %v1694
    %v1784 = vadd.f32 %v1783, %v1698
    %v1785 = vadd.f32 %v1784, %v1702
    %v1786 = vadd.f32 %v1785, %v1706
    %v1787 = vadd.f32 %v1786, %v1710
    %v1788 = vadd.f32 %v1787, %v1714
    %v1789 = vrot.slane %v1788, 4
    %v1790 = vadd.f32 %v1788, %v1789
    %v1791 = vrot.slane %v1790, 2
    %v1792 = vadd.f32 %v1790, %v1791
    %v1793 = vrot.slane %v1792, 1
    %v1794 = vadd.f32 %v1792, %v1793
    %v1795 = vadd.f32 %v1687, %v1691
    %v1796 = vadd.f32 %v1795, %v1695
    %v1797 = vadd.f32 %v1796, %v1699
    %v1798 = vadd.f32 %v1797, %v1703
    %v1799 = vadd.f32 %v1798, %v1707
    %v1800 = vadd.f32 %v1799, %v1711
    %v1801 = vadd.f32 %v1800, %v1715
    %v1802 = vrot.slane %v1801, 4
    %v1803 = vadd.f32 %v1801, %v1802
    %v1804 = vrot.slane %v1803, 2
    %v1805 = vadd.f32 %v1803, %v1804
    %v1806 = vrot.slane %v1805, 1
    %v1807 = vadd.f32 %v1805, %v1806
    %v1808 = vadd.f32 %v1688, %v1692
    %v1809 = vadd.f32 %v1808, %v1696
    %v1810 = vadd.f32 %v1809, %v1700
    %v1811 = vadd.f32 %v1810, %v1704
    %v1812 = vadd.f32 %v1811, %v1708
    %v1813 = vadd.f32 %v1812, %v1712
    %v1814 = vadd.f32 %v1813, %v1716
    %v1815 = vrot.slane %v1814, 4
    %v1816 = vadd.f32 %v1814, %v1815
    %v1817 = vrot.slane %v1816, 2
    %v1818 = vadd.f32 %v1816, %v1817
    %v1819 = vrot.slane %v1818, 1
    %v1820 = vadd.f32 %v1818, %v1819
    %v1821 = vmul.f32 %v1729, %v1638
    %v1822 = vmul.f32 %v1742, %v1638
    %v1823 = vmul.f32 %v1755, %v1638
    %v1824 = vmul.f32 %v1768, %v1638
    %v1825 = vmul.f32 %v1781, %v1643
    %v1826 = vmul.f32 %v1794, %v1643
    %v1827 = vmul.f32 %v1807, %v1643
    %v1828 = vmul.f32 %v1820, %v1643
    %v1829 = vmul.f32 %v1645, %v1645
    %v1830 = vmul.f32 %v1646, %v1646
    %v1831 = vmul.f32 %v1647, %v1647
    %v1832 = vmul.f32 %v1648, %v1648
    %v1833 = vmul.f32 %v1649, %v1649
    %v1834 = vmul.f32 %v1650, %v1650
    %v1835 = vmul.f32 %v1651, %v1651
    %v1836 = vmul.f32 %v1652, %v1652
    %v1837 = vsub.f32 %v1821, %v1829
    %v1838 = vsub.f32 %v1822, %v1830
    %v1839 = vsub.f32 %v1823, %v1831
    %v1840 = vsub.f32 %v1824, %v1832
    %v1841 = vsub.f32 %v1825, %v1833
    %v1842 = vsub.f32 %v1826, %v1834
    %v1843 = vsub.f32 %v1827, %v1835
    %v1844 = vsub.f32 %v1828, %v1836
    %v1845 = vmax.f32 %v1837, 0.0
    %v1846 = vmax.f32 %v1838, 0.0
    %v1847 = vmax.f32 %v1839, 0.0
    %v1848 = vmax.f32 %v1840, 0.0
    %v1849 = vmax.f32 %v1841, 0.0
    %v1850 = vmax.f32 %v1842, 0.0
    %v1851 = vmax.f32 %v1843, 0.0
    %v1852 = vmax.f32 %v1844, 0.0
    %v1853 = vld [vmem:[%s4] sm:$0xf]
    %v1854 = vadd.f32 %v1845, 1e-05
    %v1855 = vadd.f32 %v1846, 1e-05
    %v1856 = vadd.f32 %v1847, 1e-05
    %v1857 = vadd.f32 %v1848, 1e-05
    %v1858 = vadd.f32 %v1849, 1e-05
    %v1859 = vadd.f32 %v1850, 1e-05
    %v1860 = vadd.f32 %v1851, 1e-05
    %v1861 = vadd.f32 %v1852, 1e-05
    %v1862 = vrsqrt.pop %v1854
    %v1863 = vrsqrt.pop %v1855
    %v1864 = vrsqrt.pop %v1856
    %v1865 = vrsqrt.pop %v1857
    %v1866 = vrsqrt.pop %v1858
    %v1867 = vrsqrt.pop %v1859
    %v1868 = vrsqrt.pop %v1860
    %v1869 = vrsqrt.pop %v1861
    %v1878 = vcombine.low %v1862, %v1863
    %v1879 = vcombine.low %v1864, %v1865
    %v1881 = vunpack.c.l.s4 1966171168
    %v1882 = vunpack.c.0.s8 %v1881
    %v1883 = vlaneseq
    %v1884 = vshrl.u32 %v1883, 7
    %v1885 = vsub.s32 %v1882, %v1884
    %v1886 = vrot.slane %v1878, %v1885
    %v1888 = vunpack.c.l.s4 1966171168
    %v1889 = vunpack.c.0.s8 %v1888
    %v1890 = vlaneseq
    %v1891 = vshrl.u32 %v1890, 7
    %v1892 = vsub.s32 %v1889, %v1891
    %v1893 = vrot.slane %v1879, %v1892
    %v1894 = vcombine.low %v1886, %v1893
    %v1896 = vunpack.c.l.s4 1966171168
    %v1897 = vunpack.c.0.s8 %v1896
    %v1898 = vlaneseq
    %v1899 = vshrl.u32 %v1898, 7
    %v1900 = vsub.s32 %v1897, %v1899
    %v1901 = vrot.slane %v1894, %v1900
    %v1902 = vcombine.low %v1866, %v1867
    %v1903 = vcombine.low %v1868, %v1869
    %v1905 = vunpack.c.l.s4 1966171168
    %v1906 = vunpack.c.0.s8 %v1905
    %v1907 = vlaneseq
    %v1908 = vshrl.u32 %v1907, 7
    %v1909 = vsub.s32 %v1906, %v1908
    %v1910 = vrot.slane %v1902, %v1909
    %v1912 = vunpack.c.l.s4 1966171168
    %v1913 = vunpack.c.0.s8 %v1912
    %v1914 = vlaneseq
    %v1915 = vshrl.u32 %v1914, 7
    %v1916 = vsub.s32 %v1913, %v1915
    %v1917 = vrot.slane %v1903, %v1916
    %v1918 = vcombine.low %v1910, %v1917
    %v1920 = vunpack.c.l.s4 1966171168
    %v1921 = vunpack.c.0.s8 %v1920
    %v1922 = vlaneseq
    %v1923 = vshrl.u32 %v1922, 7
    %v1924 = vsub.s32 %v1921, %v1923
    %v1925 = vrot.slane %v1918, %v1924
    %v1928 = vmul.f32 %v1853, %v1901
    %v1929 = vmul.f32 %v1853, %v1925
    %v1930 = vld [vmem:[%s5] sm:$0xf]
    %v1933 = vlaneseq
    %v1934 = vshrl.u32 %v1933, 7
    %v1935 = vsub.s32 0, %v1934
    %v1936 = vrot.slane %v1928, %v1935
    %v1937 = vlaneseq
    %v1938 = vshrl.u32 %v1937, 7
    %v1939 = vsub.s32 1, %v1938
    %v1940 = vrot.slane %v1928, %v1939
    %v1941 = vlaneseq
    %v1942 = vshrl.u32 %v1941, 7
    %v1943 = vsub.s32 2, %v1942
    %v1944 = vrot.slane %v1928, %v1943
    %v1945 = vlaneseq
    %v1946 = vshrl.u32 %v1945, 7
    %v1947 = vsub.s32 3, %v1946
    %v1948 = vrot.slane %v1928, %v1947
    %v1949 = vlaneseq
    %v1950 = vshrl.u32 %v1949, 7
    %v1951 = vsub.s32 0, %v1950
    %v1952 = vrot.slane %v1929, %v1951
    %v1953 = vlaneseq
    %v1954 = vshrl.u32 %v1953, 7
    %v1955 = vsub.s32 1, %v1954
    %v1956 = vrot.slane %v1929, %v1955
    %v1957 = vlaneseq
    %v1958 = vshrl.u32 %v1957, 7
    %v1959 = vsub.s32 2, %v1958
    %v1960 = vrot.slane %v1929, %v1959
    %v1961 = vlaneseq
    %v1962 = vshrl.u32 %v1961, 7
    %v1963 = vsub.s32 3, %v1962
    %v1964 = vrot.slane %v1929, %v1963
    %v1973 = vmul.f32 %v1645, %v1936
    %v1974 = vmul.f32 %v1646, %v1940
    %v1975 = vmul.f32 %v1647, %v1944
    %v1976 = vmul.f32 %v1648, %v1948
    %v1977 = vmul.f32 %v1649, %v1952
    %v1978 = vmul.f32 %v1650, %v1956
    %v1979 = vmul.f32 %v1651, %v1960
    %v1980 = vmul.f32 %v1652, %v1964
    %v1989 = vcombine.low %v1973, %v1974
    %v1990 = vcombine.low %v1975, %v1976
    %v1992 = vunpack.c.l.s4 1966171168
    %v1993 = vunpack.c.0.s8 %v1992
    %v1994 = vlaneseq
    %v1995 = vshrl.u32 %v1994, 7
    %v1996 = vsub.s32 %v1993, %v1995
    %v1997 = vrot.slane %v1989, %v1996
    %v1999 = vunpack.c.l.s4 1966171168
    %v2000 = vunpack.c.0.s8 %v1999
    %v2001 = vlaneseq
    %v2002 = vshrl.u32 %v2001, 7
    %v2003 = vsub.s32 %v2000, %v2002
    %v2004 = vrot.slane %v1990, %v2003
    %v2005 = vcombine.low %v1997, %v2004
    %v2007 = vunpack.c.l.s4 1966171168
    %v2008 = vunpack.c.0.s8 %v2007
    %v2009 = vlaneseq
    %v2010 = vshrl.u32 %v2009, 7
    %v2011 = vsub.s32 %v2008, %v2010
    %v2012 = vrot.slane %v2005, %v2011
    %v2013 = vcombine.low %v1977, %v1978
    %v2014 = vcombine.low %v1979, %v1980
    %v2016 = vunpack.c.l.s4 1966171168
    %v2017 = vunpack.c.0.s8 %v2016
    %v2018 = vlaneseq
    %v2019 = vshrl.u32 %v2018, 7
    %v2020 = vsub.s32 %v2017, %v2019
    %v2021 = vrot.slane %v2013, %v2020
    %v2023 = vunpack.c.l.s4 1966171168
    %v2024 = vunpack.c.0.s8 %v2023
    %v2025 = vlaneseq
    %v2026 = vshrl.u32 %v2025, 7
    %v2027 = vsub.s32 %v2024, %v2026
    %v2028 = vrot.slane %v2014, %v2027
    %v2029 = vcombine.low %v2021, %v2028
    %v2031 = vunpack.c.l.s4 1966171168
    %v2032 = vunpack.c.0.s8 %v2031
    %v2033 = vlaneseq
    %v2034 = vshrl.u32 %v2033, 7
    %v2035 = vsub.s32 %v2032, %v2034
    %v2036 = vrot.slane %v2029, %v2035
    %v2039 = vsub.f32 %v1930, %v2012
    %v2040 = vsub.f32 %v1930, %v2036
    %v2041 = vmul.f32 %v1078, %v1936
    %v2042 = vmul.f32 %v1079, %v1940
    %v2043 = vmul.f32 %v1080, %v1944
    %v2044 = vmul.f32 %v1081, %v1948
    %v2045 = vmul.f32 %v1082, %v1936
    %v2046 = vmul.f32 %v1083, %v1940
    %v2047 = vmul.f32 %v1084, %v1944
    %v2048 = vmul.f32 %v1085, %v1948
    %v2049 = vmul.f32 %v1086, %v1936
    %v2050 = vmul.f32 %v1087, %v1940
    %v2051 = vmul.f32 %v1088, %v1944
    %v2052 = vmul.f32 %v1089, %v1948
    %v2053 = vmul.f32 %v1090, %v1936
    %v2054 = vmul.f32 %v1091, %v1940
    %v2055 = vmul.f32 %v1092, %v1944
    %v2056 = vmul.f32 %v1093, %v1948
    %v2057 = vmul.f32 %v1094, %v1936
    %v2058 = vmul.f32 %v1095, %v1940
    %v2059 = vmul.f32 %v1096, %v1944
    %v2060 = vmul.f32 %v1097, %v1948
    %v2061 = vmul.f32 %v1098, %v1936
    %v2062 = vmul.f32 %v1099, %v1940
    %v2063 = vmul.f32 %v1100, %v1944
    %v2064 = vmul.f32 %v1101, %v1948
    %v2065 = vmul.f32 %v1102, %v1936
    %v2066 = vmul.f32 %v1103, %v1940
    %v2067 = vmul.f32 %v1104, %v1944
    %v2068 = vmul.f32 %v1105, %v1948
    %v2069 = vmul.f32 %v1106, %v1936
    %v2070 = vmul.f32 %v1107, %v1940
    %v2071 = vmul.f32 %v1108, %v1944
    %v2072 = vmul.f32 %v1109, %v1948
    %v2073 = vmul.f32 %v1110, %v1952
    %v2074 = vmul.f32 %v1111, %v1956
    %v2075 = vmul.f32 %v1112, %v1960
    %v2076 = vmul.f32 %v1113, %v1964
    %v2077 = vmul.f32 %v1114, %v1952
    %v2078 = vmul.f32 %v1115, %v1956
    %v2079 = vmul.f32 %v1116, %v1960
    %v2080 = vmul.f32 %v1117, %v1964
    %v2081 = vmul.f32 %v1118, %v1952
    %v2082 = vmul.f32 %v1119, %v1956
    %v2083 = vmul.f32 %v1120, %v1960
    %v2084 = vmul.f32 %v1121, %v1964
    %v2085 = vmul.f32 %v1122, %v1952
    %v2086 = vmul.f32 %v1123, %v1956
    %v2087 = vmul.f32 %v1124, %v1960
    %v2088 = vmul.f32 %v1125, %v1964
    %v2089 = vmul.f32 %v1126, %v1952
    %v2090 = vmul.f32 %v1127, %v1956
    %v2091 = vmul.f32 %v1128, %v1960
    %v2092 = vmul.f32 %v1129, %v1964
    %v2093 = vmul.f32 %v1130, %v1952
    %v2094 = vmul.f32 %v1131, %v1956
    %v2095 = vmul.f32 %v1132, %v1960
    %v2096 = vmul.f32 %v1133, %v1964
    %v2097 = vmul.f32 %v1134, %v1952
    %v2098 = vmul.f32 %v1135, %v1956
    %v2099 = vmul.f32 %v1136, %v1960
    %v2100 = vmul.f32 %v1137, %v1964
    %v2101 = vmul.f32 %v1138, %v1952
    %v2102 = vmul.f32 %v1139, %v1956
    %v2103 = vmul.f32 %v1140, %v1960
    %v2104 = vmul.f32 %v1141, %v1964
    %v2107 = vlaneseq
    %v2108 = vshrl.u32 %v2107, 7
    %v2109 = vsub.s32 0, %v2108
    %v2110 = vrot.slane %v2039, %v2109
    %v2111 = vlaneseq
    %v2112 = vshrl.u32 %v2111, 7
    %v2113 = vsub.s32 1, %v2112
    %v2114 = vrot.slane %v2039, %v2113
    %v2115 = vlaneseq
    %v2116 = vshrl.u32 %v2115, 7
    %v2117 = vsub.s32 2, %v2116
    %v2118 = vrot.slane %v2039, %v2117
    %v2119 = vlaneseq
    %v2120 = vshrl.u32 %v2119, 7
    %v2121 = vsub.s32 3, %v2120
    %v2122 = vrot.slane %v2039, %v2121
    %v2123 = vlaneseq
    %v2124 = vshrl.u32 %v2123, 7
    %v2125 = vsub.s32 0, %v2124
    %v2126 = vrot.slane %v2040, %v2125
    %v2127 = vlaneseq
    %v2128 = vshrl.u32 %v2127, 7
    %v2129 = vsub.s32 1, %v2128
    %v2130 = vrot.slane %v2040, %v2129
    %v2131 = vlaneseq
    %v2132 = vshrl.u32 %v2131, 7
    %v2133 = vsub.s32 2, %v2132
    %v2134 = vrot.slane %v2040, %v2133
    %v2135 = vlaneseq
    %v2136 = vshrl.u32 %v2135, 7
    %v2137 = vsub.s32 3, %v2136
    %v2138 = vrot.slane %v2040, %v2137
    %v2147 = vadd.f32 %v2041, %v2110
    %v2148 = vadd.f32 %v2042, %v2114
    %v2149 = vadd.f32 %v2043, %v2118
    %v2150 = vadd.f32 %v2044, %v2122
    %v2151 = vadd.f32 %v2045, %v2110
    %v2152 = vadd.f32 %v2046, %v2114
    %v2153 = vadd.f32 %v2047, %v2118
    %v2154 = vadd.f32 %v2048, %v2122
    %v2155 = vadd.f32 %v2049, %v2110
    %v2156 = vadd.f32 %v2050, %v2114
    %v2157 = vadd.f32 %v2051, %v2118
    %v2158 = vadd.f32 %v2052, %v2122
    %v2159 = vadd.f32 %v2053, %v2110
    %v2160 = vadd.f32 %v2054, %v2114
    %v2161 = vadd.f32 %v2055, %v2118
    %v2162 = vadd.f32 %v2056, %v2122
    %v2163 = vadd.f32 %v2057, %v2110
    %v2164 = vadd.f32 %v2058, %v2114
    %v2165 = vadd.f32 %v2059, %v2118
    %v2166 = vadd.f32 %v2060, %v2122
    %v2167 = vadd.f32 %v2061, %v2110
    %v2168 = vadd.f32 %v2062, %v2114
    %v2169 = vadd.f32 %v2063, %v2118
    %v2170 = vadd.f32 %v2064, %v2122
    %v2171 = vadd.f32 %v2065, %v2110
    %v2172 = vadd.f32 %v2066, %v2114
    %v2173 = vadd.f32 %v2067, %v2118
    %v2174 = vadd.f32 %v2068, %v2122
    %v2175 = vadd.f32 %v2069, %v2110
    %v2176 = vadd.f32 %v2070, %v2114
    %v2177 = vadd.f32 %v2071, %v2118
    %v2178 = vadd.f32 %v2072, %v2122
    %v2179 = vadd.f32 %v2073, %v2126
    %v2180 = vadd.f32 %v2074, %v2130
    %v2181 = vadd.f32 %v2075, %v2134
    %v2182 = vadd.f32 %v2076, %v2138
    %v2183 = vadd.f32 %v2077, %v2126
    %v2184 = vadd.f32 %v2078, %v2130
    %v2185 = vadd.f32 %v2079, %v2134
    %v2186 = vadd.f32 %v2080, %v2138
    %v2187 = vadd.f32 %v2081, %v2126
    %v2188 = vadd.f32 %v2082, %v2130
    %v2189 = vadd.f32 %v2083, %v2134
    %v2190 = vadd.f32 %v2084, %v2138
    %v2191 = vadd.f32 %v2085, %v2126
    %v2192 = vadd.f32 %v2086, %v2130
    %v2193 = vadd.f32 %v2087, %v2134
    %v2194 = vadd.f32 %v2088, %v2138
    %v2195 = vadd.f32 %v2089, %v2126
    %v2196 = vadd.f32 %v2090, %v2130
    %v2197 = vadd.f32 %v2091, %v2134
    %v2198 = vadd.f32 %v2092, %v2138
    %v2199 = vadd.f32 %v2093, %v2126
    %v2200 = vadd.f32 %v2094, %v2130
    %v2201 = vadd.f32 %v2095, %v2134
    %v2202 = vadd.f32 %v2096, %v2138
    %v2203 = vadd.f32 %v2097, %v2126
    %v2204 = vadd.f32 %v2098, %v2130
    %v2205 = vadd.f32 %v2099, %v2134
    %v2206 = vadd.f32 %v2100, %v2138
    %v2207 = vadd.f32 %v2101, %v2126
    %v2208 = vadd.f32 %v2102, %v2130
    %v2209 = vadd.f32 %v2103, %v2134
    %v2210 = vadd.f32 %v2104, %v2138
    %v2211 = vmax.f32 %v2147, 0.0
    %v2212 = vmax.f32 %v2148, 0.0
    %v2213 = vmax.f32 %v2149, 0.0
    %v2214 = vmax.f32 %v2150, 0.0
    %v2215 = vmax.f32 %v2151, 0.0
    %v2216 = vmax.f32 %v2152, 0.0
    %v2217 = vmax.f32 %v2153, 0.0
    %v2218 = vmax.f32 %v2154, 0.0
    %v2219 = vmax.f32 %v2155, 0.0
    %v2220 = vmax.f32 %v2156, 0.0
    %v2221 = vmax.f32 %v2157, 0.0
    %v2222 = vmax.f32 %v2158, 0.0
    %v2223 = vmax.f32 %v2159, 0.0
    %v2224 = vmax.f32 %v2160, 0.0
    %v2225 = vmax.f32 %v2161, 0.0
    %v2226 = vmax.f32 %v2162, 0.0
    %v2227 = vmax.f32 %v2163, 0.0
    %v2228 = vmax.f32 %v2164, 0.0
    %v2229 = vmax.f32 %v2165, 0.0
    %v2230 = vmax.f32 %v2166, 0.0
    %v2231 = vmax.f32 %v2167, 0.0
    %v2232 = vmax.f32 %v2168, 0.0
    %v2233 = vmax.f32 %v2169, 0.0
    %v2234 = vmax.f32 %v2170, 0.0
    %v2235 = vmax.f32 %v2171, 0.0
    %v2236 = vmax.f32 %v2172, 0.0
    %v2237 = vmax.f32 %v2173, 0.0
    %v2238 = vmax.f32 %v2174, 0.0
    %v2239 = vmax.f32 %v2175, 0.0
    %v2240 = vmax.f32 %v2176, 0.0
    %v2241 = vmax.f32 %v2177, 0.0
    %v2242 = vmax.f32 %v2178, 0.0
    %v2243 = vmax.f32 %v2179, 0.0
    %v2244 = vmax.f32 %v2180, 0.0
    %v2245 = vmax.f32 %v2181, 0.0
    %v2246 = vmax.f32 %v2182, 0.0
    %v2247 = vmax.f32 %v2183, 0.0
    %v2248 = vmax.f32 %v2184, 0.0
    %v2249 = vmax.f32 %v2185, 0.0
    %v2250 = vmax.f32 %v2186, 0.0
    %v2251 = vmax.f32 %v2187, 0.0
    %v2252 = vmax.f32 %v2188, 0.0
    %v2253 = vmax.f32 %v2189, 0.0
    %v2254 = vmax.f32 %v2190, 0.0
    %v2255 = vmax.f32 %v2191, 0.0
    %v2256 = vmax.f32 %v2192, 0.0
    %v2257 = vmax.f32 %v2193, 0.0
    %v2258 = vmax.f32 %v2194, 0.0
    %v2259 = vmax.f32 %v2195, 0.0
    %v2260 = vmax.f32 %v2196, 0.0
    %v2261 = vmax.f32 %v2197, 0.0
    %v2262 = vmax.f32 %v2198, 0.0
    %v2263 = vmax.f32 %v2199, 0.0
    %v2264 = vmax.f32 %v2200, 0.0
    %v2265 = vmax.f32 %v2201, 0.0
    %v2266 = vmax.f32 %v2202, 0.0
    %v2267 = vmax.f32 %v2203, 0.0
    %v2268 = vmax.f32 %v2204, 0.0
    %v2269 = vmax.f32 %v2205, 0.0
    %v2270 = vmax.f32 %v2206, 0.0
    %v2271 = vmax.f32 %v2207, 0.0
    %v2272 = vmax.f32 %v2208, 0.0
    %v2273 = vmax.f32 %v2209, 0.0
    %v2274 = vmax.f32 %v2210, 0.0
    %v2275 = vpack.c.bf16 %v2215, %v2211
    %v2276 = vpack.c.bf16 %v2216, %v2212
    %v2277 = vpack.c.bf16 %v2217, %v2213
    %v2278 = vpack.c.bf16 %v2218, %v2214
    %v2279 = vpack.c.bf16 %v2223, %v2219
    %v2280 = vpack.c.bf16 %v2224, %v2220
    %v2281 = vpack.c.bf16 %v2225, %v2221
    %v2282 = vpack.c.bf16 %v2226, %v2222
    %v2283 = vpack.c.bf16 %v2231, %v2227
    %v2284 = vpack.c.bf16 %v2232, %v2228
    %v2285 = vpack.c.bf16 %v2233, %v2229
    %v2286 = vpack.c.bf16 %v2234, %v2230
    %v2287 = vpack.c.bf16 %v2239, %v2235
    %v2288 = vpack.c.bf16 %v2240, %v2236
    %v2289 = vpack.c.bf16 %v2241, %v2237
    %v2290 = vpack.c.bf16 %v2242, %v2238
    %v2291 = vpack.c.bf16 %v2247, %v2243
    %v2292 = vpack.c.bf16 %v2248, %v2244
    %v2293 = vpack.c.bf16 %v2249, %v2245
    %v2294 = vpack.c.bf16 %v2250, %v2246
    %v2295 = vpack.c.bf16 %v2255, %v2251
    %v2296 = vpack.c.bf16 %v2256, %v2252
    %v2297 = vpack.c.bf16 %v2257, %v2253
    %v2298 = vpack.c.bf16 %v2258, %v2254
    %v2299 = vpack.c.bf16 %v2263, %v2259
    %v2300 = vpack.c.bf16 %v2264, %v2260
    %v2301 = vpack.c.bf16 %v2265, %v2261
    %v2302 = vpack.c.bf16 %v2266, %v2262
    %v2303 = vpack.c.bf16 %v2271, %v2267
    %v2304 = vpack.c.bf16 %v2272, %v2268
    %v2305 = vpack.c.bf16 %v2273, %v2269
    %v2306 = vpack.c.bf16 %v2274, %v2270
    %v2307 = vld [vmem:[#allocation5] sm:$0xff]
    %v2308 = vld [vmem:[#allocation5 + $0x8] sm:$0xff]
    %v2309 = vld [vmem:[#allocation5 + $0x10] sm:$0xff]
    %v2310 = vld [vmem:[#allocation5 + $0x18] sm:$0xff]
    %v2311 = vld [vmem:[#allocation5 + $0x20] sm:$0xff]
    %v2312 = vld [vmem:[#allocation5 + $0x28] sm:$0xff]
    %v2313 = vld [vmem:[#allocation5 + $0x30] sm:$0xff]
    %v2314 = vld [vmem:[#allocation5 + $0x38] sm:$0xff]
    %v2315 = vld [vmem:[#allocation5 + $0x40] sm:$0xff]
    %v2316 = vld [vmem:[#allocation5 + $0x48] sm:$0xff]
    %v2317 = vld [vmem:[#allocation5 + $0x50] sm:$0xff]
    %v2318 = vld [vmem:[#allocation5 + $0x58] sm:$0xff]
    %v2319 = vld [vmem:[#allocation5 + $0x60] sm:$0xff]
    %v2320 = vld [vmem:[#allocation5 + $0x68] sm:$0xff]
    %v2321 = vld [vmem:[#allocation5 + $0x70] sm:$0xff]
    %v2322 = vld [vmem:[#allocation5 + $0x78] sm:$0xff]
    %v2323 = vld [vmem:[#allocation5 + $0x80] sm:$0xff]
    %v2324 = vld [vmem:[#allocation5 + $0x88] sm:$0xff]
    %v2325 = vld [vmem:[#allocation5 + $0x90] sm:$0xff]
    %v2326 = vld [vmem:[#allocation5 + $0x98] sm:$0xff]
    %v2327 = vld [vmem:[#allocation5 + $0xa0] sm:$0xff]
    %v2328 = vld [vmem:[#allocation5 + $0xa8] sm:$0xff]
    %v2329 = vld [vmem:[#allocation5 + $0xb0] sm:$0xff]
    %v2330 = vld [vmem:[#allocation5 + $0xb8] sm:$0xff]
    %v2331 = vld [vmem:[#allocation5 + $0xc0] sm:$0xff]
    %v2332 = vld [vmem:[#allocation5 + $0xc8] sm:$0xff]
    %v2333 = vld [vmem:[#allocation5 + $0xd0] sm:$0xff]
    %v2334 = vld [vmem:[#allocation5 + $0xd8] sm:$0xff]
    %v2335 = vld [vmem:[#allocation5 + $0xe0] sm:$0xff]
    %v2336 = vld [vmem:[#allocation5 + $0xe8] sm:$0xff]
    %v2337 = vld [vmem:[#allocation5 + $0xf0] sm:$0xff]
    %v2338 = vld [vmem:[#allocation5 + $0xf8] sm:$0xff]
    %v2339 = vld [vmem:[#allocation5 + $0x100] sm:$0xff]
    %v2340 = vld [vmem:[#allocation5 + $0x108] sm:$0xff]
    %v2341 = vld [vmem:[#allocation5 + $0x110] sm:$0xff]
    %v2342 = vld [vmem:[#allocation5 + $0x118] sm:$0xff]
    %v2343 = vld [vmem:[#allocation5 + $0x120] sm:$0xff]
    %v2344 = vld [vmem:[#allocation5 + $0x128] sm:$0xff]
    %v2345 = vld [vmem:[#allocation5 + $0x130] sm:$0xff]
    %v2346 = vld [vmem:[#allocation5 + $0x138] sm:$0xff]
    %v2347 = vld [vmem:[#allocation5 + $0x140] sm:$0xff]
    %v2348 = vld [vmem:[#allocation5 + $0x148] sm:$0xff]
    %v2349 = vld [vmem:[#allocation5 + $0x150] sm:$0xff]
    %v2350 = vld [vmem:[#allocation5 + $0x158] sm:$0xff]
    %v2351 = vld [vmem:[#allocation5 + $0x160] sm:$0xff]
    %v2352 = vld [vmem:[#allocation5 + $0x168] sm:$0xff]
    %v2353 = vld [vmem:[#allocation5 + $0x170] sm:$0xff]
    %v2354 = vld [vmem:[#allocation5 + $0x178] sm:$0xff]
    %v2355 = vld [vmem:[#allocation5 + $0x180] sm:$0xff]
    %v2356 = vld [vmem:[#allocation5 + $0x188] sm:$0xff]
    %v2357 = vld [vmem:[#allocation5 + $0x190] sm:$0xff]
    %v2358 = vld [vmem:[#allocation5 + $0x198] sm:$0xff]
    %v2359 = vld [vmem:[#allocation5 + $0x1a0] sm:$0xff]
    %v2360 = vld [vmem:[#allocation5 + $0x1a8] sm:$0xff]
    %v2361 = vld [vmem:[#allocation5 + $0x1b0] sm:$0xff]
    %v2362 = vld [vmem:[#allocation5 + $0x1b8] sm:$0xff]
    %v2363 = vld [vmem:[#allocation5 + $0x1c0] sm:$0xff]
    %v2364 = vld [vmem:[#allocation5 + $0x1c8] sm:$0xff]
    %v2365 = vld [vmem:[#allocation5 + $0x1d0] sm:$0xff]
    %v2366 = vld [vmem:[#allocation5 + $0x1d8] sm:$0xff]
    %v2367 = vld [vmem:[#allocation5 + $0x1e0] sm:$0xff]
    %v2368 = vld [vmem:[#allocation5 + $0x1e8] sm:$0xff]
    %v2369 = vld [vmem:[#allocation5 + $0x1f0] sm:$0xff]
    %v2370 = vld [vmem:[#allocation5 + $0x1f8] sm:$0xff]
    %v2371 = vld [vmem:[#allocation5 + $0x200] sm:$0xff]
    %v2372 = vld [vmem:[#allocation5 + $0x208] sm:$0xff]
    %v2373 = vld [vmem:[#allocation5 + $0x210] sm:$0xff]
    %v2374 = vld [vmem:[#allocation5 + $0x218] sm:$0xff]
    %v2375 = vld [vmem:[#allocation5 + $0x220] sm:$0xff]
    %v2376 = vld [vmem:[#allocation5 + $0x228] sm:$0xff]
    %v2377 = vld [vmem:[#allocation5 + $0x230] sm:$0xff]
    %v2378 = vld [vmem:[#allocation5 + $0x238] sm:$0xff]
    %v2379 = vld [vmem:[#allocation5 + $0x240] sm:$0xff]
    %v2380 = vld [vmem:[#allocation5 + $0x248] sm:$0xff]
    %v2381 = vld [vmem:[#allocation5 + $0x250] sm:$0xff]
    %v2382 = vld [vmem:[#allocation5 + $0x258] sm:$0xff]
    %v2383 = vld [vmem:[#allocation5 + $0x260] sm:$0xff]
    %v2384 = vld [vmem:[#allocation5 + $0x268] sm:$0xff]
    %v2385 = vld [vmem:[#allocation5 + $0x270] sm:$0xff]
    %v2386 = vld [vmem:[#allocation5 + $0x278] sm:$0xff]
    %v2387 = vld [vmem:[#allocation5 + $0x280] sm:$0xff]
    %v2388 = vld [vmem:[#allocation5 + $0x288] sm:$0xff]
    %v2389 = vld [vmem:[#allocation5 + $0x290] sm:$0xff]
    %v2390 = vld [vmem:[#allocation5 + $0x298] sm:$0xff]
    %v2391 = vld [vmem:[#allocation5 + $0x2a0] sm:$0xff]
    %v2392 = vld [vmem:[#allocation5 + $0x2a8] sm:$0xff]
    %v2393 = vld [vmem:[#allocation5 + $0x2b0] sm:$0xff]
    %v2394 = vld [vmem:[#allocation5 + $0x2b8] sm:$0xff]
    %v2395 = vld [vmem:[#allocation5 + $0x2c0] sm:$0xff]
    %v2396 = vld [vmem:[#allocation5 + $0x2c8] sm:$0xff]
    %v2397 = vld [vmem:[#allocation5 + $0x2d0] sm:$0xff]
    %v2398 = vld [vmem:[#allocation5 + $0x2d8] sm:$0xff]
    %v2399 = vld [vmem:[#allocation5 + $0x2e0] sm:$0xff]
    %v2400 = vld [vmem:[#allocation5 + $0x2e8] sm:$0xff]
    %v2401 = vld [vmem:[#allocation5 + $0x2f0] sm:$0xff]
    %v2402 = vld [vmem:[#allocation5 + $0x2f8] sm:$0xff]
    %v2403 = vld [vmem:[#allocation5 + $0x300] sm:$0xff]
    %v2404 = vld [vmem:[#allocation5 + $0x308] sm:$0xff]
    %v2405 = vld [vmem:[#allocation5 + $0x310] sm:$0xff]
    %v2406 = vld [vmem:[#allocation5 + $0x318] sm:$0xff]
    %v2407 = vld [vmem:[#allocation5 + $0x320] sm:$0xff]
    %v2408 = vld [vmem:[#allocation5 + $0x328] sm:$0xff]
    %v2409 = vld [vmem:[#allocation5 + $0x330] sm:$0xff]
    %v2410 = vld [vmem:[#allocation5 + $0x338] sm:$0xff]
    %v2411 = vld [vmem:[#allocation5 + $0x340] sm:$0xff]
    %v2412 = vld [vmem:[#allocation5 + $0x348] sm:$0xff]
    %v2413 = vld [vmem:[#allocation5 + $0x350] sm:$0xff]
    %v2414 = vld [vmem:[#allocation5 + $0x358] sm:$0xff]
    %v2415 = vld [vmem:[#allocation5 + $0x360] sm:$0xff]
    %v2416 = vld [vmem:[#allocation5 + $0x368] sm:$0xff]
    %v2417 = vld [vmem:[#allocation5 + $0x370] sm:$0xff]
    %v2418 = vld [vmem:[#allocation5 + $0x378] sm:$0xff]
    %v2419 = vld [vmem:[#allocation5 + $0x380] sm:$0xff]
    %v2420 = vld [vmem:[#allocation5 + $0x388] sm:$0xff]
    %v2421 = vld [vmem:[#allocation5 + $0x390] sm:$0xff]
    %v2422 = vld [vmem:[#allocation5 + $0x398] sm:$0xff]
    %v2423 = vld [vmem:[#allocation5 + $0x3a0] sm:$0xff]
    %v2424 = vld [vmem:[#allocation5 + $0x3a8] sm:$0xff]
    %v2425 = vld [vmem:[#allocation5 + $0x3b0] sm:$0xff]
    %v2426 = vld [vmem:[#allocation5 + $0x3b8] sm:$0xff]
    %v2427 = vld [vmem:[#allocation5 + $0x3c0] sm:$0xff]
    %v2428 = vld [vmem:[#allocation5 + $0x3c8] sm:$0xff]
    %v2429 = vld [vmem:[#allocation5 + $0x3d0] sm:$0xff]
    %v2430 = vld [vmem:[#allocation5 + $0x3d8] sm:$0xff]
    %v2431 = vld [vmem:[#allocation5 + $0x3e0] sm:$0xff]
    %v2432 = vld [vmem:[#allocation5 + $0x3e8] sm:$0xff]
    %v2433 = vld [vmem:[#allocation5 + $0x3f0] sm:$0xff]
    %v2434 = vld [vmem:[#allocation5 + $0x3f8] sm:$0xff]
    %v2435 = vld [vmem:[#allocation5 + $0x400] sm:$0xff]
    %v2436 = vld [vmem:[#allocation5 + $0x408] sm:$0xff]
    %v2437 = vld [vmem:[#allocation5 + $0x410] sm:$0xff]
    %v2438 = vld [vmem:[#allocation5 + $0x418] sm:$0xff]
    %v2439 = vld [vmem:[#allocation5 + $0x420] sm:$0xff]
    %v2440 = vld [vmem:[#allocation5 + $0x428] sm:$0xff]
    %v2441 = vld [vmem:[#allocation5 + $0x430] sm:$0xff]
    %v2442 = vld [vmem:[#allocation5 + $0x438] sm:$0xff]
    %v2443 = vld [vmem:[#allocation5 + $0x440] sm:$0xff]
    %v2444 = vld [vmem:[#allocation5 + $0x448] sm:$0xff]
    %v2445 = vld [vmem:[#allocation5 + $0x450] sm:$0xff]
    %v2446 = vld [vmem:[#allocation5 + $0x458] sm:$0xff]
    %v2447 = vld [vmem:[#allocation5 + $0x460] sm:$0xff]
    %v2448 = vld [vmem:[#allocation5 + $0x468] sm:$0xff]
    %v2449 = vld [vmem:[#allocation5 + $0x470] sm:$0xff]
    %v2450 = vld [vmem:[#allocation5 + $0x478] sm:$0xff]
    %v2451 = vld [vmem:[#allocation5 + $0x480] sm:$0xff]
    %v2452 = vld [vmem:[#allocation5 + $0x488] sm:$0xff]
    %v2453 = vld [vmem:[#allocation5 + $0x490] sm:$0xff]
    %v2454 = vld [vmem:[#allocation5 + $0x498] sm:$0xff]
    %v2455 = vld [vmem:[#allocation5 + $0x4a0] sm:$0xff]
    %v2456 = vld [vmem:[#allocation5 + $0x4a8] sm:$0xff]
    %v2457 = vld [vmem:[#allocation5 + $0x4b0] sm:$0xff]
    %v2458 = vld [vmem:[#allocation5 + $0x4b8] sm:$0xff]
    %v2459 = vld [vmem:[#allocation5 + $0x4c0] sm:$0xff]
    %v2460 = vld [vmem:[#allocation5 + $0x4c8] sm:$0xff]
    %v2461 = vld [vmem:[#allocation5 + $0x4d0] sm:$0xff]
    %v2462 = vld [vmem:[#allocation5 + $0x4d8] sm:$0xff]
    %v2463 = vld [vmem:[#allocation5 + $0x4e0] sm:$0xff]
    %v2464 = vld [vmem:[#allocation5 + $0x4e8] sm:$0xff]
    %v2465 = vld [vmem:[#allocation5 + $0x4f0] sm:$0xff]
    %v2466 = vld [vmem:[#allocation5 + $0x4f8] sm:$0xff]
    %v2467 = vld [vmem:[#allocation5 + $0x500] sm:$0xff]
    %v2468 = vld [vmem:[#allocation5 + $0x508] sm:$0xff]
    %v2469 = vld [vmem:[#allocation5 + $0x510] sm:$0xff]
    %v2470 = vld [vmem:[#allocation5 + $0x518] sm:$0xff]
    %v2471 = vld [vmem:[#allocation5 + $0x520] sm:$0xff]
    %v2472 = vld [vmem:[#allocation5 + $0x528] sm:$0xff]
    %v2473 = vld [vmem:[#allocation5 + $0x530] sm:$0xff]
    %v2474 = vld [vmem:[#allocation5 + $0x538] sm:$0xff]
    %v2475 = vld [vmem:[#allocation5 + $0x540] sm:$0xff]
    %v2476 = vld [vmem:[#allocation5 + $0x548] sm:$0xff]
    %v2477 = vld [vmem:[#allocation5 + $0x550] sm:$0xff]
    %v2478 = vld [vmem:[#allocation5 + $0x558] sm:$0xff]
    %v2479 = vld [vmem:[#allocation5 + $0x560] sm:$0xff]
    %v2480 = vld [vmem:[#allocation5 + $0x568] sm:$0xff]
    %v2481 = vld [vmem:[#allocation5 + $0x570] sm:$0xff]
    %v2482 = vld [vmem:[#allocation5 + $0x578] sm:$0xff]
    %v2483 = vld [vmem:[#allocation5 + $0x580] sm:$0xff]
    %v2484 = vld [vmem:[#allocation5 + $0x588] sm:$0xff]
    %v2485 = vld [vmem:[#allocation5 + $0x590] sm:$0xff]
    %v2486 = vld [vmem:[#allocation5 + $0x598] sm:$0xff]
    %v2487 = vld [vmem:[#allocation5 + $0x5a0] sm:$0xff]
    %v2488 = vld [vmem:[#allocation5 + $0x5a8] sm:$0xff]
    %v2489 = vld [vmem:[#allocation5 + $0x5b0] sm:$0xff]
    %v2490 = vld [vmem:[#allocation5 + $0x5b8] sm:$0xff]
    %v2491 = vld [vmem:[#allocation5 + $0x5c0] sm:$0xff]
    %v2492 = vld [vmem:[#allocation5 + $0x5c8] sm:$0xff]
    %v2493 = vld [vmem:[#allocation5 + $0x5d0] sm:$0xff]
    %v2494 = vld [vmem:[#allocation5 + $0x5d8] sm:$0xff]
    %v2495 = vld [vmem:[#allocation5 + $0x5e0] sm:$0xff]
    %v2496 = vld [vmem:[#allocation5 + $0x5e8] sm:$0xff]
    %v2497 = vld [vmem:[#allocation5 + $0x5f0] sm:$0xff]
    %v2498 = vld [vmem:[#allocation5 + $0x5f8] sm:$0xff]
    %v2499 = vld [vmem:[#allocation5 + $0x600] sm:$0xff]
    %v2500 = vld [vmem:[#allocation5 + $0x608] sm:$0xff]
    %v2501 = vld [vmem:[#allocation5 + $0x610] sm:$0xff]
    %v2502 = vld [vmem:[#allocation5 + $0x618] sm:$0xff]
    %v2503 = vld [vmem:[#allocation5 + $0x620] sm:$0xff]
    %v2504 = vld [vmem:[#allocation5 + $0x628] sm:$0xff]
    %v2505 = vld [vmem:[#allocation5 + $0x630] sm:$0xff]
    %v2506 = vld [vmem:[#allocation5 + $0x638] sm:$0xff]
    %v2507 = vld [vmem:[#allocation5 + $0x640] sm:$0xff]
    %v2508 = vld [vmem:[#allocation5 + $0x648] sm:$0xff]
    %v2509 = vld [vmem:[#allocation5 + $0x650] sm:$0xff]
    %v2510 = vld [vmem:[#allocation5 + $0x658] sm:$0xff]
    %v2511 = vld [vmem:[#allocation5 + $0x660] sm:$0xff]
    %v2512 = vld [vmem:[#allocation5 + $0x668] sm:$0xff]
    %v2513 = vld [vmem:[#allocation5 + $0x670] sm:$0xff]
    %v2514 = vld [vmem:[#allocation5 + $0x678] sm:$0xff]
    %v2515 = vld [vmem:[#allocation5 + $0x680] sm:$0xff]
    %v2516 = vld [vmem:[#allocation5 + $0x688] sm:$0xff]
    %v2517 = vld [vmem:[#allocation5 + $0x690] sm:$0xff]
    %v2518 = vld [vmem:[#allocation5 + $0x698] sm:$0xff]
    %v2519 = vld [vmem:[#allocation5 + $0x6a0] sm:$0xff]
    %v2520 = vld [vmem:[#allocation5 + $0x6a8] sm:$0xff]
    %v2521 = vld [vmem:[#allocation5 + $0x6b0] sm:$0xff]
    %v2522 = vld [vmem:[#allocation5 + $0x6b8] sm:$0xff]
    %v2523 = vld [vmem:[#allocation5 + $0x6c0] sm:$0xff]
    %v2524 = vld [vmem:[#allocation5 + $0x6c8] sm:$0xff]
    %v2525 = vld [vmem:[#allocation5 + $0x6d0] sm:$0xff]
    %v2526 = vld [vmem:[#allocation5 + $0x6d8] sm:$0xff]
    %v2527 = vld [vmem:[#allocation5 + $0x6e0] sm:$0xff]
    %v2528 = vld [vmem:[#allocation5 + $0x6e8] sm:$0xff]
    %v2529 = vld [vmem:[#allocation5 + $0x6f0] sm:$0xff]
    %v2530 = vld [vmem:[#allocation5 + $0x6f8] sm:$0xff]
    %v2531 = vld [vmem:[#allocation5 + $0x700] sm:$0xff]
    %v2532 = vld [vmem:[#allocation5 + $0x708] sm:$0xff]
    %v2533 = vld [vmem:[#allocation5 + $0x710] sm:$0xff]
    %v2534 = vld [vmem:[#allocation5 + $0x718] sm:$0xff]
    %v2535 = vld [vmem:[#allocation5 + $0x720] sm:$0xff]
    %v2536 = vld [vmem:[#allocation5 + $0x728] sm:$0xff]
    %v2537 = vld [vmem:[#allocation5 + $0x730] sm:$0xff]
    %v2538 = vld [vmem:[#allocation5 + $0x738] sm:$0xff]
    %v2539 = vld [vmem:[#allocation5 + $0x740] sm:$0xff]
    %v2540 = vld [vmem:[#allocation5 + $0x748] sm:$0xff]
    %v2541 = vld [vmem:[#allocation5 + $0x750] sm:$0xff]
    %v2542 = vld [vmem:[#allocation5 + $0x758] sm:$0xff]
    %v2543 = vld [vmem:[#allocation5 + $0x760] sm:$0xff]
    %v2544 = vld [vmem:[#allocation5 + $0x768] sm:$0xff]
    %v2545 = vld [vmem:[#allocation5 + $0x770] sm:$0xff]
    %v2546 = vld [vmem:[#allocation5 + $0x778] sm:$0xff]
    %v2547 = vld [vmem:[#allocation5 + $0x780] sm:$0xff]
    %v2548 = vld [vmem:[#allocation5 + $0x788] sm:$0xff]
    %v2549 = vld [vmem:[#allocation5 + $0x790] sm:$0xff]
    %v2550 = vld [vmem:[#allocation5 + $0x798] sm:$0xff]
    %v2551 = vld [vmem:[#allocation5 + $0x7a0] sm:$0xff]
    %v2552 = vld [vmem:[#allocation5 + $0x7a8] sm:$0xff]
    %v2553 = vld [vmem:[#allocation5 + $0x7b0] sm:$0xff]
    %v2554 = vld [vmem:[#allocation5 + $0x7b8] sm:$0xff]
    %v2555 = vld [vmem:[#allocation5 + $0x7c0] sm:$0xff]
    %v2556 = vld [vmem:[#allocation5 + $0x7c8] sm:$0xff]
    %v2557 = vld [vmem:[#allocation5 + $0x7d0] sm:$0xff]
    %v2558 = vld [vmem:[#allocation5 + $0x7d8] sm:$0xff]
    %v2559 = vld [vmem:[#allocation5 + $0x7e0] sm:$0xff]
    %v2560 = vld [vmem:[#allocation5 + $0x7e8] sm:$0xff]
    %v2561 = vld [vmem:[#allocation5 + $0x7f0] sm:$0xff]
    %v2562 = vld [vmem:[#allocation5 + $0x7f8] sm:$0xff]
    %v2563 = vld [vmem:[%s7] sm:$0xff]
    %v2565 = vlaneseq
    %v2566 = vshrl.u32 %v2565, 7
    %v2567 = vsub.s32 0, %v2566
    %v2568 = vrot.slane %v2563, %v2567
    %v2569 = vlaneseq
    %v2570 = vshrl.u32 %v2569, 7
    %v2571 = vsub.s32 1, %v2570
    %v2572 = vrot.slane %v2563, %v2571
    %v2573 = vlaneseq
    %v2574 = vshrl.u32 %v2573, 7
    %v2575 = vsub.s32 2, %v2574
    %v2576 = vrot.slane %v2563, %v2575
    %v2577 = vlaneseq
    %v2578 = vshrl.u32 %v2577, 7
    %v2579 = vsub.s32 3, %v2578
    %v2580 = vrot.slane %v2563, %v2579
    %v2581 = vlaneseq
    %v2582 = vshrl.u32 %v2581, 7
    %v2583 = vsub.s32 4, %v2582
    %v2584 = vrot.slane %v2563, %v2583
    %v2585 = vlaneseq
    %v2586 = vshrl.u32 %v2585, 7
    %v2587 = vsub.s32 5, %v2586
    %v2588 = vrot.slane %v2563, %v2587
    %v2589 = vlaneseq
    %v2590 = vshrl.u32 %v2589, 7
    %v2591 = vsub.s32 6, %v2590
    %v2592 = vrot.slane %v2563, %v2591
    %v2593 = vlaneseq
    %v2594 = vshrl.u32 %v2593, 7
    %v2595 = vsub.s32 7, %v2594
    %v2596 = vrot.slane %v2563, %v2595
    %v2861 = vunpack.c.l.b16 %v2307
    %v2862 = vunpack.c.h.b16 %v2307
    %v2863 = vunpack.c.l.b16 %v2308
    %v2864 = vunpack.c.h.b16 %v2308
    %v2865 = vunpack.c.l.b16 %v2309
    %v2866 = vunpack.c.h.b16 %v2309
    %v2867 = vunpack.c.l.b16 %v2310
    %v2868 = vunpack.c.h.b16 %v2310
    %v2869 = vunpack.c.l.b16 %v2311
    %v2870 = vunpack.c.h.b16 %v2311
    %v2871 = vunpack.c.l.b16 %v2312
    %v2872 = vunpack.c.h.b16 %v2312
    %v2873 = vunpack.c.l.b16 %v2313
    %v2874 = vunpack.c.h.b16 %v2313
    %v2875 = vunpack.c.l.b16 %v2314
    %v2876 = vunpack.c.h.b16 %v2314
    %v2877 = vunpack.c.l.b16 %v2315
    %v2878 = vunpack.c.h.b16 %v2315
    %v2879 = vunpack.c.l.b16 %v2316
    %v2880 = vunpack.c.h.b16 %v2316
    %v2881 = vunpack.c.l.b16 %v2317
    %v2882 = vunpack.c.h.b16 %v2317
    %v2883 = vunpack.c.l.b16 %v2318
    %v2884 = vunpack.c.h.b16 %v2318
    %v2885 = vunpack.c.l.b16 %v2319
    %v2886 = vunpack.c.h.b16 %v2319
    %v2887 = vunpack.c.l.b16 %v2320
    %v2888 = vunpack.c.h.b16 %v2320
    %v2889 = vunpack.c.l.b16 %v2321
    %v2890 = vunpack.c.h.b16 %v2321
    %v2891 = vunpack.c.l.b16 %v2322
    %v2892 = vunpack.c.h.b16 %v2322
    %v2893 = vunpack.c.l.b16 %v2323
    %v2894 = vunpack.c.h.b16 %v2323
    %v2895 = vunpack.c.l.b16 %v2324
    %v2896 = vunpack.c.h.b16 %v2324
    %v2897 = vunpack.c.l.b16 %v2325
    %v2898 = vunpack.c.h.b16 %v2325
    %v2899 = vunpack.c.l.b16 %v2326
    %v2900 = vunpack.c.h.b16 %v2326
    %v2901 = vunpack.c.l.b16 %v2327
    %v2902 = vunpack.c.h.b16 %v2327
    %v2903 = vunpack.c.l.b16 %v2328
    %v2904 = vunpack.c.h.b16 %v2328
    %v2905 = vunpack.c.l.b16 %v2329
    %v2906 = vunpack.c.h.b16 %v2329
    %v2907 = vunpack.c.l.b16 %v2330
    %v2908 = vunpack.c.h.b16 %v2330
    %v2909 = vunpack.c.l.b16 %v2331
    %v2910 = vunpack.c.h.b16 %v2331
    %v2911 = vunpack.c.l.b16 %v2332
    %v2912 = vunpack.c.h.b16 %v2332
    %v2913 = vunpack.c.l.b16 %v2333
    %v2914 = vunpack.c.h.b16 %v2333
    %v2915 = vunpack.c.l.b16 %v2334
    %v2916 = vunpack.c.h.b16 %v2334
    %v2917 = vunpack.c.l.b16 %v2335
    %v2918 = vunpack.c.h.b16 %v2335
    %v2919 = vunpack.c.l.b16 %v2336
    %v2920 = vunpack.c.h.b16 %v2336
    %v2921 = vunpack.c.l.b16 %v2337
    %v2922 = vunpack.c.h.b16 %v2337
    %v2923 = vunpack.c.l.b16 %v2338
    %v2924 = vunpack.c.h.b16 %v2338
    %v2925 = vunpack.c.l.b16 %v2339
    %v2926 = vunpack.c.h.b16 %v2339
    %v2927 = vunpack.c.l.b16 %v2340
    %v2928 = vunpack.c.h.b16 %v2340
    %v2929 = vunpack.c.l.b16 %v2341
    %v2930 = vunpack.c.h.b16 %v2341
    %v2931 = vunpack.c.l.b16 %v2342
    %v2932 = vunpack.c.h.b16 %v2342
    %v2933 = vunpack.c.l.b16 %v2343
    %v2934 = vunpack.c.h.b16 %v2343
    %v2935 = vunpack.c.l.b16 %v2344
    %v2936 = vunpack.c.h.b16 %v2344
    %v2937 = vunpack.c.l.b16 %v2345
    %v2938 = vunpack.c.h.b16 %v2345
    %v2939 = vunpack.c.l.b16 %v2346
    %v2940 = vunpack.c.h.b16 %v2346
    %v2941 = vunpack.c.l.b16 %v2347
    %v2942 = vunpack.c.h.b16 %v2347
    %v2943 = vunpack.c.l.b16 %v2348
    %v2944 = vunpack.c.h.b16 %v2348
    %v2945 = vunpack.c.l.b16 %v2349
    %v2946 = vunpack.c.h.b16 %v2349
    %v2947 = vunpack.c.l.b16 %v2350
    %v2948 = vunpack.c.h.b16 %v2350
    %v2949 = vunpack.c.l.b16 %v2351
    %v2950 = vunpack.c.h.b16 %v2351
    %v2951 = vunpack.c.l.b16 %v2352
    %v2952 = vunpack.c.h.b16 %v2352
    %v2953 = vunpack.c.l.b16 %v2353
    %v2954 = vunpack.c.h.b16 %v2353
    %v2955 = vunpack.c.l.b16 %v2354
    %v2956 = vunpack.c.h.b16 %v2354
    %v2957 = vunpack.c.l.b16 %v2355
    %v2958 = vunpack.c.h.b16 %v2355
    %v2959 = vunpack.c.l.b16 %v2356
    %v2960 = vunpack.c.h.b16 %v2356
    %v2961 = vunpack.c.l.b16 %v2357
    %v2962 = vunpack.c.h.b16 %v2357
    %v2963 = vunpack.c.l.b16 %v2358
    %v2964 = vunpack.c.h.b16 %v2358
    %v2965 = vunpack.c.l.b16 %v2359
    %v2966 = vunpack.c.h.b16 %v2359
    %v2967 = vunpack.c.l.b16 %v2360
    %v2968 = vunpack.c.h.b16 %v2360
    %v2969 = vunpack.c.l.b16 %v2361
    %v2970 = vunpack.c.h.b16 %v2361
    %v2971 = vunpack.c.l.b16 %v2362
    %v2972 = vunpack.c.h.b16 %v2362
    %v2973 = vunpack.c.l.b16 %v2363
    %v2974 = vunpack.c.h.b16 %v2363
    %v2975 = vunpack.c.l.b16 %v2364
    %v2976 = vunpack.c.h.b16 %v2364
    %v2977 = vunpack.c.l.b16 %v2365
    %v2978 = vunpack.c.h.b16 %v2365
    %v2979 = vunpack.c.l.b16 %v2366
    %v2980 = vunpack.c.h.b16 %v2366
    %v2981 = vunpack.c.l.b16 %v2367
    %v2982 = vunpack.c.h.b16 %v2367
    %v2983 = vunpack.c.l.b16 %v2368
    %v2984 = vunpack.c.h.b16 %v2368
    %v2985 = vunpack.c.l.b16 %v2369
    %v2986 = vunpack.c.h.b16 %v2369
    %v2987 = vunpack.c.l.b16 %v2370
    %v2988 = vunpack.c.h.b16 %v2370
    %v2989 = vunpack.c.l.b16 %v2371
    %v2990 = vunpack.c.h.b16 %v2371
    %v2991 = vunpack.c.l.b16 %v2372
    %v2992 = vunpack.c.h.b16 %v2372
    %v2993 = vunpack.c.l.b16 %v2373
    %v2994 = vunpack.c.h.b16 %v2373
    %v2995 = vunpack.c.l.b16 %v2374
    %v2996 = vunpack.c.h.b16 %v2374
    %v2997 = vunpack.c.l.b16 %v2375
    %v2998 = vunpack.c.h.b16 %v2375
    %v2999 = vunpack.c.l.b16 %v2376
    %v3000 = vunpack.c.h.b16 %v2376
    %v3001 = vunpack.c.l.b16 %v2377
    %v3002 = vunpack.c.h.b16 %v2377
    %v3003 = vunpack.c.l.b16 %v2378
    %v3004 = vunpack.c.h.b16 %v2378
    %v3005 = vunpack.c.l.b16 %v2379
    %v3006 = vunpack.c.h.b16 %v2379
    %v3007 = vunpack.c.l.b16 %v2380
    %v3008 = vunpack.c.h.b16 %v2380
    %v3009 = vunpack.c.l.b16 %v2381
    %v3010 = vunpack.c.h.b16 %v2381
    %v3011 = vunpack.c.l.b16 %v2382
    %v3012 = vunpack.c.h.b16 %v2382
    %v3013 = vunpack.c.l.b16 %v2383
    %v3014 = vunpack.c.h.b16 %v2383
    %v3015 = vunpack.c.l.b16 %v2384
    %v3016 = vunpack.c.h.b16 %v2384
    %v3017 = vunpack.c.l.b16 %v2385
    %v3018 = vunpack.c.h.b16 %v2385
    %v3019 = vunpack.c.l.b16 %v2386
    %v3020 = vunpack.c.h.b16 %v2386
    %v3021 = vunpack.c.l.b16 %v2387
    %v3022 = vunpack.c.h.b16 %v2387
    %v3023 = vunpack.c.l.b16 %v2388
    %v3024 = vunpack.c.h.b16 %v2388
    %v3025 = vunpack.c.l.b16 %v2389
    %v3026 = vunpack.c.h.b16 %v2389
    %v3027 = vunpack.c.l.b16 %v2390
    %v3028 = vunpack.c.h.b16 %v2390
    %v3029 = vunpack.c.l.b16 %v2391
    %v3030 = vunpack.c.h.b16 %v2391
    %v3031 = vunpack.c.l.b16 %v2392
    %v3032 = vunpack.c.h.b16 %v2392
    %v3033 = vunpack.c.l.b16 %v2393
    %v3034 = vunpack.c.h.b16 %v2393
    %v3035 = vunpack.c.l.b16 %v2394
    %v3036 = vunpack.c.h.b16 %v2394
    %v3037 = vunpack.c.l.b16 %v2395
    %v3038 = vunpack.c.h.b16 %v2395
    %v3039 = vunpack.c.l.b16 %v2396
    %v3040 = vunpack.c.h.b16 %v2396
    %v3041 = vunpack.c.l.b16 %v2397
    %v3042 = vunpack.c.h.b16 %v2397
    %v3043 = vunpack.c.l.b16 %v2398
    %v3044 = vunpack.c.h.b16 %v2398
    %v3045 = vunpack.c.l.b16 %v2399
    %v3046 = vunpack.c.h.b16 %v2399
    %v3047 = vunpack.c.l.b16 %v2400
    %v3048 = vunpack.c.h.b16 %v2400
    %v3049 = vunpack.c.l.b16 %v2401
    %v3050 = vunpack.c.h.b16 %v2401
    %v3051 = vunpack.c.l.b16 %v2402
    %v3052 = vunpack.c.h.b16 %v2402
    %v3053 = vunpack.c.l.b16 %v2403
    %v3054 = vunpack.c.h.b16 %v2403
    %v3055 = vunpack.c.l.b16 %v2404
    %v3056 = vunpack.c.h.b16 %v2404
    %v3057 = vunpack.c.l.b16 %v2405
    %v3058 = vunpack.c.h.b16 %v2405
    %v3059 = vunpack.c.l.b16 %v2406
    %v3060 = vunpack.c.h.b16 %v2406
    %v3061 = vunpack.c.l.b16 %v2407
    %v3062 = vunpack.c.h.b16 %v2407
    %v3063 = vunpack.c.l.b16 %v2408
    %v3064 = vunpack.c.h.b16 %v2408
    %v3065 = vunpack.c.l.b16 %v2409
    %v3066 = vunpack.c.h.b16 %v2409
    %v3067 = vunpack.c.l.b16 %v2410
    %v3068 = vunpack.c.h.b16 %v2410
    %v3069 = vunpack.c.l.b16 %v2411
    %v3070 = vunpack.c.h.b16 %v2411
    %v3071 = vunpack.c.l.b16 %v2412
    %v3072 = vunpack.c.h.b16 %v2412
    %v3073 = vunpack.c.l.b16 %v2413
    %v3074 = vunpack.c.h.b16 %v2413
    %v3075 = vunpack.c.l.b16 %v2414
    %v3076 = vunpack.c.h.b16 %v2414
    %v3077 = vunpack.c.l.b16 %v2415
    %v3078 = vunpack.c.h.b16 %v2415
    %v3079 = vunpack.c.l.b16 %v2416
    %v3080 = vunpack.c.h.b16 %v2416
    %v3081 = vunpack.c.l.b16 %v2417
    %v3082 = vunpack.c.h.b16 %v2417
    %v3083 = vunpack.c.l.b16 %v2418
    %v3084 = vunpack.c.h.b16 %v2418
    %v3085 = vunpack.c.l.b16 %v2419
    %v3086 = vunpack.c.h.b16 %v2419
    %v3087 = vunpack.c.l.b16 %v2420
    %v3088 = vunpack.c.h.b16 %v2420
    %v3089 = vunpack.c.l.b16 %v2421
    %v3090 = vunpack.c.h.b16 %v2421
    %v3091 = vunpack.c.l.b16 %v2422
    %v3092 = vunpack.c.h.b16 %v2422
    %v3093 = vunpack.c.l.b16 %v2423
    %v3094 = vunpack.c.h.b16 %v2423
    %v3095 = vunpack.c.l.b16 %v2424
    %v3096 = vunpack.c.h.b16 %v2424
    %v3097 = vunpack.c.l.b16 %v2425
    %v3098 = vunpack.c.h.b16 %v2425
    %v3099 = vunpack.c.l.b16 %v2426
    %v3100 = vunpack.c.h.b16 %v2426
    %v3101 = vunpack.c.l.b16 %v2427
    %v3102 = vunpack.c.h.b16 %v2427
    %v3103 = vunpack.c.l.b16 %v2428
    %v3104 = vunpack.c.h.b16 %v2428
    %v3105 = vunpack.c.l.b16 %v2429
    %v3106 = vunpack.c.h.b16 %v2429
    %v3107 = vunpack.c.l.b16 %v2430
    %v3108 = vunpack.c.h.b16 %v2430
    %v3109 = vunpack.c.l.b16 %v2431
    %v3110 = vunpack.c.h.b16 %v2431
    %v3111 = vunpack.c.l.b16 %v2432
    %v3112 = vunpack.c.h.b16 %v2432
    %v3113 = vunpack.c.l.b16 %v2433
    %v3114 = vunpack.c.h.b16 %v2433
    %v3115 = vunpack.c.l.b16 %v2434
    %v3116 = vunpack.c.h.b16 %v2434
    %v3117 = vunpack.c.l.b16 %v2435
    %v3118 = vunpack.c.h.b16 %v2435
    %v3119 = vunpack.c.l.b16 %v2436
    %v3120 = vunpack.c.h.b16 %v2436
    %v3121 = vunpack.c.l.b16 %v2437
    %v3122 = vunpack.c.h.b16 %v2437
    %v3123 = vunpack.c.l.b16 %v2438
    %v3124 = vunpack.c.h.b16 %v2438
    %v3125 = vunpack.c.l.b16 %v2439
    %v3126 = vunpack.c.h.b16 %v2439
    %v3127 = vunpack.c.l.b16 %v2440
    %v3128 = vunpack.c.h.b16 %v2440
    %v3129 = vunpack.c.l.b16 %v2441
    %v3130 = vunpack.c.h.b16 %v2441
    %v3131 = vunpack.c.l.b16 %v2442
    %v3132 = vunpack.c.h.b16 %v2442
    %v3133 = vunpack.c.l.b16 %v2443
    %v3134 = vunpack.c.h.b16 %v2443
    %v3135 = vunpack.c.l.b16 %v2444
    %v3136 = vunpack.c.h.b16 %v2444
    %v3137 = vunpack.c.l.b16 %v2445
    %v3138 = vunpack.c.h.b16 %v2445
    %v3139 = vunpack.c.l.b16 %v2446
    %v3140 = vunpack.c.h.b16 %v2446
    %v3141 = vunpack.c.l.b16 %v2447
    %v3142 = vunpack.c.h.b16 %v2447
    %v3143 = vunpack.c.l.b16 %v2448
    %v3144 = vunpack.c.h.b16 %v2448
    %v3145 = vunpack.c.l.b16 %v2449
    %v3146 = vunpack.c.h.b16 %v2449
    %v3147 = vunpack.c.l.b16 %v2450
    %v3148 = vunpack.c.h.b16 %v2450
    %v3149 = vunpack.c.l.b16 %v2451
    %v3150 = vunpack.c.h.b16 %v2451
    %v3151 = vunpack.c.l.b16 %v2452
    %v3152 = vunpack.c.h.b16 %v2452
    %v3153 = vunpack.c.l.b16 %v2453
    %v3154 = vunpack.c.h.b16 %v2453
    %v3155 = vunpack.c.l.b16 %v2454
    %v3156 = vunpack.c.h.b16 %v2454
    %v3157 = vunpack.c.l.b16 %v2455
    %v3158 = vunpack.c.h.b16 %v2455
    %v3159 = vunpack.c.l.b16 %v2456
    %v3160 = vunpack.c.h.b16 %v2456
    %v3161 = vunpack.c.l.b16 %v2457
    %v3162 = vunpack.c.h.b16 %v2457
    %v3163 = vunpack.c.l.b16 %v2458
    %v3164 = vunpack.c.h.b16 %v2458
    %v3165 = vunpack.c.l.b16 %v2459
    %v3166 = vunpack.c.h.b16 %v2459
    %v3167 = vunpack.c.l.b16 %v2460
    %v3168 = vunpack.c.h.b16 %v2460
    %v3169 = vunpack.c.l.b16 %v2461
    %v3170 = vunpack.c.h.b16 %v2461
    %v3171 = vunpack.c.l.b16 %v2462
    %v3172 = vunpack.c.h.b16 %v2462
    %v3173 = vunpack.c.l.b16 %v2463
    %v3174 = vunpack.c.h.b16 %v2463
    %v3175 = vunpack.c.l.b16 %v2464
    %v3176 = vunpack.c.h.b16 %v2464
    %v3177 = vunpack.c.l.b16 %v2465
    %v3178 = vunpack.c.h.b16 %v2465
    %v3179 = vunpack.c.l.b16 %v2466
    %v3180 = vunpack.c.h.b16 %v2466
    %v3181 = vunpack.c.l.b16 %v2467
    %v3182 = vunpack.c.h.b16 %v2467
    %v3183 = vunpack.c.l.b16 %v2468
    %v3184 = vunpack.c.h.b16 %v2468
    %v3185 = vunpack.c.l.b16 %v2469
    %v3186 = vunpack.c.h.b16 %v2469
    %v3187 = vunpack.c.l.b16 %v2470
    %v3188 = vunpack.c.h.b16 %v2470
    %v3189 = vunpack.c.l.b16 %v2471
    %v3190 = vunpack.c.h.b16 %v2471
    %v3191 = vunpack.c.l.b16 %v2472
    %v3192 = vunpack.c.h.b16 %v2472
    %v3193 = vunpack.c.l.b16 %v2473
    %v3194 = vunpack.c.h.b16 %v2473
    %v3195 = vunpack.c.l.b16 %v2474
    %v3196 = vunpack.c.h.b16 %v2474
    %v3197 = vunpack.c.l.b16 %v2475
    %v3198 = vunpack.c.h.b16 %v2475
    %v3199 = vunpack.c.l.b16 %v2476
    %v3200 = vunpack.c.h.b16 %v2476
    %v3201 = vunpack.c.l.b16 %v2477
    %v3202 = vunpack.c.h.b16 %v2477
    %v3203 = vunpack.c.l.b16 %v2478
    %v3204 = vunpack.c.h.b16 %v2478
    %v3205 = vunpack.c.l.b16 %v2479
    %v3206 = vunpack.c.h.b16 %v2479
    %v3207 = vunpack.c.l.b16 %v2480
    %v3208 = vunpack.c.h.b16 %v2480
    %v3209 = vunpack.c.l.b16 %v2481
    %v3210 = vunpack.c.h.b16 %v2481
    %v3211 = vunpack.c.l.b16 %v2482
    %v3212 = vunpack.c.h.b16 %v2482
    %v3213 = vunpack.c.l.b16 %v2483
    %v3214 = vunpack.c.h.b16 %v2483
    %v3215 = vunpack.c.l.b16 %v2484
    %v3216 = vunpack.c.h.b16 %v2484
    %v3217 = vunpack.c.l.b16 %v2485
    %v3218 = vunpack.c.h.b16 %v2485
    %v3219 = vunpack.c.l.b16 %v2486
    %v3220 = vunpack.c.h.b16 %v2486
    %v3221 = vunpack.c.l.b16 %v2487
    %v3222 = vunpack.c.h.b16 %v2487
    %v3223 = vunpack.c.l.b16 %v2488
    %v3224 = vunpack.c.h.b16 %v2488
    %v3225 = vunpack.c.l.b16 %v2489
    %v3226 = vunpack.c.h.b16 %v2489
    %v3227 = vunpack.c.l.b16 %v2490
    %v3228 = vunpack.c.h.b16 %v2490
    %v3229 = vunpack.c.l.b16 %v2491
    %v3230 = vunpack.c.h.b16 %v2491
    %v3231 = vunpack.c.l.b16 %v2492
    %v3232 = vunpack.c.h.b16 %v2492
    %v3233 = vunpack.c.l.b16 %v2493
    %v3234 = vunpack.c.h.b16 %v2493
    %v3235 = vunpack.c.l.b16 %v2494
    %v3236 = vunpack.c.h.b16 %v2494
    %v3237 = vunpack.c.l.b16 %v2495
    %v3238 = vunpack.c.h.b16 %v2495
    %v3239 = vunpack.c.l.b16 %v2496
    %v3240 = vunpack.c.h.b16 %v2496
    %v3241 = vunpack.c.l.b16 %v2497
    %v3242 = vunpack.c.h.b16 %v2497
    %v3243 = vunpack.c.l.b16 %v2498
    %v3244 = vunpack.c.h.b16 %v2498
    %v3245 = vunpack.c.l.b16 %v2499
    %v3246 = vunpack.c.h.b16 %v2499
    %v3247 = vunpack.c.l.b16 %v2500
    %v3248 = vunpack.c.h.b16 %v2500
    %v3249 = vunpack.c.l.b16 %v2501
    %v3250 = vunpack.c.h.b16 %v2501
    %v3251 = vunpack.c.l.b16 %v2502
    %v3252 = vunpack.c.h.b16 %v2502
    %v3253 = vunpack.c.l.b16 %v2503
    %v3254 = vunpack.c.h.b16 %v2503
    %v3255 = vunpack.c.l.b16 %v2504
    %v3256 = vunpack.c.h.b16 %v2504
    %v3257 = vunpack.c.l.b16 %v2505
    %v3258 = vunpack.c.h.b16 %v2505
    %v3259 = vunpack.c.l.b16 %v2506
    %v3260 = vunpack.c.h.b16 %v2506
    %v3261 = vunpack.c.l.b16 %v2507
    %v3262 = vunpack.c.h.b16 %v2507
    %v3263 = vunpack.c.l.b16 %v2508
    %v3264 = vunpack.c.h.b16 %v2508
    %v3265 = vunpack.c.l.b16 %v2509
    %v3266 = vunpack.c.h.b16 %v2509
    %v3267 = vunpack.c.l.b16 %v2510
    %v3268 = vunpack.c.h.b16 %v2510
    %v3269 = vunpack.c.l.b16 %v2511
    %v3270 = vunpack.c.h.b16 %v2511
    %v3271 = vunpack.c.l.b16 %v2512
    %v3272 = vunpack.c.h.b16 %v2512
    %v3273 = vunpack.c.l.b16 %v2513
    %v3274 = vunpack.c.h.b16 %v2513
    %v3275 = vunpack.c.l.b16 %v2514
    %v3276 = vunpack.c.h.b16 %v2514
    %v3277 = vunpack.c.l.b16 %v2515
    %v3278 = vunpack.c.h.b16 %v2515
    %v3279 = vunpack.c.l.b16 %v2516
    %v3280 = vunpack.c.h.b16 %v2516
    %v3281 = vunpack.c.l.b16 %v2517
    %v3282 = vunpack.c.h.b16 %v2517
    %v3283 = vunpack.c.l.b16 %v2518
    %v3284 = vunpack.c.h.b16 %v2518
    %v3285 = vunpack.c.l.b16 %v2519
    %v3286 = vunpack.c.h.b16 %v2519
    %v3287 = vunpack.c.l.b16 %v2520
    %v3288 = vunpack.c.h.b16 %v2520
    %v3289 = vunpack.c.l.b16 %v2521
    %v3290 = vunpack.c.h.b16 %v2521
    %v3291 = vunpack.c.l.b16 %v2522
    %v3292 = vunpack.c.h.b16 %v2522
    %v3293 = vunpack.c.l.b16 %v2523
    %v3294 = vunpack.c.h.b16 %v2523
    %v3295 = vunpack.c.l.b16 %v2524
    %v3296 = vunpack.c.h.b16 %v2524
    %v3297 = vunpack.c.l.b16 %v2525
    %v3298 = vunpack.c.h.b16 %v2525
    %v3299 = vunpack.c.l.b16 %v2526
    %v3300 = vunpack.c.h.b16 %v2526
    %v3301 = vunpack.c.l.b16 %v2527
    %v3302 = vunpack.c.h.b16 %v2527
    %v3303 = vunpack.c.l.b16 %v2528
    %v3304 = vunpack.c.h.b16 %v2528
    %v3305 = vunpack.c.l.b16 %v2529
    %v3306 = vunpack.c.h.b16 %v2529
    %v3307 = vunpack.c.l.b16 %v2530
    %v3308 = vunpack.c.h.b16 %v2530
    %v3309 = vunpack.c.l.b16 %v2531
    %v3310 = vunpack.c.h.b16 %v2531
    %v3311 = vunpack.c.l.b16 %v2532
    %v3312 = vunpack.c.h.b16 %v2532
    %v3313 = vunpack.c.l.b16 %v2533
    %v3314 = vunpack.c.h.b16 %v2533
    %v3315 = vunpack.c.l.b16 %v2534
    %v3316 = vunpack.c.h.b16 %v2534
    %v3317 = vunpack.c.l.b16 %v2535
    %v3318 = vunpack.c.h.b16 %v2535
    %v3319 = vunpack.c.l.b16 %v2536
    %v3320 = vunpack.c.h.b16 %v2536
    %v3321 = vunpack.c.l.b16 %v2537
    %v3322 = vunpack.c.h.b16 %v2537
    %v3323 = vunpack.c.l.b16 %v2538
    %v3324 = vunpack.c.h.b16 %v2538
    %v3325 = vunpack.c.l.b16 %v2539
    %v3326 = vunpack.c.h.b16 %v2539
    %v3327 = vunpack.c.l.b16 %v2540
    %v3328 = vunpack.c.h.b16 %v2540
    %v3329 = vunpack.c.l.b16 %v2541
    %v3330 = vunpack.c.h.b16 %v2541
    %v3331 = vunpack.c.l.b16 %v2542
    %v3332 = vunpack.c.h.b16 %v2542
    %v3333 = vunpack.c.l.b16 %v2543
    %v3334 = vunpack.c.h.b16 %v2543
    %v3335 = vunpack.c.l.b16 %v2544
    %v3336 = vunpack.c.h.b16 %v2544
    %v3337 = vunpack.c.l.b16 %v2545
    %v3338 = vunpack.c.h.b16 %v2545
    %v3339 = vunpack.c.l.b16 %v2546
    %v3340 = vunpack.c.h.b16 %v2546
    %v3341 = vunpack.c.l.b16 %v2547
    %v3342 = vunpack.c.h.b16 %v2547
    %v3343 = vunpack.c.l.b16 %v2548
    %v3344 = vunpack.c.h.b16 %v2548
    %v3345 = vunpack.c.l.b16 %v2549
    %v3346 = vunpack.c.h.b16 %v2549
    %v3347 = vunpack.c.l.b16 %v2550
    %v3348 = vunpack.c.h.b16 %v2550
    %v3349 = vunpack.c.l.b16 %v2551
    %v3350 = vunpack.c.h.b16 %v2551
    %v3351 = vunpack.c.l.b16 %v2552
    %v3352 = vunpack.c.h.b16 %v2552
    %v3353 = vunpack.c.l.b16 %v2553
    %v3354 = vunpack.c.h.b16 %v2553
    %v3355 = vunpack.c.l.b16 %v2554
    %v3356 = vunpack.c.h.b16 %v2554
    %v3357 = vunpack.c.l.b16 %v2555
    %v3358 = vunpack.c.h.b16 %v2555
    %v3359 = vunpack.c.l.b16 %v2556
    %v3360 = vunpack.c.h.b16 %v2556
    %v3361 = vunpack.c.l.b16 %v2557
    %v3362 = vunpack.c.h.b16 %v2557
    %v3363 = vunpack.c.l.b16 %v2558
    %v3364 = vunpack.c.h.b16 %v2558
    %v3365 = vunpack.c.l.b16 %v2559
    %v3366 = vunpack.c.h.b16 %v2559
    %v3367 = vunpack.c.l.b16 %v2560
    %v3368 = vunpack.c.h.b16 %v2560
    %v3369 = vunpack.c.l.b16 %v2561
    %v3370 = vunpack.c.h.b16 %v2561
    %v3371 = vunpack.c.l.b16 %v2562
    %v3372 = vunpack.c.h.b16 %v2562
    %v3373 = vpack.c.b16 %v2869, %v2861
    %v3374 = vpack.c.b16 %v2870, %v2862
    %v3375 = vpack.c.b16 %v2871, %v2863
    %v3376 = vpack.c.b16 %v2872, %v2864
    %v3377 = vpack.c.b16 %v2873, %v2865
    %v3378 = vpack.c.b16 %v2874, %v2866
    %v3379 = vpack.c.b16 %v2875, %v2867
    %v3380 = vpack.c.b16 %v2876, %v2868
    %v3381 = vpack.c.b16 %v2885, %v2877
    %v3382 = vpack.c.b16 %v2886, %v2878
    %v3383 = vpack.c.b16 %v2887, %v2879
    %v3384 = vpack.c.b16 %v2888, %v2880
    %v3385 = vpack.c.b16 %v2889, %v2881
    %v3386 = vpack.c.b16 %v2890, %v2882
    %v3387 = vpack.c.b16 %v2891, %v2883
    %v3388 = vpack.c.b16 %v2892, %v2884
    %v3389 = vpack.c.b16 %v2901, %v2893
    %v3390 = vpack.c.b16 %v2902, %v2894
    %v3391 = vpack.c.b16 %v2903, %v2895
    %v3392 = vpack.c.b16 %v2904, %v2896
    %v3393 = vpack.c.b16 %v2905, %v2897
    %v3394 = vpack.c.b16 %v2906, %v2898
    %v3395 = vpack.c.b16 %v2907, %v2899
    %v3396 = vpack.c.b16 %v2908, %v2900
    %v3397 = vpack.c.b16 %v2917, %v2909
    %v3398 = vpack.c.b16 %v2918, %v2910
    %v3399 = vpack.c.b16 %v2919, %v2911
    %v3400 = vpack.c.b16 %v2920, %v2912
    %v3401 = vpack.c.b16 %v2921, %v2913
    %v3402 = vpack.c.b16 %v2922, %v2914
    %v3403 = vpack.c.b16 %v2923, %v2915
    %v3404 = vpack.c.b16 %v2924, %v2916
    %v3405 = vpack.c.b16 %v2933, %v2925
    %v3406 = vpack.c.b16 %v2934, %v2926
    %v3407 = vpack.c.b16 %v2935, %v2927
    %v3408 = vpack.c.b16 %v2936, %v2928
    %v3409 = vpack.c.b16 %v2937, %v2929
    %v3410 = vpack.c.b16 %v2938, %v2930
    %v3411 = vpack.c.b16 %v2939, %v2931
    %v3412 = vpack.c.b16 %v2940, %v2932
    %v3413 = vpack.c.b16 %v2949, %v2941
    %v3414 = vpack.c.b16 %v2950, %v2942
    %v3415 = vpack.c.b16 %v2951, %v2943
    %v3416 = vpack.c.b16 %v2952, %v2944
    %v3417 = vpack.c.b16 %v2953, %v2945
    %v3418 = vpack.c.b16 %v2954, %v2946
    %v3419 = vpack.c.b16 %v2955, %v2947
    %v3420 = vpack.c.b16 %v2956, %v2948
    %v3421 = vpack.c.b16 %v2965, %v2957
    %v3422 = vpack.c.b16 %v2966, %v2958
    %v3423 = vpack.c.b16 %v2967, %v2959
    %v3424 = vpack.c.b16 %v2968, %v2960
    %v3425 = vpack.c.b16 %v2969, %v2961
    %v3426 = vpack.c.b16 %v2970, %v2962
    %v3427 = vpack.c.b16 %v2971, %v2963
    %v3428 = vpack.c.b16 %v2972, %v2964
    %v3429 = vpack.c.b16 %v2981, %v2973
    %v3430 = vpack.c.b16 %v2982, %v2974
    %v3431 = vpack.c.b16 %v2983, %v2975
    %v3432 = vpack.c.b16 %v2984, %v2976
    %v3433 = vpack.c.b16 %v2985, %v2977
    %v3434 = vpack.c.b16 %v2986, %v2978
    %v3435 = vpack.c.b16 %v2987, %v2979
    %v3436 = vpack.c.b16 %v2988, %v2980
    %v3437 = vpack.c.b16 %v2997, %v2989
    %v3438 = vpack.c.b16 %v2998, %v2990
    %v3439 = vpack.c.b16 %v2999, %v2991
    %v3440 = vpack.c.b16 %v3000, %v2992
    %v3441 = vpack.c.b16 %v3001, %v2993
    %v3442 = vpack.c.b16 %v3002, %v2994
    %v3443 = vpack.c.b16 %v3003, %v2995
    %v3444 = vpack.c.b16 %v3004, %v2996
    %v3445 = vpack.c.b16 %v3013, %v3005
    %v3446 = vpack.c.b16 %v3014, %v3006
    %v3447 = vpack.c.b16 %v3015, %v3007
    %v3448 = vpack.c.b16 %v3016, %v3008
    %v3449 = vpack.c.b16 %v3017, %v3009
    %v3450 = vpack.c.b16 %v3018, %v3010
    %v3451 = vpack.c.b16 %v3019, %v3011
    %v3452 = vpack.c.b16 %v3020, %v3012
    %v3453 = vpack.c.b16 %v3029, %v3021
    %v3454 = vpack.c.b16 %v3030, %v3022
    %v3455 = vpack.c.b16 %v3031, %v3023
    %v3456 = vpack.c.b16 %v3032, %v3024
    %v3457 = vpack.c.b16 %v3033, %v3025
    %v3458 = vpack.c.b16 %v3034, %v3026
    %v3459 = vpack.c.b16 %v3035, %v3027
    %v3460 = vpack.c.b16 %v3036, %v3028
    %v3461 = vpack.c.b16 %v3045, %v3037
    %v3462 = vpack.c.b16 %v3046, %v3038
    %v3463 = vpack.c.b16 %v3047, %v3039
    %v3464 = vpack.c.b16 %v3048, %v3040
    %v3465 = vpack.c.b16 %v3049, %v3041
    %v3466 = vpack.c.b16 %v3050, %v3042
    %v3467 = vpack.c.b16 %v3051, %v3043
    %v3468 = vpack.c.b16 %v3052, %v3044
    %v3469 = vpack.c.b16 %v3061, %v3053
    %v3470 = vpack.c.b16 %v3062, %v3054
    %v3471 = vpack.c.b16 %v3063, %v3055
    %v3472 = vpack.c.b16 %v3064, %v3056
    %v3473 = vpack.c.b16 %v3065, %v3057
    %v3474 = vpack.c.b16 %v3066, %v3058
    %v3475 = vpack.c.b16 %v3067, %v3059
    %v3476 = vpack.c.b16 %v3068, %v3060
    %v3477 = vpack.c.b16 %v3077, %v3069
    %v3478 = vpack.c.b16 %v3078, %v3070
    %v3479 = vpack.c.b16 %v3079, %v3071
    %v3480 = vpack.c.b16 %v3080, %v3072
    %v3481 = vpack.c.b16 %v3081, %v3073
    %v3482 = vpack.c.b16 %v3082, %v3074
    %v3483 = vpack.c.b16 %v3083, %v3075
    %v3484 = vpack.c.b16 %v3084, %v3076
    %v3485 = vpack.c.b16 %v3093, %v3085
    %v3486 = vpack.c.b16 %v3094, %v3086
    %v3487 = vpack.c.b16 %v3095, %v3087
    %v3488 = vpack.c.b16 %v3096, %v3088
    %v3489 = vpack.c.b16 %v3097, %v3089
    %v3490 = vpack.c.b16 %v3098, %v3090
    %v3491 = vpack.c.b16 %v3099, %v3091
    %v3492 = vpack.c.b16 %v3100, %v3092
    %v3493 = vpack.c.b16 %v3109, %v3101
    %v3494 = vpack.c.b16 %v3110, %v3102
    %v3495 = vpack.c.b16 %v3111, %v3103
    %v3496 = vpack.c.b16 %v3112, %v3104
    %v3497 = vpack.c.b16 %v3113, %v3105
    %v3498 = vpack.c.b16 %v3114, %v3106
    %v3499 = vpack.c.b16 %v3115, %v3107
    %v3500 = vpack.c.b16 %v3116, %v3108
    %v3501 = vpack.c.b16 %v3125, %v3117
    %v3502 = vpack.c.b16 %v3126, %v3118
    %v3503 = vpack.c.b16 %v3127, %v3119
    %v3504 = vpack.c.b16 %v3128, %v3120
    %v3505 = vpack.c.b16 %v3129, %v3121
    %v3506 = vpack.c.b16 %v3130, %v3122
    %v3507 = vpack.c.b16 %v3131, %v3123
    %v3508 = vpack.c.b16 %v3132, %v3124
    %v3509 = vpack.c.b16 %v3141, %v3133
    %v3510 = vpack.c.b16 %v3142, %v3134
    %v3511 = vpack.c.b16 %v3143, %v3135
    %v3512 = vpack.c.b16 %v3144, %v3136
    %v3513 = vpack.c.b16 %v3145, %v3137
    %v3514 = vpack.c.b16 %v3146, %v3138
    %v3515 = vpack.c.b16 %v3147, %v3139
    %v3516 = vpack.c.b16 %v3148, %v3140
    %v3517 = vpack.c.b16 %v3157, %v3149
    %v3518 = vpack.c.b16 %v3158, %v3150
    %v3519 = vpack.c.b16 %v3159, %v3151
    %v3520 = vpack.c.b16 %v3160, %v3152
    %v3521 = vpack.c.b16 %v3161, %v3153
    %v3522 = vpack.c.b16 %v3162, %v3154
    %v3523 = vpack.c.b16 %v3163, %v3155
    %v3524 = vpack.c.b16 %v3164, %v3156
    %v3525 = vpack.c.b16 %v3173, %v3165
    %v3526 = vpack.c.b16 %v3174, %v3166
    %v3527 = vpack.c.b16 %v3175, %v3167
    %v3528 = vpack.c.b16 %v3176, %v3168
    %v3529 = vpack.c.b16 %v3177, %v3169
    %v3530 = vpack.c.b16 %v3178, %v3170
    %v3531 = vpack.c.b16 %v3179, %v3171
    %v3532 = vpack.c.b16 %v3180, %v3172
    %v3533 = vpack.c.b16 %v3189, %v3181
    %v3534 = vpack.c.b16 %v3190, %v3182
    %v3535 = vpack.c.b16 %v3191, %v3183
    %v3536 = vpack.c.b16 %v3192, %v3184
    %v3537 = vpack.c.b16 %v3193, %v3185
    %v3538 = vpack.c.b16 %v3194, %v3186
    %v3539 = vpack.c.b16 %v3195, %v3187
    %v3540 = vpack.c.b16 %v3196, %v3188
    %v3541 = vpack.c.b16 %v3205, %v3197
    %v3542 = vpack.c.b16 %v3206, %v3198
    %v3543 = vpack.c.b16 %v3207, %v3199
    %v3544 = vpack.c.b16 %v3208, %v3200
    %v3545 = vpack.c.b16 %v3209, %v3201
    %v3546 = vpack.c.b16 %v3210, %v3202
    %v3547 = vpack.c.b16 %v3211, %v3203
    %v3548 = vpack.c.b16 %v3212, %v3204
    %v3549 = vpack.c.b16 %v3221, %v3213
    %v3550 = vpack.c.b16 %v3222, %v3214
    %v3551 = vpack.c.b16 %v3223, %v3215
    %v3552 = vpack.c.b16 %v3224, %v3216
    %v3553 = vpack.c.b16 %v3225, %v3217
    %v3554 = vpack.c.b16 %v3226, %v3218
    %v3555 = vpack.c.b16 %v3227, %v3219
    %v3556 = vpack.c.b16 %v3228, %v3220
    %v3557 = vpack.c.b16 %v3237, %v3229
    %v3558 = vpack.c.b16 %v3238, %v3230
    %v3559 = vpack.c.b16 %v3239, %v3231
    %v3560 = vpack.c.b16 %v3240, %v3232
    %v3561 = vpack.c.b16 %v3241, %v3233
    %v3562 = vpack.c.b16 %v3242, %v3234
    %v3563 = vpack.c.b16 %v3243, %v3235
    %v3564 = vpack.c.b16 %v3244, %v3236
    %v3565 = vpack.c.b16 %v3253, %v3245
    %v3566 = vpack.c.b16 %v3254, %v3246
    %v3567 = vpack.c.b16 %v3255, %v3247
    %v3568 = vpack.c.b16 %v3256, %v3248
    %v3569 = vpack.c.b16 %v3257, %v3249
    %v3570 = vpack.c.b16 %v3258, %v3250
    %v3571 = vpack.c.b16 %v3259, %v3251
    %v3572 = vpack.c.b16 %v3260, %v3252
    %v3573 = vpack.c.b16 %v3269, %v3261
    %v3574 = vpack.c.b16 %v3270, %v3262
    %v3575 = vpack.c.b16 %v3271, %v3263
    %v3576 = vpack.c.b16 %v3272, %v3264
    %v3577 = vpack.c.b16 %v3273, %v3265
    %v3578 = vpack.c.b16 %v3274, %v3266
    %v3579 = vpack.c.b16 %v3275, %v3267
    %v3580 = vpack.c.b16 %v3276, %v3268
    %v3581 = vpack.c.b16 %v3285, %v3277
    %v3582 = vpack.c.b16 %v3286, %v3278
    %v3583 = vpack.c.b16 %v3287, %v3279
    %v3584 = vpack.c.b16 %v3288, %v3280
    %v3585 = vpack.c.b16 %v3289, %v3281
    %v3586 = vpack.c.b16 %v3290, %v3282
    %v3587 = vpack.c.b16 %v3291, %v3283
    %v3588 = vpack.c.b16 %v3292, %v3284
    %v3589 = vpack.c.b16 %v3301, %v3293
    %v3590 = vpack.c.b16 %v3302, %v3294
    %v3591 = vpack.c.b16 %v3303, %v3295
    %v3592 = vpack.c.b16 %v3304, %v3296
    %v3593 = vpack.c.b16 %v3305, %v3297
    %v3594 = vpack.c.b16 %v3306, %v3298
    %v3595 = vpack.c.b16 %v3307, %v3299
    %v3596 = vpack.c.b16 %v3308, %v3300
    %v3597 = vpack.c.b16 %v3317, %v3309
    %v3598 = vpack.c.b16 %v3318, %v3310
    %v3599 = vpack.c.b16 %v3319, %v3311
    %v3600 = vpack.c.b16 %v3320, %v3312
    %v3601 = vpack.c.b16 %v3321, %v3313
    %v3602 = vpack.c.b16 %v3322, %v3314
    %v3603 = vpack.c.b16 %v3323, %v3315
    %v3604 = vpack.c.b16 %v3324, %v3316
    %v3605 = vpack.c.b16 %v3333, %v3325
    %v3606 = vpack.c.b16 %v3334, %v3326
    %v3607 = vpack.c.b16 %v3335, %v3327
    %v3608 = vpack.c.b16 %v3336, %v3328
    %v3609 = vpack.c.b16 %v3337, %v3329
    %v3610 = vpack.c.b16 %v3338, %v3330
    %v3611 = vpack.c.b16 %v3339, %v3331
    %v3612 = vpack.c.b16 %v3340, %v3332
    %v3613 = vpack.c.b16 %v3349, %v3341
    %v3614 = vpack.c.b16 %v3350, %v3342
    %v3615 = vpack.c.b16 %v3351, %v3343
    %v3616 = vpack.c.b16 %v3352, %v3344
    %v3617 = vpack.c.b16 %v3353, %v3345
    %v3618 = vpack.c.b16 %v3354, %v3346
    %v3619 = vpack.c.b16 %v3355, %v3347
    %v3620 = vpack.c.b16 %v3356, %v3348
    %v3621 = vpack.c.b16 %v3365, %v3357
    %v3622 = vpack.c.b16 %v3366, %v3358
    %v3623 = vpack.c.b16 %v3367, %v3359
    %v3624 = vpack.c.b16 %v3368, %v3360
    %v3625 = vpack.c.b16 %v3369, %v3361
    %v3626 = vpack.c.b16 %v3370, %v3362
    %v3627 = vpack.c.b16 %v3371, %v3363
    %v3628 = vpack.c.b16 %v3372, %v3364
    %3885 = vmatprep.subr.bf16.mxu0 %v3430
    %3886 = vmatpush1.bf16.msra.mxu0 %v3429
    %3887 = vmatprep.subr.bf16.mxu0 %v3422
    %3888 = vmatpush1.bf16.msra.mxu0 %v3421
    %3889 = vmatprep.subr.bf16.mxu0 %v3414
    %3890 = vmatpush1.bf16.msra.mxu0 %v3413
    %3891 = vmatprep.subr.bf16.mxu0 %v3406
    %3892 = vmatpush1.bf16.msra.mxu0 %v3405
    %3893 = vmatprep.subr.bf16.mxu0 %v3398
    %3894 = vmatpush1.bf16.msra.mxu0 %v3397
    %3895 = vmatprep.subr.bf16.mxu0 %v3390
    %3896 = vmatpush1.bf16.msra.mxu0 %v3389
    %3897 = vmatprep.subr.bf16.mxu0 %v3382
    %3898 = vmatpush1.bf16.msra.mxu0 %v3381
    %3899 = vmatprep.subr.bf16.mxu0 %v3374
    %3900 = vmatpush1.bf16.msra.mxu0 %v3373
    %3901 = vmatprep.subr.bf16.mxu0 %v3494
    %3902 = vmatpush2.bf16.msra.mxu0 %v3493
    %3903 = vmatprep.subr.bf16.mxu0 %v3486
    %3904 = vmatpush2.bf16.msra.mxu0 %v3485
    %3905 = vmatprep.subr.bf16.mxu0 %v3478
    %3906 = vmatpush2.bf16.msra.mxu0 %v3477
    %3907 = vmatprep.subr.bf16.mxu0 %v3470
    %3908 = vmatpush2.bf16.msra.mxu0 %v3469
    %3909 = vmatprep.subr.bf16.mxu0 %v3462
    %3910 = vmatpush2.bf16.msra.mxu0 %v3461
    %3911 = vmatprep.subr.bf16.mxu0 %v3454
    %3912 = vmatpush2.bf16.msra.mxu0 %v3453
    %3913 = vmatprep.subr.bf16.mxu0 %v3446
    %3914 = vmatpush2.bf16.msra.mxu0 %v3445
    %3915 = vmatprep.subr.bf16.mxu0 %v3438
    %3916 = vmatpush2.bf16.msra.mxu0 %v3437
    %3917 = vmatprep.mubr.bf16.mxu0 %v2276
    %3918 = vmatmul.mubr.bf16.gmra.mxu0 %v2275
    %v3919 = vpop.f32.mrf.mxu0
    %v3920 = vadd.f32 %v2568, %v3919
    %v3921 = vpop.f32.mrf.mxu0
    %v3922 = vadd.f32 %v2572, %v3921
    %v3923 = vpop.f32.mrf.mxu0
    %v3924 = vadd.f32 %v2568, %v3923
    %v3925 = vpop.f32.mrf.mxu0
    %v3926 = vadd.f32 %v2572, %v3925
    %3927 = vmatprep.mubr.bf16.mxu0 %v2280
    %3928 = vmatmul.mubr.bf16.gmra.mxu0 %v2279
    %v3929 = vpop.f32.mrf.mxu0
    %v3930 = vadd.f32 %v2568, %v3929
    %v3931 = vpop.f32.mrf.mxu0
    %v3932 = vadd.f32 %v2572, %v3931
    %v3933 = vpop.f32.mrf.mxu0
    %v3934 = vadd.f32 %v2568, %v3933
    %v3935 = vpop.f32.mrf.mxu0
    %v3936 = vadd.f32 %v2572, %v3935
    %3937 = vmatprep.mubr.bf16.mxu0 %v2284
    %3938 = vmatmul.mubr.bf16.gmra.mxu0 %v2283
    %v3939 = vpop.f32.mrf.mxu0
    %v3940 = vadd.f32 %v2568, %v3939
    %v3941 = vpop.f32.mrf.mxu0
    %v3942 = vadd.f32 %v2572, %v3941
    %v3943 = vpop.f32.mrf.mxu0
    %v3944 = vadd.f32 %v2568, %v3943
    %v3945 = vpop.f32.mrf.mxu0
    %v3946 = vadd.f32 %v2572, %v3945
    %3947 = vmatprep.mubr.bf16.mxu0 %v2288
    %3948 = vmatmul.mubr.bf16.gmra.mxu0 %v2287
    %v3949 = vpop.f32.mrf.mxu0
    %v3950 = vadd.f32 %v2568, %v3949
    %v3951 = vpop.f32.mrf.mxu0
    %v3952 = vadd.f32 %v2572, %v3951
    %v3953 = vpop.f32.mrf.mxu0
    %v3954 = vadd.f32 %v2568, %v3953
    %v3955 = vpop.f32.mrf.mxu0
    %v3956 = vadd.f32 %v2572, %v3955
    %3957 = vmatprep.mubr.bf16.mxu0 %v2292
    %3958 = vmatmul.mubr.bf16.gmra.mxu0 %v2291
    %v3959 = vpop.f32.mrf.mxu0
    %v3960 = vadd.f32 %v2568, %v3959
    %v3961 = vpop.f32.mrf.mxu0
    %v3962 = vadd.f32 %v2572, %v3961
    %v3963 = vpop.f32.mrf.mxu0
    %v3964 = vadd.f32 %v2568, %v3963
    %v3965 = vpop.f32.mrf.mxu0
    %v3966 = vadd.f32 %v2572, %v3965
    %3967 = vmatprep.mubr.bf16.mxu0 %v2296
    %3968 = vmatmul.mubr.bf16.gmra.mxu0 %v2295
    %v3969 = vpop.f32.mrf.mxu0
    %v3970 = vadd.f32 %v2568, %v3969
    %v3971 = vpop.f32.mrf.mxu0
    %v3972 = vadd.f32 %v2572, %v3971
    %v3973 = vpop.f32.mrf.mxu0
    %v3974 = vadd.f32 %v2568, %v3973
    %v3975 = vpop.f32.mrf.mxu0
    %v3976 = vadd.f32 %v2572, %v3975
    %3977 = vmatprep.mubr.bf16.mxu0 %v2300
    %3978 = vmatmul.mubr.bf16.gmra.mxu0 %v2299
    %v3979 = vpop.f32.mrf.mxu0
    %v3980 = vadd.f32 %v2568, %v3979
    %v3981 = vpop.f32.mrf.mxu0
    %v3982 = vadd.f32 %v2572, %v3981
    %v3983 = vpop.f32.mrf.mxu0
    %v3984 = vadd.f32 %v2568, %v3983
    %v3985 = vpop.f32.mrf.mxu0
    %v3986 = vadd.f32 %v2572, %v3985
    %3987 = vmatprep.mubr.bf16.mxu0 %v2304
    %3988 = vmatmul.mubr.bf16.gmra.mxu0 %v2303
    %v3989 = vpop.f32.mrf.mxu0
    %v3990 = vadd.f32 %v2568, %v3989
    %v3991 = vpop.f32.mrf.mxu0
    %v3992 = vadd.f32 %v2572, %v3991
    %v3993 = vpop.f32.mrf.mxu0
    %v3994 = vadd.f32 %v2568, %v3993
    %v3995 = vpop.f32.mrf.mxu0
    %v3996 = vadd.f32 %v2572, %v3995
    %3997 = vdwg.mxu0
    %3998 = vmatprep.subr.bf16.mxu0 %v3558
    %3999 = vmatpush1.bf16.msra.mxu0 %v3557
    %4000 = vmatprep.subr.bf16.mxu0 %v3550
    %4001 = vmatpush1.bf16.msra.mxu0 %v3549
    %4002 = vmatprep.subr.bf16.mxu0 %v3542
    %4003 = vmatpush1.bf16.msra.mxu0 %v3541
    %4004 = vmatprep.subr.bf16.mxu0 %v3534
    %4005 = vmatpush1.bf16.msra.mxu0 %v3533
    %4006 = vmatprep.subr.bf16.mxu0 %v3526
    %4007 = vmatpush1.bf16.msra.mxu0 %v3525
    %4008 = vmatprep.subr.bf16.mxu0 %v3518
    %4009 = vmatpush1.bf16.msra.mxu0 %v3517
    %4010 = vmatprep.subr.bf16.mxu0 %v3510
    %4011 = vmatpush1.bf16.msra.mxu0 %v3509
    %4012 = vmatprep.subr.bf16.mxu0 %v3502
    %4013 = vmatpush1.bf16.msra.mxu0 %v3501
    %4014 = vmatprep.subr.bf16.mxu0 %v3622
    %4015 = vmatpush2.bf16.msra.mxu0 %v3621
    %4016 = vmatprep.subr.bf16.mxu0 %v3614
    %4017 = vmatpush2.bf16.msra.mxu0 %v3613
    %4018 = vmatprep.subr.bf16.mxu0 %v3606
    %4019 = vmatpush2.bf16.msra.mxu0 %v3605
    %4020 = vmatprep.subr.bf16.mxu0 %v3598
    %4021 = vmatpush2.bf16.msra.mxu0 %v3597
    %4022 = vmatprep.subr.bf16.mxu0 %v3590
    %4023 = vmatpush2.bf16.msra.mxu0 %v3589
    %4024 = vmatprep.subr.bf16.mxu0 %v3582
    %4025 = vmatpush2.bf16.msra.mxu0 %v3581
    %4026 = vmatprep.subr.bf16.mxu0 %v3574
    %4027 = vmatpush2.bf16.msra.mxu0 %v3573
    %4028 = vmatprep.subr.bf16.mxu0 %v3566
    %4029 = vmatpush2.bf16.msra.mxu0 %v3565
    %4030 = vmatprep.mubr.bf16.mxu0 %v2278
    %4031 = vmatmul.mubr.bf16.gmra.mxu0 %v2277
    %v4032 = vpop.f32.mrf.mxu0
    %v4033 = vadd.f32 %v3920, %v4032
    %v4034 = vpop.f32.mrf.mxu0
    %v4035 = vadd.f32 %v3922, %v4034
    %v4036 = vpop.f32.mrf.mxu0
    %v4037 = vadd.f32 %v3924, %v4036
    %v4038 = vpop.f32.mrf.mxu0
    %v4039 = vadd.f32 %v3926, %v4038
    %4040 = vmatprep.mubr.bf16.mxu0 %v2282
    %4041 = vmatmul.mubr.bf16.gmra.mxu0 %v2281
    %v4042 = vpop.f32.mrf.mxu0
    %v4043 = vadd.f32 %v3930, %v4042
    %v4044 = vpop.f32.mrf.mxu0
    %v4045 = vadd.f32 %v3932, %v4044
    %v4046 = vpop.f32.mrf.mxu0
    %v4047 = vadd.f32 %v3934, %v4046
    %v4048 = vpop.f32.mrf.mxu0
    %v4049 = vadd.f32 %v3936, %v4048
    %4050 = vmatprep.mubr.bf16.mxu0 %v2286
    %4051 = vmatmul.mubr.bf16.gmra.mxu0 %v2285
    %v4052 = vpop.f32.mrf.mxu0
    %v4053 = vadd.f32 %v3940, %v4052
    %v4054 = vpop.f32.mrf.mxu0
    %v4055 = vadd.f32 %v3942, %v4054
    %v4056 = vpop.f32.mrf.mxu0
    %v4057 = vadd.f32 %v3944, %v4056
    %v4058 = vpop.f32.mrf.mxu0
    %v4059 = vadd.f32 %v3946, %v4058
    %4060 = vmatprep.mubr.bf16.mxu0 %v2290
    %4061 = vmatmul.mubr.bf16.gmra.mxu0 %v2289
    %v4062 = vpop.f32.mrf.mxu0
    %v4063 = vadd.f32 %v3950, %v4062
    %v4064 = vpop.f32.mrf.mxu0
    %v4065 = vadd.f32 %v3952, %v4064
    %v4066 = vpop.f32.mrf.mxu0
    %v4067 = vadd.f32 %v3954, %v4066
    %v4068 = vpop.f32.mrf.mxu0
    %v4069 = vadd.f32 %v3956, %v4068
    %4070 = vmatprep.mubr.bf16.mxu0 %v2294
    %4071 = vmatmul.mubr.bf16.gmra.mxu0 %v2293
    %v4072 = vpop.f32.mrf.mxu0
    %v4073 = vadd.f32 %v3960, %v4072
    %v4074 = vpop.f32.mrf.mxu0
    %v4075 = vadd.f32 %v3962, %v4074
    %v4076 = vpop.f32.mrf.mxu0
    %v4077 = vadd.f32 %v3964, %v4076
    %v4078 = vpop.f32.mrf.mxu0
    %v4079 = vadd.f32 %v3966, %v4078
    %4080 = vmatprep.mubr.bf16.mxu0 %v2298
    %4081 = vmatmul.mubr.bf16.gmra.mxu0 %v2297
    %v4082 = vpop.f32.mrf.mxu0
    %v4083 = vadd.f32 %v3970, %v4082
    %v4084 = vpop.f32.mrf.mxu0
    %v4085 = vadd.f32 %v3972, %v4084
    %v4086 = vpop.f32.mrf.mxu0
    %v4087 = vadd.f32 %v3974, %v4086
    %v4088 = vpop.f32.mrf.mxu0
    %v4089 = vadd.f32 %v3976, %v4088
    %4090 = vmatprep.mubr.bf16.mxu0 %v2302
    %4091 = vmatmul.mubr.bf16.gmra.mxu0 %v2301
    %v4092 = vpop.f32.mrf.mxu0
    %v4093 = vadd.f32 %v3980, %v4092
    %v4094 = vpop.f32.mrf.mxu0
    %v4095 = vadd.f32 %v3982, %v4094
    %v4096 = vpop.f32.mrf.mxu0
    %v4097 = vadd.f32 %v3984, %v4096
    %v4098 = vpop.f32.mrf.mxu0
    %v4099 = vadd.f32 %v3986, %v4098
    %4100 = vmatprep.mubr.bf16.mxu0 %v2306
    %4101 = vmatmul.mubr.bf16.gmra.mxu0 %v2305
    %v4102 = vpop.f32.mrf.mxu0
    %v4103 = vadd.f32 %v3990, %v4102
    %v4104 = vpop.f32.mrf.mxu0
    %v4105 = vadd.f32 %v3992, %v4104
    %v4106 = vpop.f32.mrf.mxu0
    %v4107 = vadd.f32 %v3994, %v4106
    %v4108 = vpop.f32.mrf.mxu0
    %v4109 = vadd.f32 %v3996, %v4108
    %4110 = vdwg.mxu0
    %4111 = vmatprep.subr.bf16.mxu0 %v3432
    %4112 = vmatpush1.bf16.msra.mxu0 %v3431
    %4113 = vmatprep.subr.bf16.mxu0 %v3424
    %4114 = vmatpush1.bf16.msra.mxu0 %v3423
    %4115 = vmatprep.subr.bf16.mxu0 %v3416
    %4116 = vmatpush1.bf16.msra.mxu0 %v3415
    %4117 = vmatprep.subr.bf16.mxu0 %v3408
    %4118 = vmatpush1.bf16.msra.mxu0 %v3407
    %4119 = vmatprep.subr.bf16.mxu0 %v3400
    %4120 = vmatpush1.bf16.msra.mxu0 %v3399
    %4121 = vmatprep.subr.bf16.mxu0 %v3392
    %4122 = vmatpush1.bf16.msra.mxu0 %v3391
    %4123 = vmatprep.subr.bf16.mxu0 %v3384
    %4124 = vmatpush1.bf16.msra.mxu0 %v3383
    %4125 = vmatprep.subr.bf16.mxu0 %v3376
    %4126 = vmatpush1.bf16.msra.mxu0 %v3375
    %4127 = vmatprep.subr.bf16.mxu0 %v3496
    %4128 = vmatpush2.bf16.msra.mxu0 %v3495
    %4129 = vmatprep.subr.bf16.mxu0 %v3488
    %4130 = vmatpush2.bf16.msra.mxu0 %v3487
    %4131 = vmatprep.subr.bf16.mxu0 %v3480
    %4132 = vmatpush2.bf16.msra.mxu0 %v3479
    %4133 = vmatprep.subr.bf16.mxu0 %v3472
    %4134 = vmatpush2.bf16.msra.mxu0 %v3471
    %4135 = vmatprep.subr.bf16.mxu0 %v3464
    %4136 = vmatpush2.bf16.msra.mxu0 %v3463
    %4137 = vmatprep.subr.bf16.mxu0 %v3456
    %4138 = vmatpush2.bf16.msra.mxu0 %v3455
    %4139 = vmatprep.subr.bf16.mxu0 %v3448
    %4140 = vmatpush2.bf16.msra.mxu0 %v3447
    %4141 = vmatprep.subr.bf16.mxu0 %v3440
    %4142 = vmatpush2.bf16.msra.mxu0 %v3439
    %4143 = vmatprep.mubr.bf16.mxu0 %v2276
    %4144 = vmatmul.mubr.bf16.gmra.mxu0 %v2275
    %v4145 = vpop.f32.mrf.mxu0
    %v4146 = vadd.f32 %v2576, %v4145
    %v4147 = vpop.f32.mrf.mxu0
    %v4148 = vadd.f32 %v2580, %v4147
    %v4149 = vpop.f32.mrf.mxu0
    %v4150 = vadd.f32 %v2576, %v4149
    %v4151 = vpop.f32.mrf.mxu0
    %v4152 = vadd.f32 %v2580, %v4151
    %4153 = vmatprep.mubr.bf16.mxu0 %v2280
    %4154 = vmatmul.mubr.bf16.gmra.mxu0 %v2279
    %v4155 = vpop.f32.mrf.mxu0
    %v4156 = vadd.f32 %v2576, %v4155
    %v4157 = vpop.f32.mrf.mxu0
    %v4158 = vadd.f32 %v2580, %v4157
    %v4159 = vpop.f32.mrf.mxu0
    %v4160 = vadd.f32 %v2576, %v4159
    %v4161 = vpop.f32.mrf.mxu0
    %v4162 = vadd.f32 %v2580, %v4161
    %4163 = vmatprep.mubr.bf16.mxu0 %v2284
    %4164 = vmatmul.mubr.bf16.gmra.mxu0 %v2283
    %v4165 = vpop.f32.mrf.mxu0
    %v4166 = vadd.f32 %v2576, %v4165
    %v4167 = vpop.f32.mrf.mxu0
    %v4168 = vadd.f32 %v2580, %v4167
    %v4169 = vpop.f32.mrf.mxu0
    %v4170 = vadd.f32 %v2576, %v4169
    %v4171 = vpop.f32.mrf.mxu0
    %v4172 = vadd.f32 %v2580, %v4171
    %4173 = vmatprep.mubr.bf16.mxu0 %v2288
    %4174 = vmatmul.mubr.bf16.gmra.mxu0 %v2287
    %v4175 = vpop.f32.mrf.mxu0
    %v4176 = vadd.f32 %v2576, %v4175
    %v4177 = vpop.f32.mrf.mxu0
    %v4178 = vadd.f32 %v2580, %v4177
    %v4179 = vpop.f32.mrf.mxu0
    %v4180 = vadd.f32 %v2576, %v4179
    %v4181 = vpop.f32.mrf.mxu0
    %v4182 = vadd.f32 %v2580, %v4181
    %4183 = vmatprep.mubr.bf16.mxu0 %v2292
    %4184 = vmatmul.mubr.bf16.gmra.mxu0 %v2291
    %v4185 = vpop.f32.mrf.mxu0
    %v4186 = vadd.f32 %v2576, %v4185
    %v4187 = vpop.f32.mrf.mxu0
    %v4188 = vadd.f32 %v2580, %v4187
    %v4189 = vpop.f32.mrf.mxu0
    %v4190 = vadd.f32 %v2576, %v4189
    %v4191 = vpop.f32.mrf.mxu0
    %v4192 = vadd.f32 %v2580, %v4191
    %4193 = vmatprep.mubr.bf16.mxu0 %v2296
    %4194 = vmatmul.mubr.bf16.gmra.mxu0 %v2295
    %v4195 = vpop.f32.mrf.mxu0
    %v4196 = vadd.f32 %v2576, %v4195
    %v4197 = vpop.f32.mrf.mxu0
    %v4198 = vadd.f32 %v2580, %v4197
    %v4199 = vpop.f32.mrf.mxu0
    %v4200 = vadd.f32 %v2576, %v4199
    %v4201 = vpop.f32.mrf.mxu0
    %v4202 = vadd.f32 %v2580, %v4201
    %4203 = vmatprep.mubr.bf16.mxu0 %v2300
    %4204 = vmatmul.mubr.bf16.gmra.mxu0 %v2299
    %v4205 = vpop.f32.mrf.mxu0
    %v4206 = vadd.f32 %v2576, %v4205
    %v4207 = vpop.f32.mrf.mxu0
    %v4208 = vadd.f32 %v2580, %v4207
    %v4209 = vpop.f32.mrf.mxu0
    %v4210 = vadd.f32 %v2576, %v4209
    %v4211 = vpop.f32.mrf.mxu0
    %v4212 = vadd.f32 %v2580, %v4211
    %4213 = vmatprep.mubr.bf16.mxu0 %v2304
    %4214 = vmatmul.mubr.bf16.gmra.mxu0 %v2303
    %v4215 = vpop.f32.mrf.mxu0
    %v4216 = vadd.f32 %v2576, %v4215
    %v4217 = vpop.f32.mrf.mxu0
    %v4218 = vadd.f32 %v2580, %v4217
    %v4219 = vpop.f32.mrf.mxu0
    %v4220 = vadd.f32 %v2576, %v4219
    %v4221 = vpop.f32.mrf.mxu0
    %v4222 = vadd.f32 %v2580, %v4221
    %4223 = vdwg.mxu0
    %4224 = vmatprep.subr.bf16.mxu0 %v3560
    %4225 = vmatpush1.bf16.msra.mxu0 %v3559
    %4226 = vmatprep.subr.bf16.mxu0 %v3552
    %4227 = vmatpush1.bf16.msra.mxu0 %v3551
    %4228 = vmatprep.subr.bf16.mxu0 %v3544
    %4229 = vmatpush1.bf16.msra.mxu0 %v3543
    %4230 = vmatprep.subr.bf16.mxu0 %v3536
    %4231 = vmatpush1.bf16.msra.mxu0 %v3535
    %4232 = vmatprep.subr.bf16.mxu0 %v3528
    %4233 = vmatpush1.bf16.msra.mxu0 %v3527
    %4234 = vmatprep.subr.bf16.mxu0 %v3520
    %4235 = vmatpush1.bf16.msra.mxu0 %v3519
    %4236 = vmatprep.subr.bf16.mxu0 %v3512
    %4237 = vmatpush1.bf16.msra.mxu0 %v3511
    %4238 = vmatprep.subr.bf16.mxu0 %v3504
    %4239 = vmatpush1.bf16.msra.mxu0 %v3503
    %4240 = vmatprep.subr.bf16.mxu0 %v3624
    %4241 = vmatpush2.bf16.msra.mxu0 %v3623
    %4242 = vmatprep.subr.bf16.mxu0 %v3616
    %4243 = vmatpush2.bf16.msra.mxu0 %v3615
    %4244 = vmatprep.subr.bf16.mxu0 %v3608
    %4245 = vmatpush2.bf16.msra.mxu0 %v3607
    %4246 = vmatprep.subr.bf16.mxu0 %v3600
    %4247 = vmatpush2.bf16.msra.mxu0 %v3599
    %4248 = vmatprep.subr.bf16.mxu0 %v3592
    %4249 = vmatpush2.bf16.msra.mxu0 %v3591
    %4250 = vmatprep.subr.bf16.mxu0 %v3584
    %4251 = vmatpush2.bf16.msra.mxu0 %v3583
    %4252 = vmatprep.subr.bf16.mxu0 %v3576
    %4253 = vmatpush2.bf16.msra.mxu0 %v3575
    %4254 = vmatprep.subr.bf16.mxu0 %v3568
    %4255 = vmatpush2.bf16.msra.mxu0 %v3567
    %4256 = vmatprep.mubr.bf16.mxu0 %v2278
    %4257 = vmatmul.mubr.bf16.gmra.mxu0 %v2277
    %v4258 = vpop.f32.mrf.mxu0
    %v4259 = vadd.f32 %v4146, %v4258
    %v4260 = vpop.f32.mrf.mxu0
    %v4261 = vadd.f32 %v4148, %v4260
    %v4262 = vpop.f32.mrf.mxu0
    %v4263 = vadd.f32 %v4150, %v4262
    %v4264 = vpop.f32.mrf.mxu0
    %v4265 = vadd.f32 %v4152, %v4264
    %4266 = vmatprep.mubr.bf16.mxu0 %v2282
    %4267 = vmatmul.mubr.bf16.gmra.mxu0 %v2281
    %v4268 = vpop.f32.mrf.mxu0
    %v4269 = vadd.f32 %v4156, %v4268
    %v4270 = vpop.f32.mrf.mxu0
    %v4271 = vadd.f32 %v4158, %v4270
    %v4272 = vpop.f32.mrf.mxu0
    %v4273 = vadd.f32 %v4160, %v4272
    %v4274 = vpop.f32.mrf.mxu0
    %v4275 = vadd.f32 %v4162, %v4274
    %4276 = vmatprep.mubr.bf16.mxu0 %v2286
    %4277 = vmatmul.mubr.bf16.gmra.mxu0 %v2285
    %v4278 = vpop.f32.mrf.mxu0
    %v4279 = vadd.f32 %v4166, %v4278
    %v4280 = vpop.f32.mrf.mxu0
    %v4281 = vadd.f32 %v4168, %v4280
    %v4282 = vpop.f32.mrf.mxu0
    %v4283 = vadd.f32 %v4170, %v4282
    %v4284 = vpop.f32.mrf.mxu0
    %v4285 = vadd.f32 %v4172, %v4284
    %4286 = vmatprep.mubr.bf16.mxu0 %v2290
    %4287 = vmatmul.mubr.bf16.gmra.mxu0 %v2289
    %v4288 = vpop.f32.mrf.mxu0
    %v4289 = vadd.f32 %v4176, %v4288
    %v4290 = vpop.f32.mrf.mxu0
    %v4291 = vadd.f32 %v4178, %v4290
    %v4292 = vpop.f32.mrf.mxu0
    %v4293 = vadd.f32 %v4180, %v4292
    %v4294 = vpop.f32.mrf.mxu0
    %v4295 = vadd.f32 %v4182, %v4294
    %4296 = vmatprep.mubr.bf16.mxu0 %v2294
    %4297 = vmatmul.mubr.bf16.gmra.mxu0 %v2293
    %v4298 = vpop.f32.mrf.mxu0
    %v4299 = vadd.f32 %v4186, %v4298
    %v4300 = vpop.f32.mrf.mxu0
    %v4301 = vadd.f32 %v4188, %v4300
    %v4302 = vpop.f32.mrf.mxu0
    %v4303 = vadd.f32 %v4190, %v4302
    %v4304 = vpop.f32.mrf.mxu0
    %v4305 = vadd.f32 %v4192, %v4304
    %4306 = vmatprep.mubr.bf16.mxu0 %v2298
    %4307 = vmatmul.mubr.bf16.gmra.mxu0 %v2297
    %v4308 = vpop.f32.mrf.mxu0
    %v4309 = vadd.f32 %v4196, %v4308
    %v4310 = vpop.f32.mrf.mxu0
    %v4311 = vadd.f32 %v4198, %v4310
    %v4312 = vpop.f32.mrf.mxu0
    %v4313 = vadd.f32 %v4200, %v4312
    %v4314 = vpop.f32.mrf.mxu0
    %v4315 = vadd.f32 %v4202, %v4314
    %4316 = vmatprep.mubr.bf16.mxu0 %v2302
    %4317 = vmatmul.mubr.bf16.gmra.mxu0 %v2301
    %v4318 = vpop.f32.mrf.mxu0
    %v4319 = vadd.f32 %v4206, %v4318
    %v4320 = vpop.f32.mrf.mxu0
    %v4321 = vadd.f32 %v4208, %v4320
    %v4322 = vpop.f32.mrf.mxu0
    %v4323 = vadd.f32 %v4210, %v4322
    %v4324 = vpop.f32.mrf.mxu0
    %v4325 = vadd.f32 %v4212, %v4324
    %4326 = vmatprep.mubr.bf16.mxu0 %v2306
    %4327 = vmatmul.mubr.bf16.gmra.mxu0 %v2305
    %v4328 = vpop.f32.mrf.mxu0
    %v4329 = vadd.f32 %v4216, %v4328
    %v4330 = vpop.f32.mrf.mxu0
    %v4331 = vadd.f32 %v4218, %v4330
    %v4332 = vpop.f32.mrf.mxu0
    %v4333 = vadd.f32 %v4220, %v4332
    %v4334 = vpop.f32.mrf.mxu0
    %v4335 = vadd.f32 %v4222, %v4334
    %4336 = vdwg.mxu0
    %4337 = vmatprep.subr.bf16.mxu0 %v3434
    %4338 = vmatpush1.bf16.msra.mxu0 %v3433
    %4339 = vmatprep.subr.bf16.mxu0 %v3426
    %4340 = vmatpush1.bf16.msra.mxu0 %v3425
    %4341 = vmatprep.subr.bf16.mxu0 %v3418
    %4342 = vmatpush1.bf16.msra.mxu0 %v3417
    %4343 = vmatprep.subr.bf16.mxu0 %v3410
    %4344 = vmatpush1.bf16.msra.mxu0 %v3409
    %4345 = vmatprep.subr.bf16.mxu0 %v3402
    %4346 = vmatpush1.bf16.msra.mxu0 %v3401
    %4347 = vmatprep.subr.bf16.mxu0 %v3394
    %4348 = vmatpush1.bf16.msra.mxu0 %v3393
    %4349 = vmatprep.subr.bf16.mxu0 %v3386
    %4350 = vmatpush1.bf16.msra.mxu0 %v3385
    %4351 = vmatprep.subr.bf16.mxu0 %v3378
    %4352 = vmatpush1.bf16.msra.mxu0 %v3377
    %4353 = vmatprep.subr.bf16.mxu0 %v3498
    %4354 = vmatpush2.bf16.msra.mxu0 %v3497
    %4355 = vmatprep.subr.bf16.mxu0 %v3490
    %4356 = vmatpush2.bf16.msra.mxu0 %v3489
    %4357 = vmatprep.subr.bf16.mxu0 %v3482
    %4358 = vmatpush2.bf16.msra.mxu0 %v3481
    %4359 = vmatprep.subr.bf16.mxu0 %v3474
    %4360 = vmatpush2.bf16.msra.mxu0 %v3473
    %4361 = vmatprep.subr.bf16.mxu0 %v3466
    %4362 = vmatpush2.bf16.msra.mxu0 %v3465
    %4363 = vmatprep.subr.bf16.mxu0 %v3458
    %4364 = vmatpush2.bf16.msra.mxu0 %v3457
    %4365 = vmatprep.subr.bf16.mxu0 %v3450
    %4366 = vmatpush2.bf16.msra.mxu0 %v3449
    %4367 = vmatprep.subr.bf16.mxu0 %v3442
    %4368 = vmatpush2.bf16.msra.mxu0 %v3441
    %4369 = vmatprep.mubr.bf16.mxu0 %v2276
    %4370 = vmatmul.mubr.bf16.gmra.mxu0 %v2275
    %v4371 = vpop.f32.mrf.mxu0
    %v4372 = vadd.f32 %v2584, %v4371
    %v4373 = vpop.f32.mrf.mxu0
    %v4374 = vadd.f32 %v2588, %v4373
    %v4375 = vpop.f32.mrf.mxu0
    %v4376 = vadd.f32 %v2584, %v4375
    %v4377 = vpop.f32.mrf.mxu0
    %v4378 = vadd.f32 %v2588, %v4377
    %4379 = vmatprep.mubr.bf16.mxu0 %v2280
    %4380 = vmatmul.mubr.bf16.gmra.mxu0 %v2279
    %v4381 = vpop.f32.mrf.mxu0
    %v4382 = vadd.f32 %v2584, %v4381
    %v4383 = vpop.f32.mrf.mxu0
    %v4384 = vadd.f32 %v2588, %v4383
    %v4385 = vpop.f32.mrf.mxu0
    %v4386 = vadd.f32 %v2584, %v4385
    %v4387 = vpop.f32.mrf.mxu0
    %v4388 = vadd.f32 %v2588, %v4387
    %4389 = vmatprep.mubr.bf16.mxu0 %v2284
    %4390 = vmatmul.mubr.bf16.gmra.mxu0 %v2283
    %v4391 = vpop.f32.mrf.mxu0
    %v4392 = vadd.f32 %v2584, %v4391
    %v4393 = vpop.f32.mrf.mxu0
    %v4394 = vadd.f32 %v2588, %v4393
    %v4395 = vpop.f32.mrf.mxu0
    %v4396 = vadd.f32 %v2584, %v4395
    %v4397 = vpop.f32.mrf.mxu0
    %v4398 = vadd.f32 %v2588, %v4397
    %4399 = vmatprep.mubr.bf16.mxu0 %v2288
    %4400 = vmatmul.mubr.bf16.gmra.mxu0 %v2287
    %v4401 = vpop.f32.mrf.mxu0
    %v4402 = vadd.f32 %v2584, %v4401
    %v4403 = vpop.f32.mrf.mxu0
    %v4404 = vadd.f32 %v2588, %v4403
    %v4405 = vpop.f32.mrf.mxu0
    %v4406 = vadd.f32 %v2584, %v4405
    %v4407 = vpop.f32.mrf.mxu0
    %v4408 = vadd.f32 %v2588, %v4407
    %4409 = vmatprep.mubr.bf16.mxu0 %v2292
    %4410 = vmatmul.mubr.bf16.gmra.mxu0 %v2291
    %v4411 = vpop.f32.mrf.mxu0
    %v4412 = vadd.f32 %v2584, %v4411
    %v4413 = vpop.f32.mrf.mxu0
    %v4414 = vadd.f32 %v2588, %v4413
    %v4415 = vpop.f32.mrf.mxu0
    %v4416 = vadd.f32 %v2584, %v4415
    %v4417 = vpop.f32.mrf.mxu0
    %v4418 = vadd.f32 %v2588, %v4417
    %4419 = vmatprep.mubr.bf16.mxu0 %v2296
    %4420 = vmatmul.mubr.bf16.gmra.mxu0 %v2295
    %v4421 = vpop.f32.mrf.mxu0
    %v4422 = vadd.f32 %v2584, %v4421
    %v4423 = vpop.f32.mrf.mxu0
    %v4424 = vadd.f32 %v2588, %v4423
    %v4425 = vpop.f32.mrf.mxu0
    %v4426 = vadd.f32 %v2584, %v4425
    %v4427 = vpop.f32.mrf.mxu0
    %v4428 = vadd.f32 %v2588, %v4427
    %4429 = vmatprep.mubr.bf16.mxu0 %v2300
    %4430 = vmatmul.mubr.bf16.gmra.mxu0 %v2299
    %v4431 = vpop.f32.mrf.mxu0
    %v4432 = vadd.f32 %v2584, %v4431
    %v4433 = vpop.f32.mrf.mxu0
    %v4434 = vadd.f32 %v2588, %v4433
    %v4435 = vpop.f32.mrf.mxu0
    %v4436 = vadd.f32 %v2584, %v4435
    %v4437 = vpop.f32.mrf.mxu0
    %v4438 = vadd.f32 %v2588, %v4437
    %4439 = vmatprep.mubr.bf16.mxu0 %v2304
    %4440 = vmatmul.mubr.bf16.gmra.mxu0 %v2303
    %v4441 = vpop.f32.mrf.mxu0
    %v4442 = vadd.f32 %v2584, %v4441
    %v4443 = vpop.f32.mrf.mxu0
    %v4444 = vadd.f32 %v2588, %v4443
    %v4445 = vpop.f32.mrf.mxu0
    %v4446 = vadd.f32 %v2584, %v4445
    %v4447 = vpop.f32.mrf.mxu0
    %v4448 = vadd.f32 %v2588, %v4447
    %4449 = vdwg.mxu0
    %4450 = vmatprep.subr.bf16.mxu0 %v3562
    %4451 = vmatpush1.bf16.msra.mxu0 %v3561
    %4452 = vmatprep.subr.bf16.mxu0 %v3554
    %4453 = vmatpush1.bf16.msra.mxu0 %v3553
    %4454 = vmatprep.subr.bf16.mxu0 %v3546
    %4455 = vmatpush1.bf16.msra.mxu0 %v3545
    %4456 = vmatprep.subr.bf16.mxu0 %v3538
    %4457 = vmatpush1.bf16.msra.mxu0 %v3537
    %4458 = vmatprep.subr.bf16.mxu0 %v3530
    %4459 = vmatpush1.bf16.msra.mxu0 %v3529
    %4460 = vmatprep.subr.bf16.mxu0 %v3522
    %4461 = vmatpush1.bf16.msra.mxu0 %v3521
    %4462 = vmatprep.subr.bf16.mxu0 %v3514
    %4463 = vmatpush1.bf16.msra.mxu0 %v3513
    %4464 = vmatprep.subr.bf16.mxu0 %v3506
    %4465 = vmatpush1.bf16.msra.mxu0 %v3505
    %4466 = vmatprep.subr.bf16.mxu0 %v3626
    %4467 = vmatpush2.bf16.msra.mxu0 %v3625
    %4468 = vmatprep.subr.bf16.mxu0 %v3618
    %4469 = vmatpush2.bf16.msra.mxu0 %v3617
    %4470 = vmatprep.subr.bf16.mxu0 %v3610
    %4471 = vmatpush2.bf16.msra.mxu0 %v3609
    %4472 = vmatprep.subr.bf16.mxu0 %v3602
    %4473 = vmatpush2.bf16.msra.mxu0 %v3601
    %4474 = vmatprep.subr.bf16.mxu0 %v3594
    %4475 = vmatpush2.bf16.msra.mxu0 %v3593
    %4476 = vmatprep.subr.bf16.mxu0 %v3586
    %4477 = vmatpush2.bf16.msra.mxu0 %v3585
    %4478 = vmatprep.subr.bf16.mxu0 %v3578
    %4479 = vmatpush2.bf16.msra.mxu0 %v3577
    %4480 = vmatprep.subr.bf16.mxu0 %v3570
    %4481 = vmatpush2.bf16.msra.mxu0 %v3569
    %4482 = vmatprep.mubr.bf16.mxu0 %v2278
    %4483 = vmatmul.mubr.bf16.gmra.mxu0 %v2277
    %v4484 = vpop.f32.mrf.mxu0
    %v4485 = vadd.f32 %v4372, %v4484
    %v4486 = vpop.f32.mrf.mxu0
    %v4487 = vadd.f32 %v4374, %v4486
    %v4488 = vpop.f32.mrf.mxu0
    %v4489 = vadd.f32 %v4376, %v4488
    %v4490 = vpop.f32.mrf.mxu0
    %v4491 = vadd.f32 %v4378, %v4490
    %4492 = vmatprep.mubr.bf16.mxu0 %v2282
    %4493 = vmatmul.mubr.bf16.gmra.mxu0 %v2281
    %v4494 = vpop.f32.mrf.mxu0
    %v4495 = vadd.f32 %v4382, %v4494
    %v4496 = vpop.f32.mrf.mxu0
    %v4497 = vadd.f32 %v4384, %v4496
    %v4498 = vpop.f32.mrf.mxu0
    %v4499 = vadd.f32 %v4386, %v4498
    %v4500 = vpop.f32.mrf.mxu0
    %v4501 = vadd.f32 %v4388, %v4500
    %4502 = vmatprep.mubr.bf16.mxu0 %v2286
    %4503 = vmatmul.mubr.bf16.gmra.mxu0 %v2285
    %v4504 = vpop.f32.mrf.mxu0
    %v4505 = vadd.f32 %v4392, %v4504
    %v4506 = vpop.f32.mrf.mxu0
    %v4507 = vadd.f32 %v4394, %v4506
    %v4508 = vpop.f32.mrf.mxu0
    %v4509 = vadd.f32 %v4396, %v4508
    %v4510 = vpop.f32.mrf.mxu0
    %v4511 = vadd.f32 %v4398, %v4510
    %4512 = vmatprep.mubr.bf16.mxu0 %v2290
    %4513 = vmatmul.mubr.bf16.gmra.mxu0 %v2289
    %v4514 = vpop.f32.mrf.mxu0
    %v4515 = vadd.f32 %v4402, %v4514
    %v4516 = vpop.f32.mrf.mxu0
    %v4517 = vadd.f32 %v4404, %v4516
    %v4518 = vpop.f32.mrf.mxu0
    %v4519 = vadd.f32 %v4406, %v4518
    %v4520 = vpop.f32.mrf.mxu0
    %v4521 = vadd.f32 %v4408, %v4520
    %4522 = vmatprep.mubr.bf16.mxu0 %v2294
    %4523 = vmatmul.mubr.bf16.gmra.mxu0 %v2293
    %v4524 = vpop.f32.mrf.mxu0
    %v4525 = vadd.f32 %v4412, %v4524
    %v4526 = vpop.f32.mrf.mxu0
    %v4527 = vadd.f32 %v4414, %v4526
    %v4528 = vpop.f32.mrf.mxu0
    %v4529 = vadd.f32 %v4416, %v4528
    %v4530 = vpop.f32.mrf.mxu0
    %v4531 = vadd.f32 %v4418, %v4530
    %4532 = vmatprep.mubr.bf16.mxu0 %v2298
    %4533 = vmatmul.mubr.bf16.gmra.mxu0 %v2297
    %v4534 = vpop.f32.mrf.mxu0
    %v4535 = vadd.f32 %v4422, %v4534
    %v4536 = vpop.f32.mrf.mxu0
    %v4537 = vadd.f32 %v4424, %v4536
    %v4538 = vpop.f32.mrf.mxu0
    %v4539 = vadd.f32 %v4426, %v4538
    %v4540 = vpop.f32.mrf.mxu0
    %v4541 = vadd.f32 %v4428, %v4540
    %4542 = vmatprep.mubr.bf16.mxu0 %v2302
    %4543 = vmatmul.mubr.bf16.gmra.mxu0 %v2301
    %v4544 = vpop.f32.mrf.mxu0
    %v4545 = vadd.f32 %v4432, %v4544
    %v4546 = vpop.f32.mrf.mxu0
    %v4547 = vadd.f32 %v4434, %v4546
    %v4548 = vpop.f32.mrf.mxu0
    %v4549 = vadd.f32 %v4436, %v4548
    %v4550 = vpop.f32.mrf.mxu0
    %v4551 = vadd.f32 %v4438, %v4550
    %4552 = vmatprep.mubr.bf16.mxu0 %v2306
    %4553 = vmatmul.mubr.bf16.gmra.mxu0 %v2305
    %v4554 = vpop.f32.mrf.mxu0
    %v4555 = vadd.f32 %v4442, %v4554
    %v4556 = vpop.f32.mrf.mxu0
    %v4557 = vadd.f32 %v4444, %v4556
    %v4558 = vpop.f32.mrf.mxu0
    %v4559 = vadd.f32 %v4446, %v4558
    %v4560 = vpop.f32.mrf.mxu0
    %v4561 = vadd.f32 %v4448, %v4560
    %4562 = vdwg.mxu0
    %4563 = vmatprep.subr.bf16.mxu0 %v3436
    %4564 = vmatpush1.bf16.msra.mxu0 %v3435
    %4565 = vmatprep.subr.bf16.mxu0 %v3428
    %4566 = vmatpush1.bf16.msra.mxu0 %v3427
    %4567 = vmatprep.subr.bf16.mxu0 %v3420
    %4568 = vmatpush1.bf16.msra.mxu0 %v3419
    %4569 = vmatprep.subr.bf16.mxu0 %v3412
    %4570 = vmatpush1.bf16.msra.mxu0 %v3411
    %4571 = vmatprep.subr.bf16.mxu0 %v3404
    %4572 = vmatpush1.bf16.msra.mxu0 %v3403
    %4573 = vmatprep.subr.bf16.mxu0 %v3396
    %4574 = vmatpush1.bf16.msra.mxu0 %v3395
    %4575 = vmatprep.subr.bf16.mxu0 %v3388
    %4576 = vmatpush1.bf16.msra.mxu0 %v3387
    %4577 = vmatprep.subr.bf16.mxu0 %v3380
    %4578 = vmatpush1.bf16.msra.mxu0 %v3379
    %4579 = vmatprep.subr.bf16.mxu0 %v3500
    %4580 = vmatpush2.bf16.msra.mxu0 %v3499
    %4581 = vmatprep.subr.bf16.mxu0 %v3492
    %4582 = vmatpush2.bf16.msra.mxu0 %v3491
    %4583 = vmatprep.subr.bf16.mxu0 %v3484
    %4584 = vmatpush2.bf16.msra.mxu0 %v3483
    %4585 = vmatprep.subr.bf16.mxu0 %v3476
    %4586 = vmatpush2.bf16.msra.mxu0 %v3475
    %4587 = vmatprep.subr.bf16.mxu0 %v3468
    %4588 = vmatpush2.bf16.msra.mxu0 %v3467
    %4589 = vmatprep.subr.bf16.mxu0 %v3460
    %4590 = vmatpush2.bf16.msra.mxu0 %v3459
    %4591 = vmatprep.subr.bf16.mxu0 %v3452
    %4592 = vmatpush2.bf16.msra.mxu0 %v3451
    %4593 = vmatprep.subr.bf16.mxu0 %v3444
    %4594 = vmatpush2.bf16.msra.mxu0 %v3443
    %4595 = vmatprep.mubr.bf16.mxu0 %v2276
    %4596 = vmatmul.mubr.bf16.gmra.mxu0 %v2275
    %v4597 = vpop.f32.mrf.mxu0
    %v4598 = vadd.f32 %v2592, %v4597
    %v4599 = vpop.f32.mrf.mxu0
    %v4600 = vadd.f32 %v2596, %v4599
    %v4601 = vpop.f32.mrf.mxu0
    %v4602 = vadd.f32 %v2592, %v4601
    %v4603 = vpop.f32.mrf.mxu0
    %v4604 = vadd.f32 %v2596, %v4603
    %4605 = vmatprep.mubr.bf16.mxu0 %v2280
    %4606 = vmatmul.mubr.bf16.gmra.mxu0 %v2279
    %v4607 = vpop.f32.mrf.mxu0
    %v4608 = vadd.f32 %v2592, %v4607
    %v4609 = vpop.f32.mrf.mxu0
    %v4610 = vadd.f32 %v2596, %v4609
    %v4611 = vpop.f32.mrf.mxu0
    %v4612 = vadd.f32 %v2592, %v4611
    %v4613 = vpop.f32.mrf.mxu0
    %v4614 = vadd.f32 %v2596, %v4613
    %4615 = vmatprep.mubr.bf16.mxu0 %v2284
    %4616 = vmatmul.mubr.bf16.gmra.mxu0 %v2283
    %v4617 = vpop.f32.mrf.mxu0
    %v4618 = vadd.f32 %v2592, %v4617
    %v4619 = vpop.f32.mrf.mxu0
    %v4620 = vadd.f32 %v2596, %v4619
    %v4621 = vpop.f32.mrf.mxu0
    %v4622 = vadd.f32 %v2592, %v4621
    %v4623 = vpop.f32.mrf.mxu0
    %v4624 = vadd.f32 %v2596, %v4623
    %4625 = vmatprep.mubr.bf16.mxu0 %v2288
    %4626 = vmatmul.mubr.bf16.gmra.mxu0 %v2287
    %v4627 = vpop.f32.mrf.mxu0
    %v4628 = vadd.f32 %v2592, %v4627
    %v4629 = vpop.f32.mrf.mxu0
    %v4630 = vadd.f32 %v2596, %v4629
    %v4631 = vpop.f32.mrf.mxu0
    %v4632 = vadd.f32 %v2592, %v4631
    %v4633 = vpop.f32.mrf.mxu0
    %v4634 = vadd.f32 %v2596, %v4633
    %4635 = vmatprep.mubr.bf16.mxu0 %v2292
    %4636 = vmatmul.mubr.bf16.gmra.mxu0 %v2291
    %v4637 = vpop.f32.mrf.mxu0
    %v4638 = vadd.f32 %v2592, %v4637
    %v4639 = vpop.f32.mrf.mxu0
    %v4640 = vadd.f32 %v2596, %v4639
    %v4641 = vpop.f32.mrf.mxu0
    %v4642 = vadd.f32 %v2592, %v4641
    %v4643 = vpop.f32.mrf.mxu0
    %v4644 = vadd.f32 %v2596, %v4643
    %4645 = vmatprep.mubr.bf16.mxu0 %v2296
    %4646 = vmatmul.mubr.bf16.gmra.mxu0 %v2295
    %v4647 = vpop.f32.mrf.mxu0
    %v4648 = vadd.f32 %v2592, %v4647
    %v4649 = vpop.f32.mrf.mxu0
    %v4650 = vadd.f32 %v2596, %v4649
    %v4651 = vpop.f32.mrf.mxu0
    %v4652 = vadd.f32 %v2592, %v4651
    %v4653 = vpop.f32.mrf.mxu0
    %v4654 = vadd.f32 %v2596, %v4653
    %4655 = vmatprep.mubr.bf16.mxu0 %v2300
    %4656 = vmatmul.mubr.bf16.gmra.mxu0 %v2299
    %v4657 = vpop.f32.mrf.mxu0
    %v4658 = vadd.f32 %v2592, %v4657
    %v4659 = vpop.f32.mrf.mxu0
    %v4660 = vadd.f32 %v2596, %v4659
    %v4661 = vpop.f32.mrf.mxu0
    %v4662 = vadd.f32 %v2592, %v4661
    %v4663 = vpop.f32.mrf.mxu0
    %v4664 = vadd.f32 %v2596, %v4663
    %4665 = vmatprep.mubr.bf16.mxu0 %v2304
    %4666 = vmatmul.mubr.bf16.gmra.mxu0 %v2303
    %v4667 = vpop.f32.mrf.mxu0
    %v4668 = vadd.f32 %v2592, %v4667
    %v4669 = vpop.f32.mrf.mxu0
    %v4670 = vadd.f32 %v2596, %v4669
    %v4671 = vpop.f32.mrf.mxu0
    %v4672 = vadd.f32 %v2592, %v4671
    %v4673 = vpop.f32.mrf.mxu0
    %v4674 = vadd.f32 %v2596, %v4673
    %4675 = vdwg.mxu0
    %4676 = vmatprep.subr.bf16.mxu0 %v3564
    %4677 = vmatpush1.bf16.msra.mxu0 %v3563
    %4678 = vmatprep.subr.bf16.mxu0 %v3556
    %4679 = vmatpush1.bf16.msra.mxu0 %v3555
    %4680 = vmatprep.subr.bf16.mxu0 %v3548
    %4681 = vmatpush1.bf16.msra.mxu0 %v3547
    %4682 = vmatprep.subr.bf16.mxu0 %v3540
    %4683 = vmatpush1.bf16.msra.mxu0 %v3539
    %4684 = vmatprep.subr.bf16.mxu0 %v3532
    %4685 = vmatpush1.bf16.msra.mxu0 %v3531
    %4686 = vmatprep.subr.bf16.mxu0 %v3524
    %4687 = vmatpush1.bf16.msra.mxu0 %v3523
    %4688 = vmatprep.subr.bf16.mxu0 %v3516
    %4689 = vmatpush1.bf16.msra.mxu0 %v3515
    %4690 = vmatprep.subr.bf16.mxu0 %v3508
    %4691 = vmatpush1.bf16.msra.mxu0 %v3507
    %4692 = vmatprep.subr.bf16.mxu0 %v3628
    %4693 = vmatpush2.bf16.msra.mxu0 %v3627
    %4694 = vmatprep.subr.bf16.mxu0 %v3620
    %4695 = vmatpush2.bf16.msra.mxu0 %v3619
    %4696 = vmatprep.subr.bf16.mxu0 %v3612
    %4697 = vmatpush2.bf16.msra.mxu0 %v3611
    %4698 = vmatprep.subr.bf16.mxu0 %v3604
    %4699 = vmatpush2.bf16.msra.mxu0 %v3603
    %4700 = vmatprep.subr.bf16.mxu0 %v3596
    %4701 = vmatpush2.bf16.msra.mxu0 %v3595
    %4702 = vmatprep.subr.bf16.mxu0 %v3588
    %4703 = vmatpush2.bf16.msra.mxu0 %v3587
    %4704 = vmatprep.subr.bf16.mxu0 %v3580
    %4705 = vmatpush2.bf16.msra.mxu0 %v3579
    %4706 = vmatprep.subr.bf16.mxu0 %v3572
    %4707 = vmatpush2.bf16.msra.mxu0 %v3571
    %4708 = vmatprep.mubr.bf16.mxu0 %v2278
    %4709 = vmatmul.mubr.bf16.gmra.mxu0 %v2277
    %v4710 = vpop.f32.mrf.mxu0
    %v4711 = vadd.f32 %v4598, %v4710
    %v4712 = vpop.f32.mrf.mxu0
    %v4713 = vadd.f32 %v4600, %v4712
    %v4714 = vpop.f32.mrf.mxu0
    %v4715 = vadd.f32 %v4602, %v4714
    %v4716 = vpop.f32.mrf.mxu0
    %v4717 = vadd.f32 %v4604, %v4716
    %4718 = vmatprep.mubr.bf16.mxu0 %v2282
    %4719 = vmatmul.mubr.bf16.gmra.mxu0 %v2281
    %v4720 = vpop.f32.mrf.mxu0
    %v4721 = vadd.f32 %v4608, %v4720
    %v4722 = vpop.f32.mrf.mxu0
    %v4723 = vadd.f32 %v4610, %v4722
    %v4724 = vpop.f32.mrf.mxu0
    %v4725 = vadd.f32 %v4612, %v4724
    %v4726 = vpop.f32.mrf.mxu0
    %v4727 = vadd.f32 %v4614, %v4726
    %4728 = vmatprep.mubr.bf16.mxu0 %v2286
    %4729 = vmatmul.mubr.bf16.gmra.mxu0 %v2285
    %v4730 = vpop.f32.mrf.mxu0
    %v4731 = vadd.f32 %v4618, %v4730
    %v4732 = vpop.f32.mrf.mxu0
    %v4733 = vadd.f32 %v4620, %v4732
    %v4734 = vpop.f32.mrf.mxu0
    %v4735 = vadd.f32 %v4622, %v4734
    %v4736 = vpop.f32.mrf.mxu0
    %v4737 = vadd.f32 %v4624, %v4736
    %4738 = vmatprep.mubr.bf16.mxu0 %v2290
    %4739 = vmatmul.mubr.bf16.gmra.mxu0 %v2289
    %v4740 = vpop.f32.mrf.mxu0
    %v4741 = vadd.f32 %v4628, %v4740
    %v4742 = vpop.f32.mrf.mxu0
    %v4743 = vadd.f32 %v4630, %v4742
    %v4744 = vpop.f32.mrf.mxu0
    %v4745 = vadd.f32 %v4632, %v4744
    %v4746 = vpop.f32.mrf.mxu0
    %v4747 = vadd.f32 %v4634, %v4746
    %4748 = vmatprep.mubr.bf16.mxu0 %v2294
    %4749 = vmatmul.mubr.bf16.gmra.mxu0 %v2293
    %v4750 = vpop.f32.mrf.mxu0
    %v4751 = vadd.f32 %v4638, %v4750
    %v4752 = vpop.f32.mrf.mxu0
    %v4753 = vadd.f32 %v4640, %v4752
    %v4754 = vpop.f32.mrf.mxu0
    %v4755 = vadd.f32 %v4642, %v4754
    %v4756 = vpop.f32.mrf.mxu0
    %v4757 = vadd.f32 %v4644, %v4756
    %4758 = vmatprep.mubr.bf16.mxu0 %v2298
    %4759 = vmatmul.mubr.bf16.gmra.mxu0 %v2297
    %v4760 = vpop.f32.mrf.mxu0
    %v4761 = vadd.f32 %v4648, %v4760
    %v4762 = vpop.f32.mrf.mxu0
    %v4763 = vadd.f32 %v4650, %v4762
    %v4764 = vpop.f32.mrf.mxu0
    %v4765 = vadd.f32 %v4652, %v4764
    %v4766 = vpop.f32.mrf.mxu0
    %v4767 = vadd.f32 %v4654, %v4766
    %4768 = vmatprep.mubr.bf16.mxu0 %v2302
    %4769 = vmatmul.mubr.bf16.gmra.mxu0 %v2301
    %v4770 = vpop.f32.mrf.mxu0
    %v4771 = vadd.f32 %v4658, %v4770
    %v4772 = vpop.f32.mrf.mxu0
    %v4773 = vadd.f32 %v4660, %v4772
    %v4774 = vpop.f32.mrf.mxu0
    %v4775 = vadd.f32 %v4662, %v4774
    %v4776 = vpop.f32.mrf.mxu0
    %v4777 = vadd.f32 %v4664, %v4776
    %4778 = vmatprep.mubr.bf16.mxu0 %v2306
    %4779 = vmatmul.mubr.bf16.gmra.mxu0 %v2305
    %v4780 = vpop.f32.mrf.mxu0
    %v4781 = vadd.f32 %v4668, %v4780
    %v4782 = vpop.f32.mrf.mxu0
    %v4783 = vadd.f32 %v4670, %v4782
    %v4784 = vpop.f32.mrf.mxu0
    %v4785 = vadd.f32 %v4672, %v4784
    %v4786 = vpop.f32.mrf.mxu0
    %v4787 = vadd.f32 %v4674, %v4786
    %4788 = vdwg.mxu0
    %v4789 = vmul.f32 %v4033, %v1390
    %v4790 = vmul.f32 %v4035, %v1390
    %v4791 = vmul.f32 %v4259, %v1390
    %v4792 = vmul.f32 %v4261, %v1390
    %v4793 = vmul.f32 %v4485, %v1390
    %v4794 = vmul.f32 %v4487, %v1390
    %v4795 = vmul.f32 %v4711, %v1390
    %v4796 = vmul.f32 %v4713, %v1390
    %v4797 = vmul.f32 %v4037, %v1395
    %v4798 = vmul.f32 %v4039, %v1395
    %v4799 = vmul.f32 %v4263, %v1395
    %v4800 = vmul.f32 %v4265, %v1395
    %v4801 = vmul.f32 %v4489, %v1395
    %v4802 = vmul.f32 %v4491, %v1395
    %v4803 = vmul.f32 %v4715, %v1395
    %v4804 = vmul.f32 %v4717, %v1395
    %v4805 = vmul.f32 %v4043, %v1400
    %v4806 = vmul.f32 %v4045, %v1400
    %v4807 = vmul.f32 %v4269, %v1400
    %v4808 = vmul.f32 %v4271, %v1400
    %v4809 = vmul.f32 %v4495, %v1400
    %v4810 = vmul.f32 %v4497, %v1400
    %v4811 = vmul.f32 %v4721, %v1400
    %v4812 = vmul.f32 %v4723, %v1400
    %v4813 = vmul.f32 %v4047, %v1405
    %v4814 = vmul.f32 %v4049, %v1405
    %v4815 = vmul.f32 %v4273, %v1405
    %v4816 = vmul.f32 %v4275, %v1405
    %v4817 = vmul.f32 %v4499, %v1405
    %v4818 = vmul.f32 %v4501, %v1405
    %v4819 = vmul.f32 %v4725, %v1405
    %v4820 = vmul.f32 %v4727, %v1405
    %v4821 = vmul.f32 %v4053, %v1410
    %v4822 = vmul.f32 %v4055, %v1410
    %v4823 = vmul.f32 %v4279, %v1410
    %v4824 = vmul.f32 %v4281, %v1410
    %v4825 = vmul.f32 %v4505, %v1410
    %v4826 = vmul.f32 %v4507, %v1410
    %v4827 = vmul.f32 %v4731, %v1410
    %v4828 = vmul.f32 %v4733, %v1410
    %v4829 = vmul.f32 %v4057, %v1415
    %v4830 = vmul.f32 %v4059, %v1415
    %v4831 = vmul.f32 %v4283, %v1415
    %v4832 = vmul.f32 %v4285, %v1415
    %v4833 = vmul.f32 %v4509, %v1415
    %v4834 = vmul.f32 %v4511, %v1415
    %v4835 = vmul.f32 %v4735, %v1415
    %v4836 = vmul.f32 %v4737, %v1415
    %v4837 = vmul.f32 %v4063, %v1420
    %v4838 = vmul.f32 %v4065, %v1420
    %v4839 = vmul.f32 %v4289, %v1420
    %v4840 = vmul.f32 %v4291, %v1420
    %v4841 = vmul.f32 %v4515, %v1420
    %v4842 = vmul.f32 %v4517, %v1420
    %v4843 = vmul.f32 %v4741, %v1420
    %v4844 = vmul.f32 %v4743, %v1420
    %v4845 = vmul.f32 %v4067, %v1425
    %v4846 = vmul.f32 %v4069, %v1425
    %v4847 = vmul.f32 %v4293, %v1425
    %v4848 = vmul.f32 %v4295, %v1425
    %v4849 = vmul.f32 %v4519, %v1425
    %v4850 = vmul.f32 %v4521, %v1425
    %v4851 = vmul.f32 %v4745, %v1425
    %v4852 = vmul.f32 %v4747, %v1425
    %v4853 = vmul.f32 %v4073, %v1430
    %v4854 = vmul.f32 %v4075, %v1430
    %v4855 = vmul.f32 %v4299, %v1430
    %v4856 = vmul.f32 %v4301, %v1430
    %v4857 = vmul.f32 %v4525, %v1430
    %v4858 = vmul.f32 %v4527, %v1430
    %v4859 = vmul.f32 %v4751, %v1430
    %v4860 = vmul.f32 %v4753, %v1430
    %v4861 = vmul.f32 %v4077, %v1435
    %v4862 = vmul.f32 %v4079, %v1435
    %v4863 = vmul.f32 %v4303, %v1435
    %v4864 = vmul.f32 %v4305, %v1435
    %v4865 = vmul.f32 %v4529, %v1435
    %v4866 = vmul.f32 %v4531, %v1435
    %v4867 = vmul.f32 %v4755, %v1435
    %v4868 = vmul.f32 %v4757, %v1435
    %v4869 = vmul.f32 %v4083, %v1440
    %v4870 = vmul.f32 %v4085, %v1440
    %v4871 = vmul.f32 %v4309, %v1440
    %v4872 = vmul.f32 %v4311, %v1440
    %v4873 = vmul.f32 %v4535, %v1440
    %v4874 = vmul.f32 %v4537, %v1440
    %v4875 = vmul.f32 %v4761, %v1440
    %v4876 = vmul.f32 %v4763, %v1440
    %v4877 = vmul.f32 %v4087, %v1445
    %v4878 = vmul.f32 %v4089, %v1445
    %v4879 = vmul.f32 %v4313, %v1445
    %v4880 = vmul.f32 %v4315, %v1445
    %v4881 = vmul.f32 %v4539, %v1445
    %v4882 = vmul.f32 %v4541, %v1445
    %v4883 = vmul.f32 %v4765, %v1445
    %v4884 = vmul.f32 %v4767, %v1445
    %v4885 = vmul.f32 %v4093, %v1450
    %v4886 = vmul.f32 %v4095, %v1450
    %v4887 = vmul.f32 %v4319, %v1450
    %v4888 = vmul.f32 %v4321, %v1450
    %v4889 = vmul.f32 %v4545, %v1450
    %v4890 = vmul.f32 %v4547, %v1450
    %v4891 = vmul.f32 %v4771, %v1450
    %v4892 = vmul.f32 %v4773, %v1450
    %v4893 = vmul.f32 %v4097, %v1455
    %v4894 = vmul.f32 %v4099, %v1455
    %v4895 = vmul.f32 %v4323, %v1455
    %v4896 = vmul.f32 %v4325, %v1455
    %v4897 = vmul.f32 %v4549, %v1455
    %v4898 = vmul.f32 %v4551, %v1455
    %v4899 = vmul.f32 %v4775, %v1455
    %v4900 = vmul.f32 %v4777, %v1455
    %v4901 = vmul.f32 %v4103, %v1460
    %v4902 = vmul.f32 %v4105, %v1460
    %v4903 = vmul.f32 %v4329, %v1460
    %v4904 = vmul.f32 %v4331, %v1460
    %v4905 = vmul.f32 %v4555, %v1460
    %v4906 = vmul.f32 %v4557, %v1460
    %v4907 = vmul.f32 %v4781, %v1460
    %v4908 = vmul.f32 %v4783, %v1460
    %v4909 = vmul.f32 %v4107, %v1465
    %v4910 = vmul.f32 %v4109, %v1465
    %v4911 = vmul.f32 %v4333, %v1465
    %v4912 = vmul.f32 %v4335, %v1465
    %v4913 = vmul.f32 %v4559, %v1465
    %v4914 = vmul.f32 %v4561, %v1465
    %v4915 = vmul.f32 %v4785, %v1465
    %v4916 = vmul.f32 %v4787, %v1465
    %v4917 = vadd.f32 %v4789, %v4797
    %v4918 = vadd.f32 %v4917, %v4805
    %v4919 = vadd.f32 %v4918, %v4813
    %v4920 = vadd.f32 %v4919, %v4821
    %v4921 = vadd.f32 %v4920, %v4829
    %v4922 = vadd.f32 %v4921, %v4837
    %v4923 = vadd.f32 %v4922, %v4845
    %v4924 = vrot.slane %v4923, 4
    %v4925 = vadd.f32 %v4923, %v4924
    %v4926 = vrot.slane %v4925, 2
    %v4927 = vadd.f32 %v4925, %v4926
    %v4928 = vrot.slane %v4927, 1
    %v4929 = vadd.f32 %v4927, %v4928
    %v4930 = vadd.f32 %v4790, %v4798
    %v4931 = vadd.f32 %v4930, %v4806
    %v4932 = vadd.f32 %v4931, %v4814
    %v4933 = vadd.f32 %v4932, %v4822
    %v4934 = vadd.f32 %v4933, %v4830
    %v4935 = vadd.f32 %v4934, %v4838
    %v4936 = vadd.f32 %v4935, %v4846
    %v4937 = vrot.slane %v4936, 4
    %v4938 = vadd.f32 %v4936, %v4937
    %v4939 = vrot.slane %v4938, 2
    %v4940 = vadd.f32 %v4938, %v4939
    %v4941 = vrot.slane %v4940, 1
    %v4942 = vadd.f32 %v4940, %v4941
    %v4943 = vadd.f32 %v4791, %v4799
    %v4944 = vadd.f32 %v4943, %v4807
    %v4945 = vadd.f32 %v4944, %v4815
    %v4946 = vadd.f32 %v4945, %v4823
    %v4947 = vadd.f32 %v4946, %v4831
    %v4948 = vadd.f32 %v4947, %v4839
    %v4949 = vadd.f32 %v4948, %v4847
    %v4950 = vrot.slane %v4949, 4
    %v4951 = vadd.f32 %v4949, %v4950
    %v4952 = vrot.slane %v4951, 2
    %v4953 = vadd.f32 %v4951, %v4952
    %v4954 = vrot.slane %v4953, 1
    %v4955 = vadd.f32 %v4953, %v4954
    %v4956 = vadd.f32 %v4792, %v4800
    %v4957 = vadd.f32 %v4956, %v4808
    %v4958 = vadd.f32 %v4957, %v4816
    %v4959 = vadd.f32 %v4958, %v4824
    %v4960 = vadd.f32 %v4959, %v4832
    %v4961 = vadd.f32 %v4960, %v4840
    %v4962 = vadd.f32 %v4961, %v4848
    %v4963 = vrot.slane %v4962, 4
    %v4964 = vadd.f32 %v4962, %v4963
    %v4965 = vrot.slane %v4964, 2
    %v4966 = vadd.f32 %v4964, %v4965
    %v4967 = vrot.slane %v4966, 1
    %v4968 = vadd.f32 %v4966, %v4967
    %v4969 = vadd.f32 %v4793, %v4801
    %v4970 = vadd.f32 %v4969, %v4809
    %v4971 = vadd.f32 %v4970, %v4817
    %v4972 = vadd.f32 %v4971, %v4825
    %v4973 = vadd.f32 %v4972, %v4833
    %v4974 = vadd.f32 %v4973, %v4841
    %v4975 = vadd.f32 %v4974, %v4849
    %v4976 = vrot.slane %v4975, 4
    %v4977 = vadd.f32 %v4975, %v4976
    %v4978 = vrot.slane %v4977, 2
    %v4979 = vadd.f32 %v4977, %v4978
    %v4980 = vrot.slane %v4979, 1
    %v4981 = vadd.f32 %v4979, %v4980
    %v4982 = vadd.f32 %v4794, %v4802
    %v4983 = vadd.f32 %v4982, %v4810
    %v4984 = vadd.f32 %v4983, %v4818
    %v4985 = vadd.f32 %v4984, %v4826
    %v4986 = vadd.f32 %v4985, %v4834
    %v4987 = vadd.f32 %v4986, %v4842
    %v4988 = vadd.f32 %v4987, %v4850
    %v4989 = vrot.slane %v4988, 4
    %v4990 = vadd.f32 %v4988, %v4989
    %v4991 = vrot.slane %v4990, 2
    %v4992 = vadd.f32 %v4990, %v4991
    %v4993 = vrot.slane %v4992, 1
    %v4994 = vadd.f32 %v4992, %v4993
    %v4995 = vadd.f32 %v4795, %v4803
    %v4996 = vadd.f32 %v4995, %v4811
    %v4997 = vadd.f32 %v4996, %v4819
    %v4998 = vadd.f32 %v4997, %v4827
    %v4999 = vadd.f32 %v4998, %v4835
    %v5000 = vadd.f32 %v4999, %v4843
    %v5001 = vadd.f32 %v5000, %v4851
    %v5002 = vrot.slane %v5001, 4
    %v5003 = vadd.f32 %v5001, %v5002
    %v5004 = vrot.slane %v5003, 2
    %v5005 = vadd.f32 %v5003, %v5004
    %v5006 = vrot.slane %v5005, 1
    %v5007 = vadd.f32 %v5005, %v5006
    %v5008 = vadd.f32 %v4796, %v4804
    %v5009 = vadd.f32 %v5008, %v4812
    %v5010 = vadd.f32 %v5009, %v4820
    %v5011 = vadd.f32 %v5010, %v4828
    %v5012 = vadd.f32 %v5011, %v4836
    %v5013 = vadd.f32 %v5012, %v4844
    %v5014 = vadd.f32 %v5013, %v4852
    %v5015 = vrot.slane %v5014, 4
    %v5016 = vadd.f32 %v5014, %v5015
    %v5017 = vrot.slane %v5016, 2
    %v5018 = vadd.f32 %v5016, %v5017
    %v5019 = vrot.slane %v5018, 1
    %v5020 = vadd.f32 %v5018, %v5019
    %v5021 = vadd.f32 %v4853, %v4861
    %v5022 = vadd.f32 %v5021, %v4869
    %v5023 = vadd.f32 %v5022, %v4877
    %v5024 = vadd.f32 %v5023, %v4885
    %v5025 = vadd.f32 %v5024, %v4893
    %v5026 = vadd.f32 %v5025, %v4901
    %v5027 = vadd.f32 %v5026, %v4909
    %v5028 = vrot.slane %v5027, 4
    %v5029 = vadd.f32 %v5027, %v5028
    %v5030 = vrot.slane %v5029, 2
    %v5031 = vadd.f32 %v5029, %v5030
    %v5032 = vrot.slane %v5031, 1
    %v5033 = vadd.f32 %v5031, %v5032
    %v5034 = vadd.f32 %v4854, %v4862
    %v5035 = vadd.f32 %v5034, %v4870
    %v5036 = vadd.f32 %v5035, %v4878
    %v5037 = vadd.f32 %v5036, %v4886
    %v5038 = vadd.f32 %v5037, %v4894
    %v5039 = vadd.f32 %v5038, %v4902
    %v5040 = vadd.f32 %v5039, %v4910
    %v5041 = vrot.slane %v5040, 4
    %v5042 = vadd.f32 %v5040, %v5041
    %v5043 = vrot.slane %v5042, 2
    %v5044 = vadd.f32 %v5042, %v5043
    %v5045 = vrot.slane %v5044, 1
    %v5046 = vadd.f32 %v5044, %v5045
    %v5047 = vadd.f32 %v4855, %v4863
    %v5048 = vadd.f32 %v5047, %v4871
    %v5049 = vadd.f32 %v5048, %v4879
    %v5050 = vadd.f32 %v5049, %v4887
    %v5051 = vadd.f32 %v5050, %v4895
    %v5052 = vadd.f32 %v5051, %v4903
    %v5053 = vadd.f32 %v5052, %v4911
    %v5054 = vrot.slane %v5053, 4
    %v5055 = vadd.f32 %v5053, %v5054
    %v5056 = vrot.slane %v5055, 2
    %v5057 = vadd.f32 %v5055, %v5056
    %v5058 = vrot.slane %v5057, 1
    %v5059 = vadd.f32 %v5057, %v5058
    %v5060 = vadd.f32 %v4856, %v4864
    %v5061 = vadd.f32 %v5060, %v4872
    %v5062 = vadd.f32 %v5061, %v4880
    %v5063 = vadd.f32 %v5062, %v4888
    %v5064 = vadd.f32 %v5063, %v4896
    %v5065 = vadd.f32 %v5064, %v4904
    %v5066 = vadd.f32 %v5065, %v4912
    %v5067 = vrot.slane %v5066, 4
    %v5068 = vadd.f32 %v5066, %v5067
    %v5069 = vrot.slane %v5068, 2
    %v5070 = vadd.f32 %v5068, %v5069
    %v5071 = vrot.slane %v5070, 1
    %v5072 = vadd.f32 %v5070, %v5071
    %v5073 = vadd.f32 %v4857, %v4865
    %v5074 = vadd.f32 %v5073, %v4873
    %v5075 = vadd.f32 %v5074, %v4881
    %v5076 = vadd.f32 %v5075, %v4889
    %v5077 = vadd.f32 %v5076, %v4897
    %v5078 = vadd.f32 %v5077, %v4905
    %v5079 = vadd.f32 %v5078, %v4913
    %v5080 = vrot.slane %v5079, 4
    %v5081 = vadd.f32 %v5079, %v5080
    %v5082 = vrot.slane %v5081, 2
    %v5083 = vadd.f32 %v5081, %v5082
    %v5084 = vrot.slane %v5083, 1
    %v5085 = vadd.f32 %v5083, %v5084
    %v5086 = vadd.f32 %v4858, %v4866
    %v5087 = vadd.f32 %v5086, %v4874
    %v5088 = vadd.f32 %v5087, %v4882
    %v5089 = vadd.f32 %v5088, %v4890
    %v5090 = vadd.f32 %v5089, %v4898
    %v5091 = vadd.f32 %v5090, %v4906
    %v5092 = vadd.f32 %v5091, %v4914
    %v5093 = vrot.slane %v5092, 4
    %v5094 = vadd.f32 %v5092, %v5093
    %v5095 = vrot.slane %v5094, 2
    %v5096 = vadd.f32 %v5094, %v5095
    %v5097 = vrot.slane %v5096, 1
    %v5098 = vadd.f32 %v5096, %v5097
    %v5099 = vadd.f32 %v4859, %v4867
    %v5100 = vadd.f32 %v5099, %v4875
    %v5101 = vadd.f32 %v5100, %v4883
    %v5102 = vadd.f32 %v5101, %v4891
    %v5103 = vadd.f32 %v5102, %v4899
    %v5104 = vadd.f32 %v5103, %v4907
    %v5105 = vadd.f32 %v5104, %v4915
    %v5106 = vrot.slane %v5105, 4
    %v5107 = vadd.f32 %v5105, %v5106
    %v5108 = vrot.slane %v5107, 2
    %v5109 = vadd.f32 %v5107, %v5108
    %v5110 = vrot.slane %v5109, 1
    %v5111 = vadd.f32 %v5109, %v5110
    %v5112 = vadd.f32 %v4860, %v4868
    %v5113 = vadd.f32 %v5112, %v4876
    %v5114 = vadd.f32 %v5113, %v4884
    %v5115 = vadd.f32 %v5114, %v4892
    %v5116 = vadd.f32 %v5115, %v4900
    %v5117 = vadd.f32 %v5116, %v4908
    %v5118 = vadd.f32 %v5117, %v4916
    %v5119 = vrot.slane %v5118, 4
    %v5120 = vadd.f32 %v5118, %v5119
    %v5121 = vrot.slane %v5120, 2
    %v5122 = vadd.f32 %v5120, %v5121
    %v5123 = vrot.slane %v5122, 1
    %v5124 = vadd.f32 %v5122, %v5123
    %v5125 = vmul.f32 %v4929, %v1638
    %v5126 = vmul.f32 %v4942, %v1638
    %v5127 = vmul.f32 %v4955, %v1638
    %v5128 = vmul.f32 %v4968, %v1638
    %v5129 = vmul.f32 %v4981, %v1638
    %v5130 = vmul.f32 %v4994, %v1638
    %v5131 = vmul.f32 %v5007, %v1638
    %v5132 = vmul.f32 %v5020, %v1638
    %v5133 = vmul.f32 %v5033, %v1643
    %v5134 = vmul.f32 %v5046, %v1643
    %v5135 = vmul.f32 %v5059, %v1643
    %v5136 = vmul.f32 %v5072, %v1643
    %v5137 = vmul.f32 %v5085, %v1643
    %v5138 = vmul.f32 %v5098, %v1643
    %v5139 = vmul.f32 %v5111, %v1643
    %v5140 = vmul.f32 %v5124, %v1643
    %v5141 = vmul.f32 %v4789, %v4033
    %v5142 = vmul.f32 %v4790, %v4035
    %v5143 = vmul.f32 %v4791, %v4259
    %v5144 = vmul.f32 %v4792, %v4261
    %v5145 = vmul.f32 %v4793, %v4485
    %v5146 = vmul.f32 %v4794, %v4487
    %v5147 = vmul.f32 %v4795, %v4711
    %v5148 = vmul.f32 %v4796, %v4713
    %v5149 = vmul.f32 %v4797, %v4037
    %v5150 = vmul.f32 %v4798, %v4039
    %v5151 = vmul.f32 %v4799, %v4263
    %v5152 = vmul.f32 %v4800, %v4265
    %v5153 = vmul.f32 %v4801, %v4489
    %v5154 = vmul.f32 %v4802, %v4491
    %v5155 = vmul.f32 %v4803, %v4715
    %v5156 = vmul.f32 %v4804, %v4717
    %v5157 = vmul.f32 %v4805, %v4043
    %v5158 = vmul.f32 %v4806, %v4045
    %v5159 = vmul.f32 %v4807, %v4269
    %v5160 = vmul.f32 %v4808, %v4271
    %v5161 = vmul.f32 %v4809, %v4495
    %v5162 = vmul.f32 %v4810, %v4497
    %v5163 = vmul.f32 %v4811, %v4721
    %v5164 = vmul.f32 %v4812, %v4723
    %v5165 = vmul.f32 %v4813, %v4047
    %v5166 = vmul.f32 %v4814, %v4049
    %v5167 = vmul.f32 %v4815, %v4273
    %v5168 = vmul.f32 %v4816, %v4275
    %v5169 = vmul.f32 %v4817, %v4499
    %v5170 = vmul.f32 %v4818, %v4501
    %v5171 = vmul.f32 %v4819, %v4725
    %v5172 = vmul.f32 %v4820, %v4727
    %v5173 = vmul.f32 %v4821, %v4053
    %v5174 = vmul.f32 %v4822, %v4055
    %v5175 = vmul.f32 %v4823, %v4279
    %v5176 = vmul.f32 %v4824, %v4281
    %v5177 = vmul.f32 %v4825, %v4505
    %v5178 = vmul.f32 %v4826, %v4507
    %v5179 = vmul.f32 %v4827, %v4731
    %v5180 = vmul.f32 %v4828, %v4733
    %v5181 = vmul.f32 %v4829, %v4057
    %v5182 = vmul.f32 %v4830, %v4059
    %v5183 = vmul.f32 %v4831, %v4283
    %v5184 = vmul.f32 %v4832, %v4285
    %v5185 = vmul.f32 %v4833, %v4509
    %v5186 = vmul.f32 %v4834, %v4511
    %v5187 = vmul.f32 %v4835, %v4735
    %v5188 = vmul.f32 %v4836, %v4737
    %v5189 = vmul.f32 %v4837, %v4063
    %v5190 = vmul.f32 %v4838, %v4065
    %v5191 = vmul.f32 %v4839, %v4289
    %v5192 = vmul.f32 %v4840, %v4291
    %v5193 = vmul.f32 %v4841, %v4515
    %v5194 = vmul.f32 %v4842, %v4517
    %v5195 = vmul.f32 %v4843, %v4741
    %v5196 = vmul.f32 %v4844, %v4743
    %v5197 = vmul.f32 %v4845, %v4067
    %v5198 = vmul.f32 %v4846, %v4069
    %v5199 = vmul.f32 %v4847, %v4293
    %v5200 = vmul.f32 %v4848, %v4295
    %v5201 = vmul.f32 %v4849, %v4519
    %v5202 = vmul.f32 %v4850, %v4521
    %v5203 = vmul.f32 %v4851, %v4745
    %v5204 = vmul.f32 %v4852, %v4747
    %v5205 = vmul.f32 %v4853, %v4073
    %v5206 = vmul.f32 %v4854, %v4075
    %v5207 = vmul.f32 %v4855, %v4299
    %v5208 = vmul.f32 %v4856, %v4301
    %v5209 = vmul.f32 %v4857, %v4525
    %v5210 = vmul.f32 %v4858, %v4527
    %v5211 = vmul.f32 %v4859, %v4751
    %v5212 = vmul.f32 %v4860, %v4753
    %v5213 = vmul.f32 %v4861, %v4077
    %v5214 = vmul.f32 %v4862, %v4079
    %v5215 = vmul.f32 %v4863, %v4303
    %v5216 = vmul.f32 %v4864, %v4305
    %v5217 = vmul.f32 %v4865, %v4529
    %v5218 = vmul.f32 %v4866, %v4531
    %v5219 = vmul.f32 %v4867, %v4755
    %v5220 = vmul.f32 %v4868, %v4757
    %v5221 = vmul.f32 %v4869, %v4083
    %v5222 = vmul.f32 %v4870, %v4085
    %v5223 = vmul.f32 %v4871, %v4309
    %v5224 = vmul.f32 %v4872, %v4311
    %v5225 = vmul.f32 %v4873, %v4535
    %v5226 = vmul.f32 %v4874, %v4537
    %v5227 = vmul.f32 %v4875, %v4761
    %v5228 = vmul.f32 %v4876, %v4763
    %v5229 = vmul.f32 %v4877, %v4087
    %v5230 = vmul.f32 %v4878, %v4089
    %v5231 = vmul.f32 %v4879, %v4313
    %v5232 = vmul.f32 %v4880, %v4315
    %v5233 = vmul.f32 %v4881, %v4539
    %v5234 = vmul.f32 %v4882, %v4541
    %v5235 = vmul.f32 %v4883, %v4765
    %v5236 = vmul.f32 %v4884, %v4767
    %v5237 = vmul.f32 %v4885, %v4093
    %v5238 = vmul.f32 %v4886, %v4095
    %v5239 = vmul.f32 %v4887, %v4319
    %v5240 = vmul.f32 %v4888, %v4321
    %v5241 = vmul.f32 %v4889, %v4545
    %v5242 = vmul.f32 %v4890, %v4547
    %v5243 = vmul.f32 %v4891, %v4771
    %v5244 = vmul.f32 %v4892, %v4773
    %v5245 = vmul.f32 %v4893, %v4097
    %v5246 = vmul.f32 %v4894, %v4099
    %v5247 = vmul.f32 %v4895, %v4323
    %v5248 = vmul.f32 %v4896, %v4325
    %v5249 = vmul.f32 %v4897, %v4549
    %v5250 = vmul.f32 %v4898, %v4551
    %v5251 = vmul.f32 %v4899, %v4775
    %v5252 = vmul.f32 %v4900, %v4777
    %v5253 = vmul.f32 %v4901, %v4103
    %v5254 = vmul.f32 %v4902, %v4105
    %v5255 = vmul.f32 %v4903, %v4329
    %v5256 = vmul.f32 %v4904, %v4331
    %v5257 = vmul.f32 %v4905, %v4555
    %v5258 = vmul.f32 %v4906, %v4557
    %v5259 = vmul.f32 %v4907, %v4781
    %v5260 = vmul.f32 %v4908, %v4783
    %v5261 = vmul.f32 %v4909, %v4107
    %v5262 = vmul.f32 %v4910, %v4109
    %v5263 = vmul.f32 %v4911, %v4333
    %v5264 = vmul.f32 %v4912, %v4335
    %v5265 = vmul.f32 %v4913, %v4559
    %v5266 = vmul.f32 %v4914, %v4561
    %v5267 = vmul.f32 %v4915, %v4785
    %v5268 = vmul.f32 %v4916, %v4787
    %v5269 = vadd.f32 %v5141, %v5149
    %v5270 = vadd.f32 %v5269, %v5157
    %v5271 = vadd.f32 %v5270, %v5165
    %v5272 = vadd.f32 %v5271, %v5173
    %v5273 = vadd.f32 %v5272, %v5181
    %v5274 = vadd.f32 %v5273, %v5189
    %v5275 = vadd.f32 %v5274, %v5197
    %v5276 = vrot.slane %v5275, 4
    %v5277 = vadd.f32 %v5275, %v5276
    %v5278 = vrot.slane %v5277, 2
    %v5279 = vadd.f32 %v5277, %v5278
    %v5280 = vrot.slane %v5279, 1
    %v5281 = vadd.f32 %v5279, %v5280
    %v5282 = vadd.f32 %v5142, %v5150
    %v5283 = vadd.f32 %v5282, %v5158
    %v5284 = vadd.f32 %v5283, %v5166
    %v5285 = vadd.f32 %v5284, %v5174
    %v5286 = vadd.f32 %v5285, %v5182
    %v5287 = vadd.f32 %v5286, %v5190
    %v5288 = vadd.f32 %v5287, %v5198
    %v5289 = vrot.slane %v5288, 4
    %v5290 = vadd.f32 %v5288, %v5289
    %v5291 = vrot.slane %v5290, 2
    %v5292 = vadd.f32 %v5290, %v5291
    %v5293 = vrot.slane %v5292, 1
    %v5294 = vadd.f32 %v5292, %v5293
    %v5295 = vadd.f32 %v5143, %v5151
    %v5296 = vadd.f32 %v5295, %v5159
    %v5297 = vadd.f32 %v5296, %v5167
    %v5298 = vadd.f32 %v5297, %v5175
    %v5299 = vadd.f32 %v5298, %v5183
    %v5300 = vadd.f32 %v5299, %v5191
    %v5301 = vadd.f32 %v5300, %v5199
    %v5302 = vrot.slane %v5301, 4
    %v5303 = vadd.f32 %v5301, %v5302
    %v5304 = vrot.slane %v5303, 2
    %v5305 = vadd.f32 %v5303, %v5304
    %v5306 = vrot.slane %v5305, 1
    %v5307 = vadd.f32 %v5305, %v5306
    %v5308 = vadd.f32 %v5144, %v5152
    %v5309 = vadd.f32 %v5308, %v5160
    %v5310 = vadd.f32 %v5309, %v5168
    %v5311 = vadd.f32 %v5310, %v5176
    %v5312 = vadd.f32 %v5311, %v5184
    %v5313 = vadd.f32 %v5312, %v5192
    %v5314 = vadd.f32 %v5313, %v5200
    %v5315 = vrot.slane %v5314, 4
    %v5316 = vadd.f32 %v5314, %v5315
    %v5317 = vrot.slane %v5316, 2
    %v5318 = vadd.f32 %v5316, %v5317
    %v5319 = vrot.slane %v5318, 1
    %v5320 = vadd.f32 %v5318, %v5319
    %v5321 = vadd.f32 %v5145, %v5153
    %v5322 = vadd.f32 %v5321, %v5161
    %v5323 = vadd.f32 %v5322, %v5169
    %v5324 = vadd.f32 %v5323, %v5177
    %v5325 = vadd.f32 %v5324, %v5185
    %v5326 = vadd.f32 %v5325, %v5193
    %v5327 = vadd.f32 %v5326, %v5201
    %v5328 = vrot.slane %v5327, 4
    %v5329 = vadd.f32 %v5327, %v5328
    %v5330 = vrot.slane %v5329, 2
    %v5331 = vadd.f32 %v5329, %v5330
    %v5332 = vrot.slane %v5331, 1
    %v5333 = vadd.f32 %v5331, %v5332
    %v5334 = vadd.f32 %v5146, %v5154
    %v5335 = vadd.f32 %v5334, %v5162
    %v5336 = vadd.f32 %v5335, %v5170
    %v5337 = vadd.f32 %v5336, %v5178
    %v5338 = vadd.f32 %v5337, %v5186
    %v5339 = vadd.f32 %v5338, %v5194
    %v5340 = vadd.f32 %v5339, %v5202
    %v5341 = vrot.slane %v5340, 4
    %v5342 = vadd.f32 %v5340, %v5341
    %v5343 = vrot.slane %v5342, 2
    %v5344 = vadd.f32 %v5342, %v5343
    %v5345 = vrot.slane %v5344, 1
    %v5346 = vadd.f32 %v5344, %v5345
    %v5347 = vadd.f32 %v5147, %v5155
    %v5348 = vadd.f32 %v5347, %v5163
    %v5349 = vadd.f32 %v5348, %v5171
    %v5350 = vadd.f32 %v5349, %v5179
    %v5351 = vadd.f32 %v5350, %v5187
    %v5352 = vadd.f32 %v5351, %v5195
    %v5353 = vadd.f32 %v5352, %v5203
    %v5354 = vrot.slane %v5353, 4
    %v5355 = vadd.f32 %v5353, %v5354
    %v5356 = vrot.slane %v5355, 2
    %v5357 = vadd.f32 %v5355, %v5356
    %v5358 = vrot.slane %v5357, 1
    %v5359 = vadd.f32 %v5357, %v5358
    %v5360 = vadd.f32 %v5148, %v5156
    %v5361 = vadd.f32 %v5360, %v5164
    %v5362 = vadd.f32 %v5361, %v5172
    %v5363 = vadd.f32 %v5362, %v5180
    %v5364 = vadd.f32 %v5363, %v5188
    %v5365 = vadd.f32 %v5364, %v5196
    %v5366 = vadd.f32 %v5365, %v5204
    %v5367 = vrot.slane %v5366, 4
    %v5368 = vadd.f32 %v5366, %v5367
    %v5369 = vrot.slane %v5368, 2
    %v5370 = vadd.f32 %v5368, %v5369
    %v5371 = vrot.slane %v5370, 1
    %v5372 = vadd.f32 %v5370, %v5371
    %v5373 = vadd.f32 %v5205, %v5213
    %v5374 = vadd.f32 %v5373, %v5221
    %v5375 = vadd.f32 %v5374, %v5229
    %v5376 = vadd.f32 %v5375, %v5237
    %v5377 = vadd.f32 %v5376, %v5245
    %v5378 = vadd.f32 %v5377, %v5253
    %v5379 = vadd.f32 %v5378, %v5261
    %v5380 = vrot.slane %v5379, 4
    %v5381 = vadd.f32 %v5379, %v5380
    %v5382 = vrot.slane %v5381, 2
    %v5383 = vadd.f32 %v5381, %v5382
    %v5384 = vrot.slane %v5383, 1
    %v5385 = vadd.f32 %v5383, %v5384
    %v5386 = vadd.f32 %v5206, %v5214
    %v5387 = vadd.f32 %v5386, %v5222
    %v5388 = vadd.f32 %v5387, %v5230
    %v5389 = vadd.f32 %v5388, %v5238
    %v5390 = vadd.f32 %v5389, %v5246
    %v5391 = vadd.f32 %v5390, %v5254
    %v5392 = vadd.f32 %v5391, %v5262
    %v5393 = vrot.slane %v5392, 4
    %v5394 = vadd.f32 %v5392, %v5393
    %v5395 = vrot.slane %v5394, 2
    %v5396 = vadd.f32 %v5394, %v5395
    %v5397 = vrot.slane %v5396, 1
    %v5398 = vadd.f32 %v5396, %v5397
    %v5399 = vadd.f32 %v5207, %v5215
    %v5400 = vadd.f32 %v5399, %v5223
    %v5401 = vadd.f32 %v5400, %v5231
    %v5402 = vadd.f32 %v5401, %v5239
    %v5403 = vadd.f32 %v5402, %v5247
    %v5404 = vadd.f32 %v5403, %v5255
    %v5405 = vadd.f32 %v5404, %v5263
    %v5406 = vrot.slane %v5405, 4
    %v5407 = vadd.f32 %v5405, %v5406
    %v5408 = vrot.slane %v5407, 2
    %v5409 = vadd.f32 %v5407, %v5408
    %v5410 = vrot.slane %v5409, 1
    %v5411 = vadd.f32 %v5409, %v5410
    %v5412 = vadd.f32 %v5208, %v5216
    %v5413 = vadd.f32 %v5412, %v5224
    %v5414 = vadd.f32 %v5413, %v5232
    %v5415 = vadd.f32 %v5414, %v5240
    %v5416 = vadd.f32 %v5415, %v5248
    %v5417 = vadd.f32 %v5416, %v5256
    %v5418 = vadd.f32 %v5417, %v5264
    %v5419 = vrot.slane %v5418, 4
    %v5420 = vadd.f32 %v5418, %v5419
    %v5421 = vrot.slane %v5420, 2
    %v5422 = vadd.f32 %v5420, %v5421
    %v5423 = vrot.slane %v5422, 1
    %v5424 = vadd.f32 %v5422, %v5423
    %v5425 = vadd.f32 %v5209, %v5217
    %v5426 = vadd.f32 %v5425, %v5225
    %v5427 = vadd.f32 %v5426, %v5233
    %v5428 = vadd.f32 %v5427, %v5241
    %v5429 = vadd.f32 %v5428, %v5249
    %v5430 = vadd.f32 %v5429, %v5257
    %v5431 = vadd.f32 %v5430, %v5265
    %v5432 = vrot.slane %v5431, 4
    %v5433 = vadd.f32 %v5431, %v5432
    %v5434 = vrot.slane %v5433, 2
    %v5435 = vadd.f32 %v5433, %v5434
    %v5436 = vrot.slane %v5435, 1
    %v5437 = vadd.f32 %v5435, %v5436
    %v5438 = vadd.f32 %v5210, %v5218
    %v5439 = vadd.f32 %v5438, %v5226
    %v5440 = vadd.f32 %v5439, %v5234
    %v5441 = vadd.f32 %v5440, %v5242
    %v5442 = vadd.f32 %v5441, %v5250
    %v5443 = vadd.f32 %v5442, %v5258
    %v5444 = vadd.f32 %v5443, %v5266
    %v5445 = vrot.slane %v5444, 4
    %v5446 = vadd.f32 %v5444, %v5445
    %v5447 = vrot.slane %v5446, 2
    %v5448 = vadd.f32 %v5446, %v5447
    %v5449 = vrot.slane %v5448, 1
    %v5450 = vadd.f32 %v5448, %v5449
    %v5451 = vadd.f32 %v5211, %v5219
    %v5452 = vadd.f32 %v5451, %v5227
    %v5453 = vadd.f32 %v5452, %v5235
    %v5454 = vadd.f32 %v5453, %v5243
    %v5455 = vadd.f32 %v5454, %v5251
    %v5456 = vadd.f32 %v5455, %v5259
    %v5457 = vadd.f32 %v5456, %v5267
    %v5458 = vrot.slane %v5457, 4
    %v5459 = vadd.f32 %v5457, %v5458
    %v5460 = vrot.slane %v5459, 2
    %v5461 = vadd.f32 %v5459, %v5460
    %v5462 = vrot.slane %v5461, 1
    %v5463 = vadd.f32 %v5461, %v5462
    %v5464 = vadd.f32 %v5212, %v5220
    %v5465 = vadd.f32 %v5464, %v5228
    %v5466 = vadd.f32 %v5465, %v5236
    %v5467 = vadd.f32 %v5466, %v5244
    %v5468 = vadd.f32 %v5467, %v5252
    %v5469 = vadd.f32 %v5468, %v5260
    %v5470 = vadd.f32 %v5469, %v5268
    %v5471 = vrot.slane %v5470, 4
    %v5472 = vadd.f32 %v5470, %v5471
    %v5473 = vrot.slane %v5472, 2
    %v5474 = vadd.f32 %v5472, %v5473
    %v5475 = vrot.slane %v5474, 1
    %v5476 = vadd.f32 %v5474, %v5475
    %v5477 = vmul.f32 %v5281, %v1638
    %v5478 = vmul.f32 %v5294, %v1638
    %v5479 = vmul.f32 %v5307, %v1638
    %v5480 = vmul.f32 %v5320, %v1638
    %v5481 = vmul.f32 %v5333, %v1638
    %v5482 = vmul.f32 %v5346, %v1638
    %v5483 = vmul.f32 %v5359, %v1638
    %v5484 = vmul.f32 %v5372, %v1638
    %v5485 = vmul.f32 %v5385, %v1643
    %v5486 = vmul.f32 %v5398, %v1643
    %v5487 = vmul.f32 %v5411, %v1643
    %v5488 = vmul.f32 %v5424, %v1643
    %v5489 = vmul.f32 %v5437, %v1643
    %v5490 = vmul.f32 %v5450, %v1643
    %v5491 = vmul.f32 %v5463, %v1643
    %v5492 = vmul.f32 %v5476, %v1643
    %v5493 = vmul.f32 %v5125, %v5125
    %v5494 = vmul.f32 %v5126, %v5126
    %v5495 = vmul.f32 %v5127, %v5127
    %v5496 = vmul.f32 %v5128, %v5128
    %v5497 = vmul.f32 %v5129, %v5129
    %v5498 = vmul.f32 %v5130, %v5130
    %v5499 = vmul.f32 %v5131, %v5131
    %v5500 = vmul.f32 %v5132, %v5132
    %v5501 = vmul.f32 %v5133, %v5133
    %v5502 = vmul.f32 %v5134, %v5134
    %v5503 = vmul.f32 %v5135, %v5135
    %v5504 = vmul.f32 %v5136, %v5136
    %v5505 = vmul.f32 %v5137, %v5137
    %v5506 = vmul.f32 %v5138, %v5138
    %v5507 = vmul.f32 %v5139, %v5139
    %v5508 = vmul.f32 %v5140, %v5140
    %v5509 = vsub.f32 %v5477, %v5493
    %v5510 = vsub.f32 %v5478, %v5494
    %v5511 = vsub.f32 %v5479, %v5495
    %v5512 = vsub.f32 %v5480, %v5496
    %v5513 = vsub.f32 %v5481, %v5497
    %v5514 = vsub.f32 %v5482, %v5498
    %v5515 = vsub.f32 %v5483, %v5499
    %v5516 = vsub.f32 %v5484, %v5500
    %v5517 = vsub.f32 %v5485, %v5501
    %v5518 = vsub.f32 %v5486, %v5502
    %v5519 = vsub.f32 %v5487, %v5503
    %v5520 = vsub.f32 %v5488, %v5504
    %v5521 = vsub.f32 %v5489, %v5505
    %v5522 = vsub.f32 %v5490, %v5506
    %v5523 = vsub.f32 %v5491, %v5507
    %v5524 = vsub.f32 %v5492, %v5508
    %v5525 = vmax.f32 %v5509, 0.0
    %v5526 = vmax.f32 %v5510, 0.0
    %v5527 = vmax.f32 %v5511, 0.0
    %v5528 = vmax.f32 %v5512, 0.0
    %v5529 = vmax.f32 %v5513, 0.0
    %v5530 = vmax.f32 %v5514, 0.0
    %v5531 = vmax.f32 %v5515, 0.0
    %v5532 = vmax.f32 %v5516, 0.0
    %v5533 = vmax.f32 %v5517, 0.0
    %v5534 = vmax.f32 %v5518, 0.0
    %v5535 = vmax.f32 %v5519, 0.0
    %v5536 = vmax.f32 %v5520, 0.0
    %v5537 = vmax.f32 %v5521, 0.0
    %v5538 = vmax.f32 %v5522, 0.0
    %v5539 = vmax.f32 %v5523, 0.0
    %v5540 = vmax.f32 %v5524, 0.0
    %v5541 = vld [vmem:[%s8] sm:$0xff]
    %v5542 = vadd.f32 %v5525, 1e-05
    %v5543 = vadd.f32 %v5526, 1e-05
    %v5544 = vadd.f32 %v5527, 1e-05
    %v5545 = vadd.f32 %v5528, 1e-05
    %v5546 = vadd.f32 %v5529, 1e-05
    %v5547 = vadd.f32 %v5530, 1e-05
    %v5548 = vadd.f32 %v5531, 1e-05
    %v5549 = vadd.f32 %v5532, 1e-05
    %v5550 = vadd.f32 %v5533, 1e-05
    %v5551 = vadd.f32 %v5534, 1e-05
    %v5552 = vadd.f32 %v5535, 1e-05
    %v5553 = vadd.f32 %v5536, 1e-05
    %v5554 = vadd.f32 %v5537, 1e-05
    %v5555 = vadd.f32 %v5538, 1e-05
    %v5556 = vadd.f32 %v5539, 1e-05
    %v5557 = vadd.f32 %v5540, 1e-05
    %v5558 = vrsqrt.pop %v5542
    %v5559 = vrsqrt.pop %v5543
    %v5560 = vrsqrt.pop %v5544
    %v5561 = vrsqrt.pop %v5545
    %v5562 = vrsqrt.pop %v5546
    %v5563 = vrsqrt.pop %v5547
    %v5564 = vrsqrt.pop %v5548
    %v5565 = vrsqrt.pop %v5549
    %v5566 = vrsqrt.pop %v5550
    %v5567 = vrsqrt.pop %v5551
    %v5568 = vrsqrt.pop %v5552
    %v5569 = vrsqrt.pop %v5553
    %v5570 = vrsqrt.pop %v5554
    %v5571 = vrsqrt.pop %v5555
    %v5572 = vrsqrt.pop %v5556
    %v5573 = vrsqrt.pop %v5557
    %v5590 = vcombine.low %v5558, %v5559
    %v5591 = vcombine.low %v5560, %v5561
    %v5592 = vcombine.low %v5562, %v5563
    %v5593 = vcombine.low %v5564, %v5565
    %v5595 = vunpack.c.l.s4 1966171168
    %v5596 = vunpack.c.0.s8 %v5595
    %v5597 = vlaneseq
    %v5598 = vshrl.u32 %v5597, 7
    %v5599 = vsub.s32 %v5596, %v5598
    %v5600 = vrot.slane %v5590, %v5599
    %v5602 = vunpack.c.l.s4 1966171168
    %v5603 = vunpack.c.0.s8 %v5602
    %v5604 = vlaneseq
    %v5605 = vshrl.u32 %v5604, 7
    %v5606 = vsub.s32 %v5603, %v5605
    %v5607 = vrot.slane %v5591, %v5606
    %v5609 = vunpack.c.l.s4 1966171168
    %v5610 = vunpack.c.0.s8 %v5609
    %v5611 = vlaneseq
    %v5612 = vshrl.u32 %v5611, 7
    %v5613 = vsub.s32 %v5610, %v5612
    %v5614 = vrot.slane %v5592, %v5613
    %v5616 = vunpack.c.l.s4 1966171168
    %v5617 = vunpack.c.0.s8 %v5616
    %v5618 = vlaneseq
    %v5619 = vshrl.u32 %v5618, 7
    %v5620 = vsub.s32 %v5617, %v5619
    %v5621 = vrot.slane %v5593, %v5620
    %v5622 = vcombine.low %v5600, %v5607
    %v5623 = vcombine.low %v5614, %v5621
    %v5625 = vunpack.c.l.s4 1966171168
    %v5626 = vunpack.c.0.s8 %v5625
    %v5627 = vlaneseq
    %v5628 = vshrl.u32 %v5627, 7
    %v5629 = vsub.s32 %v5626, %v5628
    %v5630 = vrot.slane %v5622, %v5629
    %v5632 = vunpack.c.l.s4 1966171168
    %v5633 = vunpack.c.0.s8 %v5632
    %v5634 = vlaneseq
    %v5635 = vshrl.u32 %v5634, 7
    %v5636 = vsub.s32 %v5633, %v5635
    %v5637 = vrot.slane %v5623, %v5636
    %v5638 = vcombine.low %v5630, %v5637
    %v5639 = vcombine.low %v5566, %v5567
    %v5640 = vcombine.low %v5568, %v5569
    %v5641 = vcombine.low %v5570, %v5571
    %v5642 = vcombine.low %v5572, %v5573
    %v5644 = vunpack.c.l.s4 1966171168
    %v5645 = vunpack.c.0.s8 %v5644
    %v5646 = vlaneseq
    %v5647 = vshrl.u32 %v5646, 7
    %v5648 = vsub.s32 %v5645, %v5647
    %v5649 = vrot.slane %v5639, %v5648
    %v5651 = vunpack.c.l.s4 1966171168
    %v5652 = vunpack.c.0.s8 %v5651
    %v5653 = vlaneseq
    %v5654 = vshrl.u32 %v5653, 7
    %v5655 = vsub.s32 %v5652, %v5654
    %v5656 = vrot.slane %v5640, %v5655
    %v5658 = vunpack.c.l.s4 1966171168
    %v5659 = vunpack.c.0.s8 %v5658
    %v5660 = vlaneseq
    %v5661 = vshrl.u32 %v5660, 7
    %v5662 = vsub.s32 %v5659, %v5661
    %v5663 = vrot.slane %v5641, %v5662
    %v5665 = vunpack.c.l.s4 1966171168
    %v5666 = vunpack.c.0.s8 %v5665
    %v5667 = vlaneseq
    %v5668 = vshrl.u32 %v5667, 7
    %v5669 = vsub.s32 %v5666, %v5668
    %v5670 = vrot.slane %v5642, %v5669
    %v5671 = vcombine.low %v5649, %v5656
    %v5672 = vcombine.low %v5663, %v5670
    %v5674 = vunpack.c.l.s4 1966171168
    %v5675 = vunpack.c.0.s8 %v5674
    %v5676 = vlaneseq
    %v5677 = vshrl.u32 %v5676, 7
    %v5678 = vsub.s32 %v5675, %v5677
    %v5679 = vrot.slane %v5671, %v5678
    %v5681 = vunpack.c.l.s4 1966171168
    %v5682 = vunpack.c.0.s8 %v5681
    %v5683 = vlaneseq
    %v5684 = vshrl.u32 %v5683, 7
    %v5685 = vsub.s32 %v5682, %v5684
    %v5686 = vrot.slane %v5672, %v5685
    %v5687 = vcombine.low %v5679, %v5686
    %v5690 = vmul.f32 %v5541, %v5638
    %v5691 = vmul.f32 %v5541, %v5687
    %v5692 = vld [vmem:[%s9] sm:$0xff]
    %v5695 = vlaneseq
    %v5696 = vshrl.u32 %v5695, 7
    %v5697 = vsub.s32 0, %v5696
    %v5698 = vrot.slane %v5690, %v5697
    %v5699 = vlaneseq
    %v5700 = vshrl.u32 %v5699, 7
    %v5701 = vsub.s32 1, %v5700
    %v5702 = vrot.slane %v5690, %v5701
    %v5703 = vlaneseq
    %v5704 = vshrl.u32 %v5703, 7
    %v5705 = vsub.s32 2, %v5704
    %v5706 = vrot.slane %v5690, %v5705
    %v5707 = vlaneseq
    %v5708 = vshrl.u32 %v5707, 7
    %v5709 = vsub.s32 3, %v5708
    %v5710 = vrot.slane %v5690, %v5709
    %v5711 = vlaneseq
    %v5712 = vshrl.u32 %v5711, 7
    %v5713 = vsub.s32 4, %v5712
    %v5714 = vrot.slane %v5690, %v5713
    %v5715 = vlaneseq
    %v5716 = vshrl.u32 %v5715, 7
    %v5717 = vsub.s32 5, %v5716
    %v5718 = vrot.slane %v5690, %v5717
    %v5719 = vlaneseq
    %v5720 = vshrl.u32 %v5719, 7
    %v5721 = vsub.s32 6, %v5720
    %v5722 = vrot.slane %v5690, %v5721
    %v5723 = vlaneseq
    %v5724 = vshrl.u32 %v5723, 7
    %v5725 = vsub.s32 7, %v5724
    %v5726 = vrot.slane %v5690, %v5725
    %v5727 = vlaneseq
    %v5728 = vshrl.u32 %v5727, 7
    %v5729 = vsub.s32 0, %v5728
    %v5730 = vrot.slane %v5691, %v5729
    %v5731 = vlaneseq
    %v5732 = vshrl.u32 %v5731, 7
    %v5733 = vsub.s32 1, %v5732
    %v5734 = vrot.slane %v5691, %v5733
    %v5735 = vlaneseq
    %v5736 = vshrl.u32 %v5735, 7
    %v5737 = vsub.s32 2, %v5736
    %v5738 = vrot.slane %v5691, %v5737
    %v5739 = vlaneseq
    %v5740 = vshrl.u32 %v5739, 7
    %v5741 = vsub.s32 3, %v5740
    %v5742 = vrot.slane %v5691, %v5741
    %v5743 = vlaneseq
    %v5744 = vshrl.u32 %v5743, 7
    %v5745 = vsub.s32 4, %v5744
    %v5746 = vrot.slane %v5691, %v5745
    %v5747 = vlaneseq
    %v5748 = vshrl.u32 %v5747, 7
    %v5749 = vsub.s32 5, %v5748
    %v5750 = vrot.slane %v5691, %v5749
    %v5751 = vlaneseq
    %v5752 = vshrl.u32 %v5751, 7
    %v5753 = vsub.s32 6, %v5752
    %v5754 = vrot.slane %v5691, %v5753
    %v5755 = vlaneseq
    %v5756 = vshrl.u32 %v5755, 7
    %v5757 = vsub.s32 7, %v5756
    %v5758 = vrot.slane %v5691, %v5757
    %v5775 = vmul.f32 %v5125, %v5698
    %v5776 = vmul.f32 %v5126, %v5702
    %v5777 = vmul.f32 %v5127, %v5706
    %v5778 = vmul.f32 %v5128, %v5710
    %v5779 = vmul.f32 %v5129, %v5714
    %v5780 = vmul.f32 %v5130, %v5718
    %v5781 = vmul.f32 %v5131, %v5722
    %v5782 = vmul.f32 %v5132, %v5726
    %v5783 = vmul.f32 %v5133, %v5730
    %v5784 = vmul.f32 %v5134, %v5734
    %v5785 = vmul.f32 %v5135, %v5738
    %v5786 = vmul.f32 %v5136, %v5742
    %v5787 = vmul.f32 %v5137, %v5746
    %v5788 = vmul.f32 %v5138, %v5750
    %v5789 = vmul.f32 %v5139, %v5754
    %v5790 = vmul.f32 %v5140, %v5758
    %v5807 = vcombine.low %v5775, %v5776
    %v5808 = vcombine.low %v5777, %v5778
    %v5809 = vcombine.low %v5779, %v5780
    %v5810 = vcombine.low %v5781, %v5782
    %v5812 = vunpack.c.l.s4 1966171168
    %v5813 = vunpack.c.0.s8 %v5812
    %v5814 = vlaneseq
    %v5815 = vshrl.u32 %v5814, 7
    %v5816 = vsub.s32 %v5813, %v5815
    %v5817 = vrot.slane %v5807, %v5816
    %v5819 = vunpack.c.l.s4 1966171168
    %v5820 = vunpack.c.0.s8 %v5819
    %v5821 = vlaneseq
    %v5822 = vshrl.u32 %v5821, 7
    %v5823 = vsub.s32 %v5820, %v5822
    %v5824 = vrot.slane %v5808, %v5823
    %v5826 = vunpack.c.l.s4 1966171168
    %v5827 = vunpack.c.0.s8 %v5826
    %v5828 = vlaneseq
    %v5829 = vshrl.u32 %v5828, 7
    %v5830 = vsub.s32 %v5827, %v5829
    %v5831 = vrot.slane %v5809, %v5830
    %v5833 = vunpack.c.l.s4 1966171168
    %v5834 = vunpack.c.0.s8 %v5833
    %v5835 = vlaneseq
    %v5836 = vshrl.u32 %v5835, 7
    %v5837 = vsub.s32 %v5834, %v5836
    %v5838 = vrot.slane %v5810, %v5837
    %v5839 = vcombine.low %v5817, %v5824
    %v5840 = vcombine.low %v5831, %v5838
    %v5842 = vunpack.c.l.s4 1966171168
    %v5843 = vunpack.c.0.s8 %v5842
    %v5844 = vlaneseq
    %v5845 = vshrl.u32 %v5844, 7
    %v5846 = vsub.s32 %v5843, %v5845
    %v5847 = vrot.slane %v5839, %v5846
    %v5849 = vunpack.c.l.s4 1966171168
    %v5850 = vunpack.c.0.s8 %v5849
    %v5851 = vlaneseq
    %v5852 = vshrl.u32 %v5851, 7
    %v5853 = vsub.s32 %v5850, %v5852
    %v5854 = vrot.slane %v5840, %v5853
    %v5855 = vcombine.low %v5847, %v5854
    %v5856 = vcombine.low %v5783, %v5784
    %v5857 = vcombine.low %v5785, %v5786
    %v5858 = vcombine.low %v5787, %v5788
    %v5859 = vcombine.low %v5789, %v5790
    %v5861 = vunpack.c.l.s4 1966171168
    %v5862 = vunpack.c.0.s8 %v5861
    %v5863 = vlaneseq
    %v5864 = vshrl.u32 %v5863, 7
    %v5865 = vsub.s32 %v5862, %v5864
    %v5866 = vrot.slane %v5856, %v5865
    %v5868 = vunpack.c.l.s4 1966171168
    %v5869 = vunpack.c.0.s8 %v5868
    %v5870 = vlaneseq
    %v5871 = vshrl.u32 %v5870, 7
    %v5872 = vsub.s32 %v5869, %v5871
    %v5873 = vrot.slane %v5857, %v5872
    %v5875 = vunpack.c.l.s4 1966171168
    %v5876 = vunpack.c.0.s8 %v5875
    %v5877 = vlaneseq
    %v5878 = vshrl.u32 %v5877, 7
    %v5879 = vsub.s32 %v5876, %v5878
    %v5880 = vrot.slane %v5858, %v5879
    %v5882 = vunpack.c.l.s4 1966171168
    %v5883 = vunpack.c.0.s8 %v5882
    %v5884 = vlaneseq
    %v5885 = vshrl.u32 %v5884, 7
    %v5886 = vsub.s32 %v5883, %v5885
    %v5887 = vrot.slane %v5859, %v5886
    %v5888 = vcombine.low %v5866, %v5873
    %v5889 = vcombine.low %v5880, %v5887
    %v5891 = vunpack.c.l.s4 1966171168
    %v5892 = vunpack.c.0.s8 %v5891
    %v5893 = vlaneseq
    %v5894 = vshrl.u32 %v5893, 7
    %v5895 = vsub.s32 %v5892, %v5894
    %v5896 = vrot.slane %v5888, %v5895
    %v5898 = vunpack.c.l.s4 1966171168
    %v5899 = vunpack.c.0.s8 %v5898
    %v5900 = vlaneseq
    %v5901 = vshrl.u32 %v5900, 7
    %v5902 = vsub.s32 %v5899, %v5901
    %v5903 = vrot.slane %v5889, %v5902
    %v5904 = vcombine.low %v5896, %v5903
    %v5907 = vsub.f32 %v5692, %v5855
    %v5908 = vsub.f32 %v5692, %v5904
    %v5909 = vpack.c.bf16 %v4037, %v4033
    %v5910 = vpack.c.bf16 %v4039, %v4035
    %v5911 = vpack.c.bf16 %v4263, %v4259
    %v5912 = vpack.c.bf16 %v4265, %v4261
    %v5913 = vpack.c.bf16 %v4489, %v4485
    %v5914 = vpack.c.bf16 %v4491, %v4487
    %v5915 = vpack.c.bf16 %v4715, %v4711
    %v5916 = vpack.c.bf16 %v4717, %v4713
    %v5917 = vpack.c.bf16 %v4047, %v4043
    %v5918 = vpack.c.bf16 %v4049, %v4045
    %v5919 = vpack.c.bf16 %v4273, %v4269
    %v5920 = vpack.c.bf16 %v4275, %v4271
    %v5921 = vpack.c.bf16 %v4499, %v4495
    %v5922 = vpack.c.bf16 %v4501, %v4497
    %v5923 = vpack.c.bf16 %v4725, %v4721
    %v5924 = vpack.c.bf16 %v4727, %v4723
    %v5925 = vpack.c.bf16 %v4057, %v4053
    %v5926 = vpack.c.bf16 %v4059, %v4055
    %v5927 = vpack.c.bf16 %v4283, %v4279
    %v5928 = vpack.c.bf16 %v4285, %v4281
    %v5929 = vpack.c.bf16 %v4509, %v4505
    %v5930 = vpack.c.bf16 %v4511, %v4507
    %v5931 = vpack.c.bf16 %v4735, %v4731
    %v5932 = vpack.c.bf16 %v4737, %v4733
    %v5933 = vpack.c.bf16 %v4067, %v4063
    %v5934 = vpack.c.bf16 %v4069, %v4065
    %v5935 = vpack.c.bf16 %v4293, %v4289
    %v5936 = vpack.c.bf16 %v4295, %v4291
    %v5937 = vpack.c.bf16 %v4519, %v4515
    %v5938 = vpack.c.bf16 %v4521, %v4517
    %v5939 = vpack.c.bf16 %v4745, %v4741
    %v5940 = vpack.c.bf16 %v4747, %v4743
    %v5941 = vpack.c.bf16 %v4077, %v4073
    %v5942 = vpack.c.bf16 %v4079, %v4075
    %v5943 = vpack.c.bf16 %v4303, %v4299
    %v5944 = vpack.c.bf16 %v4305, %v4301
    %v5945 = vpack.c.bf16 %v4529, %v4525
    %v5946 = vpack.c.bf16 %v4531, %v4527
    %v5947 = vpack.c.bf16 %v4755, %v4751
    %v5948 = vpack.c.bf16 %v4757, %v4753
    %v5949 = vpack.c.bf16 %v4087, %v4083
    %v5950 = vpack.c.bf16 %v4089, %v4085
    %v5951 = vpack.c.bf16 %v4313, %v4309
    %v5952 = vpack.c.bf16 %v4315, %v4311
    %v5953 = vpack.c.bf16 %v4539, %v4535
    %v5954 = vpack.c.bf16 %v4541, %v4537
    %v5955 = vpack.c.bf16 %v4765, %v4761
    %v5956 = vpack.c.bf16 %v4767, %v4763
    %v5957 = vpack.c.bf16 %v4097, %v4093
    %v5958 = vpack.c.bf16 %v4099, %v4095
    %v5959 = vpack.c.bf16 %v4323, %v4319
    %v5960 = vpack.c.bf16 %v4325, %v4321
    %v5961 = vpack.c.bf16 %v4549, %v4545
    %v5962 = vpack.c.bf16 %v4551, %v4547
    %v5963 = vpack.c.bf16 %v4775, %v4771
    %v5964 = vpack.c.bf16 %v4777, %v4773
    %v5965 = vpack.c.bf16 %v4107, %v4103
    %v5966 = vpack.c.bf16 %v4109, %v4105
    %v5967 = vpack.c.bf16 %v4333, %v4329
    %v5968 = vpack.c.bf16 %v4335, %v4331
    %v5969 = vpack.c.bf16 %v4559, %v4555
    %v5970 = vpack.c.bf16 %v4561, %v4557
    %v5971 = vpack.c.bf16 %v4785, %v4781
    %v5972 = vpack.c.bf16 %v4787, %v4783
    %v5973 = vpack.c.bf16 %v5698, %v5698
    %v5974 = vpack.c.bf16 %v5702, %v5702
    %v5975 = vpack.c.bf16 %v5706, %v5706
    %v5976 = vpack.c.bf16 %v5710, %v5710
    %v5977 = vpack.c.bf16 %v5714, %v5714
    %v5978 = vpack.c.bf16 %v5718, %v5718
    %v5979 = vpack.c.bf16 %v5722, %v5722
    %v5980 = vpack.c.bf16 %v5726, %v5726
    %v5981 = vpack.c.bf16 %v5730, %v5730
    %v5982 = vpack.c.bf16 %v5734, %v5734
    %v5983 = vpack.c.bf16 %v5738, %v5738
    %v5984 = vpack.c.bf16 %v5742, %v5742
    %v5985 = vpack.c.bf16 %v5746, %v5746
    %v5986 = vpack.c.bf16 %v5750, %v5750
    %v5987 = vpack.c.bf16 %v5754, %v5754
    %v5988 = vpack.c.bf16 %v5758, %v5758
    %v5990 = vpack.i.b16 %v5973, %v5973
    %v5992 = vlaneseq
    %v5993 = vshrl.u32 %v5992, 7
    %v5994 = vsub.s32 0, %v5993
    %v5995 = vrot.slane %v5990, %v5994
    %v5997 = vpack.i.b16 %v5974, %v5974
    %v5999 = vlaneseq
    %v6000 = vshrl.u32 %v5999, 7
    %v6001 = vsub.s32 0, %v6000
    %v6002 = vrot.slane %v5997, %v6001
    %v6004 = vpack.i.b16 %v5975, %v5975
    %v6006 = vlaneseq
    %v6007 = vshrl.u32 %v6006, 7
    %v6008 = vsub.s32 0, %v6007
    %v6009 = vrot.slane %v6004, %v6008
    %v6011 = vpack.i.b16 %v5976, %v5976
    %v6013 = vlaneseq
    %v6014 = vshrl.u32 %v6013, 7
    %v6015 = vsub.s32 0, %v6014
    %v6016 = vrot.slane %v6011, %v6015
    %v6018 = vpack.i.b16 %v5977, %v5977
    %v6020 = vlaneseq
    %v6021 = vshrl.u32 %v6020, 7
    %v6022 = vsub.s32 0, %v6021
    %v6023 = vrot.slane %v6018, %v6022
    %v6025 = vpack.i.b16 %v5978, %v5978
    %v6027 = vlaneseq
    %v6028 = vshrl.u32 %v6027, 7
    %v6029 = vsub.s32 0, %v6028
    %v6030 = vrot.slane %v6025, %v6029
    %v6032 = vpack.i.b16 %v5979, %v5979
    %v6034 = vlaneseq
    %v6035 = vshrl.u32 %v6034, 7
    %v6036 = vsub.s32 0, %v6035
    %v6037 = vrot.slane %v6032, %v6036
    %v6039 = vpack.i.b16 %v5980, %v5980
    %v6041 = vlaneseq
    %v6042 = vshrl.u32 %v6041, 7
    %v6043 = vsub.s32 0, %v6042
    %v6044 = vrot.slane %v6039, %v6043
    %v6046 = vpack.i.b16 %v5981, %v5981
    %v6048 = vlaneseq
    %v6049 = vshrl.u32 %v6048, 7
    %v6050 = vsub.s32 0, %v6049
    %v6051 = vrot.slane %v6046, %v6050
    %v6053 = vpack.i.b16 %v5982, %v5982
    %v6055 = vlaneseq
    %v6056 = vshrl.u32 %v6055, 7
    %v6057 = vsub.s32 0, %v6056
    %v6058 = vrot.slane %v6053, %v6057
    %v6060 = vpack.i.b16 %v5983, %v5983
    %v6062 = vlaneseq
    %v6063 = vshrl.u32 %v6062, 7
    %v6064 = vsub.s32 0, %v6063
    %v6065 = vrot.slane %v6060, %v6064
    %v6067 = vpack.i.b16 %v5984, %v5984
    %v6069 = vlaneseq
    %v6070 = vshrl.u32 %v6069, 7
    %v6071 = vsub.s32 0, %v6070
    %v6072 = vrot.slane %v6067, %v6071
    %v6074 = vpack.i.b16 %v5985, %v5985
    %v6076 = vlaneseq
    %v6077 = vshrl.u32 %v6076, 7
    %v6078 = vsub.s32 0, %v6077
    %v6079 = vrot.slane %v6074, %v6078
    %v6081 = vpack.i.b16 %v5986, %v5986
    %v6083 = vlaneseq
    %v6084 = vshrl.u32 %v6083, 7
    %v6085 = vsub.s32 0, %v6084
    %v6086 = vrot.slane %v6081, %v6085
    %v6088 = vpack.i.b16 %v5987, %v5987
    %v6090 = vlaneseq
    %v6091 = vshrl.u32 %v6090, 7
    %v6092 = vsub.s32 0, %v6091
    %v6093 = vrot.slane %v6088, %v6092
    %v6095 = vpack.i.b16 %v5988, %v5988
    %v6097 = vlaneseq
    %v6098 = vshrl.u32 %v6097, 7
    %v6099 = vsub.s32 0, %v6098
    %v6100 = vrot.slane %v6095, %v6099
    %v6101 = vmul.bf16 %v5909, %v5995
    %v6102 = vmul.bf16 %v5910, %v6002
    %v6103 = vmul.bf16 %v5911, %v6009
    %v6104 = vmul.bf16 %v5912, %v6016
    %v6105 = vmul.bf16 %v5913, %v6023
    %v6106 = vmul.bf16 %v5914, %v6030
    %v6107 = vmul.bf16 %v5915, %v6037
    %v6108 = vmul.bf16 %v5916, %v6044
    %v6109 = vmul.bf16 %v5917, %v5995
    %v6110 = vmul.bf16 %v5918, %v6002
    %v6111 = vmul.bf16 %v5919, %v6009
    %v6112 = vmul.bf16 %v5920, %v6016
    %v6113 = vmul.bf16 %v5921, %v6023
    %v6114 = vmul.bf16 %v5922, %v6030
    %v6115 = vmul.bf16 %v5923, %v6037
    %v6116 = vmul.bf16 %v5924, %v6044
    %v6117 = vmul.bf16 %v5925, %v5995
    %v6118 = vmul.bf16 %v5926, %v6002
    %v6119 = vmul.bf16 %v5927, %v6009
    %v6120 = vmul.bf16 %v5928, %v6016
    %v6121 = vmul.bf16 %v5929, %v6023
    %v6122 = vmul.bf16 %v5930, %v6030
    %v6123 = vmul.bf16 %v5931, %v6037
    %v6124 = vmul.bf16 %v5932, %v6044
    %v6125 = vmul.bf16 %v5933, %v5995
    %v6126 = vmul.bf16 %v5934, %v6002
    %v6127 = vmul.bf16 %v5935, %v6009
    %v6128 = vmul.bf16 %v5936, %v6016
    %v6129 = vmul.bf16 %v5937, %v6023
    %v6130 = vmul.bf16 %v5938, %v6030
    %v6131 = vmul.bf16 %v5939, %v6037
    %v6132 = vmul.bf16 %v5940, %v6044
    %v6133 = vmul.bf16 %v5941, %v6051
    %v6134 = vmul.bf16 %v5942, %v6058
    %v6135 = vmul.bf16 %v5943, %v6065
    %v6136 = vmul.bf16 %v5944, %v6072
    %v6137 = vmul.bf16 %v5945, %v6079
    %v6138 = vmul.bf16 %v5946, %v6086
    %v6139 = vmul.bf16 %v5947, %v6093
    %v6140 = vmul.bf16 %v5948, %v6100
    %v6141 = vmul.bf16 %v5949, %v6051
    %v6142 = vmul.bf16 %v5950, %v6058
    %v6143 = vmul.bf16 %v5951, %v6065
    %v6144 = vmul.bf16 %v5952, %v6072
    %v6145 = vmul.bf16 %v5953, %v6079
    %v6146 = vmul.bf16 %v5954, %v6086
    %v6147 = vmul.bf16 %v5955, %v6093
    %v6148 = vmul.bf16 %v5956, %v6100
    %v6149 = vmul.bf16 %v5957, %v6051
    %v6150 = vmul.bf16 %v5958, %v6058
    %v6151 = vmul.bf16 %v5959, %v6065
    %v6152 = vmul.bf16 %v5960, %v6072
    %v6153 = vmul.bf16 %v5961, %v6079
    %v6154 = vmul.bf16 %v5962, %v6086
    %v6155 = vmul.bf16 %v5963, %v6093
    %v6156 = vmul.bf16 %v5964, %v6100
    %v6157 = vmul.bf16 %v5965, %v6051
    %v6158 = vmul.bf16 %v5966, %v6058
    %v6159 = vmul.bf16 %v5967, %v6065
    %v6160 = vmul.bf16 %v5968, %v6072
    %v6161 = vmul.bf16 %v5969, %v6079
    %v6162 = vmul.bf16 %v5970, %v6086
    %v6163 = vmul.bf16 %v5971, %v6093
    %v6164 = vmul.bf16 %v5972, %v6100
    %v6167 = vlaneseq
    %v6168 = vshrl.u32 %v6167, 7
    %v6169 = vsub.s32 0, %v6168
    %v6170 = vrot.slane %v5907, %v6169
    %v6171 = vlaneseq
    %v6172 = vshrl.u32 %v6171, 7
    %v6173 = vsub.s32 1, %v6172
    %v6174 = vrot.slane %v5907, %v6173
    %v6175 = vlaneseq
    %v6176 = vshrl.u32 %v6175, 7
    %v6177 = vsub.s32 2, %v6176
    %v6178 = vrot.slane %v5907, %v6177
    %v6179 = vlaneseq
    %v6180 = vshrl.u32 %v6179, 7
    %v6181 = vsub.s32 3, %v6180
    %v6182 = vrot.slane %v5907, %v6181
    %v6183 = vlaneseq
    %v6184 = vshrl.u32 %v6183, 7
    %v6185 = vsub.s32 4, %v6184
    %v6186 = vrot.slane %v5907, %v6185
    %v6187 = vlaneseq
    %v6188 = vshrl.u32 %v6187, 7
    %v6189 = vsub.s32 5, %v6188
    %v6190 = vrot.slane %v5907, %v6189
    %v6191 = vlaneseq
    %v6192 = vshrl.u32 %v6191, 7
    %v6193 = vsub.s32 6, %v6192
    %v6194 = vrot.slane %v5907, %v6193
    %v6195 = vlaneseq
    %v6196 = vshrl.u32 %v6195, 7
    %v6197 = vsub.s32 7, %v6196
    %v6198 = vrot.slane %v5907, %v6197
    %v6199 = vlaneseq
    %v6200 = vshrl.u32 %v6199, 7
    %v6201 = vsub.s32 0, %v6200
    %v6202 = vrot.slane %v5908, %v6201
    %v6203 = vlaneseq
    %v6204 = vshrl.u32 %v6203, 7
    %v6205 = vsub.s32 1, %v6204
    %v6206 = vrot.slane %v5908, %v6205
    %v6207 = vlaneseq
    %v6208 = vshrl.u32 %v6207, 7
    %v6209 = vsub.s32 2, %v6208
    %v6210 = vrot.slane %v5908, %v6209
    %v6211 = vlaneseq
    %v6212 = vshrl.u32 %v6211, 7
    %v6213 = vsub.s32 3, %v6212
    %v6214 = vrot.slane %v5908, %v6213
    %v6215 = vlaneseq
    %v6216 = vshrl.u32 %v6215, 7
    %v6217 = vsub.s32 4, %v6216
    %v6218 = vrot.slane %v5908, %v6217
    %v6219 = vlaneseq
    %v6220 = vshrl.u32 %v6219, 7
    %v6221 = vsub.s32 5, %v6220
    %v6222 = vrot.slane %v5908, %v6221
    %v6223 = vlaneseq
    %v6224 = vshrl.u32 %v6223, 7
    %v6225 = vsub.s32 6, %v6224
    %v6226 = vrot.slane %v5908, %v6225
    %v6227 = vlaneseq
    %v6228 = vshrl.u32 %v6227, 7
    %v6229 = vsub.s32 7, %v6228
    %v6230 = vrot.slane %v5908, %v6229
    %v6247 = vpack.c.bf16 %v6170, %v6170
    %v6248 = vpack.c.bf16 %v6174, %v6174
    %v6249 = vpack.c.bf16 %v6178, %v6178
    %v6250 = vpack.c.bf16 %v6182, %v6182
    %v6251 = vpack.c.bf16 %v6186, %v6186
    %v6252 = vpack.c.bf16 %v6190, %v6190
    %v6253 = vpack.c.bf16 %v6194, %v6194
    %v6254 = vpack.c.bf16 %v6198, %v6198
    %v6255 = vpack.c.bf16 %v6202, %v6202
    %v6256 = vpack.c.bf16 %v6206, %v6206
    %v6257 = vpack.c.bf16 %v6210, %v6210
    %v6258 = vpack.c.bf16 %v6214, %v6214
    %v6259 = vpack.c.bf16 %v6218, %v6218
    %v6260 = vpack.c.bf16 %v6222, %v6222
    %v6261 = vpack.c.bf16 %v6226, %v6226
    %v6262 = vpack.c.bf16 %v6230, %v6230
    %v6264 = vpack.i.b16 %v6247, %v6247
    %v6266 = vlaneseq
    %v6267 = vshrl.u32 %v6266, 7
    %v6268 = vsub.s32 0, %v6267
    %v6269 = vrot.slane %v6264, %v6268
    %v6271 = vpack.i.b16 %v6248, %v6248
    %v6273 = vlaneseq
    %v6274 = vshrl.u32 %v6273, 7
    %v6275 = vsub.s32 0, %v6274
    %v6276 = vrot.slane %v6271, %v6275
    %v6278 = vpack.i.b16 %v6249, %v6249
    %v6280 = vlaneseq
    %v6281 = vshrl.u32 %v6280, 7
    %v6282 = vsub.s32 0, %v6281
    %v6283 = vrot.slane %v6278, %v6282
    %v6285 = vpack.i.b16 %v6250, %v6250
    %v6287 = vlaneseq
    %v6288 = vshrl.u32 %v6287, 7
    %v6289 = vsub.s32 0, %v6288
    %v6290 = vrot.slane %v6285, %v6289
    %v6292 = vpack.i.b16 %v6251, %v6251
    %v6294 = vlaneseq
    %v6295 = vshrl.u32 %v6294, 7
    %v6296 = vsub.s32 0, %v6295
    %v6297 = vrot.slane %v6292, %v6296
    %v6299 = vpack.i.b16 %v6252, %v6252
    %v6301 = vlaneseq
    %v6302 = vshrl.u32 %v6301, 7
    %v6303 = vsub.s32 0, %v6302
    %v6304 = vrot.slane %v6299, %v6303
    %v6306 = vpack.i.b16 %v6253, %v6253
    %v6308 = vlaneseq
    %v6309 = vshrl.u32 %v6308, 7
    %v6310 = vsub.s32 0, %v6309
    %v6311 = vrot.slane %v6306, %v6310
    %v6313 = vpack.i.b16 %v6254, %v6254
    %v6315 = vlaneseq
    %v6316 = vshrl.u32 %v6315, 7
    %v6317 = vsub.s32 0, %v6316
    %v6318 = vrot.slane %v6313, %v6317
    %v6320 = vpack.i.b16 %v6255, %v6255
    %v6322 = vlaneseq
    %v6323 = vshrl.u32 %v6322, 7
    %v6324 = vsub.s32 0, %v6323
    %v6325 = vrot.slane %v6320, %v6324
    %v6327 = vpack.i.b16 %v6256, %v6256
    %v6329 = vlaneseq
    %v6330 = vshrl.u32 %v6329, 7
    %v6331 = vsub.s32 0, %v6330
    %v6332 = vrot.slane %v6327, %v6331
    %v6334 = vpack.i.b16 %v6257, %v6257
    %v6336 = vlaneseq
    %v6337 = vshrl.u32 %v6336, 7
    %v6338 = vsub.s32 0, %v6337
    %v6339 = vrot.slane %v6334, %v6338
    %v6341 = vpack.i.b16 %v6258, %v6258
    %v6343 = vlaneseq
    %v6344 = vshrl.u32 %v6343, 7
    %v6345 = vsub.s32 0, %v6344
    %v6346 = vrot.slane %v6341, %v6345
    %v6348 = vpack.i.b16 %v6259, %v6259
    %v6350 = vlaneseq
    %v6351 = vshrl.u32 %v6350, 7
    %v6352 = vsub.s32 0, %v6351
    %v6353 = vrot.slane %v6348, %v6352
    %v6355 = vpack.i.b16 %v6260, %v6260
    %v6357 = vlaneseq
    %v6358 = vshrl.u32 %v6357, 7
    %v6359 = vsub.s32 0, %v6358
    %v6360 = vrot.slane %v6355, %v6359
    %v6362 = vpack.i.b16 %v6261, %v6261
    %v6364 = vlaneseq
    %v6365 = vshrl.u32 %v6364, 7
    %v6366 = vsub.s32 0, %v6365
    %v6367 = vrot.slane %v6362, %v6366
    %v6369 = vpack.i.b16 %v6262, %v6262
    %v6371 = vlaneseq
    %v6372 = vshrl.u32 %v6371, 7
    %v6373 = vsub.s32 0, %v6372
    %v6374 = vrot.slane %v6369, %v6373
    %v6375 = vadd.bf16 %v6101, %v6269
    %v6376 = vadd.bf16 %v6102, %v6276
    %v6377 = vadd.bf16 %v6103, %v6283
    %v6378 = vadd.bf16 %v6104, %v6290
    %v6379 = vadd.bf16 %v6105, %v6297
    %v6380 = vadd.bf16 %v6106, %v6304
    %v6381 = vadd.bf16 %v6107, %v6311
    %v6382 = vadd.bf16 %v6108, %v6318
    %v6383 = vadd.bf16 %v6109, %v6269
    %v6384 = vadd.bf16 %v6110, %v6276
    %v6385 = vadd.bf16 %v6111, %v6283
    %v6386 = vadd.bf16 %v6112, %v6290
    %v6387 = vadd.bf16 %v6113, %v6297
    %v6388 = vadd.bf16 %v6114, %v6304
    %v6389 = vadd.bf16 %v6115, %v6311
    %v6390 = vadd.bf16 %v6116, %v6318
    %v6391 = vadd.bf16 %v6117, %v6269
    %v6392 = vadd.bf16 %v6118, %v6276
    %v6393 = vadd.bf16 %v6119, %v6283
    %v6394 = vadd.bf16 %v6120, %v6290
    %v6395 = vadd.bf16 %v6121, %v6297
    %v6396 = vadd.bf16 %v6122, %v6304
    %v6397 = vadd.bf16 %v6123, %v6311
    %v6398 = vadd.bf16 %v6124, %v6318
    %v6399 = vadd.bf16 %v6125, %v6269
    %v6400 = vadd.bf16 %v6126, %v6276
    %v6401 = vadd.bf16 %v6127, %v6283
    %v6402 = vadd.bf16 %v6128, %v6290
    %v6403 = vadd.bf16 %v6129, %v6297
    %v6404 = vadd.bf16 %v6130, %v6304
    %v6405 = vadd.bf16 %v6131, %v6311
    %v6406 = vadd.bf16 %v6132, %v6318
    %v6407 = vadd.bf16 %v6133, %v6325
    %v6408 = vadd.bf16 %v6134, %v6332
    %v6409 = vadd.bf16 %v6135, %v6339
    %v6410 = vadd.bf16 %v6136, %v6346
    %v6411 = vadd.bf16 %v6137, %v6353
    %v6412 = vadd.bf16 %v6138, %v6360
    %v6413 = vadd.bf16 %v6139, %v6367
    %v6414 = vadd.bf16 %v6140, %v6374
    %v6415 = vadd.bf16 %v6141, %v6325
    %v6416 = vadd.bf16 %v6142, %v6332
    %v6417 = vadd.bf16 %v6143, %v6339
    %v6418 = vadd.bf16 %v6144, %v6346
    %v6419 = vadd.bf16 %v6145, %v6353
    %v6420 = vadd.bf16 %v6146, %v6360
    %v6421 = vadd.bf16 %v6147, %v6367
    %v6422 = vadd.bf16 %v6148, %v6374
    %v6423 = vadd.bf16 %v6149, %v6325
    %v6424 = vadd.bf16 %v6150, %v6332
    %v6425 = vadd.bf16 %v6151, %v6339
    %v6426 = vadd.bf16 %v6152, %v6346
    %v6427 = vadd.bf16 %v6153, %v6353
    %v6428 = vadd.bf16 %v6154, %v6360
    %v6429 = vadd.bf16 %v6155, %v6367
    %v6430 = vadd.bf16 %v6156, %v6374
    %v6431 = vadd.bf16 %v6157, %v6325
    %v6432 = vadd.bf16 %v6158, %v6332
    %v6433 = vadd.bf16 %v6159, %v6339
    %v6434 = vadd.bf16 %v6160, %v6346
    %v6435 = vadd.bf16 %v6161, %v6353
    %v6436 = vadd.bf16 %v6162, %v6360
    %v6437 = vadd.bf16 %v6163, %v6367
    %v6438 = vadd.bf16 %v6164, %v6374
    %v6439 = vmax.bf16 %v6375, 0
    %v6440 = vmax.bf16 %v6376, 0
    %v6441 = vmax.bf16 %v6377, 0
    %v6442 = vmax.bf16 %v6378, 0
    %v6443 = vmax.bf16 %v6379, 0
    %v6444 = vmax.bf16 %v6380, 0
    %v6445 = vmax.bf16 %v6381, 0
    %v6446 = vmax.bf16 %v6382, 0
    %v6447 = vmax.bf16 %v6383, 0
    %v6448 = vmax.bf16 %v6384, 0
    %v6449 = vmax.bf16 %v6385, 0
    %v6450 = vmax.bf16 %v6386, 0
    %v6451 = vmax.bf16 %v6387, 0
    %v6452 = vmax.bf16 %v6388, 0
    %v6453 = vmax.bf16 %v6389, 0
    %v6454 = vmax.bf16 %v6390, 0
    %v6455 = vmax.bf16 %v6391, 0
    %v6456 = vmax.bf16 %v6392, 0
    %v6457 = vmax.bf16 %v6393, 0
    %v6458 = vmax.bf16 %v6394, 0
    %v6459 = vmax.bf16 %v6395, 0
    %v6460 = vmax.bf16 %v6396, 0
    %v6461 = vmax.bf16 %v6397, 0
    %v6462 = vmax.bf16 %v6398, 0
    %v6463 = vmax.bf16 %v6399, 0
    %v6464 = vmax.bf16 %v6400, 0
    %v6465 = vmax.bf16 %v6401, 0
    %v6466 = vmax.bf16 %v6402, 0
    %v6467 = vmax.bf16 %v6403, 0
    %v6468 = vmax.bf16 %v6404, 0
    %v6469 = vmax.bf16 %v6405, 0
    %v6470 = vmax.bf16 %v6406, 0
    %v6471 = vmax.bf16 %v6407, 0
    %v6472 = vmax.bf16 %v6408, 0
    %v6473 = vmax.bf16 %v6409, 0
    %v6474 = vmax.bf16 %v6410, 0
    %v6475 = vmax.bf16 %v6411, 0
    %v6476 = vmax.bf16 %v6412, 0
    %v6477 = vmax.bf16 %v6413, 0
    %v6478 = vmax.bf16 %v6414, 0
    %v6479 = vmax.bf16 %v6415, 0
    %v6480 = vmax.bf16 %v6416, 0
    %v6481 = vmax.bf16 %v6417, 0
    %v6482 = vmax.bf16 %v6418, 0
    %v6483 = vmax.bf16 %v6419, 0
    %v6484 = vmax.bf16 %v6420, 0
    %v6485 = vmax.bf16 %v6421, 0
    %v6486 = vmax.bf16 %v6422, 0
    %v6487 = vmax.bf16 %v6423, 0
    %v6488 = vmax.bf16 %v6424, 0
    %v6489 = vmax.bf16 %v6425, 0
    %v6490 = vmax.bf16 %v6426, 0
    %v6491 = vmax.bf16 %v6427, 0
    %v6492 = vmax.bf16 %v6428, 0
    %v6493 = vmax.bf16 %v6429, 0
    %v6494 = vmax.bf16 %v6430, 0
    %v6495 = vmax.bf16 %v6431, 0
    %v6496 = vmax.bf16 %v6432, 0
    %v6497 = vmax.bf16 %v6433, 0
    %v6498 = vmax.bf16 %v6434, 0
    %v6499 = vmax.bf16 %v6435, 0
    %v6500 = vmax.bf16 %v6436, 0
    %v6501 = vmax.bf16 %v6437, 0
    %v6502 = vmax.bf16 %v6438, 0
    %v6503 = vsub.f32 %v66, 1.0
    %v6504 = vsub.f32 %v67, 1.0
    %v6505 = vmul.f32 %v6503, 1e+30
    %v6506 = vmul.f32 %v6504, 1e+30
    %v6507 = vpack.c.bf16 %v6505, %v6505
    %v6508 = vpack.c.bf16 %v6506, %v6506
    %v6573 = vunpack.c.l.b16 %v6439
    %v6574 = vunpack.c.l.b16 %v6440
    %v6575 = vunpack.c.l.b16 %v6441
    %v6576 = vunpack.c.l.b16 %v6442
    %v6577 = vunpack.c.l.b16 %v6443
    %v6578 = vunpack.c.l.b16 %v6444
    %v6579 = vunpack.c.l.b16 %v6445
    %v6580 = vunpack.c.l.b16 %v6446
    %v6581 = vunpack.c.h.b16 %v6439
    %v6582 = vunpack.c.h.b16 %v6440
    %v6583 = vunpack.c.h.b16 %v6441
    %v6584 = vunpack.c.h.b16 %v6442
    %v6585 = vunpack.c.h.b16 %v6443
    %v6586 = vunpack.c.h.b16 %v6444
    %v6587 = vunpack.c.h.b16 %v6445
    %v6588 = vunpack.c.h.b16 %v6446
    %v6589 = vunpack.c.l.b16 %v6447
    %v6590 = vunpack.c.l.b16 %v6448
    %v6591 = vunpack.c.l.b16 %v6449
    %v6592 = vunpack.c.l.b16 %v6450
    %v6593 = vunpack.c.l.b16 %v6451
    %v6594 = vunpack.c.l.b16 %v6452
    %v6595 = vunpack.c.l.b16 %v6453
    %v6596 = vunpack.c.l.b16 %v6454
    %v6597 = vunpack.c.h.b16 %v6447
    %v6598 = vunpack.c.h.b16 %v6448
    %v6599 = vunpack.c.h.b16 %v6449
    %v6600 = vunpack.c.h.b16 %v6450
    %v6601 = vunpack.c.h.b16 %v6451
    %v6602 = vunpack.c.h.b16 %v6452
    %v6603 = vunpack.c.h.b16 %v6453
    %v6604 = vunpack.c.h.b16 %v6454
    %v6605 = vunpack.c.l.b16 %v6455
    %v6606 = vunpack.c.l.b16 %v6456
    %v6607 = vunpack.c.l.b16 %v6457
    %v6608 = vunpack.c.l.b16 %v6458
    %v6609 = vunpack.c.l.b16 %v6459
    %v6610 = vunpack.c.l.b16 %v6460
    %v6611 = vunpack.c.l.b16 %v6461
    %v6612 = vunpack.c.l.b16 %v6462
    %v6613 = vunpack.c.h.b16 %v6455
    %v6614 = vunpack.c.h.b16 %v6456
    %v6615 = vunpack.c.h.b16 %v6457
    %v6616 = vunpack.c.h.b16 %v6458
    %v6617 = vunpack.c.h.b16 %v6459
    %v6618 = vunpack.c.h.b16 %v6460
    %v6619 = vunpack.c.h.b16 %v6461
    %v6620 = vunpack.c.h.b16 %v6462
    %v6621 = vunpack.c.l.b16 %v6463
    %v6622 = vunpack.c.l.b16 %v6464
    %v6623 = vunpack.c.l.b16 %v6465
    %v6624 = vunpack.c.l.b16 %v6466
    %v6625 = vunpack.c.l.b16 %v6467
    %v6626 = vunpack.c.l.b16 %v6468
    %v6627 = vunpack.c.l.b16 %v6469
    %v6628 = vunpack.c.l.b16 %v6470
    %v6629 = vunpack.c.h.b16 %v6463
    %v6630 = vunpack.c.h.b16 %v6464
    %v6631 = vunpack.c.h.b16 %v6465
    %v6632 = vunpack.c.h.b16 %v6466
    %v6633 = vunpack.c.h.b16 %v6467
    %v6634 = vunpack.c.h.b16 %v6468
    %v6635 = vunpack.c.h.b16 %v6469
    %v6636 = vunpack.c.h.b16 %v6470
    %v6637 = vunpack.c.l.b16 %v6471
    %v6638 = vunpack.c.l.b16 %v6472
    %v6639 = vunpack.c.l.b16 %v6473
    %v6640 = vunpack.c.l.b16 %v6474
    %v6641 = vunpack.c.l.b16 %v6475
    %v6642 = vunpack.c.l.b16 %v6476
    %v6643 = vunpack.c.l.b16 %v6477
    %v6644 = vunpack.c.l.b16 %v6478
    %v6645 = vunpack.c.h.b16 %v6471
    %v6646 = vunpack.c.h.b16 %v6472
    %v6647 = vunpack.c.h.b16 %v6473
    %v6648 = vunpack.c.h.b16 %v6474
    %v6649 = vunpack.c.h.b16 %v6475
    %v6650 = vunpack.c.h.b16 %v6476
    %v6651 = vunpack.c.h.b16 %v6477
    %v6652 = vunpack.c.h.b16 %v6478
    %v6653 = vunpack.c.l.b16 %v6479
    %v6654 = vunpack.c.l.b16 %v6480
    %v6655 = vunpack.c.l.b16 %v6481
    %v6656 = vunpack.c.l.b16 %v6482
    %v6657 = vunpack.c.l.b16 %v6483
    %v6658 = vunpack.c.l.b16 %v6484
    %v6659 = vunpack.c.l.b16 %v6485
    %v6660 = vunpack.c.l.b16 %v6486
    %v6661 = vunpack.c.h.b16 %v6479
    %v6662 = vunpack.c.h.b16 %v6480
    %v6663 = vunpack.c.h.b16 %v6481
    %v6664 = vunpack.c.h.b16 %v6482
    %v6665 = vunpack.c.h.b16 %v6483
    %v6666 = vunpack.c.h.b16 %v6484
    %v6667 = vunpack.c.h.b16 %v6485
    %v6668 = vunpack.c.h.b16 %v6486
    %v6669 = vunpack.c.l.b16 %v6487
    %v6670 = vunpack.c.l.b16 %v6488
    %v6671 = vunpack.c.l.b16 %v6489
    %v6672 = vunpack.c.l.b16 %v6490
    %v6673 = vunpack.c.l.b16 %v6491
    %v6674 = vunpack.c.l.b16 %v6492
    %v6675 = vunpack.c.l.b16 %v6493
    %v6676 = vunpack.c.l.b16 %v6494
    %v6677 = vunpack.c.h.b16 %v6487
    %v6678 = vunpack.c.h.b16 %v6488
    %v6679 = vunpack.c.h.b16 %v6489
    %v6680 = vunpack.c.h.b16 %v6490
    %v6681 = vunpack.c.h.b16 %v6491
    %v6682 = vunpack.c.h.b16 %v6492
    %v6683 = vunpack.c.h.b16 %v6493
    %v6684 = vunpack.c.h.b16 %v6494
    %v6685 = vunpack.c.l.b16 %v6495
    %v6686 = vunpack.c.l.b16 %v6496
    %v6687 = vunpack.c.l.b16 %v6497
    %v6688 = vunpack.c.l.b16 %v6498
    %v6689 = vunpack.c.l.b16 %v6499
    %v6690 = vunpack.c.l.b16 %v6500
    %v6691 = vunpack.c.l.b16 %v6501
    %v6692 = vunpack.c.l.b16 %v6502
    %v6693 = vunpack.c.h.b16 %v6495
    %v6694 = vunpack.c.h.b16 %v6496
    %v6695 = vunpack.c.h.b16 %v6497
    %v6696 = vunpack.c.h.b16 %v6498
    %v6697 = vunpack.c.h.b16 %v6499
    %v6698 = vunpack.c.h.b16 %v6500
    %v6699 = vunpack.c.h.b16 %v6501
    %v6700 = vunpack.c.h.b16 %v6502
    %v6701 = vpack.c.b16 %v6574, %v6573
    %v6702 = vpack.c.b16 %v6576, %v6575
    %v6703 = vpack.c.b16 %v6578, %v6577
    %v6704 = vpack.c.b16 %v6580, %v6579
    %v6705 = vpack.c.b16 %v6582, %v6581
    %v6706 = vpack.c.b16 %v6584, %v6583
    %v6707 = vpack.c.b16 %v6586, %v6585
    %v6708 = vpack.c.b16 %v6588, %v6587
    %v6709 = vpack.c.b16 %v6590, %v6589
    %v6710 = vpack.c.b16 %v6592, %v6591
    %v6711 = vpack.c.b16 %v6594, %v6593
    %v6712 = vpack.c.b16 %v6596, %v6595
    %v6713 = vpack.c.b16 %v6598, %v6597
    %v6714 = vpack.c.b16 %v6600, %v6599
    %v6715 = vpack.c.b16 %v6602, %v6601
    %v6716 = vpack.c.b16 %v6604, %v6603
    %v6717 = vpack.c.b16 %v6606, %v6605
    %v6718 = vpack.c.b16 %v6608, %v6607
    %v6719 = vpack.c.b16 %v6610, %v6609
    %v6720 = vpack.c.b16 %v6612, %v6611
    %v6721 = vpack.c.b16 %v6614, %v6613
    %v6722 = vpack.c.b16 %v6616, %v6615
    %v6723 = vpack.c.b16 %v6618, %v6617
    %v6724 = vpack.c.b16 %v6620, %v6619
    %v6725 = vpack.c.b16 %v6622, %v6621
    %v6726 = vpack.c.b16 %v6624, %v6623
    %v6727 = vpack.c.b16 %v6626, %v6625
    %v6728 = vpack.c.b16 %v6628, %v6627
    %v6729 = vpack.c.b16 %v6630, %v6629
    %v6730 = vpack.c.b16 %v6632, %v6631
    %v6731 = vpack.c.b16 %v6634, %v6633
    %v6732 = vpack.c.b16 %v6636, %v6635
    %v6733 = vpack.c.b16 %v6638, %v6637
    %v6734 = vpack.c.b16 %v6640, %v6639
    %v6735 = vpack.c.b16 %v6642, %v6641
    %v6736 = vpack.c.b16 %v6644, %v6643
    %v6737 = vpack.c.b16 %v6646, %v6645
    %v6738 = vpack.c.b16 %v6648, %v6647
    %v6739 = vpack.c.b16 %v6650, %v6649
    %v6740 = vpack.c.b16 %v6652, %v6651
    %v6741 = vpack.c.b16 %v6654, %v6653
    %v6742 = vpack.c.b16 %v6656, %v6655
    %v6743 = vpack.c.b16 %v6658, %v6657
    %v6744 = vpack.c.b16 %v6660, %v6659
    %v6745 = vpack.c.b16 %v6662, %v6661
    %v6746 = vpack.c.b16 %v6664, %v6663
    %v6747 = vpack.c.b16 %v6666, %v6665
    %v6748 = vpack.c.b16 %v6668, %v6667
    %v6749 = vpack.c.b16 %v6670, %v6669
    %v6750 = vpack.c.b16 %v6672, %v6671
    %v6751 = vpack.c.b16 %v6674, %v6673
    %v6752 = vpack.c.b16 %v6676, %v6675
    %v6753 = vpack.c.b16 %v6678, %v6677
    %v6754 = vpack.c.b16 %v6680, %v6679
    %v6755 = vpack.c.b16 %v6682, %v6681
    %v6756 = vpack.c.b16 %v6684, %v6683
    %v6757 = vpack.c.b16 %v6686, %v6685
    %v6758 = vpack.c.b16 %v6688, %v6687
    %v6759 = vpack.c.b16 %v6690, %v6689
    %v6760 = vpack.c.b16 %v6692, %v6691
    %v6761 = vpack.c.b16 %v6694, %v6693
    %v6762 = vpack.c.b16 %v6696, %v6695
    %v6763 = vpack.c.b16 %v6698, %v6697
    %v6764 = vpack.c.b16 %v6700, %v6699
    %6830 = vset.pattern.permute.xlu0 0
    %6831 = vperm.xlu0 %6830, %v6507
    %v6832 = vpop.permute.xlu0 %6831
    %6834 = vset.pattern.permute.xlu0 0
    %6835 = vperm.xlu0 %6834, %v6508
    %v6836 = vpop.permute.xlu0 %6835
    %v6840 = vunpack.c.l.s4 839922192
    %v6841 = vunpack.c.0.s8 %v6840
    %v6842 = vlaneseq
    %v6843 = vshrl.u32 %v6842, 7
    %v6844 = vsub.s32 %v6841, %v6843
    %v6845 = vrot.slane %v6832, %v6844
    %v6847 = vunpack.c.l.s4 839922192
    %v6848 = vunpack.c.0.s8 %v6847
    %v6849 = vlaneseq
    %v6850 = vshrl.u32 %v6849, 7
    %v6851 = vsub.s32 %v6848, %v6850
    %v6852 = vrot.slane %v6836, %v6851
    %v6855 = vadd.bf16 %v6701, %v6845
    %v6856 = vadd.bf16 %v6702, %v6845
    %v6857 = vadd.bf16 %v6703, %v6845
    %v6858 = vadd.bf16 %v6704, %v6845
    %v6859 = vadd.bf16 %v6705, %v6845
    %v6860 = vadd.bf16 %v6706, %v6845
    %v6861 = vadd.bf16 %v6707, %v6845
    %v6862 = vadd.bf16 %v6708, %v6845
    %v6863 = vadd.bf16 %v6709, %v6845
    %v6864 = vadd.bf16 %v6710, %v6845
    %v6865 = vadd.bf16 %v6711, %v6845
    %v6866 = vadd.bf16 %v6712, %v6845
    %v6867 = vadd.bf16 %v6713, %v6845
    %v6868 = vadd.bf16 %v6714, %v6845
    %v6869 = vadd.bf16 %v6715, %v6845
    %v6870 = vadd.bf16 %v6716, %v6845
    %v6871 = vadd.bf16 %v6717, %v6845
    %v6872 = vadd.bf16 %v6718, %v6845
    %v6873 = vadd.bf16 %v6719, %v6845
    %v6874 = vadd.bf16 %v6720, %v6845
    %v6875 = vadd.bf16 %v6721, %v6845
    %v6876 = vadd.bf16 %v6722, %v6845
    %v6877 = vadd.bf16 %v6723, %v6845
    %v6878 = vadd.bf16 %v6724, %v6845
    %v6879 = vadd.bf16 %v6725, %v6845
    %v6880 = vadd.bf16 %v6726, %v6845
    %v6881 = vadd.bf16 %v6727, %v6845
    %v6882 = vadd.bf16 %v6728, %v6845
    %v6883 = vadd.bf16 %v6729, %v6845
    %v6884 = vadd.bf16 %v6730, %v6845
    %v6885 = vadd.bf16 %v6731, %v6845
    %v6886 = vadd.bf16 %v6732, %v6845
    %v6887 = vadd.bf16 %v6733, %v6852
    %v6888 = vadd.bf16 %v6734, %v6852
    %v6889 = vadd.bf16 %v6735, %v6852
    %v6890 = vadd.bf16 %v6736, %v6852
    %v6891 = vadd.bf16 %v6737, %v6852
    %v6892 = vadd.bf16 %v6738, %v6852
    %v6893 = vadd.bf16 %v6739, %v6852
    %v6894 = vadd.bf16 %v6740, %v6852
    %v6895 = vadd.bf16 %v6741, %v6852
    %v6896 = vadd.bf16 %v6742, %v6852
    %v6897 = vadd.bf16 %v6743, %v6852
    %v6898 = vadd.bf16 %v6744, %v6852
    %v6899 = vadd.bf16 %v6745, %v6852
    %v6900 = vadd.bf16 %v6746, %v6852
    %v6901 = vadd.bf16 %v6747, %v6852
    %v6902 = vadd.bf16 %v6748, %v6852
    %v6903 = vadd.bf16 %v6749, %v6852
    %v6904 = vadd.bf16 %v6750, %v6852
    %v6905 = vadd.bf16 %v6751, %v6852
    %v6906 = vadd.bf16 %v6752, %v6852
    %v6907 = vadd.bf16 %v6753, %v6852
    %v6908 = vadd.bf16 %v6754, %v6852
    %v6909 = vadd.bf16 %v6755, %v6852
    %v6910 = vadd.bf16 %v6756, %v6852
    %v6911 = vadd.bf16 %v6757, %v6852
    %v6912 = vadd.bf16 %v6758, %v6852
    %v6913 = vadd.bf16 %v6759, %v6852
    %v6914 = vadd.bf16 %v6760, %v6852
    %v6915 = vadd.bf16 %v6761, %v6852
    %v6916 = vadd.bf16 %v6762, %v6852
    %v6917 = vadd.bf16 %v6763, %v6852
    %v6918 = vadd.bf16 %v6764, %v6852
    %v6983 = vunpack.c.l.b16 %v6855
    %v6984 = vunpack.c.h.b16 %v6855
    %v6985 = vunpack.c.l.b16 %v6856
    %v6986 = vunpack.c.h.b16 %v6856
    %v6987 = vunpack.c.l.b16 %v6857
    %v6988 = vunpack.c.h.b16 %v6857
    %v6989 = vunpack.c.l.b16 %v6858
    %v6990 = vunpack.c.h.b16 %v6858
    %v6991 = vunpack.c.l.b16 %v6859
    %v6992 = vunpack.c.h.b16 %v6859
    %v6993 = vunpack.c.l.b16 %v6860
    %v6994 = vunpack.c.h.b16 %v6860
    %v6995 = vunpack.c.l.b16 %v6861
    %v6996 = vunpack.c.h.b16 %v6861
    %v6997 = vunpack.c.l.b16 %v6862
    %v6998 = vunpack.c.h.b16 %v6862
    %v6999 = vunpack.c.l.b16 %v6863
    %v7000 = vunpack.c.h.b16 %v6863
    %v7001 = vunpack.c.l.b16 %v6864
    %v7002 = vunpack.c.h.b16 %v6864
    %v7003 = vunpack.c.l.b16 %v6865
    %v7004 = vunpack.c.h.b16 %v6865
    %v7005 = vunpack.c.l.b16 %v6866
    %v7006 = vunpack.c.h.b16 %v6866
    %v7007 = vunpack.c.l.b16 %v6867
    %v7008 = vunpack.c.h.b16 %v6867
    %v7009 = vunpack.c.l.b16 %v6868
    %v7010 = vunpack.c.h.b16 %v6868
    %v7011 = vunpack.c.l.b16 %v6869
    %v7012 = vunpack.c.h.b16 %v6869
    %v7013 = vunpack.c.l.b16 %v6870
    %v7014 = vunpack.c.h.b16 %v6870
    %v7015 = vunpack.c.l.b16 %v6871
    %v7016 = vunpack.c.h.b16 %v6871
    %v7017 = vunpack.c.l.b16 %v6872
    %v7018 = vunpack.c.h.b16 %v6872
    %v7019 = vunpack.c.l.b16 %v6873
    %v7020 = vunpack.c.h.b16 %v6873
    %v7021 = vunpack.c.l.b16 %v6874
    %v7022 = vunpack.c.h.b16 %v6874
    %v7023 = vunpack.c.l.b16 %v6875
    %v7024 = vunpack.c.h.b16 %v6875
    %v7025 = vunpack.c.l.b16 %v6876
    %v7026 = vunpack.c.h.b16 %v6876
    %v7027 = vunpack.c.l.b16 %v6877
    %v7028 = vunpack.c.h.b16 %v6877
    %v7029 = vunpack.c.l.b16 %v6878
    %v7030 = vunpack.c.h.b16 %v6878
    %v7031 = vunpack.c.l.b16 %v6879
    %v7032 = vunpack.c.h.b16 %v6879
    %v7033 = vunpack.c.l.b16 %v6880
    %v7034 = vunpack.c.h.b16 %v6880
    %v7035 = vunpack.c.l.b16 %v6881
    %v7036 = vunpack.c.h.b16 %v6881
    %v7037 = vunpack.c.l.b16 %v6882
    %v7038 = vunpack.c.h.b16 %v6882
    %v7039 = vunpack.c.l.b16 %v6883
    %v7040 = vunpack.c.h.b16 %v6883
    %v7041 = vunpack.c.l.b16 %v6884
    %v7042 = vunpack.c.h.b16 %v6884
    %v7043 = vunpack.c.l.b16 %v6885
    %v7044 = vunpack.c.h.b16 %v6885
    %v7045 = vunpack.c.l.b16 %v6886
    %v7046 = vunpack.c.h.b16 %v6886
    %v7047 = vunpack.c.l.b16 %v6887
    %v7048 = vunpack.c.h.b16 %v6887
    %v7049 = vunpack.c.l.b16 %v6888
    %v7050 = vunpack.c.h.b16 %v6888
    %v7051 = vunpack.c.l.b16 %v6889
    %v7052 = vunpack.c.h.b16 %v6889
    %v7053 = vunpack.c.l.b16 %v6890
    %v7054 = vunpack.c.h.b16 %v6890
    %v7055 = vunpack.c.l.b16 %v6891
    %v7056 = vunpack.c.h.b16 %v6891
    %v7057 = vunpack.c.l.b16 %v6892
    %v7058 = vunpack.c.h.b16 %v6892
    %v7059 = vunpack.c.l.b16 %v6893
    %v7060 = vunpack.c.h.b16 %v6893
    %v7061 = vunpack.c.l.b16 %v6894
    %v7062 = vunpack.c.h.b16 %v6894
    %v7063 = vunpack.c.l.b16 %v6895
    %v7064 = vunpack.c.h.b16 %v6895
    %v7065 = vunpack.c.l.b16 %v6896
    %v7066 = vunpack.c.h.b16 %v6896
    %v7067 = vunpack.c.l.b16 %v6897
    %v7068 = vunpack.c.h.b16 %v6897
    %v7069 = vunpack.c.l.b16 %v6898
    %v7070 = vunpack.c.h.b16 %v6898
    %v7071 = vunpack.c.l.b16 %v6899
    %v7072 = vunpack.c.h.b16 %v6899
    %v7073 = vunpack.c.l.b16 %v6900
    %v7074 = vunpack.c.h.b16 %v6900
    %v7075 = vunpack.c.l.b16 %v6901
    %v7076 = vunpack.c.h.b16 %v6901
    %v7077 = vunpack.c.l.b16 %v6902
    %v7078 = vunpack.c.h.b16 %v6902
    %v7079 = vunpack.c.l.b16 %v6903
    %v7080 = vunpack.c.h.b16 %v6903
    %v7081 = vunpack.c.l.b16 %v6904
    %v7082 = vunpack.c.h.b16 %v6904
    %v7083 = vunpack.c.l.b16 %v6905
    %v7084 = vunpack.c.h.b16 %v6905
    %v7085 = vunpack.c.l.b16 %v6906
    %v7086 = vunpack.c.h.b16 %v6906
    %v7087 = vunpack.c.l.b16 %v6907
    %v7088 = vunpack.c.h.b16 %v6907
    %v7089 = vunpack.c.l.b16 %v6908
    %v7090 = vunpack.c.h.b16 %v6908
    %v7091 = vunpack.c.l.b16 %v6909
    %v7092 = vunpack.c.h.b16 %v6909
    %v7093 = vunpack.c.l.b16 %v6910
    %v7094 = vunpack.c.h.b16 %v6910
    %v7095 = vunpack.c.l.b16 %v6911
    %v7096 = vunpack.c.h.b16 %v6911
    %v7097 = vunpack.c.l.b16 %v6912
    %v7098 = vunpack.c.h.b16 %v6912
    %v7099 = vunpack.c.l.b16 %v6913
    %v7100 = vunpack.c.h.b16 %v6913
    %v7101 = vunpack.c.l.b16 %v6914
    %v7102 = vunpack.c.h.b16 %v6914
    %v7103 = vunpack.c.l.b16 %v6915
    %v7104 = vunpack.c.h.b16 %v6915
    %v7105 = vunpack.c.l.b16 %v6916
    %v7106 = vunpack.c.h.b16 %v6916
    %v7107 = vunpack.c.l.b16 %v6917
    %v7108 = vunpack.c.h.b16 %v6917
    %v7109 = vunpack.c.l.b16 %v6918
    %v7110 = vunpack.c.h.b16 %v6918
    %v7111 = vpack.c.b16 %v6983, %v6983
    %v7112 = vpack.c.b16 %v6984, %v6984
    %v7113 = vpack.c.b16 %v6985, %v6985
    %v7114 = vpack.c.b16 %v6986, %v6986
    %v7115 = vpack.c.b16 %v6987, %v6987
    %v7116 = vpack.c.b16 %v6988, %v6988
    %v7117 = vpack.c.b16 %v6989, %v6989
    %v7118 = vpack.c.b16 %v6990, %v6990
    %v7119 = vpack.c.b16 %v6991, %v6991
    %v7120 = vpack.c.b16 %v6992, %v6992
    %v7121 = vpack.c.b16 %v6993, %v6993
    %v7122 = vpack.c.b16 %v6994, %v6994
    %v7123 = vpack.c.b16 %v6995, %v6995
    %v7124 = vpack.c.b16 %v6996, %v6996
    %v7125 = vpack.c.b16 %v6997, %v6997
    %v7126 = vpack.c.b16 %v6998, %v6998
    %v7127 = vpack.c.b16 %v6999, %v6999
    %v7128 = vpack.c.b16 %v7000, %v7000
    %v7129 = vpack.c.b16 %v7001, %v7001
    %v7130 = vpack.c.b16 %v7002, %v7002
    %v7131 = vpack.c.b16 %v7003, %v7003
    %v7132 = vpack.c.b16 %v7004, %v7004
    %v7133 = vpack.c.b16 %v7005, %v7005
    %v7134 = vpack.c.b16 %v7006, %v7006
    %v7135 = vpack.c.b16 %v7007, %v7007
    %v7136 = vpack.c.b16 %v7008, %v7008
    %v7137 = vpack.c.b16 %v7009, %v7009
    %v7138 = vpack.c.b16 %v7010, %v7010
    %v7139 = vpack.c.b16 %v7011, %v7011
    %v7140 = vpack.c.b16 %v7012, %v7012
    %v7141 = vpack.c.b16 %v7013, %v7013
    %v7142 = vpack.c.b16 %v7014, %v7014
    %v7143 = vpack.c.b16 %v7015, %v7015
    %v7144 = vpack.c.b16 %v7016, %v7016
    %v7145 = vpack.c.b16 %v7017, %v7017
    %v7146 = vpack.c.b16 %v7018, %v7018
    %v7147 = vpack.c.b16 %v7019, %v7019
    %v7148 = vpack.c.b16 %v7020, %v7020
    %v7149 = vpack.c.b16 %v7021, %v7021
    %v7150 = vpack.c.b16 %v7022, %v7022
    %v7151 = vpack.c.b16 %v7023, %v7023
    %v7152 = vpack.c.b16 %v7024, %v7024
    %v7153 = vpack.c.b16 %v7025, %v7025
    %v7154 = vpack.c.b16 %v7026, %v7026
    %v7155 = vpack.c.b16 %v7027, %v7027
    %v7156 = vpack.c.b16 %v7028, %v7028
    %v7157 = vpack.c.b16 %v7029, %v7029
    %v7158 = vpack.c.b16 %v7030, %v7030
    %v7159 = vpack.c.b16 %v7031, %v7031
    %v7160 = vpack.c.b16 %v7032, %v7032
    %v7161 = vpack.c.b16 %v7033, %v7033
    %v7162 = vpack.c.b16 %v7034, %v7034
    %v7163 = vpack.c.b16 %v7035, %v7035
    %v7164 = vpack.c.b16 %v7036, %v7036
    %v7165 = vpack.c.b16 %v7037, %v7037
    %v7166 = vpack.c.b16 %v7038, %v7038
    %v7167 = vpack.c.b16 %v7039, %v7039
    %v7168 = vpack.c.b16 %v7040, %v7040
    %v7169 = vpack.c.b16 %v7041, %v7041
    %v7170 = vpack.c.b16 %v7042, %v7042
    %v7171 = vpack.c.b16 %v7043, %v7043
    %v7172 = vpack.c.b16 %v7044, %v7044
    %v7173 = vpack.c.b16 %v7045, %v7045
    %v7174 = vpack.c.b16 %v7046, %v7046
    %v7175 = vpack.c.b16 %v7047, %v7047
    %v7176 = vpack.c.b16 %v7048, %v7048
    %v7177 = vpack.c.b16 %v7049, %v7049
    %v7178 = vpack.c.b16 %v7050, %v7050
    %v7179 = vpack.c.b16 %v7051, %v7051
    %v7180 = vpack.c.b16 %v7052, %v7052
    %v7181 = vpack.c.b16 %v7053, %v7053
    %v7182 = vpack.c.b16 %v7054, %v7054
    %v7183 = vpack.c.b16 %v7055, %v7055
    %v7184 = vpack.c.b16 %v7056, %v7056
    %v7185 = vpack.c.b16 %v7057, %v7057
    %v7186 = vpack.c.b16 %v7058, %v7058
    %v7187 = vpack.c.b16 %v7059, %v7059
    %v7188 = vpack.c.b16 %v7060, %v7060
    %v7189 = vpack.c.b16 %v7061, %v7061
    %v7190 = vpack.c.b16 %v7062, %v7062
    %v7191 = vpack.c.b16 %v7063, %v7063
    %v7192 = vpack.c.b16 %v7064, %v7064
    %v7193 = vpack.c.b16 %v7065, %v7065
    %v7194 = vpack.c.b16 %v7066, %v7066
    %v7195 = vpack.c.b16 %v7067, %v7067
    %v7196 = vpack.c.b16 %v7068, %v7068
    %v7197 = vpack.c.b16 %v7069, %v7069
    %v7198 = vpack.c.b16 %v7070, %v7070
    %v7199 = vpack.c.b16 %v7071, %v7071
    %v7200 = vpack.c.b16 %v7072, %v7072
    %v7201 = vpack.c.b16 %v7073, %v7073
    %v7202 = vpack.c.b16 %v7074, %v7074
    %v7203 = vpack.c.b16 %v7075, %v7075
    %v7204 = vpack.c.b16 %v7076, %v7076
    %v7205 = vpack.c.b16 %v7077, %v7077
    %v7206 = vpack.c.b16 %v7078, %v7078
    %v7207 = vpack.c.b16 %v7079, %v7079
    %v7208 = vpack.c.b16 %v7080, %v7080
    %v7209 = vpack.c.b16 %v7081, %v7081
    %v7210 = vpack.c.b16 %v7082, %v7082
    %v7211 = vpack.c.b16 %v7083, %v7083
    %v7212 = vpack.c.b16 %v7084, %v7084
    %v7213 = vpack.c.b16 %v7085, %v7085
    %v7214 = vpack.c.b16 %v7086, %v7086
    %v7215 = vpack.c.b16 %v7087, %v7087
    %v7216 = vpack.c.b16 %v7088, %v7088
    %v7217 = vpack.c.b16 %v7089, %v7089
    %v7218 = vpack.c.b16 %v7090, %v7090
    %v7219 = vpack.c.b16 %v7091, %v7091
    %v7220 = vpack.c.b16 %v7092, %v7092
    %v7221 = vpack.c.b16 %v7093, %v7093
    %v7222 = vpack.c.b16 %v7094, %v7094
    %v7223 = vpack.c.b16 %v7095, %v7095
    %v7224 = vpack.c.b16 %v7096, %v7096
    %v7225 = vpack.c.b16 %v7097, %v7097
    %v7226 = vpack.c.b16 %v7098, %v7098
    %v7227 = vpack.c.b16 %v7099, %v7099
    %v7228 = vpack.c.b16 %v7100, %v7100
    %v7229 = vpack.c.b16 %v7101, %v7101
    %v7230 = vpack.c.b16 %v7102, %v7102
    %v7231 = vpack.c.b16 %v7103, %v7103
    %v7232 = vpack.c.b16 %v7104, %v7104
    %v7233 = vpack.c.b16 %v7105, %v7105
    %v7234 = vpack.c.b16 %v7106, %v7106
    %v7235 = vpack.c.b16 %v7107, %v7107
    %v7236 = vpack.c.b16 %v7108, %v7108
    %v7237 = vpack.c.b16 %v7109, %v7109
    %v7238 = vpack.c.b16 %v7110, %v7110
    %vm7239 = vcmask 1043456
    %v7242 = vsel %vm7239, %v7111, 4286644096
    %v7244 = vunpack.i.l.bf16 %v7242
    %v7245 = vunpack.i.h.bf16 %v7242
    %v7246 = vmax.f32 %v7244, %v7245
    %v7247 = vrot.slane %v7246, 4
    %v7248 = vmax.f32 %v7246, %v7247
    %v7249 = vrot.slane %v7248, 2
    %v7250 = vmax.f32 %v7248, %v7249
    %v7251 = vrot.slane %v7250, 1
    %v7252 = vmax.f32 %v7250, %v7251
    %v7253 = vpack.i.bf16 %v7252, %v7252
    %v7255 = vsel %vm7239, %v7112, 4286644096
    %v7257 = vunpack.i.l.bf16 %v7255
    %v7258 = vunpack.i.h.bf16 %v7255
    %v7259 = vmax.f32 %v7257, %v7258
    %v7260 = vrot.slane %v7259, 4
    %v7261 = vmax.f32 %v7259, %v7260
    %v7262 = vrot.slane %v7261, 2
    %v7263 = vmax.f32 %v7261, %v7262
    %v7264 = vrot.slane %v7263, 1
    %v7265 = vmax.f32 %v7263, %v7264
    %v7266 = vpack.i.bf16 %v7265, %v7265
    %v7268 = vsel %vm7239, %v7113, 4286644096
    %v7270 = vunpack.i.l.bf16 %v7268
    %v7271 = vunpack.i.h.bf16 %v7268
    %v7272 = vmax.f32 %v7270, %v7271
    %v7273 = vrot.slane %v7272, 4
    %v7274 = vmax.f32 %v7272, %v7273
    %v7275 = vrot.slane %v7274, 2
    %v7276 = vmax.f32 %v7274, %v7275
    %v7277 = vrot.slane %v7276, 1
    %v7278 = vmax.f32 %v7276, %v7277
    %v7279 = vpack.i.bf16 %v7278, %v7278
    %v7281 = vsel %vm7239, %v7114, 4286644096
    %v7283 = vunpack.i.l.bf16 %v7281
    %v7284 = vunpack.i.h.bf16 %v7281
    %v7285 = vmax.f32 %v7283, %v7284
    %v7286 = vrot.slane %v7285, 4
    %v7287 = vmax.f32 %v7285, %v7286
    %v7288 = vrot.slane %v7287, 2
    %v7289 = vmax.f32 %v7287, %v7288
    %v7290 = vrot.slane %v7289, 1
    %v7291 = vmax.f32 %v7289, %v7290
    %v7292 = vpack.i.bf16 %v7291, %v7291
    %v7294 = vsel %vm7239, %v7115, 4286644096
    %v7296 = vunpack.i.l.bf16 %v7294
    %v7297 = vunpack.i.h.bf16 %v7294
    %v7298 = vmax.f32 %v7296, %v7297
    %v7299 = vrot.slane %v7298, 4
    %v7300 = vmax.f32 %v7298, %v7299
    %v7301 = vrot.slane %v7300, 2
    %v7302 = vmax.f32 %v7300, %v7301
    %v7303 = vrot.slane %v7302, 1
    %v7304 = vmax.f32 %v7302, %v7303
    %v7305 = vpack.i.bf16 %v7304, %v7304
    %v7307 = vsel %vm7239, %v7116, 4286644096
    %v7309 = vunpack.i.l.bf16 %v7307
    %v7310 = vunpack.i.h.bf16 %v7307
    %v7311 = vmax.f32 %v7309, %v7310
    %v7312 = vrot.slane %v7311, 4
    %v7313 = vmax.f32 %v7311, %v7312
    %v7314 = vrot.slane %v7313, 2
    %v7315 = vmax.f32 %v7313, %v7314
    %v7316 = vrot.slane %v7315, 1
    %v7317 = vmax.f32 %v7315, %v7316
    %v7318 = vpack.i.bf16 %v7317, %v7317
    %v7320 = vsel %vm7239, %v7117, 4286644096
    %v7322 = vunpack.i.l.bf16 %v7320
    %v7323 = vunpack.i.h.bf16 %v7320
    %v7324 = vmax.f32 %v7322, %v7323
    %v7325 = vrot.slane %v7324, 4
    %v7326 = vmax.f32 %v7324, %v7325
    %v7327 = vrot.slane %v7326, 2
    %v7328 = vmax.f32 %v7326, %v7327
    %v7329 = vrot.slane %v7328, 1
    %v7330 = vmax.f32 %v7328, %v7329
    %v7331 = vpack.i.bf16 %v7330, %v7330
    %v7333 = vsel %vm7239, %v7118, 4286644096
    %v7335 = vunpack.i.l.bf16 %v7333
    %v7336 = vunpack.i.h.bf16 %v7333
    %v7337 = vmax.f32 %v7335, %v7336
    %v7338 = vrot.slane %v7337, 4
    %v7339 = vmax.f32 %v7337, %v7338
    %v7340 = vrot.slane %v7339, 2
    %v7341 = vmax.f32 %v7339, %v7340
    %v7342 = vrot.slane %v7341, 1
    %v7343 = vmax.f32 %v7341, %v7342
    %v7344 = vpack.i.bf16 %v7343, %v7343
    %v7346 = vsel %vm7239, %v7119, 4286644096
    %v7348 = vunpack.i.l.bf16 %v7346
    %v7349 = vunpack.i.h.bf16 %v7346
    %v7350 = vmax.f32 %v7348, %v7349
    %v7351 = vrot.slane %v7350, 4
    %v7352 = vmax.f32 %v7350, %v7351
    %v7353 = vrot.slane %v7352, 2
    %v7354 = vmax.f32 %v7352, %v7353
    %v7355 = vrot.slane %v7354, 1
    %v7356 = vmax.f32 %v7354, %v7355
    %v7357 = vpack.i.bf16 %v7356, %v7356
    %v7359 = vsel %vm7239, %v7120, 4286644096
    %v7361 = vunpack.i.l.bf16 %v7359
    %v7362 = vunpack.i.h.bf16 %v7359
    %v7363 = vmax.f32 %v7361, %v7362
    %v7364 = vrot.slane %v7363, 4
    %v7365 = vmax.f32 %v7363, %v7364
    %v7366 = vrot.slane %v7365, 2
    %v7367 = vmax.f32 %v7365, %v7366
    %v7368 = vrot.slane %v7367, 1
    %v7369 = vmax.f32 %v7367, %v7368
    %v7370 = vpack.i.bf16 %v7369, %v7369
    %v7372 = vsel %vm7239, %v7121, 4286644096
    %v7374 = vunpack.i.l.bf16 %v7372
    %v7375 = vunpack.i.h.bf16 %v7372
    %v7376 = vmax.f32 %v7374, %v7375
    %v7377 = vrot.slane %v7376, 4
    %v7378 = vmax.f32 %v7376, %v7377
    %v7379 = vrot.slane %v7378, 2
    %v7380 = vmax.f32 %v7378, %v7379
    %v7381 = vrot.slane %v7380, 1
    %v7382 = vmax.f32 %v7380, %v7381
    %v7383 = vpack.i.bf16 %v7382, %v7382
    %v7385 = vsel %vm7239, %v7122, 4286644096
    %v7387 = vunpack.i.l.bf16 %v7385
    %v7388 = vunpack.i.h.bf16 %v7385
    %v7389 = vmax.f32 %v7387, %v7388
    %v7390 = vrot.slane %v7389, 4
    %v7391 = vmax.f32 %v7389, %v7390
    %v7392 = vrot.slane %v7391, 2
    %v7393 = vmax.f32 %v7391, %v7392
    %v7394 = vrot.slane %v7393, 1
    %v7395 = vmax.f32 %v7393, %v7394
    %v7396 = vpack.i.bf16 %v7395, %v7395
    %v7398 = vsel %vm7239, %v7123, 4286644096
    %v7400 = vunpack.i.l.bf16 %v7398
    %v7401 = vunpack.i.h.bf16 %v7398
    %v7402 = vmax.f32 %v7400, %v7401
    %v7403 = vrot.slane %v7402, 4
    %v7404 = vmax.f32 %v7402, %v7403
    %v7405 = vrot.slane %v7404, 2
    %v7406 = vmax.f32 %v7404, %v7405
    %v7407 = vrot.slane %v7406, 1
    %v7408 = vmax.f32 %v7406, %v7407
    %v7409 = vpack.i.bf16 %v7408, %v7408
    %v7411 = vsel %vm7239, %v7124, 4286644096
    %v7413 = vunpack.i.l.bf16 %v7411
    %v7414 = vunpack.i.h.bf16 %v7411
    %v7415 = vmax.f32 %v7413, %v7414
    %v7416 = vrot.slane %v7415, 4
    %v7417 = vmax.f32 %v7415, %v7416
    %v7418 = vrot.slane %v7417, 2
    %v7419 = vmax.f32 %v7417, %v7418
    %v7420 = vrot.slane %v7419, 1
    %v7421 = vmax.f32 %v7419, %v7420
    %v7422 = vpack.i.bf16 %v7421, %v7421
    %v7424 = vsel %vm7239, %v7125, 4286644096
    %v7426 = vunpack.i.l.bf16 %v7424
    %v7427 = vunpack.i.h.bf16 %v7424
    %v7428 = vmax.f32 %v7426, %v7427
    %v7429 = vrot.slane %v7428, 4
    %v7430 = vmax.f32 %v7428, %v7429
    %v7431 = vrot.slane %v7430, 2
    %v7432 = vmax.f32 %v7430, %v7431
    %v7433 = vrot.slane %v7432, 1
    %v7434 = vmax.f32 %v7432, %v7433
    %v7435 = vpack.i.bf16 %v7434, %v7434
    %v7437 = vsel %vm7239, %v7126, 4286644096
    %v7439 = vunpack.i.l.bf16 %v7437
    %v7440 = vunpack.i.h.bf16 %v7437
    %v7441 = vmax.f32 %v7439, %v7440
    %v7442 = vrot.slane %v7441, 4
    %v7443 = vmax.f32 %v7441, %v7442
    %v7444 = vrot.slane %v7443, 2
    %v7445 = vmax.f32 %v7443, %v7444
    %v7446 = vrot.slane %v7445, 1
    %v7447 = vmax.f32 %v7445, %v7446
    %v7448 = vpack.i.bf16 %v7447, %v7447
    %v7450 = vsel %vm7239, %v7127, 4286644096
    %v7452 = vunpack.i.l.bf16 %v7450
    %v7453 = vunpack.i.h.bf16 %v7450
    %v7454 = vmax.f32 %v7452, %v7453
    %v7455 = vrot.slane %v7454, 4
    %v7456 = vmax.f32 %v7454, %v7455
    %v7457 = vrot.slane %v7456, 2
    %v7458 = vmax.f32 %v7456, %v7457
    %v7459 = vrot.slane %v7458, 1
    %v7460 = vmax.f32 %v7458, %v7459
    %v7461 = vpack.i.bf16 %v7460, %v7460
    %v7463 = vsel %vm7239, %v7128, 4286644096
    %v7465 = vunpack.i.l.bf16 %v7463
    %v7466 = vunpack.i.h.bf16 %v7463
    %v7467 = vmax.f32 %v7465, %v7466
    %v7468 = vrot.slane %v7467, 4
    %v7469 = vmax.f32 %v7467, %v7468
    %v7470 = vrot.slane %v7469, 2
    %v7471 = vmax.f32 %v7469, %v7470
    %v7472 = vrot.slane %v7471, 1
    %v7473 = vmax.f32 %v7471, %v7472
    %v7474 = vpack.i.bf16 %v7473, %v7473
    %v7476 = vsel %vm7239, %v7129, 4286644096
    %v7478 = vunpack.i.l.bf16 %v7476
    %v7479 = vunpack.i.h.bf16 %v7476
    %v7480 = vmax.f32 %v7478, %v7479
    %v7481 = vrot.slane %v7480, 4
    %v7482 = vmax.f32 %v7480, %v7481
    %v7483 = vrot.slane %v7482, 2
    %v7484 = vmax.f32 %v7482, %v7483
    %v7485 = vrot.slane %v7484, 1
    %v7486 = vmax.f32 %v7484, %v7485
    %v7487 = vpack.i.bf16 %v7486, %v7486
    %v7489 = vsel %vm7239, %v7130, 4286644096
    %v7491 = vunpack.i.l.bf16 %v7489
    %v7492 = vunpack.i.h.bf16 %v7489
    %v7493 = vmax.f32 %v7491, %v7492
    %v7494 = vrot.slane %v7493, 4
    %v7495 = vmax.f32 %v7493, %v7494
    %v7496 = vrot.slane %v7495, 2
    %v7497 = vmax.f32 %v7495, %v7496
    %v7498 = vrot.slane %v7497, 1
    %v7499 = vmax.f32 %v7497, %v7498
    %v7500 = vpack.i.bf16 %v7499, %v7499
    %v7502 = vsel %vm7239, %v7131, 4286644096
    %v7504 = vunpack.i.l.bf16 %v7502
    %v7505 = vunpack.i.h.bf16 %v7502
    %v7506 = vmax.f32 %v7504, %v7505
    %v7507 = vrot.slane %v7506, 4
    %v7508 = vmax.f32 %v7506, %v7507
    %v7509 = vrot.slane %v7508, 2
    %v7510 = vmax.f32 %v7508, %v7509
    %v7511 = vrot.slane %v7510, 1
    %v7512 = vmax.f32 %v7510, %v7511
    %v7513 = vpack.i.bf16 %v7512, %v7512
    %v7515 = vsel %vm7239, %v7132, 4286644096
    %v7517 = vunpack.i.l.bf16 %v7515
    %v7518 = vunpack.i.h.bf16 %v7515
    %v7519 = vmax.f32 %v7517, %v7518
    %v7520 = vrot.slane %v7519, 4
    %v7521 = vmax.f32 %v7519, %v7520
    %v7522 = vrot.slane %v7521, 2
    %v7523 = vmax.f32 %v7521, %v7522
    %v7524 = vrot.slane %v7523, 1
    %v7525 = vmax.f32 %v7523, %v7524
    %v7526 = vpack.i.bf16 %v7525, %v7525
    %v7528 = vsel %vm7239, %v7133, 4286644096
    %v7530 = vunpack.i.l.bf16 %v7528
    %v7531 = vunpack.i.h.bf16 %v7528
    %v7532 = vmax.f32 %v7530, %v7531
    %v7533 = vrot.slane %v7532, 4
    %v7534 = vmax.f32 %v7532, %v7533
    %v7535 = vrot.slane %v7534, 2
    %v7536 = vmax.f32 %v7534, %v7535
    %v7537 = vrot.slane %v7536, 1
    %v7538 = vmax.f32 %v7536, %v7537
    %v7539 = vpack.i.bf16 %v7538, %v7538
    %v7541 = vsel %vm7239, %v7134, 4286644096
    %v7543 = vunpack.i.l.bf16 %v7541
    %v7544 = vunpack.i.h.bf16 %v7541
    %v7545 = vmax.f32 %v7543, %v7544
    %v7546 = vrot.slane %v7545, 4
    %v7547 = vmax.f32 %v7545, %v7546
    %v7548 = vrot.slane %v7547, 2
    %v7549 = vmax.f32 %v7547, %v7548
    %v7550 = vrot.slane %v7549, 1
    %v7551 = vmax.f32 %v7549, %v7550
    %v7552 = vpack.i.bf16 %v7551, %v7551
    %v7554 = vsel %vm7239, %v7135, 4286644096
    %v7556 = vunpack.i.l.bf16 %v7554
    %v7557 = vunpack.i.h.bf16 %v7554
    %v7558 = vmax.f32 %v7556, %v7557
    %v7559 = vrot.slane %v7558, 4
    %v7560 = vmax.f32 %v7558, %v7559
    %v7561 = vrot.slane %v7560, 2
    %v7562 = vmax.f32 %v7560, %v7561
    %v7563 = vrot.slane %v7562, 1
    %v7564 = vmax.f32 %v7562, %v7563
    %v7565 = vpack.i.bf16 %v7564, %v7564
    %v7567 = vsel %vm7239, %v7136, 4286644096
    %v7569 = vunpack.i.l.bf16 %v7567
    %v7570 = vunpack.i.h.bf16 %v7567
    %v7571 = vmax.f32 %v7569, %v7570
    %v7572 = vrot.slane %v7571, 4
    %v7573 = vmax.f32 %v7571, %v7572
    %v7574 = vrot.slane %v7573, 2
    %v7575 = vmax.f32 %v7573, %v7574
    %v7576 = vrot.slane %v7575, 1
    %v7577 = vmax.f32 %v7575, %v7576
    %v7578 = vpack.i.bf16 %v7577, %v7577
    %v7580 = vsel %vm7239, %v7137, 4286644096
    %v7582 = vunpack.i.l.bf16 %v7580
    %v7583 = vunpack.i.h.bf16 %v7580
    %v7584 = vmax.f32 %v7582, %v7583
    %v7585 = vrot.slane %v7584, 4
    %v7586 = vmax.f32 %v7584, %v7585
    %v7587 = vrot.slane %v7586, 2
    %v7588 = vmax.f32 %v7586, %v7587
    %v7589 = vrot.slane %v7588, 1
    %v7590 = vmax.f32 %v7588, %v7589
    %v7591 = vpack.i.bf16 %v7590, %v7590
    %v7593 = vsel %vm7239, %v7138, 4286644096
    %v7595 = vunpack.i.l.bf16 %v7593
    %v7596 = vunpack.i.h.bf16 %v7593
    %v7597 = vmax.f32 %v7595, %v7596
    %v7598 = vrot.slane %v7597, 4
    %v7599 = vmax.f32 %v7597, %v7598
    %v7600 = vrot.slane %v7599, 2
    %v7601 = vmax.f32 %v7599, %v7600
    %v7602 = vrot.slane %v7601, 1
    %v7603 = vmax.f32 %v7601, %v7602
    %v7604 = vpack.i.bf16 %v7603, %v7603
    %v7606 = vsel %vm7239, %v7139, 4286644096
    %v7608 = vunpack.i.l.bf16 %v7606
    %v7609 = vunpack.i.h.bf16 %v7606
    %v7610 = vmax.f32 %v7608, %v7609
    %v7611 = vrot.slane %v7610, 4
    %v7612 = vmax.f32 %v7610, %v7611
    %v7613 = vrot.slane %v7612, 2
    %v7614 = vmax.f32 %v7612, %v7613
    %v7615 = vrot.slane %v7614, 1
    %v7616 = vmax.f32 %v7614, %v7615
    %v7617 = vpack.i.bf16 %v7616, %v7616
    %v7619 = vsel %vm7239, %v7140, 4286644096
    %v7621 = vunpack.i.l.bf16 %v7619
    %v7622 = vunpack.i.h.bf16 %v7619
    %v7623 = vmax.f32 %v7621, %v7622
    %v7624 = vrot.slane %v7623, 4
    %v7625 = vmax.f32 %v7623, %v7624
    %v7626 = vrot.slane %v7625, 2
    %v7627 = vmax.f32 %v7625, %v7626
    %v7628 = vrot.slane %v7627, 1
    %v7629 = vmax.f32 %v7627, %v7628
    %v7630 = vpack.i.bf16 %v7629, %v7629
    %v7632 = vsel %vm7239, %v7141, 4286644096
    %v7634 = vunpack.i.l.bf16 %v7632
    %v7635 = vunpack.i.h.bf16 %v7632
    %v7636 = vmax.f32 %v7634, %v7635
    %v7637 = vrot.slane %v7636, 4
    %v7638 = vmax.f32 %v7636, %v7637
    %v7639 = vrot.slane %v7638, 2
    %v7640 = vmax.f32 %v7638, %v7639
    %v7641 = vrot.slane %v7640, 1
    %v7642 = vmax.f32 %v7640, %v7641
    %v7643 = vpack.i.bf16 %v7642, %v7642
    %v7645 = vsel %vm7239, %v7142, 4286644096
    %v7647 = vunpack.i.l.bf16 %v7645
    %v7648 = vunpack.i.h.bf16 %v7645
    %v7649 = vmax.f32 %v7647, %v7648
    %v7650 = vrot.slane %v7649, 4
    %v7651 = vmax.f32 %v7649, %v7650
    %v7652 = vrot.slane %v7651, 2
    %v7653 = vmax.f32 %v7651, %v7652
    %v7654 = vrot.slane %v7653, 1
    %v7655 = vmax.f32 %v7653, %v7654
    %v7656 = vpack.i.bf16 %v7655, %v7655
    %v7658 = vsel %vm7239, %v7143, 4286644096
    %v7660 = vunpack.i.l.bf16 %v7658
    %v7661 = vunpack.i.h.bf16 %v7658
    %v7662 = vmax.f32 %v7660, %v7661
    %v7663 = vrot.slane %v7662, 4
    %v7664 = vmax.f32 %v7662, %v7663
    %v7665 = vrot.slane %v7664, 2
    %v7666 = vmax.f32 %v7664, %v7665
    %v7667 = vrot.slane %v7666, 1
    %v7668 = vmax.f32 %v7666, %v7667
    %v7669 = vpack.i.bf16 %v7668, %v7668
    %v7671 = vsel %vm7239, %v7144, 4286644096
    %v7673 = vunpack.i.l.bf16 %v7671
    %v7674 = vunpack.i.h.bf16 %v7671
    %v7675 = vmax.f32 %v7673, %v7674
    %v7676 = vrot.slane %v7675, 4
    %v7677 = vmax.f32 %v7675, %v7676
    %v7678 = vrot.slane %v7677, 2
    %v7679 = vmax.f32 %v7677, %v7678
    %v7680 = vrot.slane %v7679, 1
    %v7681 = vmax.f32 %v7679, %v7680
    %v7682 = vpack.i.bf16 %v7681, %v7681
    %v7684 = vsel %vm7239, %v7145, 4286644096
    %v7686 = vunpack.i.l.bf16 %v7684
    %v7687 = vunpack.i.h.bf16 %v7684
    %v7688 = vmax.f32 %v7686, %v7687
    %v7689 = vrot.slane %v7688, 4
    %v7690 = vmax.f32 %v7688, %v7689
    %v7691 = vrot.slane %v7690, 2
    %v7692 = vmax.f32 %v7690, %v7691
    %v7693 = vrot.slane %v7692, 1
    %v7694 = vmax.f32 %v7692, %v7693
    %v7695 = vpack.i.bf16 %v7694, %v7694
    %v7697 = vsel %vm7239, %v7146, 4286644096
    %v7699 = vunpack.i.l.bf16 %v7697
    %v7700 = vunpack.i.h.bf16 %v7697
    %v7701 = vmax.f32 %v7699, %v7700
    %v7702 = vrot.slane %v7701, 4
    %v7703 = vmax.f32 %v7701, %v7702
    %v7704 = vrot.slane %v7703, 2
    %v7705 = vmax.f32 %v7703, %v7704
    %v7706 = vrot.slane %v7705, 1
    %v7707 = vmax.f32 %v7705, %v7706
    %v7708 = vpack.i.bf16 %v7707, %v7707
    %v7710 = vsel %vm7239, %v7147, 4286644096
    %v7712 = vunpack.i.l.bf16 %v7710
    %v7713 = vunpack.i.h.bf16 %v7710
    %v7714 = vmax.f32 %v7712, %v7713
    %v7715 = vrot.slane %v7714, 4
    %v7716 = vmax.f32 %v7714, %v7715
    %v7717 = vrot.slane %v7716, 2
    %v7718 = vmax.f32 %v7716, %v7717
    %v7719 = vrot.slane %v7718, 1
    %v7720 = vmax.f32 %v7718, %v7719
    %v7721 = vpack.i.bf16 %v7720, %v7720
    %v7723 = vsel %vm7239, %v7148, 4286644096
    %v7725 = vunpack.i.l.bf16 %v7723
    %v7726 = vunpack.i.h.bf16 %v7723
    %v7727 = vmax.f32 %v7725, %v7726
    %v7728 = vrot.slane %v7727, 4
    %v7729 = vmax.f32 %v7727, %v7728
    %v7730 = vrot.slane %v7729, 2
    %v7731 = vmax.f32 %v7729, %v7730
    %v7732 = vrot.slane %v7731, 1
    %v7733 = vmax.f32 %v7731, %v7732
    %v7734 = vpack.i.bf16 %v7733, %v7733
    %v7736 = vsel %vm7239, %v7149, 4286644096
    %v7738 = vunpack.i.l.bf16 %v7736
    %v7739 = vunpack.i.h.bf16 %v7736
    %v7740 = vmax.f32 %v7738, %v7739
    %v7741 = vrot.slane %v7740, 4
    %v7742 = vmax.f32 %v7740, %v7741
    %v7743 = vrot.slane %v7742, 2
    %v7744 = vmax.f32 %v7742, %v7743
    %v7745 = vrot.slane %v7744, 1
    %v7746 = vmax.f32 %v7744, %v7745
    %v7747 = vpack.i.bf16 %v7746, %v7746
    %v7749 = vsel %vm7239, %v7150, 4286644096
    %v7751 = vunpack.i.l.bf16 %v7749
    %v7752 = vunpack.i.h.bf16 %v7749
    %v7753 = vmax.f32 %v7751, %v7752
    %v7754 = vrot.slane %v7753, 4
    %v7755 = vmax.f32 %v7753, %v7754
    %v7756 = vrot.slane %v7755, 2
    %v7757 = vmax.f32 %v7755, %v7756
    %v7758 = vrot.slane %v7757, 1
    %v7759 = vmax.f32 %v7757, %v7758
    %v7760 = vpack.i.bf16 %v7759, %v7759
    %v7762 = vsel %vm7239, %v7151, 4286644096
    %v7764 = vunpack.i.l.bf16 %v7762
    %v7765 = vunpack.i.h.bf16 %v7762
    %v7766 = vmax.f32 %v7764, %v7765
    %v7767 = vrot.slane %v7766, 4
    %v7768 = vmax.f32 %v7766, %v7767
    %v7769 = vrot.slane %v7768, 2
    %v7770 = vmax.f32 %v7768, %v7769
    %v7771 = vrot.slane %v7770, 1
    %v7772 = vmax.f32 %v7770, %v7771
    %v7773 = vpack.i.bf16 %v7772, %v7772
    %v7775 = vsel %vm7239, %v7152, 4286644096
    %v7777 = vunpack.i.l.bf16 %v7775
    %v7778 = vunpack.i.h.bf16 %v7775
    %v7779 = vmax.f32 %v7777, %v7778
    %v7780 = vrot.slane %v7779, 4
    %v7781 = vmax.f32 %v7779, %v7780
    %v7782 = vrot.slane %v7781, 2
    %v7783 = vmax.f32 %v7781, %v7782
    %v7784 = vrot.slane %v7783, 1
    %v7785 = vmax.f32 %v7783, %v7784
    %v7786 = vpack.i.bf16 %v7785, %v7785
    %v7788 = vsel %vm7239, %v7153, 4286644096
    %v7790 = vunpack.i.l.bf16 %v7788
    %v7791 = vunpack.i.h.bf16 %v7788
    %v7792 = vmax.f32 %v7790, %v7791
    %v7793 = vrot.slane %v7792, 4
    %v7794 = vmax.f32 %v7792, %v7793
    %v7795 = vrot.slane %v7794, 2
    %v7796 = vmax.f32 %v7794, %v7795
    %v7797 = vrot.slane %v7796, 1
    %v7798 = vmax.f32 %v7796, %v7797
    %v7799 = vpack.i.bf16 %v7798, %v7798
    %v7801 = vsel %vm7239, %v7154, 4286644096
    %v7803 = vunpack.i.l.bf16 %v7801
    %v7804 = vunpack.i.h.bf16 %v7801
    %v7805 = vmax.f32 %v7803, %v7804
    %v7806 = vrot.slane %v7805, 4
    %v7807 = vmax.f32 %v7805, %v7806
    %v7808 = vrot.slane %v7807, 2
    %v7809 = vmax.f32 %v7807, %v7808
    %v7810 = vrot.slane %v7809, 1
    %v7811 = vmax.f32 %v7809, %v7810
    %v7812 = vpack.i.bf16 %v7811, %v7811
    %v7814 = vsel %vm7239, %v7155, 4286644096
    %v7816 = vunpack.i.l.bf16 %v7814
    %v7817 = vunpack.i.h.bf16 %v7814
    %v7818 = vmax.f32 %v7816, %v7817
    %v7819 = vrot.slane %v7818, 4
    %v7820 = vmax.f32 %v7818, %v7819
    %v7821 = vrot.slane %v7820, 2
    %v7822 = vmax.f32 %v7820, %v7821
    %v7823 = vrot.slane %v7822, 1
    %v7824 = vmax.f32 %v7822, %v7823
    %v7825 = vpack.i.bf16 %v7824, %v7824
    %v7827 = vsel %vm7239, %v7156, 4286644096
    %v7829 = vunpack.i.l.bf16 %v7827
    %v7830 = vunpack.i.h.bf16 %v7827
    %v7831 = vmax.f32 %v7829, %v7830
    %v7832 = vrot.slane %v7831, 4
    %v7833 = vmax.f32 %v7831, %v7832
    %v7834 = vrot.slane %v7833, 2
    %v7835 = vmax.f32 %v7833, %v7834
    %v7836 = vrot.slane %v7835, 1
    %v7837 = vmax.f32 %v7835, %v7836
    %v7838 = vpack.i.bf16 %v7837, %v7837
    %v7840 = vsel %vm7239, %v7157, 4286644096
    %v7842 = vunpack.i.l.bf16 %v7840
    %v7843 = vunpack.i.h.bf16 %v7840
    %v7844 = vmax.f32 %v7842, %v7843
    %v7845 = vrot.slane %v7844, 4
    %v7846 = vmax.f32 %v7844, %v7845
    %v7847 = vrot.slane %v7846, 2
    %v7848 = vmax.f32 %v7846, %v7847
    %v7849 = vrot.slane %v7848, 1
    %v7850 = vmax.f32 %v7848, %v7849
    %v7851 = vpack.i.bf16 %v7850, %v7850
    %v7853 = vsel %vm7239, %v7158, 4286644096
    %v7855 = vunpack.i.l.bf16 %v7853
    %v7856 = vunpack.i.h.bf16 %v7853
    %v7857 = vmax.f32 %v7855, %v7856
    %v7858 = vrot.slane %v7857, 4
    %v7859 = vmax.f32 %v7857, %v7858
    %v7860 = vrot.slane %v7859, 2
    %v7861 = vmax.f32 %v7859, %v7860
    %v7862 = vrot.slane %v7861, 1
    %v7863 = vmax.f32 %v7861, %v7862
    %v7864 = vpack.i.bf16 %v7863, %v7863
    %v7866 = vsel %vm7239, %v7159, 4286644096
    %v7868 = vunpack.i.l.bf16 %v7866
    %v7869 = vunpack.i.h.bf16 %v7866
    %v7870 = vmax.f32 %v7868, %v7869
    %v7871 = vrot.slane %v7870, 4
    %v7872 = vmax.f32 %v7870, %v7871
    %v7873 = vrot.slane %v7872, 2
    %v7874 = vmax.f32 %v7872, %v7873
    %v7875 = vrot.slane %v7874, 1
    %v7876 = vmax.f32 %v7874, %v7875
    %v7877 = vpack.i.bf16 %v7876, %v7876
    %v7879 = vsel %vm7239, %v7160, 4286644096
    %v7881 = vunpack.i.l.bf16 %v7879
    %v7882 = vunpack.i.h.bf16 %v7879
    %v7883 = vmax.f32 %v7881, %v7882
    %v7884 = vrot.slane %v7883, 4
    %v7885 = vmax.f32 %v7883, %v7884
    %v7886 = vrot.slane %v7885, 2
    %v7887 = vmax.f32 %v7885, %v7886
    %v7888 = vrot.slane %v7887, 1
    %v7889 = vmax.f32 %v7887, %v7888
    %v7890 = vpack.i.bf16 %v7889, %v7889
    %v7892 = vsel %vm7239, %v7161, 4286644096
    %v7894 = vunpack.i.l.bf16 %v7892
    %v7895 = vunpack.i.h.bf16 %v7892
    %v7896 = vmax.f32 %v7894, %v7895
    %v7897 = vrot.slane %v7896, 4
    %v7898 = vmax.f32 %v7896, %v7897
    %v7899 = vrot.slane %v7898, 2
    %v7900 = vmax.f32 %v7898, %v7899
    %v7901 = vrot.slane %v7900, 1
    %v7902 = vmax.f32 %v7900, %v7901
    %v7903 = vpack.i.bf16 %v7902, %v7902
    %v7905 = vsel %vm7239, %v7162, 4286644096
    %v7907 = vunpack.i.l.bf16 %v7905
    %v7908 = vunpack.i.h.bf16 %v7905
    %v7909 = vmax.f32 %v7907, %v7908
    %v7910 = vrot.slane %v7909, 4
    %v7911 = vmax.f32 %v7909, %v7910
    %v7912 = vrot.slane %v7911, 2
    %v7913 = vmax.f32 %v7911, %v7912
    %v7914 = vrot.slane %v7913, 1
    %v7915 = vmax.f32 %v7913, %v7914
    %v7916 = vpack.i.bf16 %v7915, %v7915
    %v7918 = vsel %vm7239, %v7163, 4286644096
    %v7920 = vunpack.i.l.bf16 %v7918
    %v7921 = vunpack.i.h.bf16 %v7918
    %v7922 = vmax.f32 %v7920, %v7921
    %v7923 = vrot.slane %v7922, 4
    %v7924 = vmax.f32 %v7922, %v7923
    %v7925 = vrot.slane %v7924, 2
    %v7926 = vmax.f32 %v7924, %v7925
    %v7927 = vrot.slane %v7926, 1
    %v7928 = vmax.f32 %v7926, %v7927
    %v7929 = vpack.i.bf16 %v7928, %v7928
    %v7931 = vsel %vm7239, %v7164, 4286644096
    %v7933 = vunpack.i.l.bf16 %v7931
    %v7934 = vunpack.i.h.bf16 %v7931
    %v7935 = vmax.f32 %v7933, %v7934
    %v7936 = vrot.slane %v7935, 4
    %v7937 = vmax.f32 %v7935, %v7936
    %v7938 = vrot.slane %v7937, 2
    %v7939 = vmax.f32 %v7937, %v7938
    %v7940 = vrot.slane %v7939, 1
    %v7941 = vmax.f32 %v7939, %v7940
    %v7942 = vpack.i.bf16 %v7941, %v7941
    %v7944 = vsel %vm7239, %v7165, 4286644096
    %v7946 = vunpack.i.l.bf16 %v7944
    %v7947 = vunpack.i.h.bf16 %v7944
    %v7948 = vmax.f32 %v7946, %v7947
    %v7949 = vrot.slane %v7948, 4
    %v7950 = vmax.f32 %v7948, %v7949
    %v7951 = vrot.slane %v7950, 2
    %v7952 = vmax.f32 %v7950, %v7951
    %v7953 = vrot.slane %v7952, 1
    %v7954 = vmax.f32 %v7952, %v7953
    %v7955 = vpack.i.bf16 %v7954, %v7954
    %v7957 = vsel %vm7239, %v7166, 4286644096
    %v7959 = vunpack.i.l.bf16 %v7957
    %v7960 = vunpack.i.h.bf16 %v7957
    %v7961 = vmax.f32 %v7959, %v7960
    %v7962 = vrot.slane %v7961, 4
    %v7963 = vmax.f32 %v7961, %v7962
    %v7964 = vrot.slane %v7963, 2
    %v7965 = vmax.f32 %v7963, %v7964
    %v7966 = vrot.slane %v7965, 1
    %v7967 = vmax.f32 %v7965, %v7966
    %v7968 = vpack.i.bf16 %v7967, %v7967
    %v7970 = vsel %vm7239, %v7167, 4286644096
    %v7972 = vunpack.i.l.bf16 %v7970
    %v7973 = vunpack.i.h.bf16 %v7970
    %v7974 = vmax.f32 %v7972, %v7973
    %v7975 = vrot.slane %v7974, 4
    %v7976 = vmax.f32 %v7974, %v7975
    %v7977 = vrot.slane %v7976, 2
    %v7978 = vmax.f32 %v7976, %v7977
    %v7979 = vrot.slane %v7978, 1
    %v7980 = vmax.f32 %v7978, %v7979
    %v7981 = vpack.i.bf16 %v7980, %v7980
    %v7983 = vsel %vm7239, %v7168, 4286644096
    %v7985 = vunpack.i.l.bf16 %v7983
    %v7986 = vunpack.i.h.bf16 %v7983
    %v7987 = vmax.f32 %v7985, %v7986
    %v7988 = vrot.slane %v7987, 4
    %v7989 = vmax.f32 %v7987, %v7988
    %v7990 = vrot.slane %v7989, 2
    %v7991 = vmax.f32 %v7989, %v7990
    %v7992 = vrot.slane %v7991, 1
    %v7993 = vmax.f32 %v7991, %v7992
    %v7994 = vpack.i.bf16 %v7993, %v7993
    %v7996 = vsel %vm7239, %v7169, 4286644096
    %v7998 = vunpack.i.l.bf16 %v7996
    %v7999 = vunpack.i.h.bf16 %v7996
    %v8000 = vmax.f32 %v7998, %v7999
    %v8001 = vrot.slane %v8000, 4
    %v8002 = vmax.f32 %v8000, %v8001
    %v8003 = vrot.slane %v8002, 2
    %v8004 = vmax.f32 %v8002, %v8003
    %v8005 = vrot.slane %v8004, 1
    %v8006 = vmax.f32 %v8004, %v8005
    %v8007 = vpack.i.bf16 %v8006, %v8006
    %v8009 = vsel %vm7239, %v7170, 4286644096
    %v8011 = vunpack.i.l.bf16 %v8009
    %v8012 = vunpack.i.h.bf16 %v8009
    %v8013 = vmax.f32 %v8011, %v8012
    %v8014 = vrot.slane %v8013, 4
    %v8015 = vmax.f32 %v8013, %v8014
    %v8016 = vrot.slane %v8015, 2
    %v8017 = vmax.f32 %v8015, %v8016
    %v8018 = vrot.slane %v8017, 1
    %v8019 = vmax.f32 %v8017, %v8018
    %v8020 = vpack.i.bf16 %v8019, %v8019
    %v8022 = vsel %vm7239, %v7171, 4286644096
    %v8024 = vunpack.i.l.bf16 %v8022
    %v8025 = vunpack.i.h.bf16 %v8022
    %v8026 = vmax.f32 %v8024, %v8025
    %v8027 = vrot.slane %v8026, 4
    %v8028 = vmax.f32 %v8026, %v8027
    %v8029 = vrot.slane %v8028, 2
    %v8030 = vmax.f32 %v8028, %v8029
    %v8031 = vrot.slane %v8030, 1
    %v8032 = vmax.f32 %v8030, %v8031
    %v8033 = vpack.i.bf16 %v8032, %v8032
    %v8035 = vsel %vm7239, %v7172, 4286644096
    %v8037 = vunpack.i.l.bf16 %v8035
    %v8038 = vunpack.i.h.bf16 %v8035
    %v8039 = vmax.f32 %v8037, %v8038
    %v8040 = vrot.slane %v8039, 4
    %v8041 = vmax.f32 %v8039, %v8040
    %v8042 = vrot.slane %v8041, 2
    %v8043 = vmax.f32 %v8041, %v8042
    %v8044 = vrot.slane %v8043, 1
    %v8045 = vmax.f32 %v8043, %v8044
    %v8046 = vpack.i.bf16 %v8045, %v8045
    %v8048 = vsel %vm7239, %v7173, 4286644096
    %v8050 = vunpack.i.l.bf16 %v8048
    %v8051 = vunpack.i.h.bf16 %v8048
    %v8052 = vmax.f32 %v8050, %v8051
    %v8053 = vrot.slane %v8052, 4
    %v8054 = vmax.f32 %v8052, %v8053
    %v8055 = vrot.slane %v8054, 2
    %v8056 = vmax.f32 %v8054, %v8055
    %v8057 = vrot.slane %v8056, 1
    %v8058 = vmax.f32 %v8056, %v8057
    %v8059 = vpack.i.bf16 %v8058, %v8058
    %v8061 = vsel %vm7239, %v7174, 4286644096
    %v8063 = vunpack.i.l.bf16 %v8061
    %v8064 = vunpack.i.h.bf16 %v8061
    %v8065 = vmax.f32 %v8063, %v8064
    %v8066 = vrot.slane %v8065, 4
    %v8067 = vmax.f32 %v8065, %v8066
    %v8068 = vrot.slane %v8067, 2
    %v8069 = vmax.f32 %v8067, %v8068
    %v8070 = vrot.slane %v8069, 1
    %v8071 = vmax.f32 %v8069, %v8070
    %v8072 = vpack.i.bf16 %v8071, %v8071
    %v8074 = vsel %vm7239, %v7175, 4286644096
    %v8076 = vunpack.i.l.bf16 %v8074
    %v8077 = vunpack.i.h.bf16 %v8074
    %v8078 = vmax.f32 %v8076, %v8077
    %v8079 = vrot.slane %v8078, 4
    %v8080 = vmax.f32 %v8078, %v8079
    %v8081 = vrot.slane %v8080, 2
    %v8082 = vmax.f32 %v8080, %v8081
    %v8083 = vrot.slane %v8082, 1
    %v8084 = vmax.f32 %v8082, %v8083
    %v8085 = vpack.i.bf16 %v8084, %v8084
    %v8087 = vsel %vm7239, %v7176, 4286644096
    %v8089 = vunpack.i.l.bf16 %v8087
    %v8090 = vunpack.i.h.bf16 %v8087
    %v8091 = vmax.f32 %v8089, %v8090
    %v8092 = vrot.slane %v8091, 4
    %v8093 = vmax.f32 %v8091, %v8092
    %v8094 = vrot.slane %v8093, 2
    %v8095 = vmax.f32 %v8093, %v8094
    %v8096 = vrot.slane %v8095, 1
    %v8097 = vmax.f32 %v8095, %v8096
    %v8098 = vpack.i.bf16 %v8097, %v8097
    %v8100 = vsel %vm7239, %v7177, 4286644096
    %v8102 = vunpack.i.l.bf16 %v8100
    %v8103 = vunpack.i.h.bf16 %v8100
    %v8104 = vmax.f32 %v8102, %v8103
    %v8105 = vrot.slane %v8104, 4
    %v8106 = vmax.f32 %v8104, %v8105
    %v8107 = vrot.slane %v8106, 2
    %v8108 = vmax.f32 %v8106, %v8107
    %v8109 = vrot.slane %v8108, 1
    %v8110 = vmax.f32 %v8108, %v8109
    %v8111 = vpack.i.bf16 %v8110, %v8110
    %v8113 = vsel %vm7239, %v7178, 4286644096
    %v8115 = vunpack.i.l.bf16 %v8113
    %v8116 = vunpack.i.h.bf16 %v8113
    %v8117 = vmax.f32 %v8115, %v8116
    %v8118 = vrot.slane %v8117, 4
    %v8119 = vmax.f32 %v8117, %v8118
    %v8120 = vrot.slane %v8119, 2
    %v8121 = vmax.f32 %v8119, %v8120
    %v8122 = vrot.slane %v8121, 1
    %v8123 = vmax.f32 %v8121, %v8122
    %v8124 = vpack.i.bf16 %v8123, %v8123
    %v8126 = vsel %vm7239, %v7179, 4286644096
    %v8128 = vunpack.i.l.bf16 %v8126
    %v8129 = vunpack.i.h.bf16 %v8126
    %v8130 = vmax.f32 %v8128, %v8129
    %v8131 = vrot.slane %v8130, 4
    %v8132 = vmax.f32 %v8130, %v8131
    %v8133 = vrot.slane %v8132, 2
    %v8134 = vmax.f32 %v8132, %v8133
    %v8135 = vrot.slane %v8134, 1
    %v8136 = vmax.f32 %v8134, %v8135
    %v8137 = vpack.i.bf16 %v8136, %v8136
    %v8139 = vsel %vm7239, %v7180, 4286644096
    %v8141 = vunpack.i.l.bf16 %v8139
    %v8142 = vunpack.i.h.bf16 %v8139
    %v8143 = vmax.f32 %v8141, %v8142
    %v8144 = vrot.slane %v8143, 4
    %v8145 = vmax.f32 %v8143, %v8144
    %v8146 = vrot.slane %v8145, 2
    %v8147 = vmax.f32 %v8145, %v8146
    %v8148 = vrot.slane %v8147, 1
    %v8149 = vmax.f32 %v8147, %v8148
    %v8150 = vpack.i.bf16 %v8149, %v8149
    %v8152 = vsel %vm7239, %v7181, 4286644096
    %v8154 = vunpack.i.l.bf16 %v8152
    %v8155 = vunpack.i.h.bf16 %v8152
    %v8156 = vmax.f32 %v8154, %v8155
    %v8157 = vrot.slane %v8156, 4
    %v8158 = vmax.f32 %v8156, %v8157
    %v8159 = vrot.slane %v8158, 2
    %v8160 = vmax.f32 %v8158, %v8159
    %v8161 = vrot.slane %v8160, 1
    %v8162 = vmax.f32 %v8160, %v8161
    %v8163 = vpack.i.bf16 %v8162, %v8162
    %v8165 = vsel %vm7239, %v7182, 4286644096
    %v8167 = vunpack.i.l.bf16 %v8165
    %v8168 = vunpack.i.h.bf16 %v8165
    %v8169 = vmax.f32 %v8167, %v8168
    %v8170 = vrot.slane %v8169, 4
    %v8171 = vmax.f32 %v8169, %v8170
    %v8172 = vrot.slane %v8171, 2
    %v8173 = vmax.f32 %v8171, %v8172
    %v8174 = vrot.slane %v8173, 1
    %v8175 = vmax.f32 %v8173, %v8174
    %v8176 = vpack.i.bf16 %v8175, %v8175
    %v8178 = vsel %vm7239, %v7183, 4286644096
    %v8180 = vunpack.i.l.bf16 %v8178
    %v8181 = vunpack.i.h.bf16 %v8178
    %v8182 = vmax.f32 %v8180, %v8181
    %v8183 = vrot.slane %v8182, 4
    %v8184 = vmax.f32 %v8182, %v8183
    %v8185 = vrot.slane %v8184, 2
    %v8186 = vmax.f32 %v8184, %v8185
    %v8187 = vrot.slane %v8186, 1
    %v8188 = vmax.f32 %v8186, %v8187
    %v8189 = vpack.i.bf16 %v8188, %v8188
    %v8191 = vsel %vm7239, %v7184, 4286644096
    %v8193 = vunpack.i.l.bf16 %v8191
    %v8194 = vunpack.i.h.bf16 %v8191
    %v8195 = vmax.f32 %v8193, %v8194
    %v8196 = vrot.slane %v8195, 4
    %v8197 = vmax.f32 %v8195, %v8196
    %v8198 = vrot.slane %v8197, 2
    %v8199 = vmax.f32 %v8197, %v8198
    %v8200 = vrot.slane %v8199, 1
    %v8201 = vmax.f32 %v8199, %v8200
    %v8202 = vpack.i.bf16 %v8201, %v8201
    %v8204 = vsel %vm7239, %v7185, 4286644096
    %v8206 = vunpack.i.l.bf16 %v8204
    %v8207 = vunpack.i.h.bf16 %v8204
    %v8208 = vmax.f32 %v8206, %v8207
    %v8209 = vrot.slane %v8208, 4
    %v8210 = vmax.f32 %v8208, %v8209
    %v8211 = vrot.slane %v8210, 2
    %v8212 = vmax.f32 %v8210, %v8211
    %v8213 = vrot.slane %v8212, 1
    %v8214 = vmax.f32 %v8212, %v8213
    %v8215 = vpack.i.bf16 %v8214, %v8214
    %v8217 = vsel %vm7239, %v7186, 4286644096
    %v8219 = vunpack.i.l.bf16 %v8217
    %v8220 = vunpack.i.h.bf16 %v8217
    %v8221 = vmax.f32 %v8219, %v8220
    %v8222 = vrot.slane %v8221, 4
    %v8223 = vmax.f32 %v8221, %v8222
    %v8224 = vrot.slane %v8223, 2
    %v8225 = vmax.f32 %v8223, %v8224
    %v8226 = vrot.slane %v8225, 1
    %v8227 = vmax.f32 %v8225, %v8226
    %v8228 = vpack.i.bf16 %v8227, %v8227
    %v8230 = vsel %vm7239, %v7187, 4286644096
    %v8232 = vunpack.i.l.bf16 %v8230
    %v8233 = vunpack.i.h.bf16 %v8230
    %v8234 = vmax.f32 %v8232, %v8233
    %v8235 = vrot.slane %v8234, 4
    %v8236 = vmax.f32 %v8234, %v8235
    %v8237 = vrot.slane %v8236, 2
    %v8238 = vmax.f32 %v8236, %v8237
    %v8239 = vrot.slane %v8238, 1
    %v8240 = vmax.f32 %v8238, %v8239
    %v8241 = vpack.i.bf16 %v8240, %v8240
    %v8243 = vsel %vm7239, %v7188, 4286644096
    %v8245 = vunpack.i.l.bf16 %v8243
    %v8246 = vunpack.i.h.bf16 %v8243
    %v8247 = vmax.f32 %v8245, %v8246
    %v8248 = vrot.slane %v8247, 4
    %v8249 = vmax.f32 %v8247, %v8248
    %v8250 = vrot.slane %v8249, 2
    %v8251 = vmax.f32 %v8249, %v8250
    %v8252 = vrot.slane %v8251, 1
    %v8253 = vmax.f32 %v8251, %v8252
    %v8254 = vpack.i.bf16 %v8253, %v8253
    %v8256 = vsel %vm7239, %v7189, 4286644096
    %v8258 = vunpack.i.l.bf16 %v8256
    %v8259 = vunpack.i.h.bf16 %v8256
    %v8260 = vmax.f32 %v8258, %v8259
    %v8261 = vrot.slane %v8260, 4
    %v8262 = vmax.f32 %v8260, %v8261
    %v8263 = vrot.slane %v8262, 2
    %v8264 = vmax.f32 %v8262, %v8263
    %v8265 = vrot.slane %v8264, 1
    %v8266 = vmax.f32 %v8264, %v8265
    %v8267 = vpack.i.bf16 %v8266, %v8266
    %v8269 = vsel %vm7239, %v7190, 4286644096
    %v8271 = vunpack.i.l.bf16 %v8269
    %v8272 = vunpack.i.h.bf16 %v8269
    %v8273 = vmax.f32 %v8271, %v8272
    %v8274 = vrot.slane %v8273, 4
    %v8275 = vmax.f32 %v8273, %v8274
    %v8276 = vrot.slane %v8275, 2
    %v8277 = vmax.f32 %v8275, %v8276
    %v8278 = vrot.slane %v8277, 1
    %v8279 = vmax.f32 %v8277, %v8278
    %v8280 = vpack.i.bf16 %v8279, %v8279
    %v8282 = vsel %vm7239, %v7191, 4286644096
    %v8284 = vunpack.i.l.bf16 %v8282
    %v8285 = vunpack.i.h.bf16 %v8282
    %v8286 = vmax.f32 %v8284, %v8285
    %v8287 = vrot.slane %v8286, 4
    %v8288 = vmax.f32 %v8286, %v8287
    %v8289 = vrot.slane %v8288, 2
    %v8290 = vmax.f32 %v8288, %v8289
    %v8291 = vrot.slane %v8290, 1
    %v8292 = vmax.f32 %v8290, %v8291
    %v8293 = vpack.i.bf16 %v8292, %v8292
    %v8295 = vsel %vm7239, %v7192, 4286644096
    %v8297 = vunpack.i.l.bf16 %v8295
    %v8298 = vunpack.i.h.bf16 %v8295
    %v8299 = vmax.f32 %v8297, %v8298
    %v8300 = vrot.slane %v8299, 4
    %v8301 = vmax.f32 %v8299, %v8300
    %v8302 = vrot.slane %v8301, 2
    %v8303 = vmax.f32 %v8301, %v8302
    %v8304 = vrot.slane %v8303, 1
    %v8305 = vmax.f32 %v8303, %v8304
    %v8306 = vpack.i.bf16 %v8305, %v8305
    %v8308 = vsel %vm7239, %v7193, 4286644096
    %v8310 = vunpack.i.l.bf16 %v8308
    %v8311 = vunpack.i.h.bf16 %v8308
    %v8312 = vmax.f32 %v8310, %v8311
    %v8313 = vrot.slane %v8312, 4
    %v8314 = vmax.f32 %v8312, %v8313
    %v8315 = vrot.slane %v8314, 2
    %v8316 = vmax.f32 %v8314, %v8315
    %v8317 = vrot.slane %v8316, 1
    %v8318 = vmax.f32 %v8316, %v8317
    %v8319 = vpack.i.bf16 %v8318, %v8318
    %v8321 = vsel %vm7239, %v7194, 4286644096
    %v8323 = vunpack.i.l.bf16 %v8321
    %v8324 = vunpack.i.h.bf16 %v8321
    %v8325 = vmax.f32 %v8323, %v8324
    %v8326 = vrot.slane %v8325, 4
    %v8327 = vmax.f32 %v8325, %v8326
    %v8328 = vrot.slane %v8327, 2
    %v8329 = vmax.f32 %v8327, %v8328
    %v8330 = vrot.slane %v8329, 1
    %v8331 = vmax.f32 %v8329, %v8330
    %v8332 = vpack.i.bf16 %v8331, %v8331
    %v8334 = vsel %vm7239, %v7195, 4286644096
    %v8336 = vunpack.i.l.bf16 %v8334
    %v8337 = vunpack.i.h.bf16 %v8334
    %v8338 = vmax.f32 %v8336, %v8337
    %v8339 = vrot.slane %v8338, 4
    %v8340 = vmax.f32 %v8338, %v8339
    %v8341 = vrot.slane %v8340, 2
    %v8342 = vmax.f32 %v8340, %v8341
    %v8343 = vrot.slane %v8342, 1
    %v8344 = vmax.f32 %v8342, %v8343
    %v8345 = vpack.i.bf16 %v8344, %v8344
    %v8347 = vsel %vm7239, %v7196, 4286644096
    %v8349 = vunpack.i.l.bf16 %v8347
    %v8350 = vunpack.i.h.bf16 %v8347
    %v8351 = vmax.f32 %v8349, %v8350
    %v8352 = vrot.slane %v8351, 4
    %v8353 = vmax.f32 %v8351, %v8352
    %v8354 = vrot.slane %v8353, 2
    %v8355 = vmax.f32 %v8353, %v8354
    %v8356 = vrot.slane %v8355, 1
    %v8357 = vmax.f32 %v8355, %v8356
    %v8358 = vpack.i.bf16 %v8357, %v8357
    %v8360 = vsel %vm7239, %v7197, 4286644096
    %v8362 = vunpack.i.l.bf16 %v8360
    %v8363 = vunpack.i.h.bf16 %v8360
    %v8364 = vmax.f32 %v8362, %v8363
    %v8365 = vrot.slane %v8364, 4
    %v8366 = vmax.f32 %v8364, %v8365
    %v8367 = vrot.slane %v8366, 2
    %v8368 = vmax.f32 %v8366, %v8367
    %v8369 = vrot.slane %v8368, 1
    %v8370 = vmax.f32 %v8368, %v8369
    %v8371 = vpack.i.bf16 %v8370, %v8370
    %v8373 = vsel %vm7239, %v7198, 4286644096
    %v8375 = vunpack.i.l.bf16 %v8373
    %v8376 = vunpack.i.h.bf16 %v8373
    %v8377 = vmax.f32 %v8375, %v8376
    %v8378 = vrot.slane %v8377, 4
    %v8379 = vmax.f32 %v8377, %v8378
    %v8380 = vrot.slane %v8379, 2
    %v8381 = vmax.f32 %v8379, %v8380
    %v8382 = vrot.slane %v8381, 1
    %v8383 = vmax.f32 %v8381, %v8382
    %v8384 = vpack.i.bf16 %v8383, %v8383
    %v8386 = vsel %vm7239, %v7199, 4286644096
    %v8388 = vunpack.i.l.bf16 %v8386
    %v8389 = vunpack.i.h.bf16 %v8386
    %v8390 = vmax.f32 %v8388, %v8389
    %v8391 = vrot.slane %v8390, 4
    %v8392 = vmax.f32 %v8390, %v8391
    %v8393 = vrot.slane %v8392, 2
    %v8394 = vmax.f32 %v8392, %v8393
    %v8395 = vrot.slane %v8394, 1
    %v8396 = vmax.f32 %v8394, %v8395
    %v8397 = vpack.i.bf16 %v8396, %v8396
    %v8399 = vsel %vm7239, %v7200, 4286644096
    %v8401 = vunpack.i.l.bf16 %v8399
    %v8402 = vunpack.i.h.bf16 %v8399
    %v8403 = vmax.f32 %v8401, %v8402
    %v8404 = vrot.slane %v8403, 4
    %v8405 = vmax.f32 %v8403, %v8404
    %v8406 = vrot.slane %v8405, 2
    %v8407 = vmax.f32 %v8405, %v8406
    %v8408 = vrot.slane %v8407, 1
    %v8409 = vmax.f32 %v8407, %v8408
    %v8410 = vpack.i.bf16 %v8409, %v8409
    %v8412 = vsel %vm7239, %v7201, 4286644096
    %v8414 = vunpack.i.l.bf16 %v8412
    %v8415 = vunpack.i.h.bf16 %v8412
    %v8416 = vmax.f32 %v8414, %v8415
    %v8417 = vrot.slane %v8416, 4
    %v8418 = vmax.f32 %v8416, %v8417
    %v8419 = vrot.slane %v8418, 2
    %v8420 = vmax.f32 %v8418, %v8419
    %v8421 = vrot.slane %v8420, 1
    %v8422 = vmax.f32 %v8420, %v8421
    %v8423 = vpack.i.bf16 %v8422, %v8422
    %v8425 = vsel %vm7239, %v7202, 4286644096
    %v8427 = vunpack.i.l.bf16 %v8425
    %v8428 = vunpack.i.h.bf16 %v8425
    %v8429 = vmax.f32 %v8427, %v8428
    %v8430 = vrot.slane %v8429, 4
    %v8431 = vmax.f32 %v8429, %v8430
    %v8432 = vrot.slane %v8431, 2
    %v8433 = vmax.f32 %v8431, %v8432
    %v8434 = vrot.slane %v8433, 1
    %v8435 = vmax.f32 %v8433, %v8434
    %v8436 = vpack.i.bf16 %v8435, %v8435
    %v8438 = vsel %vm7239, %v7203, 4286644096
    %v8440 = vunpack.i.l.bf16 %v8438
    %v8441 = vunpack.i.h.bf16 %v8438
    %v8442 = vmax.f32 %v8440, %v8441
    %v8443 = vrot.slane %v8442, 4
    %v8444 = vmax.f32 %v8442, %v8443
    %v8445 = vrot.slane %v8444, 2
    %v8446 = vmax.f32 %v8444, %v8445
    %v8447 = vrot.slane %v8446, 1
    %v8448 = vmax.f32 %v8446, %v8447
    %v8449 = vpack.i.bf16 %v8448, %v8448
    %v8451 = vsel %vm7239, %v7204, 4286644096
    %v8453 = vunpack.i.l.bf16 %v8451
    %v8454 = vunpack.i.h.bf16 %v8451
    %v8455 = vmax.f32 %v8453, %v8454
    %v8456 = vrot.slane %v8455, 4
    %v8457 = vmax.f32 %v8455, %v8456
    %v8458 = vrot.slane %v8457, 2
    %v8459 = vmax.f32 %v8457, %v8458
    %v8460 = vrot.slane %v8459, 1
    %v8461 = vmax.f32 %v8459, %v8460
    %v8462 = vpack.i.bf16 %v8461, %v8461
    %v8464 = vsel %vm7239, %v7205, 4286644096
    %v8466 = vunpack.i.l.bf16 %v8464
    %v8467 = vunpack.i.h.bf16 %v8464
    %v8468 = vmax.f32 %v8466, %v8467
    %v8469 = vrot.slane %v8468, 4
    %v8470 = vmax.f32 %v8468, %v8469
    %v8471 = vrot.slane %v8470, 2
    %v8472 = vmax.f32 %v8470, %v8471
    %v8473 = vrot.slane %v8472, 1
    %v8474 = vmax.f32 %v8472, %v8473
    %v8475 = vpack.i.bf16 %v8474, %v8474
    %v8477 = vsel %vm7239, %v7206, 4286644096
    %v8479 = vunpack.i.l.bf16 %v8477
    %v8480 = vunpack.i.h.bf16 %v8477
    %v8481 = vmax.f32 %v8479, %v8480
    %v8482 = vrot.slane %v8481, 4
    %v8483 = vmax.f32 %v8481, %v8482
    %v8484 = vrot.slane %v8483, 2
    %v8485 = vmax.f32 %v8483, %v8484
    %v8486 = vrot.slane %v8485, 1
    %v8487 = vmax.f32 %v8485, %v8486
    %v8488 = vpack.i.bf16 %v8487, %v8487
    %v8490 = vsel %vm7239, %v7207, 4286644096
    %v8492 = vunpack.i.l.bf16 %v8490
    %v8493 = vunpack.i.h.bf16 %v8490
    %v8494 = vmax.f32 %v8492, %v8493
    %v8495 = vrot.slane %v8494, 4
    %v8496 = vmax.f32 %v8494, %v8495
    %v8497 = vrot.slane %v8496, 2
    %v8498 = vmax.f32 %v8496, %v8497
    %v8499 = vrot.slane %v8498, 1
    %v8500 = vmax.f32 %v8498, %v8499
    %v8501 = vpack.i.bf16 %v8500, %v8500
    %v8503 = vsel %vm7239, %v7208, 4286644096
    %v8505 = vunpack.i.l.bf16 %v8503
    %v8506 = vunpack.i.h.bf16 %v8503
    %v8507 = vmax.f32 %v8505, %v8506
    %v8508 = vrot.slane %v8507, 4
    %v8509 = vmax.f32 %v8507, %v8508
    %v8510 = vrot.slane %v8509, 2
    %v8511 = vmax.f32 %v8509, %v8510
    %v8512 = vrot.slane %v8511, 1
    %v8513 = vmax.f32 %v8511, %v8512
    %v8514 = vpack.i.bf16 %v8513, %v8513
    %v8516 = vsel %vm7239, %v7209, 4286644096
    %v8518 = vunpack.i.l.bf16 %v8516
    %v8519 = vunpack.i.h.bf16 %v8516
    %v8520 = vmax.f32 %v8518, %v8519
    %v8521 = vrot.slane %v8520, 4
    %v8522 = vmax.f32 %v8520, %v8521
    %v8523 = vrot.slane %v8522, 2
    %v8524 = vmax.f32 %v8522, %v8523
    %v8525 = vrot.slane %v8524, 1
    %v8526 = vmax.f32 %v8524, %v8525
    %v8527 = vpack.i.bf16 %v8526, %v8526
    %v8529 = vsel %vm7239, %v7210, 4286644096
    %v8531 = vunpack.i.l.bf16 %v8529
    %v8532 = vunpack.i.h.bf16 %v8529
    %v8533 = vmax.f32 %v8531, %v8532
    %v8534 = vrot.slane %v8533, 4
    %v8535 = vmax.f32 %v8533, %v8534
    %v8536 = vrot.slane %v8535, 2
    %v8537 = vmax.f32 %v8535, %v8536
    %v8538 = vrot.slane %v8537, 1
    %v8539 = vmax.f32 %v8537, %v8538
    %v8540 = vpack.i.bf16 %v8539, %v8539
    %v8542 = vsel %vm7239, %v7211, 4286644096
    %v8544 = vunpack.i.l.bf16 %v8542
    %v8545 = vunpack.i.h.bf16 %v8542
    %v8546 = vmax.f32 %v8544, %v8545
    %v8547 = vrot.slane %v8546, 4
    %v8548 = vmax.f32 %v8546, %v8547
    %v8549 = vrot.slane %v8548, 2
    %v8550 = vmax.f32 %v8548, %v8549
    %v8551 = vrot.slane %v8550, 1
    %v8552 = vmax.f32 %v8550, %v8551
    %v8553 = vpack.i.bf16 %v8552, %v8552
    %v8555 = vsel %vm7239, %v7212, 4286644096
    %v8557 = vunpack.i.l.bf16 %v8555
    %v8558 = vunpack.i.h.bf16 %v8555
    %v8559 = vmax.f32 %v8557, %v8558
    %v8560 = vrot.slane %v8559, 4
    %v8561 = vmax.f32 %v8559, %v8560
    %v8562 = vrot.slane %v8561, 2
    %v8563 = vmax.f32 %v8561, %v8562
    %v8564 = vrot.slane %v8563, 1
    %v8565 = vmax.f32 %v8563, %v8564
    %v8566 = vpack.i.bf16 %v8565, %v8565
    %v8568 = vsel %vm7239, %v7213, 4286644096
    %v8570 = vunpack.i.l.bf16 %v8568
    %v8571 = vunpack.i.h.bf16 %v8568
    %v8572 = vmax.f32 %v8570, %v8571
    %v8573 = vrot.slane %v8572, 4
    %v8574 = vmax.f32 %v8572, %v8573
    %v8575 = vrot.slane %v8574, 2
    %v8576 = vmax.f32 %v8574, %v8575
    %v8577 = vrot.slane %v8576, 1
    %v8578 = vmax.f32 %v8576, %v8577
    %v8579 = vpack.i.bf16 %v8578, %v8578
    %v8581 = vsel %vm7239, %v7214, 4286644096
    %v8583 = vunpack.i.l.bf16 %v8581
    %v8584 = vunpack.i.h.bf16 %v8581
    %v8585 = vmax.f32 %v8583, %v8584
    %v8586 = vrot.slane %v8585, 4
    %v8587 = vmax.f32 %v8585, %v8586
    %v8588 = vrot.slane %v8587, 2
    %v8589 = vmax.f32 %v8587, %v8588
    %v8590 = vrot.slane %v8589, 1
    %v8591 = vmax.f32 %v8589, %v8590
    %v8592 = vpack.i.bf16 %v8591, %v8591
    %v8594 = vsel %vm7239, %v7215, 4286644096
    %v8596 = vunpack.i.l.bf16 %v8594
    %v8597 = vunpack.i.h.bf16 %v8594
    %v8598 = vmax.f32 %v8596, %v8597
    %v8599 = vrot.slane %v8598, 4
    %v8600 = vmax.f32 %v8598, %v8599
    %v8601 = vrot.slane %v8600, 2
    %v8602 = vmax.f32 %v8600, %v8601
    %v8603 = vrot.slane %v8602, 1
    %v8604 = vmax.f32 %v8602, %v8603
    %v8605 = vpack.i.bf16 %v8604, %v8604
    %v8607 = vsel %vm7239, %v7216, 4286644096
    %v8609 = vunpack.i.l.bf16 %v8607
    %v8610 = vunpack.i.h.bf16 %v8607
    %v8611 = vmax.f32 %v8609, %v8610
    %v8612 = vrot.slane %v8611, 4
    %v8613 = vmax.f32 %v8611, %v8612
    %v8614 = vrot.slane %v8613, 2
    %v8615 = vmax.f32 %v8613, %v8614
    %v8616 = vrot.slane %v8615, 1
    %v8617 = vmax.f32 %v8615, %v8616
    %v8618 = vpack.i.bf16 %v8617, %v8617
    %v8620 = vsel %vm7239, %v7217, 4286644096
    %v8622 = vunpack.i.l.bf16 %v8620
    %v8623 = vunpack.i.h.bf16 %v8620
    %v8624 = vmax.f32 %v8622, %v8623
    %v8625 = vrot.slane %v8624, 4
    %v8626 = vmax.f32 %v8624, %v8625
    %v8627 = vrot.slane %v8626, 2
    %v8628 = vmax.f32 %v8626, %v8627
    %v8629 = vrot.slane %v8628, 1
    %v8630 = vmax.f32 %v8628, %v8629
    %v8631 = vpack.i.bf16 %v8630, %v8630
    %v8633 = vsel %vm7239, %v7218, 4286644096
    %v8635 = vunpack.i.l.bf16 %v8633
    %v8636 = vunpack.i.h.bf16 %v8633
    %v8637 = vmax.f32 %v8635, %v8636
    %v8638 = vrot.slane %v8637, 4
    %v8639 = vmax.f32 %v8637, %v8638
    %v8640 = vrot.slane %v8639, 2
    %v8641 = vmax.f32 %v8639, %v8640
    %v8642 = vrot.slane %v8641, 1
    %v8643 = vmax.f32 %v8641, %v8642
    %v8644 = vpack.i.bf16 %v8643, %v8643
    %v8646 = vsel %vm7239, %v7219, 4286644096
    %v8648 = vunpack.i.l.bf16 %v8646
    %v8649 = vunpack.i.h.bf16 %v8646
    %v8650 = vmax.f32 %v8648, %v8649
    %v8651 = vrot.slane %v8650, 4
    %v8652 = vmax.f32 %v8650, %v8651
    %v8653 = vrot.slane %v8652, 2
    %v8654 = vmax.f32 %v8652, %v8653
    %v8655 = vrot.slane %v8654, 1
    %v8656 = vmax.f32 %v8654, %v8655
    %v8657 = vpack.i.bf16 %v8656, %v8656
    %v8659 = vsel %vm7239, %v7220, 4286644096
    %v8661 = vunpack.i.l.bf16 %v8659
    %v8662 = vunpack.i.h.bf16 %v8659
    %v8663 = vmax.f32 %v8661, %v8662
    %v8664 = vrot.slane %v8663, 4
    %v8665 = vmax.f32 %v8663, %v8664
    %v8666 = vrot.slane %v8665, 2
    %v8667 = vmax.f32 %v8665, %v8666
    %v8668 = vrot.slane %v8667, 1
    %v8669 = vmax.f32 %v8667, %v8668
    %v8670 = vpack.i.bf16 %v8669, %v8669
    %v8672 = vsel %vm7239, %v7221, 4286644096
    %v8674 = vunpack.i.l.bf16 %v8672
    %v8675 = vunpack.i.h.bf16 %v8672
    %v8676 = vmax.f32 %v8674, %v8675
    %v8677 = vrot.slane %v8676, 4
    %v8678 = vmax.f32 %v8676, %v8677
    %v8679 = vrot.slane %v8678, 2
    %v8680 = vmax.f32 %v8678, %v8679
    %v8681 = vrot.slane %v8680, 1
    %v8682 = vmax.f32 %v8680, %v8681
    %v8683 = vpack.i.bf16 %v8682, %v8682
    %v8685 = vsel %vm7239, %v7222, 4286644096
    %v8687 = vunpack.i.l.bf16 %v8685
    %v8688 = vunpack.i.h.bf16 %v8685
    %v8689 = vmax.f32 %v8687, %v8688
    %v8690 = vrot.slane %v8689, 4
    %v8691 = vmax.f32 %v8689, %v8690
    %v8692 = vrot.slane %v8691, 2
    %v8693 = vmax.f32 %v8691, %v8692
    %v8694 = vrot.slane %v8693, 1
    %v8695 = vmax.f32 %v8693, %v8694
    %v8696 = vpack.i.bf16 %v8695, %v8695
    %v8698 = vsel %vm7239, %v7223, 4286644096
    %v8700 = vunpack.i.l.bf16 %v8698
    %v8701 = vunpack.i.h.bf16 %v8698
    %v8702 = vmax.f32 %v8700, %v8701
    %v8703 = vrot.slane %v8702, 4
    %v8704 = vmax.f32 %v8702, %v8703
    %v8705 = vrot.slane %v8704, 2
    %v8706 = vmax.f32 %v8704, %v8705
    %v8707 = vrot.slane %v8706, 1
    %v8708 = vmax.f32 %v8706, %v8707
    %v8709 = vpack.i.bf16 %v8708, %v8708
    %v8711 = vsel %vm7239, %v7224, 4286644096
    %v8713 = vunpack.i.l.bf16 %v8711
    %v8714 = vunpack.i.h.bf16 %v8711
    %v8715 = vmax.f32 %v8713, %v8714
    %v8716 = vrot.slane %v8715, 4
    %v8717 = vmax.f32 %v8715, %v8716
    %v8718 = vrot.slane %v8717, 2
    %v8719 = vmax.f32 %v8717, %v8718
    %v8720 = vrot.slane %v8719, 1
    %v8721 = vmax.f32 %v8719, %v8720
    %v8722 = vpack.i.bf16 %v8721, %v8721
    %v8724 = vsel %vm7239, %v7225, 4286644096
    %v8726 = vunpack.i.l.bf16 %v8724
    %v8727 = vunpack.i.h.bf16 %v8724
    %v8728 = vmax.f32 %v8726, %v8727
    %v8729 = vrot.slane %v8728, 4
    %v8730 = vmax.f32 %v8728, %v8729
    %v8731 = vrot.slane %v8730, 2
    %v8732 = vmax.f32 %v8730, %v8731
    %v8733 = vrot.slane %v8732, 1
    %v8734 = vmax.f32 %v8732, %v8733
    %v8735 = vpack.i.bf16 %v8734, %v8734
    %v8737 = vsel %vm7239, %v7226, 4286644096
    %v8739 = vunpack.i.l.bf16 %v8737
    %v8740 = vunpack.i.h.bf16 %v8737
    %v8741 = vmax.f32 %v8739, %v8740
    %v8742 = vrot.slane %v8741, 4
    %v8743 = vmax.f32 %v8741, %v8742
    %v8744 = vrot.slane %v8743, 2
    %v8745 = vmax.f32 %v8743, %v8744
    %v8746 = vrot.slane %v8745, 1
    %v8747 = vmax.f32 %v8745, %v8746
    %v8748 = vpack.i.bf16 %v8747, %v8747
    %v8750 = vsel %vm7239, %v7227, 4286644096
    %v8752 = vunpack.i.l.bf16 %v8750
    %v8753 = vunpack.i.h.bf16 %v8750
    %v8754 = vmax.f32 %v8752, %v8753
    %v8755 = vrot.slane %v8754, 4
    %v8756 = vmax.f32 %v8754, %v8755
    %v8757 = vrot.slane %v8756, 2
    %v8758 = vmax.f32 %v8756, %v8757
    %v8759 = vrot.slane %v8758, 1
    %v8760 = vmax.f32 %v8758, %v8759
    %v8761 = vpack.i.bf16 %v8760, %v8760
    %v8763 = vsel %vm7239, %v7228, 4286644096
    %v8765 = vunpack.i.l.bf16 %v8763
    %v8766 = vunpack.i.h.bf16 %v8763
    %v8767 = vmax.f32 %v8765, %v8766
    %v8768 = vrot.slane %v8767, 4
    %v8769 = vmax.f32 %v8767, %v8768
    %v8770 = vrot.slane %v8769, 2
    %v8771 = vmax.f32 %v8769, %v8770
    %v8772 = vrot.slane %v8771, 1
    %v8773 = vmax.f32 %v8771, %v8772
    %v8774 = vpack.i.bf16 %v8773, %v8773
    %v8776 = vsel %vm7239, %v7229, 4286644096
    %v8778 = vunpack.i.l.bf16 %v8776
    %v8779 = vunpack.i.h.bf16 %v8776
    %v8780 = vmax.f32 %v8778, %v8779
    %v8781 = vrot.slane %v8780, 4
    %v8782 = vmax.f32 %v8780, %v8781
    %v8783 = vrot.slane %v8782, 2
    %v8784 = vmax.f32 %v8782, %v8783
    %v8785 = vrot.slane %v8784, 1
    %v8786 = vmax.f32 %v8784, %v8785
    %v8787 = vpack.i.bf16 %v8786, %v8786
    %v8789 = vsel %vm7239, %v7230, 4286644096
    %v8791 = vunpack.i.l.bf16 %v8789
    %v8792 = vunpack.i.h.bf16 %v8789
    %v8793 = vmax.f32 %v8791, %v8792
    %v8794 = vrot.slane %v8793, 4
    %v8795 = vmax.f32 %v8793, %v8794
    %v8796 = vrot.slane %v8795, 2
    %v8797 = vmax.f32 %v8795, %v8796
    %v8798 = vrot.slane %v8797, 1
    %v8799 = vmax.f32 %v8797, %v8798
    %v8800 = vpack.i.bf16 %v8799, %v8799
    %v8802 = vsel %vm7239, %v7231, 4286644096
    %v8804 = vunpack.i.l.bf16 %v8802
    %v8805 = vunpack.i.h.bf16 %v8802
    %v8806 = vmax.f32 %v8804, %v8805
    %v8807 = vrot.slane %v8806, 4
    %v8808 = vmax.f32 %v8806, %v8807
    %v8809 = vrot.slane %v8808, 2
    %v8810 = vmax.f32 %v8808, %v8809
    %v8811 = vrot.slane %v8810, 1
    %v8812 = vmax.f32 %v8810, %v8811
    %v8813 = vpack.i.bf16 %v8812, %v8812
    %v8815 = vsel %vm7239, %v7232, 4286644096
    %v8817 = vunpack.i.l.bf16 %v8815
    %v8818 = vunpack.i.h.bf16 %v8815
    %v8819 = vmax.f32 %v8817, %v8818
    %v8820 = vrot.slane %v8819, 4
    %v8821 = vmax.f32 %v8819, %v8820
    %v8822 = vrot.slane %v8821, 2
    %v8823 = vmax.f32 %v8821, %v8822
    %v8824 = vrot.slane %v8823, 1
    %v8825 = vmax.f32 %v8823, %v8824
    %v8826 = vpack.i.bf16 %v8825, %v8825
    %v8828 = vsel %vm7239, %v7233, 4286644096
    %v8830 = vunpack.i.l.bf16 %v8828
    %v8831 = vunpack.i.h.bf16 %v8828
    %v8832 = vmax.f32 %v8830, %v8831
    %v8833 = vrot.slane %v8832, 4
    %v8834 = vmax.f32 %v8832, %v8833
    %v8835 = vrot.slane %v8834, 2
    %v8836 = vmax.f32 %v8834, %v8835
    %v8837 = vrot.slane %v8836, 1
    %v8838 = vmax.f32 %v8836, %v8837
    %v8839 = vpack.i.bf16 %v8838, %v8838
    %v8841 = vsel %vm7239, %v7234, 4286644096
    %v8843 = vunpack.i.l.bf16 %v8841
    %v8844 = vunpack.i.h.bf16 %v8841
    %v8845 = vmax.f32 %v8843, %v8844
    %v8846 = vrot.slane %v8845, 4
    %v8847 = vmax.f32 %v8845, %v8846
    %v8848 = vrot.slane %v8847, 2
    %v8849 = vmax.f32 %v8847, %v8848
    %v8850 = vrot.slane %v8849, 1
    %v8851 = vmax.f32 %v8849, %v8850
    %v8852 = vpack.i.bf16 %v8851, %v8851
    %v8854 = vsel %vm7239, %v7235, 4286644096
    %v8856 = vunpack.i.l.bf16 %v8854
    %v8857 = vunpack.i.h.bf16 %v8854
    %v8858 = vmax.f32 %v8856, %v8857
    %v8859 = vrot.slane %v8858, 4
    %v8860 = vmax.f32 %v8858, %v8859
    %v8861 = vrot.slane %v8860, 2
    %v8862 = vmax.f32 %v8860, %v8861
    %v8863 = vrot.slane %v8862, 1
    %v8864 = vmax.f32 %v8862, %v8863
    %v8865 = vpack.i.bf16 %v8864, %v8864
    %v8867 = vsel %vm7239, %v7236, 4286644096
    %v8869 = vunpack.i.l.bf16 %v8867
    %v8870 = vunpack.i.h.bf16 %v8867
    %v8871 = vmax.f32 %v8869, %v8870
    %v8872 = vrot.slane %v8871, 4
    %v8873 = vmax.f32 %v8871, %v8872
    %v8874 = vrot.slane %v8873, 2
    %v8875 = vmax.f32 %v8873, %v8874
    %v8876 = vrot.slane %v8875, 1
    %v8877 = vmax.f32 %v8875, %v8876
    %v8878 = vpack.i.bf16 %v8877, %v8877
    %v8880 = vsel %vm7239, %v7237, 4286644096
    %v8882 = vunpack.i.l.bf16 %v8880
    %v8883 = vunpack.i.h.bf16 %v8880
    %v8884 = vmax.f32 %v8882, %v8883
    %v8885 = vrot.slane %v8884, 4
    %v8886 = vmax.f32 %v8884, %v8885
    %v8887 = vrot.slane %v8886, 2
    %v8888 = vmax.f32 %v8886, %v8887
    %v8889 = vrot.slane %v8888, 1
    %v8890 = vmax.f32 %v8888, %v8889
    %v8891 = vpack.i.bf16 %v8890, %v8890
    %v8893 = vsel %vm7239, %v7238, 4286644096
    %v8895 = vunpack.i.l.bf16 %v8893
    %v8896 = vunpack.i.h.bf16 %v8893
    %v8897 = vmax.f32 %v8895, %v8896
    %v8898 = vrot.slane %v8897, 4
    %v8899 = vmax.f32 %v8897, %v8898
    %v8900 = vrot.slane %v8899, 2
    %v8901 = vmax.f32 %v8899, %v8900
    %v8902 = vrot.slane %v8901, 1
    %v8903 = vmax.f32 %v8901, %v8902
    %v8904 = vpack.i.bf16 %v8903, %v8903
    %vm8905 = vcmp.gt.f32.partialorder %v66, 0.0
    %vm8906 = vcmp.gt.f32.partialorder %v67, 0.0
    %v8907 = vunpack.c.l.bf16 %v7253
    %v8908 = vunpack.c.l.bf16 %v7266
    %v8909 = vunpack.c.l.bf16 %v7279
    %v8910 = vunpack.c.l.bf16 %v7292
    %v8911 = vunpack.c.l.bf16 %v7305
    %v8912 = vunpack.c.l.bf16 %v7318
    %v8913 = vunpack.c.l.bf16 %v7331
    %v8914 = vunpack.c.l.bf16 %v7344
    %v8915 = vunpack.c.l.bf16 %v7357
    %v8916 = vunpack.c.l.bf16 %v7370
    %v8917 = vunpack.c.l.bf16 %v7383
    %v8918 = vunpack.c.l.bf16 %v7396
    %v8919 = vunpack.c.l.bf16 %v7409
    %v8920 = vunpack.c.l.bf16 %v7422
    %v8921 = vunpack.c.l.bf16 %v7435
    %v8922 = vunpack.c.l.bf16 %v7448
    %v8923 = vunpack.c.l.bf16 %v7461
    %v8924 = vunpack.c.l.bf16 %v7474
    %v8925 = vunpack.c.l.bf16 %v7487
    %v8926 = vunpack.c.l.bf16 %v7500
    %v8927 = vunpack.c.l.bf16 %v7513
    %v8928 = vunpack.c.l.bf16 %v7526
    %v8929 = vunpack.c.l.bf16 %v7539
    %v8930 = vunpack.c.l.bf16 %v7552
    %v8931 = vunpack.c.l.bf16 %v7565
    %v8932 = vunpack.c.l.bf16 %v7578
    %v8933 = vunpack.c.l.bf16 %v7591
    %v8934 = vunpack.c.l.bf16 %v7604
    %v8935 = vunpack.c.l.bf16 %v7617
    %v8936 = vunpack.c.l.bf16 %v7630
    %v8937 = vunpack.c.l.bf16 %v7643
    %v8938 = vunpack.c.l.bf16 %v7656
    %v8939 = vunpack.c.l.bf16 %v7669
    %v8940 = vunpack.c.l.bf16 %v7682
    %v8941 = vunpack.c.l.bf16 %v7695
    %v8942 = vunpack.c.l.bf16 %v7708
    %v8943 = vunpack.c.l.bf16 %v7721
    %v8944 = vunpack.c.l.bf16 %v7734
    %v8945 = vunpack.c.l.bf16 %v7747
    %v8946 = vunpack.c.l.bf16 %v7760
    %v8947 = vunpack.c.l.bf16 %v7773
    %v8948 = vunpack.c.l.bf16 %v7786
    %v8949 = vunpack.c.l.bf16 %v7799
    %v8950 = vunpack.c.l.bf16 %v7812
    %v8951 = vunpack.c.l.bf16 %v7825
    %v8952 = vunpack.c.l.bf16 %v7838
    %v8953 = vunpack.c.l.bf16 %v7851
    %v8954 = vunpack.c.l.bf16 %v7864
    %v8955 = vunpack.c.l.bf16 %v7877
    %v8956 = vunpack.c.l.bf16 %v7890
    %v8957 = vunpack.c.l.bf16 %v7903
    %v8958 = vunpack.c.l.bf16 %v7916
    %v8959 = vunpack.c.l.bf16 %v7929
    %v8960 = vunpack.c.l.bf16 %v7942
    %v8961 = vunpack.c.l.bf16 %v7955
    %v8962 = vunpack.c.l.bf16 %v7968
    %v8963 = vunpack.c.l.bf16 %v7981
    %v8964 = vunpack.c.l.bf16 %v7994
    %v8965 = vunpack.c.l.bf16 %v8007
    %v8966 = vunpack.c.l.bf16 %v8020
    %v8967 = vunpack.c.l.bf16 %v8033
    %v8968 = vunpack.c.l.bf16 %v8046
    %v8969 = vunpack.c.l.bf16 %v8059
    %v8970 = vunpack.c.l.bf16 %v8072
    %v8971 = vunpack.c.l.bf16 %v8085
    %v8972 = vunpack.c.l.bf16 %v8098
    %v8973 = vunpack.c.l.bf16 %v8111
    %v8974 = vunpack.c.l.bf16 %v8124
    %v8975 = vunpack.c.l.bf16 %v8137
    %v8976 = vunpack.c.l.bf16 %v8150
    %v8977 = vunpack.c.l.bf16 %v8163
    %v8978 = vunpack.c.l.bf16 %v8176
    %v8979 = vunpack.c.l.bf16 %v8189
    %v8980 = vunpack.c.l.bf16 %v8202
    %v8981 = vunpack.c.l.bf16 %v8215
    %v8982 = vunpack.c.l.bf16 %v8228
    %v8983 = vunpack.c.l.bf16 %v8241
    %v8984 = vunpack.c.l.bf16 %v8254
    %v8985 = vunpack.c.l.bf16 %v8267
    %v8986 = vunpack.c.l.bf16 %v8280
    %v8987 = vunpack.c.l.bf16 %v8293
    %v8988 = vunpack.c.l.bf16 %v8306
    %v8989 = vunpack.c.l.bf16 %v8319
    %v8990 = vunpack.c.l.bf16 %v8332
    %v8991 = vunpack.c.l.bf16 %v8345
    %v8992 = vunpack.c.l.bf16 %v8358
    %v8993 = vunpack.c.l.bf16 %v8371
    %v8994 = vunpack.c.l.bf16 %v8384
    %v8995 = vunpack.c.l.bf16 %v8397
    %v8996 = vunpack.c.l.bf16 %v8410
    %v8997 = vunpack.c.l.bf16 %v8423
    %v8998 = vunpack.c.l.bf16 %v8436
    %v8999 = vunpack.c.l.bf16 %v8449
    %v9000 = vunpack.c.l.bf16 %v8462
    %v9001 = vunpack.c.l.bf16 %v8475
    %v9002 = vunpack.c.l.bf16 %v8488
    %v9003 = vunpack.c.l.bf16 %v8501
    %v9004 = vunpack.c.l.bf16 %v8514
    %v9005 = vunpack.c.l.bf16 %v8527
    %v9006 = vunpack.c.l.bf16 %v8540
    %v9007 = vunpack.c.l.bf16 %v8553
    %v9008 = vunpack.c.l.bf16 %v8566
    %v9009 = vunpack.c.l.bf16 %v8579
    %v9010 = vunpack.c.l.bf16 %v8592
    %v9011 = vunpack.c.l.bf16 %v8605
    %v9012 = vunpack.c.l.bf16 %v8618
    %v9013 = vunpack.c.l.bf16 %v8631
    %v9014 = vunpack.c.l.bf16 %v8644
    %v9015 = vunpack.c.l.bf16 %v8657
    %v9016 = vunpack.c.l.bf16 %v8670
    %v9017 = vunpack.c.l.bf16 %v8683
    %v9018 = vunpack.c.l.bf16 %v8696
    %v9019 = vunpack.c.l.bf16 %v8709
    %v9020 = vunpack.c.l.bf16 %v8722
    %v9021 = vunpack.c.l.bf16 %v8735
    %v9022 = vunpack.c.l.bf16 %v8748
    %v9023 = vunpack.c.l.bf16 %v8761
    %v9024 = vunpack.c.l.bf16 %v8774
    %v9025 = vunpack.c.l.bf16 %v8787
    %v9026 = vunpack.c.l.bf16 %v8800
    %v9027 = vunpack.c.l.bf16 %v8813
    %v9028 = vunpack.c.l.bf16 %v8826
    %v9029 = vunpack.c.l.bf16 %v8839
    %v9030 = vunpack.c.l.bf16 %v8852
    %v9031 = vunpack.c.l.bf16 %v8865
    %v9032 = vunpack.c.l.bf16 %v8878
    %v9033 = vunpack.c.l.bf16 %v8891
    %v9034 = vunpack.c.l.bf16 %v8904
    %v9035 = vsel %vm8905, 1, 0
    %v9036 = vsel %vm8906, 1, 0
    %9037 = vset.pattern.permute.xlu0 0
    %9038 = vperm.xlu0 %9037, %v9035
    %v9039 = vpop.permute.xlu0 %9038
    %9040 = vset.pattern.permute.xlu0 0
    %9041 = vperm.xlu0 %9040, %v9036
    %v9042 = vpop.permute.xlu0 %9041
    %vm9043 = vcmp.eq.s32.totalorder %v9039, 1
    %vm9044 = vcmp.eq.s32.totalorder %v9042, 1
    %vm9173 = vcmask 1041409
    %v9174 = vsel %vm9173, %v8915, %v8907
    %vm9175 = vcmask 1042434
    %v9176 = vsel %vm9175, %v8923, %v9174
    %vm9177 = vcmask 1043459
    %v9178 = vsel %vm9177, %v8931, %v9176
    %vm9179 = vcmask 1044484
    %v9180 = vsel %vm9179, %v8939, %v9178
    %vm9181 = vcmask 1045509
    %v9182 = vsel %vm9181, %v8947, %v9180
    %vm9183 = vcmask 1046534
    %v9184 = vsel %vm9183, %v8955, %v9182
    %vm9185 = vcmask 1047559
    %v9186 = vsel %vm9185, %v8963, %v9184
    %v9187 = vsel %vm9173, %v8916, %v8908
    %v9188 = vsel %vm9175, %v8924, %v9187
    %v9189 = vsel %vm9177, %v8932, %v9188
    %v9190 = vsel %vm9179, %v8940, %v9189
    %v9191 = vsel %vm9181, %v8948, %v9190
    %v9192 = vsel %vm9183, %v8956, %v9191
    %v9193 = vsel %vm9185, %v8964, %v9192
    %v9194 = vsel %vm9173, %v8917, %v8909
    %v9195 = vsel %vm9175, %v8925, %v9194
    %v9196 = vsel %vm9177, %v8933, %v9195
    %v9197 = vsel %vm9179, %v8941, %v9196
    %v9198 = vsel %vm9181, %v8949, %v9197
    %v9199 = vsel %vm9183, %v8957, %v9198
    %v9200 = vsel %vm9185, %v8965, %v9199
    %v9201 = vsel %vm9173, %v8918, %v8910
    %v9202 = vsel %vm9175, %v8926, %v9201
    %v9203 = vsel %vm9177, %v8934, %v9202
    %v9204 = vsel %vm9179, %v8942, %v9203
    %v9205 = vsel %vm9181, %v8950, %v9204
    %v9206 = vsel %vm9183, %v8958, %v9205
    %v9207 = vsel %vm9185, %v8966, %v9206
    %v9208 = vsel %vm9173, %v8919, %v8911
    %v9209 = vsel %vm9175, %v8927, %v9208
    %v9210 = vsel %vm9177, %v8935, %v9209
    %v9211 = vsel %vm9179, %v8943, %v9210
    %v9212 = vsel %vm9181, %v8951, %v9211
    %v9213 = vsel %vm9183, %v8959, %v9212
    %v9214 = vsel %vm9185, %v8967, %v9213
    %v9215 = vsel %vm9173, %v8920, %v8912
    %v9216 = vsel %vm9175, %v8928, %v9215
    %v9217 = vsel %vm9177, %v8936, %v9216
    %v9218 = vsel %vm9179, %v8944, %v9217
    %v9219 = vsel %vm9181, %v8952, %v9218
    %v9220 = vsel %vm9183, %v8960, %v9219
    %v9221 = vsel %vm9185, %v8968, %v9220
    %v9222 = vsel %vm9173, %v8921, %v8913
    %v9223 = vsel %vm9175, %v8929, %v9222
    %v9224 = vsel %vm9177, %v8937, %v9223
    %v9225 = vsel %vm9179, %v8945, %v9224
    %v9226 = vsel %vm9181, %v8953, %v9225
    %v9227 = vsel %vm9183, %v8961, %v9226
    %v9228 = vsel %vm9185, %v8969, %v9227
    %v9229 = vsel %vm9173, %v8922, %v8914
    %v9230 = vsel %vm9175, %v8930, %v9229
    %v9231 = vsel %vm9177, %v8938, %v9230
    %v9232 = vsel %vm9179, %v8946, %v9231
    %v9233 = vsel %vm9181, %v8954, %v9232
    %v9234 = vsel %vm9183, %v8962, %v9233
    %v9235 = vsel %vm9185, %v8970, %v9234
    %v9236 = vsel %vm9173, %v8979, %v8971
    %v9237 = vsel %vm9175, %v8987, %v9236
    %v9238 = vsel %vm9177, %v8995, %v9237
    %v9239 = vsel %vm9179, %v9003, %v9238
    %v9240 = vsel %vm9181, %v9011, %v9239
    %v9241 = vsel %vm9183, %v9019, %v9240
    %v9242 = vsel %vm9185, %v9027, %v9241
    %v9243 = vsel %vm9173, %v8980, %v8972
    %v9244 = vsel %vm9175, %v8988, %v9243
    %v9245 = vsel %vm9177, %v8996, %v9244
    %v9246 = vsel %vm9179, %v9004, %v9245
    %v9247 = vsel %vm9181, %v9012, %v9246
    %v9248 = vsel %vm9183, %v9020, %v9247
    %v9249 = vsel %vm9185, %v9028, %v9248
    %v9250 = vsel %vm9173, %v8981, %v8973
    %v9251 = vsel %vm9175, %v8989, %v9250
    %v9252 = vsel %vm9177, %v8997, %v9251
    %v9253 = vsel %vm9179, %v9005, %v9252
    %v9254 = vsel %vm9181, %v9013, %v9253
    %v9255 = vsel %vm9183, %v9021, %v9254
    %v9256 = vsel %vm9185, %v9029, %v9255
    %v9257 = vsel %vm9173, %v8982, %v8974
    %v9258 = vsel %vm9175, %v8990, %v9257
    %v9259 = vsel %vm9177, %v8998, %v9258
    %v9260 = vsel %vm9179, %v9006, %v9259
    %v9261 = vsel %vm9181, %v9014, %v9260
    %v9262 = vsel %vm9183, %v9022, %v9261
    %v9263 = vsel %vm9185, %v9030, %v9262
    %v9264 = vsel %vm9173, %v8983, %v8975
    %v9265 = vsel %vm9175, %v8991, %v9264
    %v9266 = vsel %vm9177, %v8999, %v9265
    %v9267 = vsel %vm9179, %v9007, %v9266
    %v9268 = vsel %vm9181, %v9015, %v9267
    %v9269 = vsel %vm9183, %v9023, %v9268
    %v9270 = vsel %vm9185, %v9031, %v9269
    %v9271 = vsel %vm9173, %v8984, %v8976
    %v9272 = vsel %vm9175, %v8992, %v9271
    %v9273 = vsel %vm9177, %v9000, %v9272
    %v9274 = vsel %vm9179, %v9008, %v9273
    %v9275 = vsel %vm9181, %v9016, %v9274
    %v9276 = vsel %vm9183, %v9024, %v9275
    %v9277 = vsel %vm9185, %v9032, %v9276
    %v9278 = vsel %vm9173, %v8985, %v8977
    %v9279 = vsel %vm9175, %v8993, %v9278
    %v9280 = vsel %vm9177, %v9001, %v9279
    %v9281 = vsel %vm9179, %v9009, %v9280
    %v9282 = vsel %vm9181, %v9017, %v9281
    %v9283 = vsel %vm9183, %v9025, %v9282
    %v9284 = vsel %vm9185, %v9033, %v9283
    %v9285 = vsel %vm9173, %v8986, %v8978
    %v9286 = vsel %vm9175, %v8994, %v9285
    %v9287 = vsel %vm9177, %v9002, %v9286
    %v9288 = vsel %vm9179, %v9010, %v9287
    %v9289 = vsel %vm9181, %v9018, %v9288
    %v9290 = vsel %vm9183, %v9026, %v9289
    %v9291 = vsel %vm9185, %v9034, %v9290
    %v9308 = vsel %vm9043, %v9186, 0.0
    %v9309 = vsel %vm9043, %v9193, 0.0
    %v9310 = vsel %vm9043, %v9200, 0.0
    %v9311 = vsel %vm9043, %v9207, 0.0
    %v9312 = vsel %vm9043, %v9214, 0.0
    %v9313 = vsel %vm9043, %v9221, 0.0
    %v9314 = vsel %vm9043, %v9228, 0.0
    %v9315 = vsel %vm9043, %v9235, 0.0
    %v9316 = vsel %vm9044, %v9242, 0.0
    %v9317 = vsel %vm9044, %v9249, 0.0
    %v9318 = vsel %vm9044, %v9256, 0.0
    %v9319 = vsel %vm9044, %v9263, 0.0
    %v9320 = vsel %vm9044, %v9270, 0.0
    %v9321 = vsel %vm9044, %v9277, 0.0
    %v9322 = vsel %vm9044, %v9284, 0.0
    %v9323 = vsel %vm9044, %v9291, 0.0
    %9324 = vst [vmem:[#allocation7] sm:$0xff] %v9308
    %9325 = vst [vmem:[#allocation7 + $0x8] sm:$0xff] %v9309
    %9326 = vst [vmem:[#allocation7 + $0x10] sm:$0xff] %v9310
    %9327 = vst [vmem:[#allocation7 + $0x18] sm:$0xff] %v9311
    %9328 = vst [vmem:[#allocation7 + $0x20] sm:$0xff] %v9312
    %9329 = vst [vmem:[#allocation7 + $0x28] sm:$0xff] %v9313
    %9330 = vst [vmem:[#allocation7 + $0x30] sm:$0xff] %v9314
    %9331 = vst [vmem:[#allocation7 + $0x38] sm:$0xff] %v9315
    %9332 = vst [vmem:[#allocation7 + $0x40] sm:$0xff] %v9316
    %9333 = vst [vmem:[#allocation7 + $0x48] sm:$0xff] %v9317
    %9334 = vst [vmem:[#allocation7 + $0x50] sm:$0xff] %v9318
    %9335 = vst [vmem:[#allocation7 + $0x58] sm:$0xff] %v9319
    %9336 = vst [vmem:[#allocation7 + $0x60] sm:$0xff] %v9320
    %9337 = vst [vmem:[#allocation7 + $0x68] sm:$0xff] %v9321
    %9338 = vst [vmem:[#allocation7 + $0x70] sm:$0xff] %v9322
    %9339 = vst [vmem:[#allocation7 + $0x78] sm:$0xff] %v9323
    // Predicated region
    $region50: #{tpu_custom_call.1} parent=1 // pred_check
      _
    $region51: #{tpu_custom_call.1} parent=1 // pred_check_branch
      %9341 = sbr.rel (0) target = $region53
    $region52: #{tpu_custom_call.1} parent=1 // pred_region
      %s9343 = ssub.s32 2048, 2048
      %9344 = vsyncadd [#allocation4], %s9343
      %s9345 = sshll.u32 [#allocation7], 4
      %s9346 = int_to_ptr.vmem [resolvable:$true] %s9345
      %9351 = dma.vmem_to_hbm [thread:$0]  %s9346, 2048, %s10, [#allocation4], 1024, 1024, 64
    $region53: #{tpu_custom_call.1} parent=1 // pred_fallthru
      _
    // Predicated region
    $region54: #{tpu_custom_call.1} parent=1 // pred_check
      _
    $region55: #{tpu_custom_call.1} parent=1 // pred_check_branch
      %9353 = sbr.rel (0) target = $region57
    $region56: #{tpu_custom_call.1} parent=1 // pred_region
      %9354 = dma.done [#allocation4], 2048
    $region57: #{tpu_custom_call.1} parent=1 // pred_fallthru
      _
    %9355 = vsyncpa [#allocation3], 1
    %9356 = vsyncpa [#allocation6], 1
    %9357 = vsyncpa [#allocation4], 1

</llo_original>
